<compile_context>
chip_gen: v6e
topology: v6e:2x2x1
jax: 0.10.0
libtpu: 0.0.40
codegen_flags: <defaults>
</compile_context>

<pallas_src>
import jax
import jax.numpy as jnp
from jax.experimental import pallas as pl
from jax.experimental.pallas import tpu as pltpu

# ----------------------------- model dims ----------------------------------
B = 2            # batch
S = 8            # sequence length
H = 32           # hidden size (pretrain_model.config.hidden_size)
NH = 4           # attention heads
DH = H // NH     # head dim
I = 128          # FFN intermediate size (4*H)
L = 2            # encoder layers
V = 100          # vocab size
P = 16           # max position embeddings
FF1 = 2048       # linear_1 output
NCLS = 2         # linear_2 output
LN_EPS = 1e-12

_N_LAYER_REFS = 12            # refs per encoder layer
_N_IN = 5 + _N_LAYER_REFS * L + 6   # total kernel inputs


# ----------------------------- fused Pallas kernel --------------------------

def _fused_forward_kernel(*refs):
    """Entire MatchingModel forward in one kernel (everything VMEM-resident).

    Ref order:
      emb[B*S,H], target[B,1](int32), drop_scale[B,FF1],
      emb_ln_g[1,H], emb_ln_b[1,H],
      per layer x L: wqkv[H,3H], bqkv[1,3H], wo[H,H], bo[1,H],
                     ln1_g, ln1_b, wi[H,I], bi[1,I], wo2[I,H], bo2[1,H],
                     ln2_g, ln2_b,
      pool_w[H,H], pool_b[1,H], lin1_w[H,FF1], lin1_b[1,FF1],
      lin2_w[FF1,NCLS], lin2_b[1,NCLS],
      outputs: pred[B,NCLS], loss[1,1]
    """
    emb_ref, tgt_ref, drop_ref, eg_ref, eb_ref = refs[:5]
    lrefs = refs[5:5 + _N_LAYER_REFS * L]
    pw_ref, pb_ref, w1_ref, b1_ref, w2_ref, b2_ref = refs[5 + _N_LAYER_REFS * L:
                                                          11 + _N_LAYER_REFS * L]
    pred_ref = refs[11 + _N_LAYER_REFS * L]
    loss_ref = refs[12 + _N_LAYER_REFS * L]

    def layernorm(x, g, b):
        mu = jnp.mean(x, axis=-1, keepdims=True)
        xc = x - mu
        var = jnp.mean(xc * xc, axis=-1, keepdims=True)
        return xc * jax.lax.rsqrt(var + LN_EPS) * g + b

    # ---- embedding LayerNorm (residual-free; no zeros tensor DMA'd) ----
    x = layernorm(emb_ref[...], eg_ref[...], eb_ref[...])          # [B*S, H]

    scale = 1.0 / float(DH) ** 0.5

    # ---- transformer encoder layers (statically unrolled) ----
    for layer in range(L):
        (wqkv, bqkv, wo, bo, ln1g, ln1b,
         wi, bi, wo2, bo2, ln2g, ln2b) = lrefs[_N_LAYER_REFS * layer:
                                               _N_LAYER_REFS * (layer + 1)]

        # fused Q/K/V projection: one [B*S,H] x [H,3H] matmul
        qkv = jnp.dot(x, wqkv[...], preferred_element_type=jnp.float32) + bqkv[...]
        q = qkv[:, 0:H]
        k = qkv[:, H:2 * H]
        v = qkv[:, 2 * H:3 * H]

        # attention per (batch, head), static slices, all in vregs/VMEM
        batch_ctx = []
        for b in range(B):
            rows = slice(b * S, (b + 1) * S)
            head_outs = []
            for h in range(NH):
                cols = slice(h * DH, (h + 1) * DH)
                qh = q[rows, cols]                                  # [S, DH]
                kh = k[rows, cols]                                  # [S, DH]
                vh = v[rows, cols]                                  # [S, DH]
                s = jax.lax.dot_general(
                    qh, kh, (((1,), (1,)), ((), ())),
                    preferred_element_type=jnp.float32) * scale     # [S, S]
                s = s - jnp.max(s, axis=-1, keepdims=True)
                p = jnp.exp(s)
                p = p / jnp.sum(p, axis=-1, keepdims=True)
                head_outs.append(
                    jnp.dot(p, vh, preferred_element_type=jnp.float32))  # [S, DH]
            batch_ctx.append(jnp.concatenate(head_outs, axis=-1))   # [S, H]
        ctx = jnp.concatenate(batch_ctx, axis=0)                    # [B*S, H]

        attn_out = jnp.dot(ctx, wo[...], preferred_element_type=jnp.float32) + bo[...]
        x = layernorm(attn_out + x, ln1g[...], ln1b[...])

        ff = jnp.dot(x, wi[...], preferred_element_type=jnp.float32) + bi[...]
        ff = jax.nn.gelu(ff, approximate=True)   # tanh-approx GELU (f32 math)
        ff = jnp.dot(ff, wo2[...], preferred_element_type=jnp.float32) + bo2[...]
        x = layernorm(ff + x, ln2g[...], ln2b[...])

    # ---- pooler: tanh(W * hidden[CLS]) ----
    cls = jnp.concatenate([x[b * S:b * S + 1, :] for b in range(B)], axis=0)  # [B,H]
    pooled = jnp.tanh(
        jnp.dot(cls, pw_ref[...], preferred_element_type=jnp.float32) + pb_ref[...])

    # ---- classification head: linear_1 -> dropout(0.5) -> linear_2 -> sigmoid ----
    hid = jnp.dot(pooled, w1_ref[...], preferred_element_type=jnp.float32) + b1_ref[...]
    hid = hid * drop_ref[...]          # {0, 2} scale mask == dropout(p=0.5) train mode
    logits = jnp.dot(hid, w2_ref[...], preferred_element_type=jnp.float32) + b2_ref[...]
    pred = jax.nn.sigmoid(logits)                                   # [B, NCLS]

    # CrossEntropyLoss applied to the *sigmoid* outputs (matches the reference).
    m = jnp.max(pred, axis=-1, keepdims=True)
    lse = m + jnp.log(jnp.sum(jnp.exp(pred - m), axis=-1, keepdims=True))
    logp = pred - lse                                               # log_softmax
    col = jax.lax.broadcasted_iota(jnp.int32, pred.shape, 1)
    onehot = (col == tgt_ref[...]).astype(jnp.float32)
    loss = -jnp.sum(onehot * logp) / jnp.float32(pred.shape[0])

    pred_ref[...] = pred
    loss_ref[...] = jnp.full((1, 1), loss, dtype=jnp.float32)


def fused_forward(emb, target, drop_scale, flat_weights):
    """One pallas_call for the whole forward. Returns (pred [B,NCLS], loss [1,1])."""
    vmem = pl.BlockSpec(memory_space=pltpu.MemorySpace.VMEM)
    inputs = [emb, target, drop_scale] + list(flat_weights)
    assert len(inputs) == _N_IN
    return pl.pallas_call(
        _fused_forward_kernel,
        out_shape=(
            jax.ShapeDtypeStruct((B, NCLS), jnp.float32),
            jax.ShapeDtypeStruct((1, 1), jnp.float32),
        ),
        in_specs=[vmem] * _N_IN,
        out_specs=(vmem, vmem),
    )(*inputs)


# ----------------------------- parameters -----------------------------------

def init_params(key):
    """Deterministic randomly-initialized mini-BERT + MatchingModel head."""
    ks = iter(jax.random.split(key, 64))

    def nrm(shape):
        return 0.02 * jax.random.normal(next(ks), shape, jnp.float32)

    p = {
        "word_emb": nrm((V, H)),
        "pos_emb": nrm((P, H)),
        "type_emb": nrm((2, H)),
        "emb_ln_g": jnp.ones((1, H), jnp.float32),
        "emb_ln_b": jnp.zeros((1, H), jnp.float32),
        "layers": [],
        "pool_w": nrm((H, H)),
        "pool_b": jnp.zeros((1, H), jnp.float32),
        # classification head (the MatchingModel-specific params)
        "lin1_w": nrm((H, FF1)),
        "lin1_b": jnp.zeros((1, FF1), jnp.float32),
        "lin2_w": nrm((FF1, NCLS)),
        "lin2_b": jnp.zeros((1, NCLS), jnp.float32),
    }
    for _ in range(L):
        p["layers"].append({
            "wqkv": nrm((H, 3 * H)), "bqkv": jnp.zeros((1, 3 * H), jnp.float32),
            "wo": nrm((H, H)), "bo": jnp.zeros((1, H), jnp.float32),
            "ln1_g": jnp.ones((1, H), jnp.float32),
            "ln1_b": jnp.zeros((1, H), jnp.float32),
            "wi": nrm((H, I)), "bi": jnp.zeros((1, I), jnp.float32),
            "wo2": nrm((I, H)), "bo2": jnp.zeros((1, H), jnp.float32),
            "ln2_g": jnp.ones((1, H), jnp.float32),
            "ln2_b": jnp.zeros((1, H), jnp.float32),
        })
    return p


def _flatten_weights(p):
    flat = [p["emb_ln_g"], p["emb_ln_b"]]
    for lp in p["layers"]:
        flat += [lp["wqkv"], lp["bqkv"], lp["wo"], lp["bo"],
                 lp["ln1_g"], lp["ln1_b"], lp["wi"], lp["bi"],
                 lp["wo2"], lp["bo2"], lp["ln2_g"], lp["ln2_b"]]
    flat += [p["pool_w"], p["pool_b"],
             p["lin1_w"], p["lin1_b"], p["lin2_w"], p["lin2_b"]]
    return flat


# ----------------------------- forward ---------------------------------------

def matching_model_forward(params, words, target, dropout_key):
    """Equivalent of MatchingModel.forward(words=..., target=...) in train mode."""
    # --- embeddings (gather + add is tiny XLA glue; everything else in-kernel) ---
    we = jnp.take(params["word_emb"], words, axis=0)                # [B, S, H]
    pe = params["pos_emb"][:S][None, :, :]                          # [1, S, H]
    te = params["type_emb"][0][None, None, :]                       # [1, 1, H]
    emb = (we + pe + te).reshape(B * S, H)

    # dropout(p=0.5) keep/scale mask, precomputed as {0, 2} values.
    # TODO(synk): on-device pltpu.prng_* has no interpret/CPU lowering, so the
    # dropout randomness is drawn with jax.random outside the kernel.
    keep = jax.random.bernoulli(dropout_key, p=0.5, shape=(B, FF1))
    drop_scale = jnp.where(keep, 2.0, 0.0).astype(jnp.float32)

    # TODO(synk): internal BERT dropout layers (p=0.1) omitted; only the head
    # dropout (p=0.5) of MatchingModel is modeled.

    tgt = target.reshape(B, 1).astype(jnp.int32)
    pred, loss = fused_forward(emb, tgt, drop_scale, _flatten_weights(params))
    return {"pred": pred, "loss": loss[0, 0]}


# ----------------------------- main ------------------------------------------

if __name__ == "__main__":
    key = jax.random.PRNGKey(0)
    k_param, k_words, k_drop = jax.random.split(key, 3)

    params = init_params(k_param)
    words = jax.random.randint(k_words, (B, S), 0, V, dtype=jnp.int32)
    target = jnp.array([0, 1], dtype=jnp.int32)

    fwd = jax.jit(matching_model_forward)
    out = fwd(params, words, target, k_drop)
    pred = jax.block_until_ready(out["pred"])
    loss = jax.block_until_ready(out["loss"])

    assert pred.shape == (B, NCLS)
    assert bool(jnp.isfinite(loss)) and bool(jnp.all(jnp.isfinite(pred)))
    print("KERNEL_OK")
</pallas_src>

<mosaic_0001>
module attributes {stable_mosaic.version = 11 : i64} {
  func.func @_fused_forward_kernel(%arg0: memref<16x32xf32, #tpu.memory_space<vmem>>, %arg1: memref<2x1xi32, #tpu.memory_space<vmem>>, %arg2: memref<2x2048xf32, #tpu.memory_space<vmem>>, %arg3: memref<1x32xf32, #tpu.memory_space<vmem>>, %arg4: memref<1x32xf32, #tpu.memory_space<vmem>>, %arg5: memref<32x96xf32, #tpu.memory_space<vmem>>, %arg6: memref<1x96xf32, #tpu.memory_space<vmem>>, %arg7: memref<32x32xf32, #tpu.memory_space<vmem>>, %arg8: memref<1x32xf32, #tpu.memory_space<vmem>>, %arg9: memref<1x32xf32, #tpu.memory_space<vmem>>, %arg10: memref<1x32xf32, #tpu.memory_space<vmem>>, %arg11: memref<32x128xf32, #tpu.memory_space<vmem>>, %arg12: memref<1x128xf32, #tpu.memory_space<vmem>>, %arg13: memref<128x32xf32, #tpu.memory_space<vmem>>, %arg14: memref<1x32xf32, #tpu.memory_space<vmem>>, %arg15: memref<1x32xf32, #tpu.memory_space<vmem>>, %arg16: memref<1x32xf32, #tpu.memory_space<vmem>>, %arg17: memref<32x96xf32, #tpu.memory_space<vmem>>, %arg18: memref<1x96xf32, #tpu.memory_space<vmem>>, %arg19: memref<32x32xf32, #tpu.memory_space<vmem>>, %arg20: memref<1x32xf32, #tpu.memory_space<vmem>>, %arg21: memref<1x32xf32, #tpu.memory_space<vmem>>, %arg22: memref<1x32xf32, #tpu.memory_space<vmem>>, %arg23: memref<32x128xf32, #tpu.memory_space<vmem>>, %arg24: memref<1x128xf32, #tpu.memory_space<vmem>>, %arg25: memref<128x32xf32, #tpu.memory_space<vmem>>, %arg26: memref<1x32xf32, #tpu.memory_space<vmem>>, %arg27: memref<1x32xf32, #tpu.memory_space<vmem>>, %arg28: memref<1x32xf32, #tpu.memory_space<vmem>>, %arg29: memref<32x32xf32, #tpu.memory_space<vmem>>, %arg30: memref<1x32xf32, #tpu.memory_space<vmem>>, %arg31: memref<32x2048xf32, #tpu.memory_space<vmem>>, %arg32: memref<1x2048xf32, #tpu.memory_space<vmem>>, %arg33: memref<2048x2xf32, #tpu.memory_space<vmem>>, %arg34: memref<1x2xf32, #tpu.memory_space<vmem>>, %arg35: memref<2x2xf32, #tpu.memory_space<vmem>>, %arg36: memref<1x1xf32, #tpu.memory_space<vmem>>) attributes {dimension_semantics = [], scalar_prefetch = 0 : i64, scratch_operands = 0 : i64, tpu.core_type = #tpu.core_type<tc>} {
    %c0 = arith.constant 0 : index
    %c0_0 = arith.constant 0 : index
    %0 = vector.load %arg0[%c0, %c0_0] : memref<16x32xf32, #tpu.memory_space<vmem>>, vector<16x32xf32>
    %c0_1 = arith.constant 0 : index
    %c0_2 = arith.constant 0 : index
    %1 = vector.load %arg3[%c0_1, %c0_2] : memref<1x32xf32, #tpu.memory_space<vmem>>, vector<1x32xf32>
    %c0_3 = arith.constant 0 : index
    %c0_4 = arith.constant 0 : index
    %2 = vector.load %arg4[%c0_3, %c0_4] : memref<1x32xf32, #tpu.memory_space<vmem>>, vector<1x32xf32>
    %cst = arith.constant dense<0.000000e+00> : vector<16xf32>
    %3 = vector.multi_reduction <add>, %0, %cst [1] : vector<16x32xf32> to vector<16xf32>
    %4 = vector.shape_cast %3 : vector<16xf32> to vector<16x1xf32>
    %cst_5 = arith.constant 3.200000e+01 : f32
    %5 = vector.broadcast %cst_5 : f32 to vector<16x1xf32>
    %6 = arith.divf %4, %5 : vector<16x1xf32>
    %7 = vector.broadcast %6 : vector<16x1xf32> to vector<16x32xf32>
    %8 = arith.subf %0, %7 : vector<16x32xf32>
    %9 = arith.mulf %8, %8 : vector<16x32xf32>
    %cst_6 = arith.constant dense<0.000000e+00> : vector<16xf32>
    %10 = vector.multi_reduction <add>, %9, %cst_6 [1] : vector<16x32xf32> to vector<16xf32>
    %11 = vector.shape_cast %10 : vector<16xf32> to vector<16x1xf32>
    %cst_7 = arith.constant 3.200000e+01 : f32
    %12 = vector.broadcast %cst_7 : f32 to vector<16x1xf32>
    %13 = arith.divf %11, %12 : vector<16x1xf32>
    %cst_8 = arith.constant 9.99999996E-13 : f32
    %14 = vector.broadcast %cst_8 : f32 to vector<16x1xf32>
    %15 = arith.addf %13, %14 : vector<16x1xf32>
    %16 = math.rsqrt %15 : vector<16x1xf32>
    %17 = vector.broadcast %16 : vector<16x1xf32> to vector<16x32xf32>
    %18 = arith.mulf %8, %17 : vector<16x32xf32>
    %19 = vector.broadcast %1 : vector<1x32xf32> to vector<16x32xf32>
    %20 = arith.mulf %18, %19 : vector<16x32xf32>
    %21 = vector.broadcast %2 : vector<1x32xf32> to vector<16x32xf32>
    %22 = arith.addf %20, %21 : vector<16x32xf32>
    %c0_9 = arith.constant 0 : index
    %c0_10 = arith.constant 0 : index
    %23 = vector.load %arg5[%c0_9, %c0_10] : memref<32x96xf32, #tpu.memory_space<vmem>>, vector<32x96xf32>
    %cst_11 = arith.constant dense<0.000000e+00> : vector<16x96xf32>
    %24 = tpu.matmul %22, %23, %cst_11 {dimension_numbers = #tpu.dot_dimension_numbers<[1], [0], [0], [1], [0, 0, 1, 1], [], []>} : vector<16x32xf32>, vector<32x96xf32>, vector<16x96xf32> -> vector<16x96xf32>
    %c0_12 = arith.constant 0 : index
    %c0_13 = arith.constant 0 : index
    %25 = vector.load %arg6[%c0_12, %c0_13] : memref<1x96xf32, #tpu.memory_space<vmem>>, vector<1x96xf32>
    %26 = vector.broadcast %25 : vector<1x96xf32> to vector<16x96xf32>
    %27 = arith.addf %24, %26 : vector<16x96xf32>
    %28 = vector.extract_strided_slice %27 {offsets = [0, 0], sizes = [16, 32], strides = [1, 1]} : vector<16x96xf32> to vector<16x32xf32>
    %29 = vector.extract_strided_slice %27 {offsets = [0, 32], sizes = [16, 32], strides = [1, 1]} : vector<16x96xf32> to vector<16x32xf32>
    %30 = vector.extract_strided_slice %27 {offsets = [0, 64], sizes = [16, 32], strides = [1, 1]} : vector<16x96xf32> to vector<16x32xf32>
    %31 = vector.extract_strided_slice %28 {offsets = [0, 0], sizes = [8, 8], strides = [1, 1]} : vector<16x32xf32> to vector<8x8xf32>
    %32 = vector.extract_strided_slice %29 {offsets = [0, 0], sizes = [8, 8], strides = [1, 1]} : vector<16x32xf32> to vector<8x8xf32>
    %33 = vector.extract_strided_slice %30 {offsets = [0, 0], sizes = [8, 8], strides = [1, 1]} : vector<16x32xf32> to vector<8x8xf32>
    %cst_14 = arith.constant dense<0.000000e+00> : vector<8x8xf32>
    %34 = tpu.matmul %31, %32, %cst_14 {dimension_numbers = #tpu.dot_dimension_numbers<[1], [1], [0], [0], [0, 0, 1, 0], [], []>} : vector<8x8xf32>, vector<8x8xf32>, vector<8x8xf32> -> vector<8x8xf32>
    %cst_15 = arith.constant 0.353553385 : f32
    %35 = vector.broadcast %cst_15 : f32 to vector<8x8xf32>
    %36 = arith.mulf %34, %35 : vector<8x8xf32>
    %cst_16 = arith.constant dense<0xFF800000> : vector<8xf32>
    %37 = vector.multi_reduction <maximumf>, %36, %cst_16 [1] : vector<8x8xf32> to vector<8xf32>
    %38 = vector.shape_cast %37 : vector<8xf32> to vector<8x1xf32>
    %39 = vector.broadcast %38 : vector<8x1xf32> to vector<8x8xf32>
    %40 = arith.subf %36, %39 : vector<8x8xf32>
    %41 = math.exp %40 : vector<8x8xf32>
    %cst_17 = arith.constant dense<0.000000e+00> : vector<8xf32>
    %42 = vector.multi_reduction <add>, %41, %cst_17 [1] : vector<8x8xf32> to vector<8xf32>
    %43 = vector.shape_cast %42 : vector<8xf32> to vector<8x1xf32>
    %44 = vector.broadcast %43 : vector<8x1xf32> to vector<8x8xf32>
    %45 = arith.divf %41, %44 : vector<8x8xf32>
    %cst_18 = arith.constant dense<0.000000e+00> : vector<8x8xf32>
    %46 = tpu.matmul %45, %33, %cst_18 {dimension_numbers = #tpu.dot_dimension_numbers<[1], [0], [0], [1], [0, 0, 1, 1], [], []>} : vector<8x8xf32>, vector<8x8xf32>, vector<8x8xf32> -> vector<8x8xf32>
    %47 = vector.extract_strided_slice %28 {offsets = [0, 8], sizes = [8, 8], strides = [1, 1]} : vector<16x32xf32> to vector<8x8xf32>
    %48 = vector.extract_strided_slice %29 {offsets = [0, 8], sizes = [8, 8], strides = [1, 1]} : vector<16x32xf32> to vector<8x8xf32>
    %49 = vector.extract_strided_slice %30 {offsets = [0, 8], sizes = [8, 8], strides = [1, 1]} : vector<16x32xf32> to vector<8x8xf32>
    %cst_19 = arith.constant dense<0.000000e+00> : vector<8x8xf32>
    %50 = tpu.matmul %47, %48, %cst_19 {dimension_numbers = #tpu.dot_dimension_numbers<[1], [1], [0], [0], [0, 0, 1, 0], [], []>} : vector<8x8xf32>, vector<8x8xf32>, vector<8x8xf32> -> vector<8x8xf32>
    %cst_20 = arith.constant 0.353553385 : f32
    %51 = vector.broadcast %cst_20 : f32 to vector<8x8xf32>
    %52 = arith.mulf %50, %51 : vector<8x8xf32>
    %cst_21 = arith.constant dense<0xFF800000> : vector<8xf32>
    %53 = vector.multi_reduction <maximumf>, %52, %cst_21 [1] : vector<8x8xf32> to vector<8xf32>
    %54 = vector.shape_cast %53 : vector<8xf32> to vector<8x1xf32>
    %55 = vector.broadcast %54 : vector<8x1xf32> to vector<8x8xf32>
    %56 = arith.subf %52, %55 : vector<8x8xf32>
    %57 = math.exp %56 : vector<8x8xf32>
    %cst_22 = arith.constant dense<0.000000e+00> : vector<8xf32>
    %58 = vector.multi_reduction <add>, %57, %cst_22 [1] : vector<8x8xf32> to vector<8xf32>
    %59 = vector.shape_cast %58 : vector<8xf32> to vector<8x1xf32>
    %60 = vector.broadcast %59 : vector<8x1xf32> to vector<8x8xf32>
    %61 = arith.divf %57, %60 : vector<8x8xf32>
    %cst_23 = arith.constant dense<0.000000e+00> : vector<8x8xf32>
    %62 = tpu.matmul %61, %49, %cst_23 {dimension_numbers = #tpu.dot_dimension_numbers<[1], [0], [0], [1], [0, 0, 1, 1], [], []>} : vector<8x8xf32>, vector<8x8xf32>, vector<8x8xf32> -> vector<8x8xf32>
    %63 = vector.extract_strided_slice %28 {offsets = [0, 16], sizes = [8, 8], strides = [1, 1]} : vector<16x32xf32> to vector<8x8xf32>
    %64 = vector.extract_strided_slice %29 {offsets = [0, 16], sizes = [8, 8], strides = [1, 1]} : vector<16x32xf32> to vector<8x8xf32>
    %65 = vector.extract_strided_slice %30 {offsets = [0, 16], sizes = [8, 8], strides = [1, 1]} : vector<16x32xf32> to vector<8x8xf32>
    %cst_24 = arith.constant dense<0.000000e+00> : vector<8x8xf32>
    %66 = tpu.matmul %63, %64, %cst_24 {dimension_numbers = #tpu.dot_dimension_numbers<[1], [1], [0], [0], [0, 0, 1, 0], [], []>} : vector<8x8xf32>, vector<8x8xf32>, vector<8x8xf32> -> vector<8x8xf32>
    %cst_25 = arith.constant 0.353553385 : f32
    %67 = vector.broadcast %cst_25 : f32 to vector<8x8xf32>
    %68 = arith.mulf %66, %67 : vector<8x8xf32>
    %cst_26 = arith.constant dense<0xFF800000> : vector<8xf32>
    %69 = vector.multi_reduction <maximumf>, %68, %cst_26 [1] : vector<8x8xf32> to vector<8xf32>
    %70 = vector.shape_cast %69 : vector<8xf32> to vector<8x1xf32>
    %71 = vector.broadcast %70 : vector<8x1xf32> to vector<8x8xf32>
    %72 = arith.subf %68, %71 : vector<8x8xf32>
    %73 = math.exp %72 : vector<8x8xf32>
    %cst_27 = arith.constant dense<0.000000e+00> : vector<8xf32>
    %74 = vector.multi_reduction <add>, %73, %cst_27 [1] : vector<8x8xf32> to vector<8xf32>
    %75 = vector.shape_cast %74 : vector<8xf32> to vector<8x1xf32>
    %76 = vector.broadcast %75 : vector<8x1xf32> to vector<8x8xf32>
    %77 = arith.divf %73, %76 : vector<8x8xf32>
    %cst_28 = arith.constant dense<0.000000e+00> : vector<8x8xf32>
    %78 = tpu.matmul %77, %65, %cst_28 {dimension_numbers = #tpu.dot_dimension_numbers<[1], [0], [0], [1], [0, 0, 1, 1], [], []>} : vector<8x8xf32>, vector<8x8xf32>, vector<8x8xf32> -> vector<8x8xf32>
    %79 = vector.extract_strided_slice %28 {offsets = [0, 24], sizes = [8, 8], strides = [1, 1]} : vector<16x32xf32> to vector<8x8xf32>
    %80 = vector.extract_strided_slice %29 {offsets = [0, 24], sizes = [8, 8], strides = [1, 1]} : vector<16x32xf32> to vector<8x8xf32>
    %81 = vector.extract_strided_slice %30 {offsets = [0, 24], sizes = [8, 8], strides = [1, 1]} : vector<16x32xf32> to vector<8x8xf32>
    %cst_29 = arith.constant dense<0.000000e+00> : vector<8x8xf32>
    %82 = tpu.matmul %79, %80, %cst_29 {dimension_numbers = #tpu.dot_dimension_numbers<[1], [1], [0], [0], [0, 0, 1, 0], [], []>} : vector<8x8xf32>, vector<8x8xf32>, vector<8x8xf32> -> vector<8x8xf32>
    %cst_30 = arith.constant 0.353553385 : f32
    %83 = vector.broadcast %cst_30 : f32 to vector<8x8xf32>
    %84 = arith.mulf %82, %83 : vector<8x8xf32>
    %cst_31 = arith.constant dense<0xFF800000> : vector<8xf32>
    %85 = vector.multi_reduction <maximumf>, %84, %cst_31 [1] : vector<8x8xf32> to vector<8xf32>
    %86 = vector.shape_cast %85 : vector<8xf32> to vector<8x1xf32>
    %87 = vector.broadcast %86 : vector<8x1xf32> to vector<8x8xf32>
    %88 = arith.subf %84, %87 : vector<8x8xf32>
    %89 = math.exp %88 : vector<8x8xf32>
    %cst_32 = arith.constant dense<0.000000e+00> : vector<8xf32>
    %90 = vector.multi_reduction <add>, %89, %cst_32 [1] : vector<8x8xf32> to vector<8xf32>
    %91 = vector.shape_cast %90 : vector<8xf32> to vector<8x1xf32>
    %92 = vector.broadcast %91 : vector<8x1xf32> to vector<8x8xf32>
    %93 = arith.divf %89, %92 : vector<8x8xf32>
    %cst_33 = arith.constant dense<0.000000e+00> : vector<8x8xf32>
    %94 = tpu.matmul %93, %81, %cst_33 {dimension_numbers = #tpu.dot_dimension_numbers<[1], [0], [0], [1], [0, 0, 1, 1], [], []>} : vector<8x8xf32>, vector<8x8xf32>, vector<8x8xf32> -> vector<8x8xf32>
    %95 = tpu.concatenate %46, %62, %78, %94 in 1 : vector<8x8xf32>, vector<8x8xf32>, vector<8x8xf32>, vector<8x8xf32> -> vector<8x32xf32>
    %96 = vector.extract_strided_slice %28 {offsets = [8, 0], sizes = [8, 8], strides = [1, 1]} : vector<16x32xf32> to vector<8x8xf32>
    %97 = vector.extract_strided_slice %29 {offsets = [8, 0], sizes = [8, 8], strides = [1, 1]} : vector<16x32xf32> to vector<8x8xf32>
    %98 = vector.extract_strided_slice %30 {offsets = [8, 0], sizes = [8, 8], strides = [1, 1]} : vector<16x32xf32> to vector<8x8xf32>
    %cst_34 = arith.constant dense<0.000000e+00> : vector<8x8xf32>
    %99 = tpu.matmul %96, %97, %cst_34 {dimension_numbers = #tpu.dot_dimension_numbers<[1], [1], [0], [0], [0, 0, 1, 0], [], []>} : vector<8x8xf32>, vector<8x8xf32>, vector<8x8xf32> -> vector<8x8xf32>
    %cst_35 = arith.constant 0.353553385 : f32
    %100 = vector.broadcast %cst_35 : f32 to vector<8x8xf32>
    %101 = arith.mulf %99, %100 : vector<8x8xf32>
    %cst_36 = arith.constant dense<0xFF800000> : vector<8xf32>
    %102 = vector.multi_reduction <maximumf>, %101, %cst_36 [1] : vector<8x8xf32> to vector<8xf32>
    %103 = vector.shape_cast %102 : vector<8xf32> to vector<8x1xf32>
    %104 = vector.broadcast %103 : vector<8x1xf32> to vector<8x8xf32>
    %105 = arith.subf %101, %104 : vector<8x8xf32>
    %106 = math.exp %105 : vector<8x8xf32>
    %cst_37 = arith.constant dense<0.000000e+00> : vector<8xf32>
    %107 = vector.multi_reduction <add>, %106, %cst_37 [1] : vector<8x8xf32> to vector<8xf32>
    %108 = vector.shape_cast %107 : vector<8xf32> to vector<8x1xf32>
    %109 = vector.broadcast %108 : vector<8x1xf32> to vector<8x8xf32>
    %110 = arith.divf %106, %109 : vector<8x8xf32>
    %cst_38 = arith.constant dense<0.000000e+00> : vector<8x8xf32>
    %111 = tpu.matmul %110, %98, %cst_38 {dimension_numbers = #tpu.dot_dimension_numbers<[1], [0], [0], [1], [0, 0, 1, 1], [], []>} : vector<8x8xf32>, vector<8x8xf32>, vector<8x8xf32> -> vector<8x8xf32>
    %112 = vector.extract_strided_slice %28 {offsets = [8, 8], sizes = [8, 8], strides = [1, 1]} : vector<16x32xf32> to vector<8x8xf32>
    %113 = vector.extract_strided_slice %29 {offsets = [8, 8], sizes = [8, 8], strides = [1, 1]} : vector<16x32xf32> to vector<8x8xf32>
    %114 = vector.extract_strided_slice %30 {offsets = [8, 8], sizes = [8, 8], strides = [1, 1]} : vector<16x32xf32> to vector<8x8xf32>
    %cst_39 = arith.constant dense<0.000000e+00> : vector<8x8xf32>
    %115 = tpu.matmul %112, %113, %cst_39 {dimension_numbers = #tpu.dot_dimension_numbers<[1], [1], [0], [0], [0, 0, 1, 0], [], []>} : vector<8x8xf32>, vector<8x8xf32>, vector<8x8xf32> -> vector<8x8xf32>
    %cst_40 = arith.constant 0.353553385 : f32
    %116 = vector.broadcast %cst_40 : f32 to vector<8x8xf32>
    %117 = arith.mulf %115, %116 : vector<8x8xf32>
    %cst_41 = arith.constant dense<0xFF800000> : vector<8xf32>
    %118 = vector.multi_reduction <maximumf>, %117, %cst_41 [1] : vector<8x8xf32> to vector<8xf32>
    %119 = vector.shape_cast %118 : vector<8xf32> to vector<8x1xf32>
    %120 = vector.broadcast %119 : vector<8x1xf32> to vector<8x8xf32>
    %121 = arith.subf %117, %120 : vector<8x8xf32>
    %122 = math.exp %121 : vector<8x8xf32>
    %cst_42 = arith.constant dense<0.000000e+00> : vector<8xf32>
    %123 = vector.multi_reduction <add>, %122, %cst_42 [1] : vector<8x8xf32> to vector<8xf32>
    %124 = vector.shape_cast %123 : vector<8xf32> to vector<8x1xf32>
    %125 = vector.broadcast %124 : vector<8x1xf32> to vector<8x8xf32>
    %126 = arith.divf %122, %125 : vector<8x8xf32>
    %cst_43 = arith.constant dense<0.000000e+00> : vector<8x8xf32>
    %127 = tpu.matmul %126, %114, %cst_43 {dimension_numbers = #tpu.dot_dimension_numbers<[1], [0], [0], [1], [0, 0, 1, 1], [], []>} : vector<8x8xf32>, vector<8x8xf32>, vector<8x8xf32> -> vector<8x8xf32>
    %128 = vector.extract_strided_slice %28 {offsets = [8, 16], sizes = [8, 8], strides = [1, 1]} : vector<16x32xf32> to vector<8x8xf32>
    %129 = vector.extract_strided_slice %29 {offsets = [8, 16], sizes = [8, 8], strides = [1, 1]} : vector<16x32xf32> to vector<8x8xf32>
    %130 = vector.extract_strided_slice %30 {offsets = [8, 16], sizes = [8, 8], strides = [1, 1]} : vector<16x32xf32> to vector<8x8xf32>
    %cst_44 = arith.constant dense<0.000000e+00> : vector<8x8xf32>
    %131 = tpu.matmul %128, %129, %cst_44 {dimension_numbers = #tpu.dot_dimension_numbers<[1], [1], [0], [0], [0, 0, 1, 0], [], []>} : vector<8x8xf32>, vector<8x8xf32>, vector<8x8xf32> -> vector<8x8xf32>
    %cst_45 = arith.constant 0.353553385 : f32
    %132 = vector.broadcast %cst_45 : f32 to vector<8x8xf32>
    %133 = arith.mulf %131, %132 : vector<8x8xf32>
    %cst_46 = arith.constant dense<0xFF800000> : vector<8xf32>
    %134 = vector.multi_reduction <maximumf>, %133, %cst_46 [1] : vector<8x8xf32> to vector<8xf32>
    %135 = vector.shape_cast %134 : vector<8xf32> to vector<8x1xf32>
    %136 = vector.broadcast %135 : vector<8x1xf32> to vector<8x8xf32>
    %137 = arith.subf %133, %136 : vector<8x8xf32>
    %138 = math.exp %137 : vector<8x8xf32>
    %cst_47 = arith.constant dense<0.000000e+00> : vector<8xf32>
    %139 = vector.multi_reduction <add>, %138, %cst_47 [1] : vector<8x8xf32> to vector<8xf32>
    %140 = vector.shape_cast %139 : vector<8xf32> to vector<8x1xf32>
    %141 = vector.broadcast %140 : vector<8x1xf32> to vector<8x8xf32>
    %142 = arith.divf %138, %141 : vector<8x8xf32>
    %cst_48 = arith.constant dense<0.000000e+00> : vector<8x8xf32>
    %143 = tpu.matmul %142, %130, %cst_48 {dimension_numbers = #tpu.dot_dimension_numbers<[1], [0], [0], [1], [0, 0, 1, 1], [], []>} : vector<8x8xf32>, vector<8x8xf32>, vector<8x8xf32> -> vector<8x8xf32>
    %144 = vector.extract_strided_slice %28 {offsets = [8, 24], sizes = [8, 8], strides = [1, 1]} : vector<16x32xf32> to vector<8x8xf32>
    %145 = vector.extract_strided_slice %29 {offsets = [8, 24], sizes = [8, 8], strides = [1, 1]} : vector<16x32xf32> to vector<8x8xf32>
    %146 = vector.extract_strided_slice %30 {offsets = [8, 24], sizes = [8, 8], strides = [1, 1]} : vector<16x32xf32> to vector<8x8xf32>
    %cst_49 = arith.constant dense<0.000000e+00> : vector<8x8xf32>
    %147 = tpu.matmul %144, %145, %cst_49 {dimension_numbers = #tpu.dot_dimension_numbers<[1], [1], [0], [0], [0, 0, 1, 0], [], []>} : vector<8x8xf32>, vector<8x8xf32>, vector<8x8xf32> -> vector<8x8xf32>
    %cst_50 = arith.constant 0.353553385 : f32
    %148 = vector.broadcast %cst_50 : f32 to vector<8x8xf32>
    %149 = arith.mulf %147, %148 : vector<8x8xf32>
    %cst_51 = arith.constant dense<0xFF800000> : vector<8xf32>
    %150 = vector.multi_reduction <maximumf>, %149, %cst_51 [1] : vector<8x8xf32> to vector<8xf32>
    %151 = vector.shape_cast %150 : vector<8xf32> to vector<8x1xf32>
    %152 = vector.broadcast %151 : vector<8x1xf32> to vector<8x8xf32>
    %153 = arith.subf %149, %152 : vector<8x8xf32>
    %154 = math.exp %153 : vector<8x8xf32>
    %cst_52 = arith.constant dense<0.000000e+00> : vector<8xf32>
    %155 = vector.multi_reduction <add>, %154, %cst_52 [1] : vector<8x8xf32> to vector<8xf32>
    %156 = vector.shape_cast %155 : vector<8xf32> to vector<8x1xf32>
    %157 = vector.broadcast %156 : vector<8x1xf32> to vector<8x8xf32>
    %158 = arith.divf %154, %157 : vector<8x8xf32>
    %cst_53 = arith.constant dense<0.000000e+00> : vector<8x8xf32>
    %159 = tpu.matmul %158, %146, %cst_53 {dimension_numbers = #tpu.dot_dimension_numbers<[1], [0], [0], [1], [0, 0, 1, 1], [], []>} : vector<8x8xf32>, vector<8x8xf32>, vector<8x8xf32> -> vector<8x8xf32>
    %160 = tpu.concatenate %111, %127, %143, %159 in 1 : vector<8x8xf32>, vector<8x8xf32>, vector<8x8xf32>, vector<8x8xf32> -> vector<8x32xf32>
    %161 = tpu.concatenate %95, %160 in 0 : vector<8x32xf32>, vector<8x32xf32> -> vector<16x32xf32>
    %c0_54 = arith.constant 0 : index
    %c0_55 = arith.constant 0 : index
    %162 = vector.load %arg7[%c0_54, %c0_55] : memref<32x32xf32, #tpu.memory_space<vmem>>, vector<32x32xf32>
    %cst_56 = arith.constant dense<0.000000e+00> : vector<16x32xf32>
    %163 = tpu.matmul %161, %162, %cst_56 {dimension_numbers = #tpu.dot_dimension_numbers<[1], [0], [0], [1], [0, 0, 1, 1], [], []>} : vector<16x32xf32>, vector<32x32xf32>, vector<16x32xf32> -> vector<16x32xf32>
    %c0_57 = arith.constant 0 : index
    %c0_58 = arith.constant 0 : index
    %164 = vector.load %arg8[%c0_57, %c0_58] : memref<1x32xf32, #tpu.memory_space<vmem>>, vector<1x32xf32>
    %165 = vector.broadcast %164 : vector<1x32xf32> to vector<16x32xf32>
    %166 = arith.addf %163, %165 : vector<16x32xf32>
    %167 = arith.addf %166, %22 : vector<16x32xf32>
    %c0_59 = arith.constant 0 : index
    %c0_60 = arith.constant 0 : index
    %168 = vector.load %arg9[%c0_59, %c0_60] : memref<1x32xf32, #tpu.memory_space<vmem>>, vector<1x32xf32>
    %c0_61 = arith.constant 0 : index
    %c0_62 = arith.constant 0 : index
    %169 = vector.load %arg10[%c0_61, %c0_62] : memref<1x32xf32, #tpu.memory_space<vmem>>, vector<1x32xf32>
    %cst_63 = arith.constant dense<0.000000e+00> : vector<16xf32>
    %170 = vector.multi_reduction <add>, %167, %cst_63 [1] : vector<16x32xf32> to vector<16xf32>
    %171 = vector.shape_cast %170 : vector<16xf32> to vector<16x1xf32>
    %cst_64 = arith.constant 3.200000e+01 : f32
    %172 = vector.broadcast %cst_64 : f32 to vector<16x1xf32>
    %173 = arith.divf %171, %172 : vector<16x1xf32>
    %174 = vector.broadcast %173 : vector<16x1xf32> to vector<16x32xf32>
    %175 = arith.subf %167, %174 : vector<16x32xf32>
    %176 = arith.mulf %175, %175 : vector<16x32xf32>
    %cst_65 = arith.constant dense<0.000000e+00> : vector<16xf32>
    %177 = vector.multi_reduction <add>, %176, %cst_65 [1] : vector<16x32xf32> to vector<16xf32>
    %178 = vector.shape_cast %177 : vector<16xf32> to vector<16x1xf32>
    %cst_66 = arith.constant 3.200000e+01 : f32
    %179 = vector.broadcast %cst_66 : f32 to vector<16x1xf32>
    %180 = arith.divf %178, %179 : vector<16x1xf32>
    %cst_67 = arith.constant 9.99999996E-13 : f32
    %181 = vector.broadcast %cst_67 : f32 to vector<16x1xf32>
    %182 = arith.addf %180, %181 : vector<16x1xf32>
    %183 = math.rsqrt %182 : vector<16x1xf32>
    %184 = vector.broadcast %183 : vector<16x1xf32> to vector<16x32xf32>
    %185 = arith.mulf %175, %184 : vector<16x32xf32>
    %186 = vector.broadcast %168 : vector<1x32xf32> to vector<16x32xf32>
    %187 = arith.mulf %185, %186 : vector<16x32xf32>
    %188 = vector.broadcast %169 : vector<1x32xf32> to vector<16x32xf32>
    %189 = arith.addf %187, %188 : vector<16x32xf32>
    %c0_68 = arith.constant 0 : index
    %c0_69 = arith.constant 0 : index
    %190 = vector.load %arg11[%c0_68, %c0_69] : memref<32x128xf32, #tpu.memory_space<vmem>>, vector<32x128xf32>
    %cst_70 = arith.constant dense<0.000000e+00> : vector<16x128xf32>
    %191 = tpu.matmul %189, %190, %cst_70 {dimension_numbers = #tpu.dot_dimension_numbers<[1], [0], [0], [1], [0, 0, 1, 1], [], []>} : vector<16x32xf32>, vector<32x128xf32>, vector<16x128xf32> -> vector<16x128xf32>
    %c0_71 = arith.constant 0 : index
    %c0_72 = arith.constant 0 : index
    %192 = vector.load %arg12[%c0_71, %c0_72] : memref<1x128xf32, #tpu.memory_space<vmem>>, vector<1x128xf32>
    %193 = vector.broadcast %192 : vector<1x128xf32> to vector<16x128xf32>
    %194 = arith.addf %191, %193 : vector<16x128xf32>
    %195 = arith.mulf %194, %194 : vector<16x128xf32>
    %196 = arith.mulf %194, %195 : vector<16x128xf32>
    %cst_73 = arith.constant 4.471500e-02 : f32
    %197 = vector.broadcast %cst_73 : f32 to vector<16x128xf32>
    %198 = arith.mulf %197, %196 : vector<16x128xf32>
    %199 = arith.addf %194, %198 : vector<16x128xf32>
    %cst_74 = arith.constant 0.797884583 : f32
    %200 = vector.broadcast %cst_74 : f32 to vector<16x128xf32>
    %201 = arith.mulf %200, %199 : vector<16x128xf32>
    %202 = math.tanh %201 : vector<16x128xf32>
    %cst_75 = arith.constant 1.000000e+00 : f32
    %203 = vector.broadcast %cst_75 : f32 to vector<16x128xf32>
    %204 = arith.addf %203, %202 : vector<16x128xf32>
    %cst_76 = arith.constant 5.000000e-01 : f32
    %205 = vector.broadcast %cst_76 : f32 to vector<16x128xf32>
    %206 = arith.mulf %205, %204 : vector<16x128xf32>
    %207 = arith.mulf %194, %206 : vector<16x128xf32>
    %c0_77 = arith.constant 0 : index
    %c0_78 = arith.constant 0 : index
    %208 = vector.load %arg13[%c0_77, %c0_78] : memref<128x32xf32, #tpu.memory_space<vmem>>, vector<128x32xf32>
    %cst_79 = arith.constant dense<0.000000e+00> : vector<16x32xf32>
    %209 = tpu.matmul %207, %208, %cst_79 {dimension_numbers = #tpu.dot_dimension_numbers<[1], [0], [0], [1], [0, 0, 1, 1], [], []>} : vector<16x128xf32>, vector<128x32xf32>, vector<16x32xf32> -> vector<16x32xf32>
    %c0_80 = arith.constant 0 : index
    %c0_81 = arith.constant 0 : index
    %210 = vector.load %arg14[%c0_80, %c0_81] : memref<1x32xf32, #tpu.memory_space<vmem>>, vector<1x32xf32>
    %211 = vector.broadcast %210 : vector<1x32xf32> to vector<16x32xf32>
    %212 = arith.addf %209, %211 : vector<16x32xf32>
    %213 = arith.addf %212, %189 : vector<16x32xf32>
    %c0_82 = arith.constant 0 : index
    %c0_83 = arith.constant 0 : index
    %214 = vector.load %arg15[%c0_82, %c0_83] : memref<1x32xf32, #tpu.memory_space<vmem>>, vector<1x32xf32>
    %c0_84 = arith.constant 0 : index
    %c0_85 = arith.constant 0 : index
    %215 = vector.load %arg16[%c0_84, %c0_85] : memref<1x32xf32, #tpu.memory_space<vmem>>, vector<1x32xf32>
    %cst_86 = arith.constant dense<0.000000e+00> : vector<16xf32>
    %216 = vector.multi_reduction <add>, %213, %cst_86 [1] : vector<16x32xf32> to vector<16xf32>
    %217 = vector.shape_cast %216 : vector<16xf32> to vector<16x1xf32>
    %cst_87 = arith.constant 3.200000e+01 : f32
    %218 = vector.broadcast %cst_87 : f32 to vector<16x1xf32>
    %219 = arith.divf %217, %218 : vector<16x1xf32>
    %220 = vector.broadcast %219 : vector<16x1xf32> to vector<16x32xf32>
    %221 = arith.subf %213, %220 : vector<16x32xf32>
    %222 = arith.mulf %221, %221 : vector<16x32xf32>
    %cst_88 = arith.constant dense<0.000000e+00> : vector<16xf32>
    %223 = vector.multi_reduction <add>, %222, %cst_88 [1] : vector<16x32xf32> to vector<16xf32>
    %224 = vector.shape_cast %223 : vector<16xf32> to vector<16x1xf32>
    %cst_89 = arith.constant 3.200000e+01 : f32
    %225 = vector.broadcast %cst_89 : f32 to vector<16x1xf32>
    %226 = arith.divf %224, %225 : vector<16x1xf32>
    %cst_90 = arith.constant 9.99999996E-13 : f32
    %227 = vector.broadcast %cst_90 : f32 to vector<16x1xf32>
    %228 = arith.addf %226, %227 : vector<16x1xf32>
    %229 = math.rsqrt %228 : vector<16x1xf32>
    %230 = vector.broadcast %229 : vector<16x1xf32> to vector<16x32xf32>
    %231 = arith.mulf %221, %230 : vector<16x32xf32>
    %232 = vector.broadcast %214 : vector<1x32xf32> to vector<16x32xf32>
    %233 = arith.mulf %231, %232 : vector<16x32xf32>
    %234 = vector.broadcast %215 : vector<1x32xf32> to vector<16x32xf32>
    %235 = arith.addf %233, %234 : vector<16x32xf32>
    %c0_91 = arith.constant 0 : index
    %c0_92 = arith.constant 0 : index
    %236 = vector.load %arg17[%c0_91, %c0_92] : memref<32x96xf32, #tpu.memory_space<vmem>>, vector<32x96xf32>
    %cst_93 = arith.constant dense<0.000000e+00> : vector<16x96xf32>
    %237 = tpu.matmul %235, %236, %cst_93 {dimension_numbers = #tpu.dot_dimension_numbers<[1], [0], [0], [1], [0, 0, 1, 1], [], []>} : vector<16x32xf32>, vector<32x96xf32>, vector<16x96xf32> -> vector<16x96xf32>
    %c0_94 = arith.constant 0 : index
    %c0_95 = arith.constant 0 : index
    %238 = vector.load %arg18[%c0_94, %c0_95] : memref<1x96xf32, #tpu.memory_space<vmem>>, vector<1x96xf32>
    %239 = vector.broadcast %238 : vector<1x96xf32> to vector<16x96xf32>
    %240 = arith.addf %237, %239 : vector<16x96xf32>
    %241 = vector.extract_strided_slice %240 {offsets = [0, 0], sizes = [16, 32], strides = [1, 1]} : vector<16x96xf32> to vector<16x32xf32>
    %242 = vector.extract_strided_slice %240 {offsets = [0, 32], sizes = [16, 32], strides = [1, 1]} : vector<16x96xf32> to vector<16x32xf32>
    %243 = vector.extract_strided_slice %240 {offsets = [0, 64], sizes = [16, 32], strides = [1, 1]} : vector<16x96xf32> to vector<16x32xf32>
    %244 = vector.extract_strided_slice %241 {offsets = [0, 0], sizes = [8, 8], strides = [1, 1]} : vector<16x32xf32> to vector<8x8xf32>
    %245 = vector.extract_strided_slice %242 {offsets = [0, 0], sizes = [8, 8], strides = [1, 1]} : vector<16x32xf32> to vector<8x8xf32>
    %246 = vector.extract_strided_slice %243 {offsets = [0, 0], sizes = [8, 8], strides = [1, 1]} : vector<16x32xf32> to vector<8x8xf32>
    %cst_96 = arith.constant dense<0.000000e+00> : vector<8x8xf32>
    %247 = tpu.matmul %244, %245, %cst_96 {dimension_numbers = #tpu.dot_dimension_numbers<[1], [1], [0], [0], [0, 0, 1, 0], [], []>} : vector<8x8xf32>, vector<8x8xf32>, vector<8x8xf32> -> vector<8x8xf32>
    %cst_97 = arith.constant 0.353553385 : f32
    %248 = vector.broadcast %cst_97 : f32 to vector<8x8xf32>
    %249 = arith.mulf %247, %248 : vector<8x8xf32>
    %cst_98 = arith.constant dense<0xFF800000> : vector<8xf32>
    %250 = vector.multi_reduction <maximumf>, %249, %cst_98 [1] : vector<8x8xf32> to vector<8xf32>
    %251 = vector.shape_cast %250 : vector<8xf32> to vector<8x1xf32>
    %252 = vector.broadcast %251 : vector<8x1xf32> to vector<8x8xf32>
    %253 = arith.subf %249, %252 : vector<8x8xf32>
    %254 = math.exp %253 : vector<8x8xf32>
    %cst_99 = arith.constant dense<0.000000e+00> : vector<8xf32>
    %255 = vector.multi_reduction <add>, %254, %cst_99 [1] : vector<8x8xf32> to vector<8xf32>
    %256 = vector.shape_cast %255 : vector<8xf32> to vector<8x1xf32>
    %257 = vector.broadcast %256 : vector<8x1xf32> to vector<8x8xf32>
    %258 = arith.divf %254, %257 : vector<8x8xf32>
    %cst_100 = arith.constant dense<0.000000e+00> : vector<8x8xf32>
    %259 = tpu.matmul %258, %246, %cst_100 {dimension_numbers = #tpu.dot_dimension_numbers<[1], [0], [0], [1], [0, 0, 1, 1], [], []>} : vector<8x8xf32>, vector<8x8xf32>, vector<8x8xf32> -> vector<8x8xf32>
    %260 = vector.extract_strided_slice %241 {offsets = [0, 8], sizes = [8, 8], strides = [1, 1]} : vector<16x32xf32> to vector<8x8xf32>
    %261 = vector.extract_strided_slice %242 {offsets = [0, 8], sizes = [8, 8], strides = [1, 1]} : vector<16x32xf32> to vector<8x8xf32>
    %262 = vector.extract_strided_slice %243 {offsets = [0, 8], sizes = [8, 8], strides = [1, 1]} : vector<16x32xf32> to vector<8x8xf32>
    %cst_101 = arith.constant dense<0.000000e+00> : vector<8x8xf32>
    %263 = tpu.matmul %260, %261, %cst_101 {dimension_numbers = #tpu.dot_dimension_numbers<[1], [1], [0], [0], [0, 0, 1, 0], [], []>} : vector<8x8xf32>, vector<8x8xf32>, vector<8x8xf32> -> vector<8x8xf32>
    %cst_102 = arith.constant 0.353553385 : f32
    %264 = vector.broadcast %cst_102 : f32 to vector<8x8xf32>
    %265 = arith.mulf %263, %264 : vector<8x8xf32>
    %cst_103 = arith.constant dense<0xFF800000> : vector<8xf32>
    %266 = vector.multi_reduction <maximumf>, %265, %cst_103 [1] : vector<8x8xf32> to vector<8xf32>
    %267 = vector.shape_cast %266 : vector<8xf32> to vector<8x1xf32>
    %268 = vector.broadcast %267 : vector<8x1xf32> to vector<8x8xf32>
    %269 = arith.subf %265, %268 : vector<8x8xf32>
    %270 = math.exp %269 : vector<8x8xf32>
    %cst_104 = arith.constant dense<0.000000e+00> : vector<8xf32>
    %271 = vector.multi_reduction <add>, %270, %cst_104 [1] : vector<8x8xf32> to vector<8xf32>
    %272 = vector.shape_cast %271 : vector<8xf32> to vector<8x1xf32>
    %273 = vector.broadcast %272 : vector<8x1xf32> to vector<8x8xf32>
    %274 = arith.divf %270, %273 : vector<8x8xf32>
    %cst_105 = arith.constant dense<0.000000e+00> : vector<8x8xf32>
    %275 = tpu.matmul %274, %262, %cst_105 {dimension_numbers = #tpu.dot_dimension_numbers<[1], [0], [0], [1], [0, 0, 1, 1], [], []>} : vector<8x8xf32>, vector<8x8xf32>, vector<8x8xf32> -> vector<8x8xf32>
    %276 = vector.extract_strided_slice %241 {offsets = [0, 16], sizes = [8, 8], strides = [1, 1]} : vector<16x32xf32> to vector<8x8xf32>
    %277 = vector.extract_strided_slice %242 {offsets = [0, 16], sizes = [8, 8], strides = [1, 1]} : vector<16x32xf32> to vector<8x8xf32>
    %278 = vector.extract_strided_slice %243 {offsets = [0, 16], sizes = [8, 8], strides = [1, 1]} : vector<16x32xf32> to vector<8x8xf32>
    %cst_106 = arith.constant dense<0.000000e+00> : vector<8x8xf32>
    %279 = tpu.matmul %276, %277, %cst_106 {dimension_numbers = #tpu.dot_dimension_numbers<[1], [1], [0], [0], [0, 0, 1, 0], [], []>} : vector<8x8xf32>, vector<8x8xf32>, vector<8x8xf32> -> vector<8x8xf32>
    %cst_107 = arith.constant 0.353553385 : f32
    %280 = vector.broadcast %cst_107 : f32 to vector<8x8xf32>
    %281 = arith.mulf %279, %280 : vector<8x8xf32>
    %cst_108 = arith.constant dense<0xFF800000> : vector<8xf32>
    %282 = vector.multi_reduction <maximumf>, %281, %cst_108 [1] : vector<8x8xf32> to vector<8xf32>
    %283 = vector.shape_cast %282 : vector<8xf32> to vector<8x1xf32>
    %284 = vector.broadcast %283 : vector<8x1xf32> to vector<8x8xf32>
    %285 = arith.subf %281, %284 : vector<8x8xf32>
    %286 = math.exp %285 : vector<8x8xf32>
    %cst_109 = arith.constant dense<0.000000e+00> : vector<8xf32>
    %287 = vector.multi_reduction <add>, %286, %cst_109 [1] : vector<8x8xf32> to vector<8xf32>
    %288 = vector.shape_cast %287 : vector<8xf32> to vector<8x1xf32>
    %289 = vector.broadcast %288 : vector<8x1xf32> to vector<8x8xf32>
    %290 = arith.divf %286, %289 : vector<8x8xf32>
    %cst_110 = arith.constant dense<0.000000e+00> : vector<8x8xf32>
    %291 = tpu.matmul %290, %278, %cst_110 {dimension_numbers = #tpu.dot_dimension_numbers<[1], [0], [0], [1], [0, 0, 1, 1], [], []>} : vector<8x8xf32>, vector<8x8xf32>, vector<8x8xf32> -> vector<8x8xf32>
    %292 = vector.extract_strided_slice %241 {offsets = [0, 24], sizes = [8, 8], strides = [1, 1]} : vector<16x32xf32> to vector<8x8xf32>
    %293 = vector.extract_strided_slice %242 {offsets = [0, 24], sizes = [8, 8], strides = [1, 1]} : vector<16x32xf32> to vector<8x8xf32>
    %294 = vector.extract_strided_slice %243 {offsets = [0, 24], sizes = [8, 8], strides = [1, 1]} : vector<16x32xf32> to vector<8x8xf32>
    %cst_111 = arith.constant dense<0.000000e+00> : vector<8x8xf32>
    %295 = tpu.matmul %292, %293, %cst_111 {dimension_numbers = #tpu.dot_dimension_numbers<[1], [1], [0], [0], [0, 0, 1, 0], [], []>} : vector<8x8xf32>, vector<8x8xf32>, vector<8x8xf32> -> vector<8x8xf32>
    %cst_112 = arith.constant 0.353553385 : f32
    %296 = vector.broadcast %cst_112 : f32 to vector<8x8xf32>
    %297 = arith.mulf %295, %296 : vector<8x8xf32>
    %cst_113 = arith.constant dense<0xFF800000> : vector<8xf32>
    %298 = vector.multi_reduction <maximumf>, %297, %cst_113 [1] : vector<8x8xf32> to vector<8xf32>
    %299 = vector.shape_cast %298 : vector<8xf32> to vector<8x1xf32>
    %300 = vector.broadcast %299 : vector<8x1xf32> to vector<8x8xf32>
    %301 = arith.subf %297, %300 : vector<8x8xf32>
    %302 = math.exp %301 : vector<8x8xf32>
    %cst_114 = arith.constant dense<0.000000e+00> : vector<8xf32>
    %303 = vector.multi_reduction <add>, %302, %cst_114 [1] : vector<8x8xf32> to vector<8xf32>
    %304 = vector.shape_cast %303 : vector<8xf32> to vector<8x1xf32>
    %305 = vector.broadcast %304 : vector<8x1xf32> to vector<8x8xf32>
    %306 = arith.divf %302, %305 : vector<8x8xf32>
    %cst_115 = arith.constant dense<0.000000e+00> : vector<8x8xf32>
    %307 = tpu.matmul %306, %294, %cst_115 {dimension_numbers = #tpu.dot_dimension_numbers<[1], [0], [0], [1], [0, 0, 1, 1], [], []>} : vector<8x8xf32>, vector<8x8xf32>, vector<8x8xf32> -> vector<8x8xf32>
    %308 = tpu.concatenate %259, %275, %291, %307 in 1 : vector<8x8xf32>, vector<8x8xf32>, vector<8x8xf32>, vector<8x8xf32> -> vector<8x32xf32>
    %309 = vector.extract_strided_slice %241 {offsets = [8, 0], sizes = [8, 8], strides = [1, 1]} : vector<16x32xf32> to vector<8x8xf32>
    %310 = vector.extract_strided_slice %242 {offsets = [8, 0], sizes = [8, 8], strides = [1, 1]} : vector<16x32xf32> to vector<8x8xf32>
    %311 = vector.extract_strided_slice %243 {offsets = [8, 0], sizes = [8, 8], strides = [1, 1]} : vector<16x32xf32> to vector<8x8xf32>
    %cst_116 = arith.constant dense<0.000000e+00> : vector<8x8xf32>
    %312 = tpu.matmul %309, %310, %cst_116 {dimension_numbers = #tpu.dot_dimension_numbers<[1], [1], [0], [0], [0, 0, 1, 0], [], []>} : vector<8x8xf32>, vector<8x8xf32>, vector<8x8xf32> -> vector<8x8xf32>
    %cst_117 = arith.constant 0.353553385 : f32
    %313 = vector.broadcast %cst_117 : f32 to vector<8x8xf32>
    %314 = arith.mulf %312, %313 : vector<8x8xf32>
    %cst_118 = arith.constant dense<0xFF800000> : vector<8xf32>
    %315 = vector.multi_reduction <maximumf>, %314, %cst_118 [1] : vector<8x8xf32> to vector<8xf32>
    %316 = vector.shape_cast %315 : vector<8xf32> to vector<8x1xf32>
    %317 = vector.broadcast %316 : vector<8x1xf32> to vector<8x8xf32>
    %318 = arith.subf %314, %317 : vector<8x8xf32>
    %319 = math.exp %318 : vector<8x8xf32>
    %cst_119 = arith.constant dense<0.000000e+00> : vector<8xf32>
    %320 = vector.multi_reduction <add>, %319, %cst_119 [1] : vector<8x8xf32> to vector<8xf32>
    %321 = vector.shape_cast %320 : vector<8xf32> to vector<8x1xf32>
    %322 = vector.broadcast %321 : vector<8x1xf32> to vector<8x8xf32>
    %323 = arith.divf %319, %322 : vector<8x8xf32>
    %cst_120 = arith.constant dense<0.000000e+00> : vector<8x8xf32>
    %324 = tpu.matmul %323, %311, %cst_120 {dimension_numbers = #tpu.dot_dimension_numbers<[1], [0], [0], [1], [0, 0, 1, 1], [], []>} : vector<8x8xf32>, vector<8x8xf32>, vector<8x8xf32> -> vector<8x8xf32>
    %325 = vector.extract_strided_slice %241 {offsets = [8, 8], sizes = [8, 8], strides = [1, 1]} : vector<16x32xf32> to vector<8x8xf32>
    %326 = vector.extract_strided_slice %242 {offsets = [8, 8], sizes = [8, 8], strides = [1, 1]} : vector<16x32xf32> to vector<8x8xf32>
    %327 = vector.extract_strided_slice %243 {offsets = [8, 8], sizes = [8, 8], strides = [1, 1]} : vector<16x32xf32> to vector<8x8xf32>
    %cst_121 = arith.constant dense<0.000000e+00> : vector<8x8xf32>
    %328 = tpu.matmul %325, %326, %cst_121 {dimension_numbers = #tpu.dot_dimension_numbers<[1], [1], [0], [0], [0, 0, 1, 0], [], []>} : vector<8x8xf32>, vector<8x8xf32>, vector<8x8xf32> -> vector<8x8xf32>
    %cst_122 = arith.constant 0.353553385 : f32
    %329 = vector.broadcast %cst_122 : f32 to vector<8x8xf32>
    %330 = arith.mulf %328, %329 : vector<8x8xf32>
    %cst_123 = arith.constant dense<0xFF800000> : vector<8xf32>
    %331 = vector.multi_reduction <maximumf>, %330, %cst_123 [1] : vector<8x8xf32> to vector<8xf32>
    %332 = vector.shape_cast %331 : vector<8xf32> to vector<8x1xf32>
    %333 = vector.broadcast %332 : vector<8x1xf32> to vector<8x8xf32>
    %334 = arith.subf %330, %333 : vector<8x8xf32>
    %335 = math.exp %334 : vector<8x8xf32>
    %cst_124 = arith.constant dense<0.000000e+00> : vector<8xf32>
    %336 = vector.multi_reduction <add>, %335, %cst_124 [1] : vector<8x8xf32> to vector<8xf32>
    %337 = vector.shape_cast %336 : vector<8xf32> to vector<8x1xf32>
    %338 = vector.broadcast %337 : vector<8x1xf32> to vector<8x8xf32>
    %339 = arith.divf %335, %338 : vector<8x8xf32>
    %cst_125 = arith.constant dense<0.000000e+00> : vector<8x8xf32>
    %340 = tpu.matmul %339, %327, %cst_125 {dimension_numbers = #tpu.dot_dimension_numbers<[1], [0], [0], [1], [0, 0, 1, 1], [], []>} : vector<8x8xf32>, vector<8x8xf32>, vector<8x8xf32> -> vector<8x8xf32>
    %341 = vector.extract_strided_slice %241 {offsets = [8, 16], sizes = [8, 8], strides = [1, 1]} : vector<16x32xf32> to vector<8x8xf32>
    %342 = vector.extract_strided_slice %242 {offsets = [8, 16], sizes = [8, 8], strides = [1, 1]} : vector<16x32xf32> to vector<8x8xf32>
    %343 = vector.extract_strided_slice %243 {offsets = [8, 16], sizes = [8, 8], strides = [1, 1]} : vector<16x32xf32> to vector<8x8xf32>
    %cst_126 = arith.constant dense<0.000000e+00> : vector<8x8xf32>
    %344 = tpu.matmul %341, %342, %cst_126 {dimension_numbers = #tpu.dot_dimension_numbers<[1], [1], [0], [0], [0, 0, 1, 0], [], []>} : vector<8x8xf32>, vector<8x8xf32>, vector<8x8xf32> -> vector<8x8xf32>
    %cst_127 = arith.constant 0.353553385 : f32
    %345 = vector.broadcast %cst_127 : f32 to vector<8x8xf32>
    %346 = arith.mulf %344, %345 : vector<8x8xf32>
    %cst_128 = arith.constant dense<0xFF800000> : vector<8xf32>
    %347 = vector.multi_reduction <maximumf>, %346, %cst_128 [1] : vector<8x8xf32> to vector<8xf32>
    %348 = vector.shape_cast %347 : vector<8xf32> to vector<8x1xf32>
    %349 = vector.broadcast %348 : vector<8x1xf32> to vector<8x8xf32>
    %350 = arith.subf %346, %349 : vector<8x8xf32>
    %351 = math.exp %350 : vector<8x8xf32>
    %cst_129 = arith.constant dense<0.000000e+00> : vector<8xf32>
    %352 = vector.multi_reduction <add>, %351, %cst_129 [1] : vector<8x8xf32> to vector<8xf32>
    %353 = vector.shape_cast %352 : vector<8xf32> to vector<8x1xf32>
    %354 = vector.broadcast %353 : vector<8x1xf32> to vector<8x8xf32>
    %355 = arith.divf %351, %354 : vector<8x8xf32>
    %cst_130 = arith.constant dense<0.000000e+00> : vector<8x8xf32>
    %356 = tpu.matmul %355, %343, %cst_130 {dimension_numbers = #tpu.dot_dimension_numbers<[1], [0], [0], [1], [0, 0, 1, 1], [], []>} : vector<8x8xf32>, vector<8x8xf32>, vector<8x8xf32> -> vector<8x8xf32>
    %357 = vector.extract_strided_slice %241 {offsets = [8, 24], sizes = [8, 8], strides = [1, 1]} : vector<16x32xf32> to vector<8x8xf32>
    %358 = vector.extract_strided_slice %242 {offsets = [8, 24], sizes = [8, 8], strides = [1, 1]} : vector<16x32xf32> to vector<8x8xf32>
    %359 = vector.extract_strided_slice %243 {offsets = [8, 24], sizes = [8, 8], strides = [1, 1]} : vector<16x32xf32> to vector<8x8xf32>
    %cst_131 = arith.constant dense<0.000000e+00> : vector<8x8xf32>
    %360 = tpu.matmul %357, %358, %cst_131 {dimension_numbers = #tpu.dot_dimension_numbers<[1], [1], [0], [0], [0, 0, 1, 0], [], []>} : vector<8x8xf32>, vector<8x8xf32>, vector<8x8xf32> -> vector<8x8xf32>
    %cst_132 = arith.constant 0.353553385 : f32
    %361 = vector.broadcast %cst_132 : f32 to vector<8x8xf32>
    %362 = arith.mulf %360, %361 : vector<8x8xf32>
    %cst_133 = arith.constant dense<0xFF800000> : vector<8xf32>
    %363 = vector.multi_reduction <maximumf>, %362, %cst_133 [1] : vector<8x8xf32> to vector<8xf32>
    %364 = vector.shape_cast %363 : vector<8xf32> to vector<8x1xf32>
    %365 = vector.broadcast %364 : vector<8x1xf32> to vector<8x8xf32>
    %366 = arith.subf %362, %365 : vector<8x8xf32>
    %367 = math.exp %366 : vector<8x8xf32>
    %cst_134 = arith.constant dense<0.000000e+00> : vector<8xf32>
    %368 = vector.multi_reduction <add>, %367, %cst_134 [1] : vector<8x8xf32> to vector<8xf32>
    %369 = vector.shape_cast %368 : vector<8xf32> to vector<8x1xf32>
    %370 = vector.broadcast %369 : vector<8x1xf32> to vector<8x8xf32>
    %371 = arith.divf %367, %370 : vector<8x8xf32>
    %cst_135 = arith.constant dense<0.000000e+00> : vector<8x8xf32>
    %372 = tpu.matmul %371, %359, %cst_135 {dimension_numbers = #tpu.dot_dimension_numbers<[1], [0], [0], [1], [0, 0, 1, 1], [], []>} : vector<8x8xf32>, vector<8x8xf32>, vector<8x8xf32> -> vector<8x8xf32>
    %373 = tpu.concatenate %324, %340, %356, %372 in 1 : vector<8x8xf32>, vector<8x8xf32>, vector<8x8xf32>, vector<8x8xf32> -> vector<8x32xf32>
    %374 = tpu.concatenate %308, %373 in 0 : vector<8x32xf32>, vector<8x32xf32> -> vector<16x32xf32>
    %c0_136 = arith.constant 0 : index
    %c0_137 = arith.constant 0 : index
    %375 = vector.load %arg19[%c0_136, %c0_137] : memref<32x32xf32, #tpu.memory_space<vmem>>, vector<32x32xf32>
    %cst_138 = arith.constant dense<0.000000e+00> : vector<16x32xf32>
    %376 = tpu.matmul %374, %375, %cst_138 {dimension_numbers = #tpu.dot_dimension_numbers<[1], [0], [0], [1], [0, 0, 1, 1], [], []>} : vector<16x32xf32>, vector<32x32xf32>, vector<16x32xf32> -> vector<16x32xf32>
    %c0_139 = arith.constant 0 : index
    %c0_140 = arith.constant 0 : index
    %377 = vector.load %arg20[%c0_139, %c0_140] : memref<1x32xf32, #tpu.memory_space<vmem>>, vector<1x32xf32>
    %378 = vector.broadcast %377 : vector<1x32xf32> to vector<16x32xf32>
    %379 = arith.addf %376, %378 : vector<16x32xf32>
    %380 = arith.addf %379, %235 : vector<16x32xf32>
    %c0_141 = arith.constant 0 : index
    %c0_142 = arith.constant 0 : index
    %381 = vector.load %arg21[%c0_141, %c0_142] : memref<1x32xf32, #tpu.memory_space<vmem>>, vector<1x32xf32>
    %c0_143 = arith.constant 0 : index
    %c0_144 = arith.constant 0 : index
    %382 = vector.load %arg22[%c0_143, %c0_144] : memref<1x32xf32, #tpu.memory_space<vmem>>, vector<1x32xf32>
    %cst_145 = arith.constant dense<0.000000e+00> : vector<16xf32>
    %383 = vector.multi_reduction <add>, %380, %cst_145 [1] : vector<16x32xf32> to vector<16xf32>
    %384 = vector.shape_cast %383 : vector<16xf32> to vector<16x1xf32>
    %cst_146 = arith.constant 3.200000e+01 : f32
    %385 = vector.broadcast %cst_146 : f32 to vector<16x1xf32>
    %386 = arith.divf %384, %385 : vector<16x1xf32>
    %387 = vector.broadcast %386 : vector<16x1xf32> to vector<16x32xf32>
    %388 = arith.subf %380, %387 : vector<16x32xf32>
    %389 = arith.mulf %388, %388 : vector<16x32xf32>
    %cst_147 = arith.constant dense<0.000000e+00> : vector<16xf32>
    %390 = vector.multi_reduction <add>, %389, %cst_147 [1] : vector<16x32xf32> to vector<16xf32>
    %391 = vector.shape_cast %390 : vector<16xf32> to vector<16x1xf32>
    %cst_148 = arith.constant 3.200000e+01 : f32
    %392 = vector.broadcast %cst_148 : f32 to vector<16x1xf32>
    %393 = arith.divf %391, %392 : vector<16x1xf32>
    %cst_149 = arith.constant 9.99999996E-13 : f32
    %394 = vector.broadcast %cst_149 : f32 to vector<16x1xf32>
    %395 = arith.addf %393, %394 : vector<16x1xf32>
    %396 = math.rsqrt %395 : vector<16x1xf32>
    %397 = vector.broadcast %396 : vector<16x1xf32> to vector<16x32xf32>
    %398 = arith.mulf %388, %397 : vector<16x32xf32>
    %399 = vector.broadcast %381 : vector<1x32xf32> to vector<16x32xf32>
    %400 = arith.mulf %398, %399 : vector<16x32xf32>
    %401 = vector.broadcast %382 : vector<1x32xf32> to vector<16x32xf32>
    %402 = arith.addf %400, %401 : vector<16x32xf32>
    %c0_150 = arith.constant 0 : index
    %c0_151 = arith.constant 0 : index
    %403 = vector.load %arg23[%c0_150, %c0_151] : memref<32x128xf32, #tpu.memory_space<vmem>>, vector<32x128xf32>
    %cst_152 = arith.constant dense<0.000000e+00> : vector<16x128xf32>
    %404 = tpu.matmul %402, %403, %cst_152 {dimension_numbers = #tpu.dot_dimension_numbers<[1], [0], [0], [1], [0, 0, 1, 1], [], []>} : vector<16x32xf32>, vector<32x128xf32>, vector<16x128xf32> -> vector<16x128xf32>
    %c0_153 = arith.constant 0 : index
    %c0_154 = arith.constant 0 : index
    %405 = vector.load %arg24[%c0_153, %c0_154] : memref<1x128xf32, #tpu.memory_space<vmem>>, vector<1x128xf32>
    %406 = vector.broadcast %405 : vector<1x128xf32> to vector<16x128xf32>
    %407 = arith.addf %404, %406 : vector<16x128xf32>
    %408 = arith.mulf %407, %407 : vector<16x128xf32>
    %409 = arith.mulf %407, %408 : vector<16x128xf32>
    %cst_155 = arith.constant 4.471500e-02 : f32
    %410 = vector.broadcast %cst_155 : f32 to vector<16x128xf32>
    %411 = arith.mulf %410, %409 : vector<16x128xf32>
    %412 = arith.addf %407, %411 : vector<16x128xf32>
    %cst_156 = arith.constant 0.797884583 : f32
    %413 = vector.broadcast %cst_156 : f32 to vector<16x128xf32>
    %414 = arith.mulf %413, %412 : vector<16x128xf32>
    %415 = math.tanh %414 : vector<16x128xf32>
    %cst_157 = arith.constant 1.000000e+00 : f32
    %416 = vector.broadcast %cst_157 : f32 to vector<16x128xf32>
    %417 = arith.addf %416, %415 : vector<16x128xf32>
    %cst_158 = arith.constant 5.000000e-01 : f32
    %418 = vector.broadcast %cst_158 : f32 to vector<16x128xf32>
    %419 = arith.mulf %418, %417 : vector<16x128xf32>
    %420 = arith.mulf %407, %419 : vector<16x128xf32>
    %c0_159 = arith.constant 0 : index
    %c0_160 = arith.constant 0 : index
    %421 = vector.load %arg25[%c0_159, %c0_160] : memref<128x32xf32, #tpu.memory_space<vmem>>, vector<128x32xf32>
    %cst_161 = arith.constant dense<0.000000e+00> : vector<16x32xf32>
    %422 = tpu.matmul %420, %421, %cst_161 {dimension_numbers = #tpu.dot_dimension_numbers<[1], [0], [0], [1], [0, 0, 1, 1], [], []>} : vector<16x128xf32>, vector<128x32xf32>, vector<16x32xf32> -> vector<16x32xf32>
    %c0_162 = arith.constant 0 : index
    %c0_163 = arith.constant 0 : index
    %423 = vector.load %arg26[%c0_162, %c0_163] : memref<1x32xf32, #tpu.memory_space<vmem>>, vector<1x32xf32>
    %424 = vector.broadcast %423 : vector<1x32xf32> to vector<16x32xf32>
    %425 = arith.addf %422, %424 : vector<16x32xf32>
    %426 = arith.addf %425, %402 : vector<16x32xf32>
    %c0_164 = arith.constant 0 : index
    %c0_165 = arith.constant 0 : index
    %427 = vector.load %arg27[%c0_164, %c0_165] : memref<1x32xf32, #tpu.memory_space<vmem>>, vector<1x32xf32>
    %c0_166 = arith.constant 0 : index
    %c0_167 = arith.constant 0 : index
    %428 = vector.load %arg28[%c0_166, %c0_167] : memref<1x32xf32, #tpu.memory_space<vmem>>, vector<1x32xf32>
    %cst_168 = arith.constant dense<0.000000e+00> : vector<16xf32>
    %429 = vector.multi_reduction <add>, %426, %cst_168 [1] : vector<16x32xf32> to vector<16xf32>
    %430 = vector.shape_cast %429 : vector<16xf32> to vector<16x1xf32>
    %cst_169 = arith.constant 3.200000e+01 : f32
    %431 = vector.broadcast %cst_169 : f32 to vector<16x1xf32>
    %432 = arith.divf %430, %431 : vector<16x1xf32>
    %433 = vector.broadcast %432 : vector<16x1xf32> to vector<16x32xf32>
    %434 = arith.subf %426, %433 : vector<16x32xf32>
    %435 = arith.mulf %434, %434 : vector<16x32xf32>
    %cst_170 = arith.constant dense<0.000000e+00> : vector<16xf32>
    %436 = vector.multi_reduction <add>, %435, %cst_170 [1] : vector<16x32xf32> to vector<16xf32>
    %437 = vector.shape_cast %436 : vector<16xf32> to vector<16x1xf32>
    %cst_171 = arith.constant 3.200000e+01 : f32
    %438 = vector.broadcast %cst_171 : f32 to vector<16x1xf32>
    %439 = arith.divf %437, %438 : vector<16x1xf32>
    %cst_172 = arith.constant 9.99999996E-13 : f32
    %440 = vector.broadcast %cst_172 : f32 to vector<16x1xf32>
    %441 = arith.addf %439, %440 : vector<16x1xf32>
    %442 = math.rsqrt %441 : vector<16x1xf32>
    %443 = vector.broadcast %442 : vector<16x1xf32> to vector<16x32xf32>
    %444 = arith.mulf %434, %443 : vector<16x32xf32>
    %445 = vector.broadcast %427 : vector<1x32xf32> to vector<16x32xf32>
    %446 = arith.mulf %444, %445 : vector<16x32xf32>
    %447 = vector.broadcast %428 : vector<1x32xf32> to vector<16x32xf32>
    %448 = arith.addf %446, %447 : vector<16x32xf32>
    %449 = vector.extract_strided_slice %448 {offsets = [0, 0], sizes = [1, 32], strides = [1, 1]} : vector<16x32xf32> to vector<1x32xf32>
    %450 = vector.extract_strided_slice %448 {offsets = [8, 0], sizes = [1, 32], strides = [1, 1]} : vector<16x32xf32> to vector<1x32xf32>
    %451 = tpu.concatenate %449, %450 in 0 : vector<1x32xf32>, vector<1x32xf32> -> vector<2x32xf32>
    %c0_173 = arith.constant 0 : index
    %c0_174 = arith.constant 0 : index
    %452 = vector.load %arg29[%c0_173, %c0_174] : memref<32x32xf32, #tpu.memory_space<vmem>>, vector<32x32xf32>
    %cst_175 = arith.constant dense<0.000000e+00> : vector<2x32xf32>
    %453 = tpu.matmul %451, %452, %cst_175 {dimension_numbers = #tpu.dot_dimension_numbers<[1], [0], [0], [1], [0, 0, 1, 1], [], []>} : vector<2x32xf32>, vector<32x32xf32>, vector<2x32xf32> -> vector<2x32xf32>
    %c0_176 = arith.constant 0 : index
    %c0_177 = arith.constant 0 : index
    %454 = vector.load %arg30[%c0_176, %c0_177] : memref<1x32xf32, #tpu.memory_space<vmem>>, vector<1x32xf32>
    %455 = vector.broadcast %454 : vector<1x32xf32> to vector<2x32xf32>
    %456 = arith.addf %453, %455 : vector<2x32xf32>
    %457 = math.tanh %456 : vector<2x32xf32>
    %c0_178 = arith.constant 0 : index
    %c0_179 = arith.constant 0 : index
    %458 = vector.load %arg31[%c0_178, %c0_179] : memref<32x2048xf32, #tpu.memory_space<vmem>>, vector<32x2048xf32>
    %cst_180 = arith.constant dense<0.000000e+00> : vector<2x2048xf32>
    %459 = tpu.matmul %457, %458, %cst_180 {dimension_numbers = #tpu.dot_dimension_numbers<[1], [0], [0], [1], [0, 0, 1, 1], [], []>} : vector<2x32xf32>, vector<32x2048xf32>, vector<2x2048xf32> -> vector<2x2048xf32>
    %c0_181 = arith.constant 0 : index
    %c0_182 = arith.constant 0 : index
    %460 = vector.load %arg32[%c0_181, %c0_182] : memref<1x2048xf32, #tpu.memory_space<vmem>>, vector<1x2048xf32>
    %461 = vector.broadcast %460 : vector<1x2048xf32> to vector<2x2048xf32>
    %462 = arith.addf %459, %461 : vector<2x2048xf32>
    %c0_183 = arith.constant 0 : index
    %c0_184 = arith.constant 0 : index
    %463 = vector.load %arg2[%c0_183, %c0_184] : memref<2x2048xf32, #tpu.memory_space<vmem>>, vector<2x2048xf32>
    %464 = arith.mulf %462, %463 : vector<2x2048xf32>
    %c0_185 = arith.constant 0 : index
    %c0_186 = arith.constant 0 : index
    %465 = vector.load %arg33[%c0_185, %c0_186] : memref<2048x2xf32, #tpu.memory_space<vmem>>, vector<2048x2xf32>
    %cst_187 = arith.constant dense<0.000000e+00> : vector<2x2xf32>
    %466 = tpu.matmul %464, %465, %cst_187 {dimension_numbers = #tpu.dot_dimension_numbers<[1], [0], [0], [1], [0, 0, 1, 1], [], []>} : vector<2x2048xf32>, vector<2048x2xf32>, vector<2x2xf32> -> vector<2x2xf32>
    %c0_188 = arith.constant 0 : index
    %c0_189 = arith.constant 0 : index
    %467 = vector.load %arg34[%c0_188, %c0_189] : memref<1x2xf32, #tpu.memory_space<vmem>>, vector<1x2xf32>
    %468 = vector.broadcast %467 : vector<1x2xf32> to vector<2x2xf32>
    %469 = arith.addf %466, %468 : vector<2x2xf32>
    %470 = arith.negf %469 : vector<2x2xf32>
    %471 = math.exp %470 : vector<2x2xf32>
    %cst_190 = arith.constant 1.000000e+00 : f32
    %472 = vector.broadcast %cst_190 : f32 to vector<2x2xf32>
    %473 = arith.addf %472, %471 : vector<2x2xf32>
    %474 = arith.divf %472, %473 : vector<2x2xf32>
    %cst_191 = arith.constant dense<0xFF800000> : vector<2xf32>
    %475 = vector.multi_reduction <maximumf>, %474, %cst_191 [1] : vector<2x2xf32> to vector<2xf32>
    %476 = vector.shape_cast %475 : vector<2xf32> to vector<2x1xf32>
    %477 = vector.broadcast %476 : vector<2x1xf32> to vector<2x2xf32>
    %478 = arith.subf %474, %477 : vector<2x2xf32>
    %479 = math.exp %478 : vector<2x2xf32>
    %cst_192 = arith.constant dense<0.000000e+00> : vector<2xf32>
    %480 = vector.multi_reduction <add>, %479, %cst_192 [1] : vector<2x2xf32> to vector<2xf32>
    %481 = vector.shape_cast %480 : vector<2xf32> to vector<2x1xf32>
    %482 = math.log %481 : vector<2x1xf32>
    %483 = arith.addf %476, %482 : vector<2x1xf32>
    %484 = vector.broadcast %483 : vector<2x1xf32> to vector<2x2xf32>
    %485 = arith.subf %474, %484 : vector<2x2xf32>
    %486 = tpu.iota {dimensions = array<i32: 1>} : vector<2x2xi32>
    %c0_193 = arith.constant 0 : index
    %c0_194 = arith.constant 0 : index
    %487 = vector.load %arg1[%c0_193, %c0_194] : memref<2x1xi32, #tpu.memory_space<vmem>>, vector<2x1xi32>
    %488 = vector.broadcast %487 : vector<2x1xi32> to vector<2x2xi32>
    %489 = arith.cmpi eq, %486, %488 : vector<2x2xi32>
    %490 = arith.extui %489 : vector<2x2xi1> to vector<2x2xi32>
    %491 = arith.sitofp %490 : vector<2x2xi32> to vector<2x2xf32>
    %492 = arith.mulf %491, %485 : vector<2x2xf32>
    %493 = vector.shape_cast %492 : vector<2x2xf32> to vector<1x2x2xf32>
    %cst_195 = arith.constant dense<0.000000e+00> : vector<1xf32>
    %494 = vector.multi_reduction <add>, %493, %cst_195 [1, 2] : vector<1x2x2xf32> to vector<1xf32>
    %495 = vector.shape_cast %494 : vector<1xf32> to vector<1x1x1xf32>
    %496 = vector.extract %495[0, 0, 0] : f32 from vector<1x1x1xf32>
    %cst_196 = arith.constant 0.000000e+00 : f32
    %497 = arith.subf %cst_196, %496 : f32
    %cst_197 = arith.constant 2.000000e+00 : f32
    %498 = arith.divf %497, %cst_197 : f32
    %c0_198 = arith.constant 0 : index
    %c0_199 = arith.constant 0 : index
    %499 = vector.load %arg35[%c0_198, %c0_199] : memref<2x2xf32, #tpu.memory_space<vmem>>, vector<2x2xf32>
    tpu.vector_store %arg35[%c0_198, %c0_199], %474 {strides = array<i32>} : memref<2x2xf32, #tpu.memory_space<vmem>>, vector<2x2xf32>,
    %500 = vector.broadcast %498 : f32 to vector<1x1xf32>
    %c0_200 = arith.constant 0 : index
    %c0_201 = arith.constant 0 : index
    %501 = vector.load %arg36[%c0_200, %c0_201] : memref<1x1xf32, #tpu.memory_space<vmem>>, vector<1x1xf32>
    tpu.vector_store %arg36[%c0_200, %c0_201], %500 {strides = array<i32>} : memref<1x1xf32, #tpu.memory_space<vmem>>, vector<1x1xf32>,
    return
  }
}

</mosaic_0001>

<llo_original>
// kernel: matching_model_forward.1
$region0: #{matching_model_forward.1}
  #allocation0 [shape = 'u32[]', space=smem, size = 0x4, offset = 0x4, fixed_abs, tag = 'smem constant byte address 0x4 - core index']
  #allocation1 [shape = 'u32[144,128]{1,0:T(1,128)}', space=vmem, size = 0x12000, scoped, tag = 'internal scratch']
  %s0 = inlined_call_operand.smem [shape: u32[37], index: -1, kind: input, shape index: {}]
  %s1 = sld [smem:[%s0]]
  %s2 = scalar_lea.smem %s0, 1
  %s3 = sld [smem:[%s2]]
  %s4 = scalar_lea.smem %s0, 2
  %s5 = sld [smem:[%s4]]
  %s6 = scalar_lea.smem %s0, 3
  %s7 = sld [smem:[%s6]]
  %s8 = scalar_lea.smem %s0, 4
  %s9 = sld [smem:[%s8]]
  %s10 = scalar_lea.smem %s0, 5
  %s11 = sld [smem:[%s10]]
  %s12 = scalar_lea.smem %s0, 6
  %s13 = sld [smem:[%s12]]
  %s14 = scalar_lea.smem %s0, 7
  %s15 = sld [smem:[%s14]]
  %s16 = scalar_lea.smem %s0, 8
  %s17 = sld [smem:[%s16]]
  %s18 = scalar_lea.smem %s0, 9
  %s19 = sld [smem:[%s18]]
  %s20 = scalar_lea.smem %s0, 10
  %s21 = sld [smem:[%s20]]
  %s22 = scalar_lea.smem %s0, 11
  %s23 = sld [smem:[%s22]]
  %s24 = scalar_lea.smem %s0, 12
  %s25 = sld [smem:[%s24]]
  %s26 = scalar_lea.smem %s0, 13
  %s27 = sld [smem:[%s26]]
  %s28 = scalar_lea.smem %s0, 14
  %s29 = sld [smem:[%s28]]
  %s30 = scalar_lea.smem %s0, 15
  %s31 = sld [smem:[%s30]]
  %s32 = scalar_lea.smem %s0, 16
  %s33 = sld [smem:[%s32]]
  %s34 = scalar_lea.smem %s0, 17
  %s35 = sld [smem:[%s34]]
  %s36 = scalar_lea.smem %s0, 18
  %s37 = sld [smem:[%s36]]
  %s38 = scalar_lea.smem %s0, 19
  %s39 = sld [smem:[%s38]]
  %s40 = scalar_lea.smem %s0, 20
  %s41 = sld [smem:[%s40]]
  %s42 = scalar_lea.smem %s0, 21
  %s43 = sld [smem:[%s42]]
  %s44 = scalar_lea.smem %s0, 22
  %s45 = sld [smem:[%s44]]
  %s46 = scalar_lea.smem %s0, 23
  %s47 = sld [smem:[%s46]]
  %s48 = scalar_lea.smem %s0, 24
  %s49 = sld [smem:[%s48]]
  %s50 = scalar_lea.smem %s0, 25
  %s51 = sld [smem:[%s50]]
  %s52 = scalar_lea.smem %s0, 26
  %s53 = sld [smem:[%s52]]
  %s54 = scalar_lea.smem %s0, 27
  %s55 = sld [smem:[%s54]]
  %s56 = scalar_lea.smem %s0, 28
  %s57 = sld [smem:[%s56]]
  %s58 = scalar_lea.smem %s0, 29
  %s59 = sld [smem:[%s58]]
  %s60 = scalar_lea.smem %s0, 30
  %s61 = sld [smem:[%s60]]
  %s62 = scalar_lea.smem %s0, 31
  %s63 = sld [smem:[%s62]]
  %s64 = scalar_lea.smem %s0, 32
  %s65 = sld [smem:[%s64]]
  %s66 = scalar_lea.smem %s0, 33
  %s67 = sld [smem:[%s66]]
  %s68 = scalar_lea.smem %s0, 34
  %s69 = sld [smem:[%s68]]
  %s70 = scalar_lea.smem %s0, 35
  %s71 = sld [smem:[%s70]]
  %s72 = scalar_lea.smem %s0, 36
  %s73 = sld [smem:[%s72]]
  %74 = xla_tuple %s71, %s73
  %s75 = sld [smem:[#allocation0]]
  $region158: #{matching_model_forward.1} parent=0
    _
  %s77 = ssub.s32 1, %s75
  %s78 = scalar_select 0, %s77, %s75
  $region1: #{matching_model_forward.1} parent=0
    #allocation2 [shape = 'u8[1024]{0}', space=vmem, size = 0x400, scoped, tag = 'output window, operand 0, single buffered']
    #allocation3 [shape = 's32[1]{0}', space=sflag, size = 0x4, scoped, tag = 'scoped memory for matching_model_forward.1']
    #allocation4 [shape = 'u8[512]{0}', space=vmem, size = 0x400, scoped, tag = 'output window, operand 1, single buffered']
    #allocation5 [shape = 's32[1]{0}', space=sflag, size = 0x4, scoped, tag = 'scoped memory for matching_model_forward.1']
    %79 = vsyncpa [#allocation3], 0
    %80 = vsyncpa [#allocation5], 0
    // Predicated region
    $region2: #{matching_model_forward.1} parent=1 // pred_check
      _
    $region3: #{matching_model_forward.1} parent=1 // pred_check_branch
      %82 = sbr.rel (0) target = $region5
    $region4: #{matching_model_forward.1} parent=1 // pred_region
      _
    $region5: #{matching_model_forward.1} parent=1 // pred_fallthru
      _
    // Predicated region
    $region6: #{matching_model_forward.1} parent=1 // pred_check
      _
    $region7: #{matching_model_forward.1} parent=1 // pred_check_branch
      %84 = sbr.rel (0) target = $region9
    $region8: #{matching_model_forward.1} parent=1 // pred_region
      _
    $region9: #{matching_model_forward.1} parent=1 // pred_fallthru
      _
    // Predicated region
    $region10: #{matching_model_forward.1} parent=1 // pred_check
      _
    $region11: #{matching_model_forward.1} parent=1 // pred_check_branch
      %86 = sbr.rel (0) target = $region13
    $region12: #{matching_model_forward.1} parent=1 // pred_region
      _
    $region13: #{matching_model_forward.1} parent=1 // pred_fallthru
      _
    // Predicated region
    $region14: #{matching_model_forward.1} parent=1 // pred_check
      _
    $region15: #{matching_model_forward.1} parent=1 // pred_check_branch
      %88 = sbr.rel (0) target = $region17
    $region16: #{matching_model_forward.1} parent=1 // pred_region
      _
    $region17: #{matching_model_forward.1} parent=1 // pred_fallthru
      _
    // Predicated region
    $region18: #{matching_model_forward.1} parent=1 // pred_check
      _
    $region19: #{matching_model_forward.1} parent=1 // pred_check_branch
      %90 = sbr.rel (0) target = $region21
    $region20: #{matching_model_forward.1} parent=1 // pred_region
      _
    $region21: #{matching_model_forward.1} parent=1 // pred_fallthru
      _
    // Predicated region
    $region22: #{matching_model_forward.1} parent=1 // pred_check
      _
    $region23: #{matching_model_forward.1} parent=1 // pred_check_branch
      %92 = sbr.rel (0) target = $region25
    $region24: #{matching_model_forward.1} parent=1 // pred_region
      _
    $region25: #{matching_model_forward.1} parent=1 // pred_fallthru
      _
    // Predicated region
    $region26: #{matching_model_forward.1} parent=1 // pred_check
      _
    $region27: #{matching_model_forward.1} parent=1 // pred_check_branch
      %94 = sbr.rel (0) target = $region29
    $region28: #{matching_model_forward.1} parent=1 // pred_region
      _
    $region29: #{matching_model_forward.1} parent=1 // pred_fallthru
      _
    // Predicated region
    $region30: #{matching_model_forward.1} parent=1 // pred_check
      _
    $region31: #{matching_model_forward.1} parent=1 // pred_check_branch
      %96 = sbr.rel (0) target = $region33
    $region32: #{matching_model_forward.1} parent=1 // pred_region
      _
    $region33: #{matching_model_forward.1} parent=1 // pred_fallthru
      _
    // Predicated region
    $region34: #{matching_model_forward.1} parent=1 // pred_check
      _
    $region35: #{matching_model_forward.1} parent=1 // pred_check_branch
      %98 = sbr.rel (0) target = $region37
    $region36: #{matching_model_forward.1} parent=1 // pred_region
      _
    $region37: #{matching_model_forward.1} parent=1 // pred_fallthru
      _
    // Predicated region
    $region38: #{matching_model_forward.1} parent=1 // pred_check
      _
    $region39: #{matching_model_forward.1} parent=1 // pred_check_branch
      %100 = sbr.rel (0) target = $region41
    $region40: #{matching_model_forward.1} parent=1 // pred_region
      _
    $region41: #{matching_model_forward.1} parent=1 // pred_fallthru
      _
    // Predicated region
    $region42: #{matching_model_forward.1} parent=1 // pred_check
      _
    $region43: #{matching_model_forward.1} parent=1 // pred_check_branch
      %102 = sbr.rel (0) target = $region45
    $region44: #{matching_model_forward.1} parent=1 // pred_region
      _
    $region45: #{matching_model_forward.1} parent=1 // pred_fallthru
      _
    // Predicated region
    $region46: #{matching_model_forward.1} parent=1 // pred_check
      _
    $region47: #{matching_model_forward.1} parent=1 // pred_check_branch
      %104 = sbr.rel (0) target = $region49
    $region48: #{matching_model_forward.1} parent=1 // pred_region
      _
    $region49: #{matching_model_forward.1} parent=1 // pred_fallthru
      _
    // Predicated region
    $region50: #{matching_model_forward.1} parent=1 // pred_check
      _
    $region51: #{matching_model_forward.1} parent=1 // pred_check_branch
      %106 = sbr.rel (0) target = $region53
    $region52: #{matching_model_forward.1} parent=1 // pred_region
      _
    $region53: #{matching_model_forward.1} parent=1 // pred_fallthru
      _
    // Predicated region
    $region54: #{matching_model_forward.1} parent=1 // pred_check
      _
    $region55: #{matching_model_forward.1} parent=1 // pred_check_branch
      %108 = sbr.rel (0) target = $region57
    $region56: #{matching_model_forward.1} parent=1 // pred_region
      _
    $region57: #{matching_model_forward.1} parent=1 // pred_fallthru
      _
    // Predicated region
    $region58: #{matching_model_forward.1} parent=1 // pred_check
      _
    $region59: #{matching_model_forward.1} parent=1 // pred_check_branch
      %110 = sbr.rel (0) target = $region61
    $region60: #{matching_model_forward.1} parent=1 // pred_region
      _
    $region61: #{matching_model_forward.1} parent=1 // pred_fallthru
      _
    // Predicated region
    $region62: #{matching_model_forward.1} parent=1 // pred_check
      _
    $region63: #{matching_model_forward.1} parent=1 // pred_check_branch
      %112 = sbr.rel (0) target = $region65
    $region64: #{matching_model_forward.1} parent=1 // pred_region
      _
    $region65: #{matching_model_forward.1} parent=1 // pred_fallthru
      _
    // Predicated region
    $region66: #{matching_model_forward.1} parent=1 // pred_check
      _
    $region67: #{matching_model_forward.1} parent=1 // pred_check_branch
      %114 = sbr.rel (0) target = $region69
    $region68: #{matching_model_forward.1} parent=1 // pred_region
      _
    $region69: #{matching_model_forward.1} parent=1 // pred_fallthru
      _
    // Predicated region
    $region70: #{matching_model_forward.1} parent=1 // pred_check
      _
    $region71: #{matching_model_forward.1} parent=1 // pred_check_branch
      %116 = sbr.rel (0) target = $region73
    $region72: #{matching_model_forward.1} parent=1 // pred_region
      _
    $region73: #{matching_model_forward.1} parent=1 // pred_fallthru
      _
    // Predicated region
    $region74: #{matching_model_forward.1} parent=1 // pred_check
      _
    $region75: #{matching_model_forward.1} parent=1 // pred_check_branch
      %118 = sbr.rel (0) target = $region77
    $region76: #{matching_model_forward.1} parent=1 // pred_region
      _
    $region77: #{matching_model_forward.1} parent=1 // pred_fallthru
      _
    // Predicated region
    $region78: #{matching_model_forward.1} parent=1 // pred_check
      _
    $region79: #{matching_model_forward.1} parent=1 // pred_check_branch
      %120 = sbr.rel (0) target = $region81
    $region80: #{matching_model_forward.1} parent=1 // pred_region
      _
    $region81: #{matching_model_forward.1} parent=1 // pred_fallthru
      _
    // Predicated region
    $region82: #{matching_model_forward.1} parent=1 // pred_check
      _
    $region83: #{matching_model_forward.1} parent=1 // pred_check_branch
      %122 = sbr.rel (0) target = $region85
    $region84: #{matching_model_forward.1} parent=1 // pred_region
      _
    $region85: #{matching_model_forward.1} parent=1 // pred_fallthru
      _
    // Predicated region
    $region86: #{matching_model_forward.1} parent=1 // pred_check
      _
    $region87: #{matching_model_forward.1} parent=1 // pred_check_branch
      %124 = sbr.rel (0) target = $region89
    $region88: #{matching_model_forward.1} parent=1 // pred_region
      _
    $region89: #{matching_model_forward.1} parent=1 // pred_fallthru
      _
    // Predicated region
    $region90: #{matching_model_forward.1} parent=1 // pred_check
      _
    $region91: #{matching_model_forward.1} parent=1 // pred_check_branch
      %126 = sbr.rel (0) target = $region93
    $region92: #{matching_model_forward.1} parent=1 // pred_region
      _
    $region93: #{matching_model_forward.1} parent=1 // pred_fallthru
      _
    // Predicated region
    $region94: #{matching_model_forward.1} parent=1 // pred_check
      _
    $region95: #{matching_model_forward.1} parent=1 // pred_check_branch
      %128 = sbr.rel (0) target = $region97
    $region96: #{matching_model_forward.1} parent=1 // pred_region
      _
    $region97: #{matching_model_forward.1} parent=1 // pred_fallthru
      _
    // Predicated region
    $region98: #{matching_model_forward.1} parent=1 // pred_check
      _
    $region99: #{matching_model_forward.1} parent=1 // pred_check_branch
      %130 = sbr.rel (0) target = $region101
    $region100: #{matching_model_forward.1} parent=1 // pred_region
      _
    $region101: #{matching_model_forward.1} parent=1 // pred_fallthru
      _
    // Predicated region
    $region102: #{matching_model_forward.1} parent=1 // pred_check
      _
    $region103: #{matching_model_forward.1} parent=1 // pred_check_branch
      %132 = sbr.rel (0) target = $region105
    $region104: #{matching_model_forward.1} parent=1 // pred_region
      _
    $region105: #{matching_model_forward.1} parent=1 // pred_fallthru
      _
    // Predicated region
    $region106: #{matching_model_forward.1} parent=1 // pred_check
      _
    $region107: #{matching_model_forward.1} parent=1 // pred_check_branch
      %134 = sbr.rel (0) target = $region109
    $region108: #{matching_model_forward.1} parent=1 // pred_region
      _
    $region109: #{matching_model_forward.1} parent=1 // pred_fallthru
      _
    // Predicated region
    $region110: #{matching_model_forward.1} parent=1 // pred_check
      _
    $region111: #{matching_model_forward.1} parent=1 // pred_check_branch
      %136 = sbr.rel (0) target = $region113
    $region112: #{matching_model_forward.1} parent=1 // pred_region
      _
    $region113: #{matching_model_forward.1} parent=1 // pred_fallthru
      _
    // Predicated region
    $region114: #{matching_model_forward.1} parent=1 // pred_check
      _
    $region115: #{matching_model_forward.1} parent=1 // pred_check_branch
      %138 = sbr.rel (0) target = $region117
    $region116: #{matching_model_forward.1} parent=1 // pred_region
      _
    $region117: #{matching_model_forward.1} parent=1 // pred_fallthru
      _
    // Predicated region
    $region118: #{matching_model_forward.1} parent=1 // pred_check
      _
    $region119: #{matching_model_forward.1} parent=1 // pred_check_branch
      %140 = sbr.rel (0) target = $region121
    $region120: #{matching_model_forward.1} parent=1 // pred_region
      _
    $region121: #{matching_model_forward.1} parent=1 // pred_fallthru
      _
    // Predicated region
    $region122: #{matching_model_forward.1} parent=1 // pred_check
      _
    $region123: #{matching_model_forward.1} parent=1 // pred_check_branch
      %142 = sbr.rel (0) target = $region125
    $region124: #{matching_model_forward.1} parent=1 // pred_region
      _
    $region125: #{matching_model_forward.1} parent=1 // pred_fallthru
      _
    // Predicated region
    $region126: #{matching_model_forward.1} parent=1 // pred_check
      _
    $region127: #{matching_model_forward.1} parent=1 // pred_check_branch
      %144 = sbr.rel (0) target = $region129
    $region128: #{matching_model_forward.1} parent=1 // pred_region
      _
    $region129: #{matching_model_forward.1} parent=1 // pred_fallthru
      _
    // Predicated region
    $region130: #{matching_model_forward.1} parent=1 // pred_check
      _
    $region131: #{matching_model_forward.1} parent=1 // pred_check_branch
      %146 = sbr.rel (0) target = $region133
    $region132: #{matching_model_forward.1} parent=1 // pred_region
      _
    $region133: #{matching_model_forward.1} parent=1 // pred_fallthru
      _
    // Predicated region
    $region134: #{matching_model_forward.1} parent=1 // pred_check
      _
    $region135: #{matching_model_forward.1} parent=1 // pred_check_branch
      %148 = sbr.rel (0) target = $region137
    $region136: #{matching_model_forward.1} parent=1 // pred_region
      _
    $region137: #{matching_model_forward.1} parent=1 // pred_fallthru
      _
    // Predicated region
    $region138: #{matching_model_forward.1} parent=1 // pred_check
      _
    $region139: #{matching_model_forward.1} parent=1 // pred_check_branch
      %150 = sbr.rel (0) target = $region141
    $region140: #{matching_model_forward.1} parent=1 // pred_region
      _
    $region141: #{matching_model_forward.1} parent=1 // pred_fallthru
      _
    %v151 = vld [vmem:[%s1] sm:$0xff]
    %v152 = vld [vmem:[%s1 + $0x8] sm:$0xff]
    %v153 = vld [vmem:[%s7] sm:$0x1]
    %v154 = vld [vmem:[%s9] sm:$0x1]
    %vm155 = vcmask 261120
    %v156 = vsel %vm155, %v151, 0.0
    %157 = vadd.xlane.f32.xlu0 %v156
    %v158 = vpop.xlane.xlu0 %157
    %v159 = vsel %vm155, %v152, 0.0
    %160 = vadd.xlane.f32.xlu0 %v159
    %v161 = vpop.xlane.xlu0 %160
    %v162 = vrcp.pop 32.0
    %v163 = vmul.f32 %v158, %v162
    %v164 = vmul.f32 %v161, %v162
    %v165 = vsub.f32 %v151, %v163
    %v166 = vsub.f32 %v152, %v164
    %v167 = vmul.f32 %v165, %v165
    %v168 = vmul.f32 %v166, %v166
    %v169 = vsel %vm155, %v167, 0.0
    %170 = vadd.xlane.f32.xlu0 %v169
    %v171 = vpop.xlane.xlu0 %170
    %v172 = vsel %vm155, %v168, 0.0
    %173 = vadd.xlane.f32.xlu0 %v172
    %v174 = vpop.xlane.xlu0 %173
    %v175 = vmul.f32 %v171, %v162
    %v176 = vmul.f32 %v174, %v162
    %v177 = vadd.f32 %v175, 1e-12
    %v178 = vadd.f32 %v176, 1e-12
    %v179 = vrsqrt.pop %v177
    %v180 = vrsqrt.pop %v178
    %v181 = vmul.f32 %v165, %v179
    %v182 = vmul.f32 %v166, %v180
    %v184 = vlaneseq
    %v185 = vshrl.u32 %v184, 7
    %v186 = vsub.s32 0, %v185
    %v187 = vrot.slane %v153, %v186
    %v189 = vmul.f32 %v181, %v187
    %v190 = vmul.f32 %v182, %v187
    %v192 = vlaneseq
    %v193 = vshrl.u32 %v192, 7
    %v194 = vsub.s32 0, %v193
    %v195 = vrot.slane %v154, %v194
    %v197 = vadd.f32 %v189, %v195
    %v198 = vadd.f32 %v190, %v195
    %v199 = vld [vmem:[%s11] sm:$0xff]
    %v200 = vld [vmem:[%s11 + $0x8] sm:$0xff]
    %v201 = vld [vmem:[%s11 + $0x10] sm:$0xff]
    %v202 = vld [vmem:[%s11 + $0x18] sm:$0xff]
    %v203 = vld [vmem:[%s13] sm:$0x1]
    %v205 = vlaneseq
    %v206 = vshrl.u32 %v205, 7
    %v207 = vsub.s32 0, %v206
    %v208 = vrot.slane %v203, %v207
    %v211 = vsel %vm155, %v197, 0
    %v214 = vsel %vm155, %v198, 0
    %216 = vmatprep.subr.mxu0 0.0
    %217 = vmatpush1.msra.mxu0 0.0
    %218 = vmatprep.subr.mxu0 0.0
    %219 = vmatpush1.msra.mxu0 0.0
    %220 = vmatprep.subr.mxu0 0.0
    %221 = vmatpush1.msra.mxu0 0.0
    %222 = vmatprep.subr.mxu0 0.0
    %223 = vmatpush1.msra.mxu0 0.0
    %224 = vmatprep.subr.mxu0 0.0
    %225 = vmatpush1.msra.mxu0 0.0
    %226 = vmatprep.subr.mxu0 0.0
    %227 = vmatpush1.msra.mxu0 0.0
    %228 = vmatprep.subr.mxu0 0.0
    %229 = vmatpush1.msra.mxu0 0.0
    %230 = vmatprep.subr.mxu0 0.0
    %231 = vmatpush1.msra.mxu0 0.0
    %232 = vmatprep.subr.mxu0 0.0
    %233 = vmatpush1.msra.mxu0 0.0
    %234 = vmatprep.subr.mxu0 0.0
    %235 = vmatpush1.msra.mxu0 0.0
    %236 = vmatprep.subr.mxu0 0.0
    %237 = vmatpush1.msra.mxu0 0.0
    %238 = vmatprep.subr.mxu0 0.0
    %239 = vmatpush1.msra.mxu0 0.0
    %240 = vmatprep.subr.mxu0 0.0
    %241 = vmatpush1.msra.mxu0 %v202
    %242 = vmatprep.subr.mxu0 0.0
    %243 = vmatpush1.msra.mxu0 %v201
    %244 = vmatprep.subr.mxu0 0.0
    %245 = vmatpush1.msra.mxu0 %v200
    %246 = vmatprep.subr.mxu0 0.0
    %247 = vmatpush1.msra.mxu0 %v199
    %248 = vmatprep.subr.mxu0 0.0
    %249 = vmatpush2.msra.mxu0 0.0
    %250 = vmatprep.subr.mxu0 0.0
    %251 = vmatpush2.msra.mxu0 0.0
    %252 = vmatprep.subr.mxu0 0.0
    %253 = vmatpush2.msra.mxu0 0.0
    %254 = vmatprep.subr.mxu0 0.0
    %255 = vmatpush2.msra.mxu0 0.0
    %256 = vmatprep.subr.mxu0 0.0
    %257 = vmatpush2.msra.mxu0 0.0
    %258 = vmatprep.subr.mxu0 0.0
    %259 = vmatpush2.msra.mxu0 0.0
    %260 = vmatprep.subr.mxu0 0.0
    %261 = vmatpush2.msra.mxu0 0.0
    %262 = vmatprep.subr.mxu0 0.0
    %263 = vmatpush2.msra.mxu0 0.0
    %264 = vmatprep.subr.mxu0 0.0
    %265 = vmatpush2.msra.mxu0 0.0
    %266 = vmatprep.subr.mxu0 0.0
    %267 = vmatpush2.msra.mxu0 0.0
    %268 = vmatprep.subr.mxu0 0.0
    %269 = vmatpush2.msra.mxu0 0.0
    %270 = vmatprep.subr.mxu0 0.0
    %271 = vmatpush2.msra.mxu0 0.0
    %272 = vmatprep.subr.mxu0 0.0
    %273 = vmatpush2.msra.mxu0 0.0
    %274 = vmatprep.subr.mxu0 0.0
    %275 = vmatpush2.msra.mxu0 0.0
    %276 = vmatprep.subr.mxu0 0.0
    %277 = vmatpush2.msra.mxu0 0.0
    %278 = vmatprep.subr.mxu0 0.0
    %279 = vmatpush2.msra.mxu0 0.0
    %280 = vmatprep.mubr.f32.mxu0 0.0
    %281 = vmatmul.mubr.f32.gmra.mxu0 %v211
    %v282 = vpop.f32.mrf.mxu0
    %v283 = vadd.f32 %v208, %v282
    %v284 = vpop.f32.mrf.mxu0
    %285 = vmatprep.mubr.f32.mxu0 0.0
    %286 = vmatmul.mubr.f32.gmra.mxu0 %v214
    %v287 = vpop.f32.mrf.mxu0
    %v288 = vadd.f32 %v208, %v287
    %v289 = vpop.f32.mrf.mxu0
    %290 = vdwg.mxu0
    %292 = vrot.lane.b32.xlu0 %v283, 96
    %v293 = vpop.permute.xlu0 %292
    %vm294 = vcmask 64512
    %v295 = vsel %vm294, %v283, 0
    %v297 = vsel %vm294, %v293, 0
    %299 = vmatprep.subr.mxu0 0.0
    %300 = vmatpush1.xpose.msra.mxu0 0.0
    %301 = vmatprep.subr.mxu0 0.0
    %302 = vmatpush1.xpose.msra.mxu0 0.0
    %303 = vmatprep.subr.mxu0 0.0
    %304 = vmatpush1.xpose.msra.mxu0 0.0
    %305 = vmatprep.subr.mxu0 0.0
    %306 = vmatpush1.xpose.msra.mxu0 0.0
    %307 = vmatprep.subr.mxu0 0.0
    %308 = vmatpush1.xpose.msra.mxu0 0.0
    %309 = vmatprep.subr.mxu0 0.0
    %310 = vmatpush1.xpose.msra.mxu0 0.0
    %311 = vmatprep.subr.mxu0 0.0
    %312 = vmatpush1.xpose.msra.mxu0 0.0
    %313 = vmatprep.subr.mxu0 0.0
    %314 = vmatpush1.xpose.msra.mxu0 0.0
    %315 = vmatprep.subr.mxu0 0.0
    %316 = vmatpush1.xpose.msra.mxu0 0.0
    %317 = vmatprep.subr.mxu0 0.0
    %318 = vmatpush1.xpose.msra.mxu0 0.0
    %319 = vmatprep.subr.mxu0 0.0
    %320 = vmatpush1.xpose.msra.mxu0 0.0
    %321 = vmatprep.subr.mxu0 0.0
    %322 = vmatpush1.xpose.msra.mxu0 0.0
    %323 = vmatprep.subr.mxu0 0.0
    %324 = vmatpush1.xpose.msra.mxu0 0.0
    %325 = vmatprep.subr.mxu0 0.0
    %326 = vmatpush1.xpose.msra.mxu0 0.0
    %327 = vmatprep.subr.mxu0 0.0
    %328 = vmatpush1.xpose.msra.mxu0 0.0
    %329 = vmatprep.subr.mxu0 0.0
    %330 = vmatpush1.xpose.msra.mxu0 %v297
    %331 = vmatprep.subr.mxu0 0.0
    %332 = vmatpush2.xpose.msra.mxu0 0.0
    %333 = vmatprep.subr.mxu0 0.0
    %334 = vmatpush2.xpose.msra.mxu0 0.0
    %335 = vmatprep.subr.mxu0 0.0
    %336 = vmatpush2.xpose.msra.mxu0 0.0
    %337 = vmatprep.subr.mxu0 0.0
    %338 = vmatpush2.xpose.msra.mxu0 0.0
    %339 = vmatprep.subr.mxu0 0.0
    %340 = vmatpush2.xpose.msra.mxu0 0.0
    %341 = vmatprep.subr.mxu0 0.0
    %342 = vmatpush2.xpose.msra.mxu0 0.0
    %343 = vmatprep.subr.mxu0 0.0
    %344 = vmatpush2.xpose.msra.mxu0 0.0
    %345 = vmatprep.subr.mxu0 0.0
    %346 = vmatpush2.xpose.msra.mxu0 0.0
    %347 = vmatprep.subr.mxu0 0.0
    %348 = vmatpush2.xpose.msra.mxu0 0.0
    %349 = vmatprep.subr.mxu0 0.0
    %350 = vmatpush2.xpose.msra.mxu0 0.0
    %351 = vmatprep.subr.mxu0 0.0
    %352 = vmatpush2.xpose.msra.mxu0 0.0
    %353 = vmatprep.subr.mxu0 0.0
    %354 = vmatpush2.xpose.msra.mxu0 0.0
    %355 = vmatprep.subr.mxu0 0.0
    %356 = vmatpush2.xpose.msra.mxu0 0.0
    %357 = vmatprep.subr.mxu0 0.0
    %358 = vmatpush2.xpose.msra.mxu0 0.0
    %359 = vmatprep.subr.mxu0 0.0
    %360 = vmatpush2.xpose.msra.mxu0 0.0
    %361 = vmatprep.subr.mxu0 0.0
    %362 = vmatpush2.xpose.msra.mxu0 0.0
    %363 = vmatprep.mubr.f32.mxu0 0.0
    %364 = vmatmul.mubr.f32.gmra.mxu0 %v295
    %v365 = vpop.f32.mrf.mxu0
    %v366 = vadd.f32 0.0, %v365
    %v367 = vpop.f32.mrf.mxu0
    %368 = vdwg.mxu0
    %v369 = vmul.f32 %v366, 0.35355338
    %v370 = vsel %vm294, %v369, -inf
    %371 = vmax.xlane.f32.xlu0 %v370
    %v372 = vpop.xlane.xlu0 %371
    %v373 = vsub.f32 %v369, %v372
    %v374 = vmul.f32 %v373, 1.442695
    %v375 = vpow.pop %v374
    %v376 = vsel %vm294, %v375, 0.0
    %377 = vadd.xlane.f32.xlu0 %v376
    %v378 = vpop.xlane.xlu0 %377
    %v379 = vrcp.pop %v378
    %v380 = vmul.f32 %v375, %v379
    %381 = vrot.lane.b32.xlu0 %v283, 64
    %v382 = vpop.permute.xlu0 %381
    %v385 = vsel %vm294, %v380, 0
    %387 = vmatprep.subr.mxu0 0.0
    %388 = vmatpush1.msra.mxu0 0.0
    %389 = vmatprep.subr.mxu0 0.0
    %390 = vmatpush1.msra.mxu0 0.0
    %391 = vmatprep.subr.mxu0 0.0
    %392 = vmatpush1.msra.mxu0 0.0
    %393 = vmatprep.subr.mxu0 0.0
    %394 = vmatpush1.msra.mxu0 0.0
    %395 = vmatprep.subr.mxu0 0.0
    %396 = vmatpush1.msra.mxu0 0.0
    %397 = vmatprep.subr.mxu0 0.0
    %398 = vmatpush1.msra.mxu0 0.0
    %399 = vmatprep.subr.mxu0 0.0
    %400 = vmatpush1.msra.mxu0 0.0
    %401 = vmatprep.subr.mxu0 0.0
    %402 = vmatpush1.msra.mxu0 0.0
    %403 = vmatprep.subr.mxu0 0.0
    %404 = vmatpush1.msra.mxu0 0.0
    %405 = vmatprep.subr.mxu0 0.0
    %406 = vmatpush1.msra.mxu0 0.0
    %407 = vmatprep.subr.mxu0 0.0
    %408 = vmatpush1.msra.mxu0 0.0
    %409 = vmatprep.subr.mxu0 0.0
    %410 = vmatpush1.msra.mxu0 0.0
    %411 = vmatprep.subr.mxu0 0.0
    %412 = vmatpush1.msra.mxu0 0.0
    %413 = vmatprep.subr.mxu0 0.0
    %414 = vmatpush1.msra.mxu0 0.0
    %415 = vmatprep.subr.mxu0 0.0
    %416 = vmatpush1.msra.mxu0 0.0
    %417 = vmatprep.subr.mxu0 0.0
    %418 = vmatpush1.msra.mxu0 %v382
    %419 = vmatprep.subr.mxu0 0.0
    %420 = vmatpush2.msra.mxu0 0.0
    %421 = vmatprep.subr.mxu0 0.0
    %422 = vmatpush2.msra.mxu0 0.0
    %423 = vmatprep.subr.mxu0 0.0
    %424 = vmatpush2.msra.mxu0 0.0
    %425 = vmatprep.subr.mxu0 0.0
    %426 = vmatpush2.msra.mxu0 0.0
    %427 = vmatprep.subr.mxu0 0.0
    %428 = vmatpush2.msra.mxu0 0.0
    %429 = vmatprep.subr.mxu0 0.0
    %430 = vmatpush2.msra.mxu0 0.0
    %431 = vmatprep.subr.mxu0 0.0
    %432 = vmatpush2.msra.mxu0 0.0
    %433 = vmatprep.subr.mxu0 0.0
    %434 = vmatpush2.msra.mxu0 0.0
    %435 = vmatprep.subr.mxu0 0.0
    %436 = vmatpush2.msra.mxu0 0.0
    %437 = vmatprep.subr.mxu0 0.0
    %438 = vmatpush2.msra.mxu0 0.0
    %439 = vmatprep.subr.mxu0 0.0
    %440 = vmatpush2.msra.mxu0 0.0
    %441 = vmatprep.subr.mxu0 0.0
    %442 = vmatpush2.msra.mxu0 0.0
    %443 = vmatprep.subr.mxu0 0.0
    %444 = vmatpush2.msra.mxu0 0.0
    %445 = vmatprep.subr.mxu0 0.0
    %446 = vmatpush2.msra.mxu0 0.0
    %447 = vmatprep.subr.mxu0 0.0
    %448 = vmatpush2.msra.mxu0 0.0
    %449 = vmatprep.subr.mxu0 0.0
    %450 = vmatpush2.msra.mxu0 0.0
    %451 = vmatprep.mubr.f32.mxu0 0.0
    %452 = vmatmul.mubr.f32.gmra.mxu0 %v385
    %v453 = vpop.f32.mrf.mxu0
    %v454 = vadd.f32 0.0, %v453
    %v455 = vpop.f32.mrf.mxu0
    %456 = vdwg.mxu0
    %457 = vrot.lane.b32.xlu0 %v283, 120
    %v458 = vpop.permute.xlu0 %457
    %459 = vrot.lane.b32.xlu0 %v283, 88
    %v460 = vpop.permute.xlu0 %459
    %v461 = vsel %vm294, %v458, 0
    %v463 = vsel %vm294, %v460, 0
    %465 = vmatprep.subr.mxu0 0.0
    %466 = vmatpush1.xpose.msra.mxu0 0.0
    %467 = vmatprep.subr.mxu0 0.0
    %468 = vmatpush1.xpose.msra.mxu0 0.0
    %469 = vmatprep.subr.mxu0 0.0
    %470 = vmatpush1.xpose.msra.mxu0 0.0
    %471 = vmatprep.subr.mxu0 0.0
    %472 = vmatpush1.xpose.msra.mxu0 0.0
    %473 = vmatprep.subr.mxu0 0.0
    %474 = vmatpush1.xpose.msra.mxu0 0.0
    %475 = vmatprep.subr.mxu0 0.0
    %476 = vmatpush1.xpose.msra.mxu0 0.0
    %477 = vmatprep.subr.mxu0 0.0
    %478 = vmatpush1.xpose.msra.mxu0 0.0
    %479 = vmatprep.subr.mxu0 0.0
    %480 = vmatpush1.xpose.msra.mxu0 0.0
    %481 = vmatprep.subr.mxu0 0.0
    %482 = vmatpush1.xpose.msra.mxu0 0.0
    %483 = vmatprep.subr.mxu0 0.0
    %484 = vmatpush1.xpose.msra.mxu0 0.0
    %485 = vmatprep.subr.mxu0 0.0
    %486 = vmatpush1.xpose.msra.mxu0 0.0
    %487 = vmatprep.subr.mxu0 0.0
    %488 = vmatpush1.xpose.msra.mxu0 0.0
    %489 = vmatprep.subr.mxu0 0.0
    %490 = vmatpush1.xpose.msra.mxu0 0.0
    %491 = vmatprep.subr.mxu0 0.0
    %492 = vmatpush1.xpose.msra.mxu0 0.0
    %493 = vmatprep.subr.mxu0 0.0
    %494 = vmatpush1.xpose.msra.mxu0 0.0
    %495 = vmatprep.subr.mxu0 0.0
    %496 = vmatpush1.xpose.msra.mxu0 %v463
    %497 = vmatprep.subr.mxu0 0.0
    %498 = vmatpush2.xpose.msra.mxu0 0.0
    %499 = vmatprep.subr.mxu0 0.0
    %500 = vmatpush2.xpose.msra.mxu0 0.0
    %501 = vmatprep.subr.mxu0 0.0
    %502 = vmatpush2.xpose.msra.mxu0 0.0
    %503 = vmatprep.subr.mxu0 0.0
    %504 = vmatpush2.xpose.msra.mxu0 0.0
    %505 = vmatprep.subr.mxu0 0.0
    %506 = vmatpush2.xpose.msra.mxu0 0.0
    %507 = vmatprep.subr.mxu0 0.0
    %508 = vmatpush2.xpose.msra.mxu0 0.0
    %509 = vmatprep.subr.mxu0 0.0
    %510 = vmatpush2.xpose.msra.mxu0 0.0
    %511 = vmatprep.subr.mxu0 0.0
    %512 = vmatpush2.xpose.msra.mxu0 0.0
    %513 = vmatprep.subr.mxu0 0.0
    %514 = vmatpush2.xpose.msra.mxu0 0.0
    %515 = vmatprep.subr.mxu0 0.0
    %516 = vmatpush2.xpose.msra.mxu0 0.0
    %517 = vmatprep.subr.mxu0 0.0
    %518 = vmatpush2.xpose.msra.mxu0 0.0
    %519 = vmatprep.subr.mxu0 0.0
    %520 = vmatpush2.xpose.msra.mxu0 0.0
    %521 = vmatprep.subr.mxu0 0.0
    %522 = vmatpush2.xpose.msra.mxu0 0.0
    %523 = vmatprep.subr.mxu0 0.0
    %524 = vmatpush2.xpose.msra.mxu0 0.0
    %525 = vmatprep.subr.mxu0 0.0
    %526 = vmatpush2.xpose.msra.mxu0 0.0
    %527 = vmatprep.subr.mxu0 0.0
    %528 = vmatpush2.xpose.msra.mxu0 0.0
    %529 = vmatprep.mubr.f32.mxu0 0.0
    %530 = vmatmul.mubr.f32.gmra.mxu0 %v461
    %v531 = vpop.f32.mrf.mxu0
    %v532 = vadd.f32 0.0, %v531
    %v533 = vpop.f32.mrf.mxu0
    %534 = vdwg.mxu0
    %v535 = vmul.f32 %v532, 0.35355338
    %v536 = vsel %vm294, %v535, -inf
    %537 = vmax.xlane.f32.xlu0 %v536
    %v538 = vpop.xlane.xlu0 %537
    %v539 = vsub.f32 %v535, %v538
    %v540 = vmul.f32 %v539, 1.442695
    %v541 = vpow.pop %v540
    %v542 = vsel %vm294, %v541, 0.0
    %543 = vadd.xlane.f32.xlu0 %v542
    %v544 = vpop.xlane.xlu0 %543
    %v545 = vrcp.pop %v544
    %v546 = vmul.f32 %v541, %v545
    %547 = vrot.lane.b32.xlu0 %v283, 56
    %v548 = vpop.permute.xlu0 %547
    %v551 = vsel %vm294, %v546, 0
    %553 = vmatprep.subr.mxu0 0.0
    %554 = vmatpush1.msra.mxu0 0.0
    %555 = vmatprep.subr.mxu0 0.0
    %556 = vmatpush1.msra.mxu0 0.0
    %557 = vmatprep.subr.mxu0 0.0
    %558 = vmatpush1.msra.mxu0 0.0
    %559 = vmatprep.subr.mxu0 0.0
    %560 = vmatpush1.msra.mxu0 0.0
    %561 = vmatprep.subr.mxu0 0.0
    %562 = vmatpush1.msra.mxu0 0.0
    %563 = vmatprep.subr.mxu0 0.0
    %564 = vmatpush1.msra.mxu0 0.0
    %565 = vmatprep.subr.mxu0 0.0
    %566 = vmatpush1.msra.mxu0 0.0
    %567 = vmatprep.subr.mxu0 0.0
    %568 = vmatpush1.msra.mxu0 0.0
    %569 = vmatprep.subr.mxu0 0.0
    %570 = vmatpush1.msra.mxu0 0.0
    %571 = vmatprep.subr.mxu0 0.0
    %572 = vmatpush1.msra.mxu0 0.0
    %573 = vmatprep.subr.mxu0 0.0
    %574 = vmatpush1.msra.mxu0 0.0
    %575 = vmatprep.subr.mxu0 0.0
    %576 = vmatpush1.msra.mxu0 0.0
    %577 = vmatprep.subr.mxu0 0.0
    %578 = vmatpush1.msra.mxu0 0.0
    %579 = vmatprep.subr.mxu0 0.0
    %580 = vmatpush1.msra.mxu0 0.0
    %581 = vmatprep.subr.mxu0 0.0
    %582 = vmatpush1.msra.mxu0 0.0
    %583 = vmatprep.subr.mxu0 0.0
    %584 = vmatpush1.msra.mxu0 %v548
    %585 = vmatprep.subr.mxu0 0.0
    %586 = vmatpush2.msra.mxu0 0.0
    %587 = vmatprep.subr.mxu0 0.0
    %588 = vmatpush2.msra.mxu0 0.0
    %589 = vmatprep.subr.mxu0 0.0
    %590 = vmatpush2.msra.mxu0 0.0
    %591 = vmatprep.subr.mxu0 0.0
    %592 = vmatpush2.msra.mxu0 0.0
    %593 = vmatprep.subr.mxu0 0.0
    %594 = vmatpush2.msra.mxu0 0.0
    %595 = vmatprep.subr.mxu0 0.0
    %596 = vmatpush2.msra.mxu0 0.0
    %597 = vmatprep.subr.mxu0 0.0
    %598 = vmatpush2.msra.mxu0 0.0
    %599 = vmatprep.subr.mxu0 0.0
    %600 = vmatpush2.msra.mxu0 0.0
    %601 = vmatprep.subr.mxu0 0.0
    %602 = vmatpush2.msra.mxu0 0.0
    %603 = vmatprep.subr.mxu0 0.0
    %604 = vmatpush2.msra.mxu0 0.0
    %605 = vmatprep.subr.mxu0 0.0
    %606 = vmatpush2.msra.mxu0 0.0
    %607 = vmatprep.subr.mxu0 0.0
    %608 = vmatpush2.msra.mxu0 0.0
    %609 = vmatprep.subr.mxu0 0.0
    %610 = vmatpush2.msra.mxu0 0.0
    %611 = vmatprep.subr.mxu0 0.0
    %612 = vmatpush2.msra.mxu0 0.0
    %613 = vmatprep.subr.mxu0 0.0
    %614 = vmatpush2.msra.mxu0 0.0
    %615 = vmatprep.subr.mxu0 0.0
    %616 = vmatpush2.msra.mxu0 0.0
    %617 = vmatprep.mubr.f32.mxu0 0.0
    %618 = vmatmul.mubr.f32.gmra.mxu0 %v551
    %v619 = vpop.f32.mrf.mxu0
    %v620 = vadd.f32 0.0, %v619
    %v621 = vpop.f32.mrf.mxu0
    %622 = vdwg.mxu0
    %623 = vrot.lane.b32.xlu0 %v283, 112
    %v624 = vpop.permute.xlu0 %623
    %625 = vrot.lane.b32.xlu0 %v283, 80
    %v626 = vpop.permute.xlu0 %625
    %v627 = vsel %vm294, %v624, 0
    %v629 = vsel %vm294, %v626, 0
    %631 = vmatprep.subr.mxu0 0.0
    %632 = vmatpush1.xpose.msra.mxu0 0.0
    %633 = vmatprep.subr.mxu0 0.0
    %634 = vmatpush1.xpose.msra.mxu0 0.0
    %635 = vmatprep.subr.mxu0 0.0
    %636 = vmatpush1.xpose.msra.mxu0 0.0
    %637 = vmatprep.subr.mxu0 0.0
    %638 = vmatpush1.xpose.msra.mxu0 0.0
    %639 = vmatprep.subr.mxu0 0.0
    %640 = vmatpush1.xpose.msra.mxu0 0.0
    %641 = vmatprep.subr.mxu0 0.0
    %642 = vmatpush1.xpose.msra.mxu0 0.0
    %643 = vmatprep.subr.mxu0 0.0
    %644 = vmatpush1.xpose.msra.mxu0 0.0
    %645 = vmatprep.subr.mxu0 0.0
    %646 = vmatpush1.xpose.msra.mxu0 0.0
    %647 = vmatprep.subr.mxu0 0.0
    %648 = vmatpush1.xpose.msra.mxu0 0.0
    %649 = vmatprep.subr.mxu0 0.0
    %650 = vmatpush1.xpose.msra.mxu0 0.0
    %651 = vmatprep.subr.mxu0 0.0
    %652 = vmatpush1.xpose.msra.mxu0 0.0
    %653 = vmatprep.subr.mxu0 0.0
    %654 = vmatpush1.xpose.msra.mxu0 0.0
    %655 = vmatprep.subr.mxu0 0.0
    %656 = vmatpush1.xpose.msra.mxu0 0.0
    %657 = vmatprep.subr.mxu0 0.0
    %658 = vmatpush1.xpose.msra.mxu0 0.0
    %659 = vmatprep.subr.mxu0 0.0
    %660 = vmatpush1.xpose.msra.mxu0 0.0
    %661 = vmatprep.subr.mxu0 0.0
    %662 = vmatpush1.xpose.msra.mxu0 %v629
    %663 = vmatprep.subr.mxu0 0.0
    %664 = vmatpush2.xpose.msra.mxu0 0.0
    %665 = vmatprep.subr.mxu0 0.0
    %666 = vmatpush2.xpose.msra.mxu0 0.0
    %667 = vmatprep.subr.mxu0 0.0
    %668 = vmatpush2.xpose.msra.mxu0 0.0
    %669 = vmatprep.subr.mxu0 0.0
    %670 = vmatpush2.xpose.msra.mxu0 0.0
    %671 = vmatprep.subr.mxu0 0.0
    %672 = vmatpush2.xpose.msra.mxu0 0.0
    %673 = vmatprep.subr.mxu0 0.0
    %674 = vmatpush2.xpose.msra.mxu0 0.0
    %675 = vmatprep.subr.mxu0 0.0
    %676 = vmatpush2.xpose.msra.mxu0 0.0
    %677 = vmatprep.subr.mxu0 0.0
    %678 = vmatpush2.xpose.msra.mxu0 0.0
    %679 = vmatprep.subr.mxu0 0.0
    %680 = vmatpush2.xpose.msra.mxu0 0.0
    %681 = vmatprep.subr.mxu0 0.0
    %682 = vmatpush2.xpose.msra.mxu0 0.0
    %683 = vmatprep.subr.mxu0 0.0
    %684 = vmatpush2.xpose.msra.mxu0 0.0
    %685 = vmatprep.subr.mxu0 0.0
    %686 = vmatpush2.xpose.msra.mxu0 0.0
    %687 = vmatprep.subr.mxu0 0.0
    %688 = vmatpush2.xpose.msra.mxu0 0.0
    %689 = vmatprep.subr.mxu0 0.0
    %690 = vmatpush2.xpose.msra.mxu0 0.0
    %691 = vmatprep.subr.mxu0 0.0
    %692 = vmatpush2.xpose.msra.mxu0 0.0
    %693 = vmatprep.subr.mxu0 0.0
    %694 = vmatpush2.xpose.msra.mxu0 0.0
    %695 = vmatprep.mubr.f32.mxu0 0.0
    %696 = vmatmul.mubr.f32.gmra.mxu0 %v627
    %v697 = vpop.f32.mrf.mxu0
    %v698 = vadd.f32 0.0, %v697
    %v699 = vpop.f32.mrf.mxu0
    %700 = vdwg.mxu0
    %v701 = vmul.f32 %v698, 0.35355338
    %v702 = vsel %vm294, %v701, -inf
    %703 = vmax.xlane.f32.xlu0 %v702
    %v704 = vpop.xlane.xlu0 %703
    %v705 = vsub.f32 %v701, %v704
    %v706 = vmul.f32 %v705, 1.442695
    %v707 = vpow.pop %v706
    %v708 = vsel %vm294, %v707, 0.0
    %709 = vadd.xlane.f32.xlu0 %v708
    %v710 = vpop.xlane.xlu0 %709
    %v711 = vrcp.pop %v710
    %v712 = vmul.f32 %v707, %v711
    %713 = vrot.lane.b32.xlu0 %v283, 48
    %v714 = vpop.permute.xlu0 %713
    %v717 = vsel %vm294, %v712, 0
    %719 = vmatprep.subr.mxu0 0.0
    %720 = vmatpush1.msra.mxu0 0.0
    %721 = vmatprep.subr.mxu0 0.0
    %722 = vmatpush1.msra.mxu0 0.0
    %723 = vmatprep.subr.mxu0 0.0
    %724 = vmatpush1.msra.mxu0 0.0
    %725 = vmatprep.subr.mxu0 0.0
    %726 = vmatpush1.msra.mxu0 0.0
    %727 = vmatprep.subr.mxu0 0.0
    %728 = vmatpush1.msra.mxu0 0.0
    %729 = vmatprep.subr.mxu0 0.0
    %730 = vmatpush1.msra.mxu0 0.0
    %731 = vmatprep.subr.mxu0 0.0
    %732 = vmatpush1.msra.mxu0 0.0
    %733 = vmatprep.subr.mxu0 0.0
    %734 = vmatpush1.msra.mxu0 0.0
    %735 = vmatprep.subr.mxu0 0.0
    %736 = vmatpush1.msra.mxu0 0.0
    %737 = vmatprep.subr.mxu0 0.0
    %738 = vmatpush1.msra.mxu0 0.0
    %739 = vmatprep.subr.mxu0 0.0
    %740 = vmatpush1.msra.mxu0 0.0
    %741 = vmatprep.subr.mxu0 0.0
    %742 = vmatpush1.msra.mxu0 0.0
    %743 = vmatprep.subr.mxu0 0.0
    %744 = vmatpush1.msra.mxu0 0.0
    %745 = vmatprep.subr.mxu0 0.0
    %746 = vmatpush1.msra.mxu0 0.0
    %747 = vmatprep.subr.mxu0 0.0
    %748 = vmatpush1.msra.mxu0 0.0
    %749 = vmatprep.subr.mxu0 0.0
    %750 = vmatpush1.msra.mxu0 %v714
    %751 = vmatprep.subr.mxu0 0.0
    %752 = vmatpush2.msra.mxu0 0.0
    %753 = vmatprep.subr.mxu0 0.0
    %754 = vmatpush2.msra.mxu0 0.0
    %755 = vmatprep.subr.mxu0 0.0
    %756 = vmatpush2.msra.mxu0 0.0
    %757 = vmatprep.subr.mxu0 0.0
    %758 = vmatpush2.msra.mxu0 0.0
    %759 = vmatprep.subr.mxu0 0.0
    %760 = vmatpush2.msra.mxu0 0.0
    %761 = vmatprep.subr.mxu0 0.0
    %762 = vmatpush2.msra.mxu0 0.0
    %763 = vmatprep.subr.mxu0 0.0
    %764 = vmatpush2.msra.mxu0 0.0
    %765 = vmatprep.subr.mxu0 0.0
    %766 = vmatpush2.msra.mxu0 0.0
    %767 = vmatprep.subr.mxu0 0.0
    %768 = vmatpush2.msra.mxu0 0.0
    %769 = vmatprep.subr.mxu0 0.0
    %770 = vmatpush2.msra.mxu0 0.0
    %771 = vmatprep.subr.mxu0 0.0
    %772 = vmatpush2.msra.mxu0 0.0
    %773 = vmatprep.subr.mxu0 0.0
    %774 = vmatpush2.msra.mxu0 0.0
    %775 = vmatprep.subr.mxu0 0.0
    %776 = vmatpush2.msra.mxu0 0.0
    %777 = vmatprep.subr.mxu0 0.0
    %778 = vmatpush2.msra.mxu0 0.0
    %779 = vmatprep.subr.mxu0 0.0
    %780 = vmatpush2.msra.mxu0 0.0
    %781 = vmatprep.subr.mxu0 0.0
    %782 = vmatpush2.msra.mxu0 0.0
    %783 = vmatprep.mubr.f32.mxu0 0.0
    %784 = vmatmul.mubr.f32.gmra.mxu0 %v717
    %v785 = vpop.f32.mrf.mxu0
    %v786 = vadd.f32 0.0, %v785
    %v787 = vpop.f32.mrf.mxu0
    %788 = vdwg.mxu0
    %789 = vrot.lane.b32.xlu0 %v283, 104
    %v790 = vpop.permute.xlu0 %789
    %791 = vrot.lane.b32.xlu0 %v283, 72
    %v792 = vpop.permute.xlu0 %791
    %v793 = vsel %vm294, %v790, 0
    %v795 = vsel %vm294, %v792, 0
    %797 = vmatprep.subr.mxu0 0.0
    %798 = vmatpush1.xpose.msra.mxu0 0.0
    %799 = vmatprep.subr.mxu0 0.0
    %800 = vmatpush1.xpose.msra.mxu0 0.0
    %801 = vmatprep.subr.mxu0 0.0
    %802 = vmatpush1.xpose.msra.mxu0 0.0
    %803 = vmatprep.subr.mxu0 0.0
    %804 = vmatpush1.xpose.msra.mxu0 0.0
    %805 = vmatprep.subr.mxu0 0.0
    %806 = vmatpush1.xpose.msra.mxu0 0.0
    %807 = vmatprep.subr.mxu0 0.0
    %808 = vmatpush1.xpose.msra.mxu0 0.0
    %809 = vmatprep.subr.mxu0 0.0
    %810 = vmatpush1.xpose.msra.mxu0 0.0
    %811 = vmatprep.subr.mxu0 0.0
    %812 = vmatpush1.xpose.msra.mxu0 0.0
    %813 = vmatprep.subr.mxu0 0.0
    %814 = vmatpush1.xpose.msra.mxu0 0.0
    %815 = vmatprep.subr.mxu0 0.0
    %816 = vmatpush1.xpose.msra.mxu0 0.0
    %817 = vmatprep.subr.mxu0 0.0
    %818 = vmatpush1.xpose.msra.mxu0 0.0
    %819 = vmatprep.subr.mxu0 0.0
    %820 = vmatpush1.xpose.msra.mxu0 0.0
    %821 = vmatprep.subr.mxu0 0.0
    %822 = vmatpush1.xpose.msra.mxu0 0.0
    %823 = vmatprep.subr.mxu0 0.0
    %824 = vmatpush1.xpose.msra.mxu0 0.0
    %825 = vmatprep.subr.mxu0 0.0
    %826 = vmatpush1.xpose.msra.mxu0 0.0
    %827 = vmatprep.subr.mxu0 0.0
    %828 = vmatpush1.xpose.msra.mxu0 %v795
    %829 = vmatprep.subr.mxu0 0.0
    %830 = vmatpush2.xpose.msra.mxu0 0.0
    %831 = vmatprep.subr.mxu0 0.0
    %832 = vmatpush2.xpose.msra.mxu0 0.0
    %833 = vmatprep.subr.mxu0 0.0
    %834 = vmatpush2.xpose.msra.mxu0 0.0
    %835 = vmatprep.subr.mxu0 0.0
    %836 = vmatpush2.xpose.msra.mxu0 0.0
    %837 = vmatprep.subr.mxu0 0.0
    %838 = vmatpush2.xpose.msra.mxu0 0.0
    %839 = vmatprep.subr.mxu0 0.0
    %840 = vmatpush2.xpose.msra.mxu0 0.0
    %841 = vmatprep.subr.mxu0 0.0
    %842 = vmatpush2.xpose.msra.mxu0 0.0
    %843 = vmatprep.subr.mxu0 0.0
    %844 = vmatpush2.xpose.msra.mxu0 0.0
    %845 = vmatprep.subr.mxu0 0.0
    %846 = vmatpush2.xpose.msra.mxu0 0.0
    %847 = vmatprep.subr.mxu0 0.0
    %848 = vmatpush2.xpose.msra.mxu0 0.0
    %849 = vmatprep.subr.mxu0 0.0
    %850 = vmatpush2.xpose.msra.mxu0 0.0
    %851 = vmatprep.subr.mxu0 0.0
    %852 = vmatpush2.xpose.msra.mxu0 0.0
    %853 = vmatprep.subr.mxu0 0.0
    %854 = vmatpush2.xpose.msra.mxu0 0.0
    %855 = vmatprep.subr.mxu0 0.0
    %856 = vmatpush2.xpose.msra.mxu0 0.0
    %857 = vmatprep.subr.mxu0 0.0
    %858 = vmatpush2.xpose.msra.mxu0 0.0
    %859 = vmatprep.subr.mxu0 0.0
    %860 = vmatpush2.xpose.msra.mxu0 0.0
    %861 = vmatprep.mubr.f32.mxu0 0.0
    %862 = vmatmul.mubr.f32.gmra.mxu0 %v793
    %v863 = vpop.f32.mrf.mxu0
    %v864 = vadd.f32 0.0, %v863
    %v865 = vpop.f32.mrf.mxu0
    %866 = vdwg.mxu0
    %v867 = vmul.f32 %v864, 0.35355338
    %v868 = vsel %vm294, %v867, -inf
    %869 = vmax.xlane.f32.xlu0 %v868
    %v870 = vpop.xlane.xlu0 %869
    %v871 = vsub.f32 %v867, %v870
    %v872 = vmul.f32 %v871, 1.442695
    %v873 = vpow.pop %v872
    %v874 = vsel %vm294, %v873, 0.0
    %875 = vadd.xlane.f32.xlu0 %v874
    %v876 = vpop.xlane.xlu0 %875
    %v877 = vrcp.pop %v876
    %v878 = vmul.f32 %v873, %v877
    %879 = vrot.lane.b32.xlu0 %v283, 40
    %v880 = vpop.permute.xlu0 %879
    %v883 = vsel %vm294, %v878, 0
    %885 = vmatprep.subr.mxu0 0.0
    %886 = vmatpush1.msra.mxu0 0.0
    %887 = vmatprep.subr.mxu0 0.0
    %888 = vmatpush1.msra.mxu0 0.0
    %889 = vmatprep.subr.mxu0 0.0
    %890 = vmatpush1.msra.mxu0 0.0
    %891 = vmatprep.subr.mxu0 0.0
    %892 = vmatpush1.msra.mxu0 0.0
    %893 = vmatprep.subr.mxu0 0.0
    %894 = vmatpush1.msra.mxu0 0.0
    %895 = vmatprep.subr.mxu0 0.0
    %896 = vmatpush1.msra.mxu0 0.0
    %897 = vmatprep.subr.mxu0 0.0
    %898 = vmatpush1.msra.mxu0 0.0
    %899 = vmatprep.subr.mxu0 0.0
    %900 = vmatpush1.msra.mxu0 0.0
    %901 = vmatprep.subr.mxu0 0.0
    %902 = vmatpush1.msra.mxu0 0.0
    %903 = vmatprep.subr.mxu0 0.0
    %904 = vmatpush1.msra.mxu0 0.0
    %905 = vmatprep.subr.mxu0 0.0
    %906 = vmatpush1.msra.mxu0 0.0
    %907 = vmatprep.subr.mxu0 0.0
    %908 = vmatpush1.msra.mxu0 0.0
    %909 = vmatprep.subr.mxu0 0.0
    %910 = vmatpush1.msra.mxu0 0.0
    %911 = vmatprep.subr.mxu0 0.0
    %912 = vmatpush1.msra.mxu0 0.0
    %913 = vmatprep.subr.mxu0 0.0
    %914 = vmatpush1.msra.mxu0 0.0
    %915 = vmatprep.subr.mxu0 0.0
    %916 = vmatpush1.msra.mxu0 %v880
    %917 = vmatprep.subr.mxu0 0.0
    %918 = vmatpush2.msra.mxu0 0.0
    %919 = vmatprep.subr.mxu0 0.0
    %920 = vmatpush2.msra.mxu0 0.0
    %921 = vmatprep.subr.mxu0 0.0
    %922 = vmatpush2.msra.mxu0 0.0
    %923 = vmatprep.subr.mxu0 0.0
    %924 = vmatpush2.msra.mxu0 0.0
    %925 = vmatprep.subr.mxu0 0.0
    %926 = vmatpush2.msra.mxu0 0.0
    %927 = vmatprep.subr.mxu0 0.0
    %928 = vmatpush2.msra.mxu0 0.0
    %929 = vmatprep.subr.mxu0 0.0
    %930 = vmatpush2.msra.mxu0 0.0
    %931 = vmatprep.subr.mxu0 0.0
    %932 = vmatpush2.msra.mxu0 0.0
    %933 = vmatprep.subr.mxu0 0.0
    %934 = vmatpush2.msra.mxu0 0.0
    %935 = vmatprep.subr.mxu0 0.0
    %936 = vmatpush2.msra.mxu0 0.0
    %937 = vmatprep.subr.mxu0 0.0
    %938 = vmatpush2.msra.mxu0 0.0
    %939 = vmatprep.subr.mxu0 0.0
    %940 = vmatpush2.msra.mxu0 0.0
    %941 = vmatprep.subr.mxu0 0.0
    %942 = vmatpush2.msra.mxu0 0.0
    %943 = vmatprep.subr.mxu0 0.0
    %944 = vmatpush2.msra.mxu0 0.0
    %945 = vmatprep.subr.mxu0 0.0
    %946 = vmatpush2.msra.mxu0 0.0
    %947 = vmatprep.subr.mxu0 0.0
    %948 = vmatpush2.msra.mxu0 0.0
    %949 = vmatprep.mubr.f32.mxu0 0.0
    %950 = vmatmul.mubr.f32.gmra.mxu0 %v883
    %v951 = vpop.f32.mrf.mxu0
    %v952 = vadd.f32 0.0, %v951
    %v953 = vpop.f32.mrf.mxu0
    %954 = vdwg.mxu0
    %956 = vrot.lane.b32.xlu0 %v620, 8
    %v957 = vpop.permute.xlu0 %956
    %960 = vrot.lane.b32.xlu0 %v786, 16
    %v961 = vpop.permute.xlu0 %960
    %964 = vrot.lane.b32.xlu0 %v952, 24
    %v965 = vpop.permute.xlu0 %964
    %v967 = vsel %vm294, %v454, %v957
    %vm968 = vcmask 130048
    %v969 = vsel %vm968, %v967, %v961
    %vm970 = vcmask 195584
    %v971 = vsel %vm970, %v969, %v965
    %973 = vrot.lane.b32.xlu0 %v288, 96
    %v974 = vpop.permute.xlu0 %973
    %v975 = vsel %vm294, %v288, 0
    %v977 = vsel %vm294, %v974, 0
    %979 = vmatprep.subr.mxu0 0.0
    %980 = vmatpush1.xpose.msra.mxu0 0.0
    %981 = vmatprep.subr.mxu0 0.0
    %982 = vmatpush1.xpose.msra.mxu0 0.0
    %983 = vmatprep.subr.mxu0 0.0
    %984 = vmatpush1.xpose.msra.mxu0 0.0
    %985 = vmatprep.subr.mxu0 0.0
    %986 = vmatpush1.xpose.msra.mxu0 0.0
    %987 = vmatprep.subr.mxu0 0.0
    %988 = vmatpush1.xpose.msra.mxu0 0.0
    %989 = vmatprep.subr.mxu0 0.0
    %990 = vmatpush1.xpose.msra.mxu0 0.0
    %991 = vmatprep.subr.mxu0 0.0
    %992 = vmatpush1.xpose.msra.mxu0 0.0
    %993 = vmatprep.subr.mxu0 0.0
    %994 = vmatpush1.xpose.msra.mxu0 0.0
    %995 = vmatprep.subr.mxu0 0.0
    %996 = vmatpush1.xpose.msra.mxu0 0.0
    %997 = vmatprep.subr.mxu0 0.0
    %998 = vmatpush1.xpose.msra.mxu0 0.0
    %999 = vmatprep.subr.mxu0 0.0
    %1000 = vmatpush1.xpose.msra.mxu0 0.0
    %1001 = vmatprep.subr.mxu0 0.0
    %1002 = vmatpush1.xpose.msra.mxu0 0.0
    %1003 = vmatprep.subr.mxu0 0.0
    %1004 = vmatpush1.xpose.msra.mxu0 0.0
    %1005 = vmatprep.subr.mxu0 0.0
    %1006 = vmatpush1.xpose.msra.mxu0 0.0
    %1007 = vmatprep.subr.mxu0 0.0
    %1008 = vmatpush1.xpose.msra.mxu0 0.0
    %1009 = vmatprep.subr.mxu0 0.0
    %1010 = vmatpush1.xpose.msra.mxu0 %v977
    %1011 = vmatprep.subr.mxu0 0.0
    %1012 = vmatpush2.xpose.msra.mxu0 0.0
    %1013 = vmatprep.subr.mxu0 0.0
    %1014 = vmatpush2.xpose.msra.mxu0 0.0
    %1015 = vmatprep.subr.mxu0 0.0
    %1016 = vmatpush2.xpose.msra.mxu0 0.0
    %1017 = vmatprep.subr.mxu0 0.0
    %1018 = vmatpush2.xpose.msra.mxu0 0.0
    %1019 = vmatprep.subr.mxu0 0.0
    %1020 = vmatpush2.xpose.msra.mxu0 0.0
    %1021 = vmatprep.subr.mxu0 0.0
    %1022 = vmatpush2.xpose.msra.mxu0 0.0
    %1023 = vmatprep.subr.mxu0 0.0
    %1024 = vmatpush2.xpose.msra.mxu0 0.0
    %1025 = vmatprep.subr.mxu0 0.0
    %1026 = vmatpush2.xpose.msra.mxu0 0.0
    %1027 = vmatprep.subr.mxu0 0.0
    %1028 = vmatpush2.xpose.msra.mxu0 0.0
    %1029 = vmatprep.subr.mxu0 0.0
    %1030 = vmatpush2.xpose.msra.mxu0 0.0
    %1031 = vmatprep.subr.mxu0 0.0
    %1032 = vmatpush2.xpose.msra.mxu0 0.0
    %1033 = vmatprep.subr.mxu0 0.0
    %1034 = vmatpush2.xpose.msra.mxu0 0.0
    %1035 = vmatprep.subr.mxu0 0.0
    %1036 = vmatpush2.xpose.msra.mxu0 0.0
    %1037 = vmatprep.subr.mxu0 0.0
    %1038 = vmatpush2.xpose.msra.mxu0 0.0
    %1039 = vmatprep.subr.mxu0 0.0
    %1040 = vmatpush2.xpose.msra.mxu0 0.0
    %1041 = vmatprep.subr.mxu0 0.0
    %1042 = vmatpush2.xpose.msra.mxu0 0.0
    %1043 = vmatprep.mubr.f32.mxu0 0.0
    %1044 = vmatmul.mubr.f32.gmra.mxu0 %v975
    %v1045 = vpop.f32.mrf.mxu0
    %v1046 = vadd.f32 0.0, %v1045
    %v1047 = vpop.f32.mrf.mxu0
    %1048 = vdwg.mxu0
    %v1049 = vmul.f32 %v1046, 0.35355338
    %v1050 = vsel %vm294, %v1049, -inf
    %1051 = vmax.xlane.f32.xlu0 %v1050
    %v1052 = vpop.xlane.xlu0 %1051
    %v1053 = vsub.f32 %v1049, %v1052
    %v1054 = vmul.f32 %v1053, 1.442695
    %v1055 = vpow.pop %v1054
    %v1056 = vsel %vm294, %v1055, 0.0
    %1057 = vadd.xlane.f32.xlu0 %v1056
    %v1058 = vpop.xlane.xlu0 %1057
    %v1059 = vrcp.pop %v1058
    %v1060 = vmul.f32 %v1055, %v1059
    %1061 = vrot.lane.b32.xlu0 %v288, 64
    %v1062 = vpop.permute.xlu0 %1061
    %v1065 = vsel %vm294, %v1060, 0
    %1067 = vmatprep.subr.mxu0 0.0
    %1068 = vmatpush1.msra.mxu0 0.0
    %1069 = vmatprep.subr.mxu0 0.0
    %1070 = vmatpush1.msra.mxu0 0.0
    %1071 = vmatprep.subr.mxu0 0.0
    %1072 = vmatpush1.msra.mxu0 0.0
    %1073 = vmatprep.subr.mxu0 0.0
    %1074 = vmatpush1.msra.mxu0 0.0
    %1075 = vmatprep.subr.mxu0 0.0
    %1076 = vmatpush1.msra.mxu0 0.0
    %1077 = vmatprep.subr.mxu0 0.0
    %1078 = vmatpush1.msra.mxu0 0.0
    %1079 = vmatprep.subr.mxu0 0.0
    %1080 = vmatpush1.msra.mxu0 0.0
    %1081 = vmatprep.subr.mxu0 0.0
    %1082 = vmatpush1.msra.mxu0 0.0
    %1083 = vmatprep.subr.mxu0 0.0
    %1084 = vmatpush1.msra.mxu0 0.0
    %1085 = vmatprep.subr.mxu0 0.0
    %1086 = vmatpush1.msra.mxu0 0.0
    %1087 = vmatprep.subr.mxu0 0.0
    %1088 = vmatpush1.msra.mxu0 0.0
    %1089 = vmatprep.subr.mxu0 0.0
    %1090 = vmatpush1.msra.mxu0 0.0
    %1091 = vmatprep.subr.mxu0 0.0
    %1092 = vmatpush1.msra.mxu0 0.0
    %1093 = vmatprep.subr.mxu0 0.0
    %1094 = vmatpush1.msra.mxu0 0.0
    %1095 = vmatprep.subr.mxu0 0.0
    %1096 = vmatpush1.msra.mxu0 0.0
    %1097 = vmatprep.subr.mxu0 0.0
    %1098 = vmatpush1.msra.mxu0 %v1062
    %1099 = vmatprep.subr.mxu0 0.0
    %1100 = vmatpush2.msra.mxu0 0.0
    %1101 = vmatprep.subr.mxu0 0.0
    %1102 = vmatpush2.msra.mxu0 0.0
    %1103 = vmatprep.subr.mxu0 0.0
    %1104 = vmatpush2.msra.mxu0 0.0
    %1105 = vmatprep.subr.mxu0 0.0
    %1106 = vmatpush2.msra.mxu0 0.0
    %1107 = vmatprep.subr.mxu0 0.0
    %1108 = vmatpush2.msra.mxu0 0.0
    %1109 = vmatprep.subr.mxu0 0.0
    %1110 = vmatpush2.msra.mxu0 0.0
    %1111 = vmatprep.subr.mxu0 0.0
    %1112 = vmatpush2.msra.mxu0 0.0
    %1113 = vmatprep.subr.mxu0 0.0
    %1114 = vmatpush2.msra.mxu0 0.0
    %1115 = vmatprep.subr.mxu0 0.0
    %1116 = vmatpush2.msra.mxu0 0.0
    %1117 = vmatprep.subr.mxu0 0.0
    %1118 = vmatpush2.msra.mxu0 0.0
    %1119 = vmatprep.subr.mxu0 0.0
    %1120 = vmatpush2.msra.mxu0 0.0
    %1121 = vmatprep.subr.mxu0 0.0
    %1122 = vmatpush2.msra.mxu0 0.0
    %1123 = vmatprep.subr.mxu0 0.0
    %1124 = vmatpush2.msra.mxu0 0.0
    %1125 = vmatprep.subr.mxu0 0.0
    %1126 = vmatpush2.msra.mxu0 0.0
    %1127 = vmatprep.subr.mxu0 0.0
    %1128 = vmatpush2.msra.mxu0 0.0
    %1129 = vmatprep.subr.mxu0 0.0
    %1130 = vmatpush2.msra.mxu0 0.0
    %1131 = vmatprep.mubr.f32.mxu0 0.0
    %1132 = vmatmul.mubr.f32.gmra.mxu0 %v1065
    %v1133 = vpop.f32.mrf.mxu0
    %v1134 = vadd.f32 0.0, %v1133
    %v1135 = vpop.f32.mrf.mxu0
    %1136 = vdwg.mxu0
    %1137 = vrot.lane.b32.xlu0 %v288, 120
    %v1138 = vpop.permute.xlu0 %1137
    %1139 = vrot.lane.b32.xlu0 %v288, 88
    %v1140 = vpop.permute.xlu0 %1139
    %v1141 = vsel %vm294, %v1138, 0
    %v1143 = vsel %vm294, %v1140, 0
    %1145 = vmatprep.subr.mxu0 0.0
    %1146 = vmatpush1.xpose.msra.mxu0 0.0
    %1147 = vmatprep.subr.mxu0 0.0
    %1148 = vmatpush1.xpose.msra.mxu0 0.0
    %1149 = vmatprep.subr.mxu0 0.0
    %1150 = vmatpush1.xpose.msra.mxu0 0.0
    %1151 = vmatprep.subr.mxu0 0.0
    %1152 = vmatpush1.xpose.msra.mxu0 0.0
    %1153 = vmatprep.subr.mxu0 0.0
    %1154 = vmatpush1.xpose.msra.mxu0 0.0
    %1155 = vmatprep.subr.mxu0 0.0
    %1156 = vmatpush1.xpose.msra.mxu0 0.0
    %1157 = vmatprep.subr.mxu0 0.0
    %1158 = vmatpush1.xpose.msra.mxu0 0.0
    %1159 = vmatprep.subr.mxu0 0.0
    %1160 = vmatpush1.xpose.msra.mxu0 0.0
    %1161 = vmatprep.subr.mxu0 0.0
    %1162 = vmatpush1.xpose.msra.mxu0 0.0
    %1163 = vmatprep.subr.mxu0 0.0
    %1164 = vmatpush1.xpose.msra.mxu0 0.0
    %1165 = vmatprep.subr.mxu0 0.0
    %1166 = vmatpush1.xpose.msra.mxu0 0.0
    %1167 = vmatprep.subr.mxu0 0.0
    %1168 = vmatpush1.xpose.msra.mxu0 0.0
    %1169 = vmatprep.subr.mxu0 0.0
    %1170 = vmatpush1.xpose.msra.mxu0 0.0
    %1171 = vmatprep.subr.mxu0 0.0
    %1172 = vmatpush1.xpose.msra.mxu0 0.0
    %1173 = vmatprep.subr.mxu0 0.0
    %1174 = vmatpush1.xpose.msra.mxu0 0.0
    %1175 = vmatprep.subr.mxu0 0.0
    %1176 = vmatpush1.xpose.msra.mxu0 %v1143
    %1177 = vmatprep.subr.mxu0 0.0
    %1178 = vmatpush2.xpose.msra.mxu0 0.0
    %1179 = vmatprep.subr.mxu0 0.0
    %1180 = vmatpush2.xpose.msra.mxu0 0.0
    %1181 = vmatprep.subr.mxu0 0.0
    %1182 = vmatpush2.xpose.msra.mxu0 0.0
    %1183 = vmatprep.subr.mxu0 0.0
    %1184 = vmatpush2.xpose.msra.mxu0 0.0
    %1185 = vmatprep.subr.mxu0 0.0
    %1186 = vmatpush2.xpose.msra.mxu0 0.0
    %1187 = vmatprep.subr.mxu0 0.0
    %1188 = vmatpush2.xpose.msra.mxu0 0.0
    %1189 = vmatprep.subr.mxu0 0.0
    %1190 = vmatpush2.xpose.msra.mxu0 0.0
    %1191 = vmatprep.subr.mxu0 0.0
    %1192 = vmatpush2.xpose.msra.mxu0 0.0
    %1193 = vmatprep.subr.mxu0 0.0
    %1194 = vmatpush2.xpose.msra.mxu0 0.0
    %1195 = vmatprep.subr.mxu0 0.0
    %1196 = vmatpush2.xpose.msra.mxu0 0.0
    %1197 = vmatprep.subr.mxu0 0.0
    %1198 = vmatpush2.xpose.msra.mxu0 0.0
    %1199 = vmatprep.subr.mxu0 0.0
    %1200 = vmatpush2.xpose.msra.mxu0 0.0
    %1201 = vmatprep.subr.mxu0 0.0
    %1202 = vmatpush2.xpose.msra.mxu0 0.0
    %1203 = vmatprep.subr.mxu0 0.0
    %1204 = vmatpush2.xpose.msra.mxu0 0.0
    %1205 = vmatprep.subr.mxu0 0.0
    %1206 = vmatpush2.xpose.msra.mxu0 0.0
    %1207 = vmatprep.subr.mxu0 0.0
    %1208 = vmatpush2.xpose.msra.mxu0 0.0
    %1209 = vmatprep.mubr.f32.mxu0 0.0
    %1210 = vmatmul.mubr.f32.gmra.mxu0 %v1141
    %v1211 = vpop.f32.mrf.mxu0
    %v1212 = vadd.f32 0.0, %v1211
    %v1213 = vpop.f32.mrf.mxu0
    %1214 = vdwg.mxu0
    %v1215 = vmul.f32 %v1212, 0.35355338
    %v1216 = vsel %vm294, %v1215, -inf
    %1217 = vmax.xlane.f32.xlu0 %v1216
    %v1218 = vpop.xlane.xlu0 %1217
    %v1219 = vsub.f32 %v1215, %v1218
    %v1220 = vmul.f32 %v1219, 1.442695
    %v1221 = vpow.pop %v1220
    %v1222 = vsel %vm294, %v1221, 0.0
    %1223 = vadd.xlane.f32.xlu0 %v1222
    %v1224 = vpop.xlane.xlu0 %1223
    %v1225 = vrcp.pop %v1224
    %v1226 = vmul.f32 %v1221, %v1225
    %1227 = vrot.lane.b32.xlu0 %v288, 56
    %v1228 = vpop.permute.xlu0 %1227
    %v1231 = vsel %vm294, %v1226, 0
    %1233 = vmatprep.subr.mxu0 0.0
    %1234 = vmatpush1.msra.mxu0 0.0
    %1235 = vmatprep.subr.mxu0 0.0
    %1236 = vmatpush1.msra.mxu0 0.0
    %1237 = vmatprep.subr.mxu0 0.0
    %1238 = vmatpush1.msra.mxu0 0.0
    %1239 = vmatprep.subr.mxu0 0.0
    %1240 = vmatpush1.msra.mxu0 0.0
    %1241 = vmatprep.subr.mxu0 0.0
    %1242 = vmatpush1.msra.mxu0 0.0
    %1243 = vmatprep.subr.mxu0 0.0
    %1244 = vmatpush1.msra.mxu0 0.0
    %1245 = vmatprep.subr.mxu0 0.0
    %1246 = vmatpush1.msra.mxu0 0.0
    %1247 = vmatprep.subr.mxu0 0.0
    %1248 = vmatpush1.msra.mxu0 0.0
    %1249 = vmatprep.subr.mxu0 0.0
    %1250 = vmatpush1.msra.mxu0 0.0
    %1251 = vmatprep.subr.mxu0 0.0
    %1252 = vmatpush1.msra.mxu0 0.0
    %1253 = vmatprep.subr.mxu0 0.0
    %1254 = vmatpush1.msra.mxu0 0.0
    %1255 = vmatprep.subr.mxu0 0.0
    %1256 = vmatpush1.msra.mxu0 0.0
    %1257 = vmatprep.subr.mxu0 0.0
    %1258 = vmatpush1.msra.mxu0 0.0
    %1259 = vmatprep.subr.mxu0 0.0
    %1260 = vmatpush1.msra.mxu0 0.0
    %1261 = vmatprep.subr.mxu0 0.0
    %1262 = vmatpush1.msra.mxu0 0.0
    %1263 = vmatprep.subr.mxu0 0.0
    %1264 = vmatpush1.msra.mxu0 %v1228
    %1265 = vmatprep.subr.mxu0 0.0
    %1266 = vmatpush2.msra.mxu0 0.0
    %1267 = vmatprep.subr.mxu0 0.0
    %1268 = vmatpush2.msra.mxu0 0.0
    %1269 = vmatprep.subr.mxu0 0.0
    %1270 = vmatpush2.msra.mxu0 0.0
    %1271 = vmatprep.subr.mxu0 0.0
    %1272 = vmatpush2.msra.mxu0 0.0
    %1273 = vmatprep.subr.mxu0 0.0
    %1274 = vmatpush2.msra.mxu0 0.0
    %1275 = vmatprep.subr.mxu0 0.0
    %1276 = vmatpush2.msra.mxu0 0.0
    %1277 = vmatprep.subr.mxu0 0.0
    %1278 = vmatpush2.msra.mxu0 0.0
    %1279 = vmatprep.subr.mxu0 0.0
    %1280 = vmatpush2.msra.mxu0 0.0
    %1281 = vmatprep.subr.mxu0 0.0
    %1282 = vmatpush2.msra.mxu0 0.0
    %1283 = vmatprep.subr.mxu0 0.0
    %1284 = vmatpush2.msra.mxu0 0.0
    %1285 = vmatprep.subr.mxu0 0.0
    %1286 = vmatpush2.msra.mxu0 0.0
    %1287 = vmatprep.subr.mxu0 0.0
    %1288 = vmatpush2.msra.mxu0 0.0
    %1289 = vmatprep.subr.mxu0 0.0
    %1290 = vmatpush2.msra.mxu0 0.0
    %1291 = vmatprep.subr.mxu0 0.0
    %1292 = vmatpush2.msra.mxu0 0.0
    %1293 = vmatprep.subr.mxu0 0.0
    %1294 = vmatpush2.msra.mxu0 0.0
    %1295 = vmatprep.subr.mxu0 0.0
    %1296 = vmatpush2.msra.mxu0 0.0
    %1297 = vmatprep.mubr.f32.mxu0 0.0
    %1298 = vmatmul.mubr.f32.gmra.mxu0 %v1231
    %v1299 = vpop.f32.mrf.mxu0
    %v1300 = vadd.f32 0.0, %v1299
    %v1301 = vpop.f32.mrf.mxu0
    %1302 = vdwg.mxu0
    %1303 = vrot.lane.b32.xlu0 %v288, 112
    %v1304 = vpop.permute.xlu0 %1303
    %1305 = vrot.lane.b32.xlu0 %v288, 80
    %v1306 = vpop.permute.xlu0 %1305
    %v1307 = vsel %vm294, %v1304, 0
    %v1309 = vsel %vm294, %v1306, 0
    %1311 = vmatprep.subr.mxu0 0.0
    %1312 = vmatpush1.xpose.msra.mxu0 0.0
    %1313 = vmatprep.subr.mxu0 0.0
    %1314 = vmatpush1.xpose.msra.mxu0 0.0
    %1315 = vmatprep.subr.mxu0 0.0
    %1316 = vmatpush1.xpose.msra.mxu0 0.0
    %1317 = vmatprep.subr.mxu0 0.0
    %1318 = vmatpush1.xpose.msra.mxu0 0.0
    %1319 = vmatprep.subr.mxu0 0.0
    %1320 = vmatpush1.xpose.msra.mxu0 0.0
    %1321 = vmatprep.subr.mxu0 0.0
    %1322 = vmatpush1.xpose.msra.mxu0 0.0
    %1323 = vmatprep.subr.mxu0 0.0
    %1324 = vmatpush1.xpose.msra.mxu0 0.0
    %1325 = vmatprep.subr.mxu0 0.0
    %1326 = vmatpush1.xpose.msra.mxu0 0.0
    %1327 = vmatprep.subr.mxu0 0.0
    %1328 = vmatpush1.xpose.msra.mxu0 0.0
    %1329 = vmatprep.subr.mxu0 0.0
    %1330 = vmatpush1.xpose.msra.mxu0 0.0
    %1331 = vmatprep.subr.mxu0 0.0
    %1332 = vmatpush1.xpose.msra.mxu0 0.0
    %1333 = vmatprep.subr.mxu0 0.0
    %1334 = vmatpush1.xpose.msra.mxu0 0.0
    %1335 = vmatprep.subr.mxu0 0.0
    %1336 = vmatpush1.xpose.msra.mxu0 0.0
    %1337 = vmatprep.subr.mxu0 0.0
    %1338 = vmatpush1.xpose.msra.mxu0 0.0
    %1339 = vmatprep.subr.mxu0 0.0
    %1340 = vmatpush1.xpose.msra.mxu0 0.0
    %1341 = vmatprep.subr.mxu0 0.0
    %1342 = vmatpush1.xpose.msra.mxu0 %v1309
    %1343 = vmatprep.subr.mxu0 0.0
    %1344 = vmatpush2.xpose.msra.mxu0 0.0
    %1345 = vmatprep.subr.mxu0 0.0
    %1346 = vmatpush2.xpose.msra.mxu0 0.0
    %1347 = vmatprep.subr.mxu0 0.0
    %1348 = vmatpush2.xpose.msra.mxu0 0.0
    %1349 = vmatprep.subr.mxu0 0.0
    %1350 = vmatpush2.xpose.msra.mxu0 0.0
    %1351 = vmatprep.subr.mxu0 0.0
    %1352 = vmatpush2.xpose.msra.mxu0 0.0
    %1353 = vmatprep.subr.mxu0 0.0
    %1354 = vmatpush2.xpose.msra.mxu0 0.0
    %1355 = vmatprep.subr.mxu0 0.0
    %1356 = vmatpush2.xpose.msra.mxu0 0.0
    %1357 = vmatprep.subr.mxu0 0.0
    %1358 = vmatpush2.xpose.msra.mxu0 0.0
    %1359 = vmatprep.subr.mxu0 0.0
    %1360 = vmatpush2.xpose.msra.mxu0 0.0
    %1361 = vmatprep.subr.mxu0 0.0
    %1362 = vmatpush2.xpose.msra.mxu0 0.0
    %1363 = vmatprep.subr.mxu0 0.0
    %1364 = vmatpush2.xpose.msra.mxu0 0.0
    %1365 = vmatprep.subr.mxu0 0.0
    %1366 = vmatpush2.xpose.msra.mxu0 0.0
    %1367 = vmatprep.subr.mxu0 0.0
    %1368 = vmatpush2.xpose.msra.mxu0 0.0
    %1369 = vmatprep.subr.mxu0 0.0
    %1370 = vmatpush2.xpose.msra.mxu0 0.0
    %1371 = vmatprep.subr.mxu0 0.0
    %1372 = vmatpush2.xpose.msra.mxu0 0.0
    %1373 = vmatprep.subr.mxu0 0.0
    %1374 = vmatpush2.xpose.msra.mxu0 0.0
    %1375 = vmatprep.mubr.f32.mxu0 0.0
    %1376 = vmatmul.mubr.f32.gmra.mxu0 %v1307
    %v1377 = vpop.f32.mrf.mxu0
    %v1378 = vadd.f32 0.0, %v1377
    %v1379 = vpop.f32.mrf.mxu0
    %1380 = vdwg.mxu0
    %v1381 = vmul.f32 %v1378, 0.35355338
    %v1382 = vsel %vm294, %v1381, -inf
    %1383 = vmax.xlane.f32.xlu0 %v1382
    %v1384 = vpop.xlane.xlu0 %1383
    %v1385 = vsub.f32 %v1381, %v1384
    %v1386 = vmul.f32 %v1385, 1.442695
    %v1387 = vpow.pop %v1386
    %v1388 = vsel %vm294, %v1387, 0.0
    %1389 = vadd.xlane.f32.xlu0 %v1388
    %v1390 = vpop.xlane.xlu0 %1389
    %v1391 = vrcp.pop %v1390
    %v1392 = vmul.f32 %v1387, %v1391
    %1393 = vrot.lane.b32.xlu0 %v288, 48
    %v1394 = vpop.permute.xlu0 %1393
    %v1397 = vsel %vm294, %v1392, 0
    %1399 = vmatprep.subr.mxu0 0.0
    %1400 = vmatpush1.msra.mxu0 0.0
    %1401 = vmatprep.subr.mxu0 0.0
    %1402 = vmatpush1.msra.mxu0 0.0
    %1403 = vmatprep.subr.mxu0 0.0
    %1404 = vmatpush1.msra.mxu0 0.0
    %1405 = vmatprep.subr.mxu0 0.0
    %1406 = vmatpush1.msra.mxu0 0.0
    %1407 = vmatprep.subr.mxu0 0.0
    %1408 = vmatpush1.msra.mxu0 0.0
    %1409 = vmatprep.subr.mxu0 0.0
    %1410 = vmatpush1.msra.mxu0 0.0
    %1411 = vmatprep.subr.mxu0 0.0
    %1412 = vmatpush1.msra.mxu0 0.0
    %1413 = vmatprep.subr.mxu0 0.0
    %1414 = vmatpush1.msra.mxu0 0.0
    %1415 = vmatprep.subr.mxu0 0.0
    %1416 = vmatpush1.msra.mxu0 0.0
    %1417 = vmatprep.subr.mxu0 0.0
    %1418 = vmatpush1.msra.mxu0 0.0
    %1419 = vmatprep.subr.mxu0 0.0
    %1420 = vmatpush1.msra.mxu0 0.0
    %1421 = vmatprep.subr.mxu0 0.0
    %1422 = vmatpush1.msra.mxu0 0.0
    %1423 = vmatprep.subr.mxu0 0.0
    %1424 = vmatpush1.msra.mxu0 0.0
    %1425 = vmatprep.subr.mxu0 0.0
    %1426 = vmatpush1.msra.mxu0 0.0
    %1427 = vmatprep.subr.mxu0 0.0
    %1428 = vmatpush1.msra.mxu0 0.0
    %1429 = vmatprep.subr.mxu0 0.0
    %1430 = vmatpush1.msra.mxu0 %v1394
    %1431 = vmatprep.subr.mxu0 0.0
    %1432 = vmatpush2.msra.mxu0 0.0
    %1433 = vmatprep.subr.mxu0 0.0
    %1434 = vmatpush2.msra.mxu0 0.0
    %1435 = vmatprep.subr.mxu0 0.0
    %1436 = vmatpush2.msra.mxu0 0.0
    %1437 = vmatprep.subr.mxu0 0.0
    %1438 = vmatpush2.msra.mxu0 0.0
    %1439 = vmatprep.subr.mxu0 0.0
    %1440 = vmatpush2.msra.mxu0 0.0
    %1441 = vmatprep.subr.mxu0 0.0
    %1442 = vmatpush2.msra.mxu0 0.0
    %1443 = vmatprep.subr.mxu0 0.0
    %1444 = vmatpush2.msra.mxu0 0.0
    %1445 = vmatprep.subr.mxu0 0.0
    %1446 = vmatpush2.msra.mxu0 0.0
    %1447 = vmatprep.subr.mxu0 0.0
    %1448 = vmatpush2.msra.mxu0 0.0
    %1449 = vmatprep.subr.mxu0 0.0
    %1450 = vmatpush2.msra.mxu0 0.0
    %1451 = vmatprep.subr.mxu0 0.0
    %1452 = vmatpush2.msra.mxu0 0.0
    %1453 = vmatprep.subr.mxu0 0.0
    %1454 = vmatpush2.msra.mxu0 0.0
    %1455 = vmatprep.subr.mxu0 0.0
    %1456 = vmatpush2.msra.mxu0 0.0
    %1457 = vmatprep.subr.mxu0 0.0
    %1458 = vmatpush2.msra.mxu0 0.0
    %1459 = vmatprep.subr.mxu0 0.0
    %1460 = vmatpush2.msra.mxu0 0.0
    %1461 = vmatprep.subr.mxu0 0.0
    %1462 = vmatpush2.msra.mxu0 0.0
    %1463 = vmatprep.mubr.f32.mxu0 0.0
    %1464 = vmatmul.mubr.f32.gmra.mxu0 %v1397
    %v1465 = vpop.f32.mrf.mxu0
    %v1466 = vadd.f32 0.0, %v1465
    %v1467 = vpop.f32.mrf.mxu0
    %1468 = vdwg.mxu0
    %1469 = vrot.lane.b32.xlu0 %v288, 104
    %v1470 = vpop.permute.xlu0 %1469
    %1471 = vrot.lane.b32.xlu0 %v288, 72
    %v1472 = vpop.permute.xlu0 %1471
    %v1473 = vsel %vm294, %v1470, 0
    %v1475 = vsel %vm294, %v1472, 0
    %1477 = vmatprep.subr.mxu0 0.0
    %1478 = vmatpush1.xpose.msra.mxu0 0.0
    %1479 = vmatprep.subr.mxu0 0.0
    %1480 = vmatpush1.xpose.msra.mxu0 0.0
    %1481 = vmatprep.subr.mxu0 0.0
    %1482 = vmatpush1.xpose.msra.mxu0 0.0
    %1483 = vmatprep.subr.mxu0 0.0
    %1484 = vmatpush1.xpose.msra.mxu0 0.0
    %1485 = vmatprep.subr.mxu0 0.0
    %1486 = vmatpush1.xpose.msra.mxu0 0.0
    %1487 = vmatprep.subr.mxu0 0.0
    %1488 = vmatpush1.xpose.msra.mxu0 0.0
    %1489 = vmatprep.subr.mxu0 0.0
    %1490 = vmatpush1.xpose.msra.mxu0 0.0
    %1491 = vmatprep.subr.mxu0 0.0
    %1492 = vmatpush1.xpose.msra.mxu0 0.0
    %1493 = vmatprep.subr.mxu0 0.0
    %1494 = vmatpush1.xpose.msra.mxu0 0.0
    %1495 = vmatprep.subr.mxu0 0.0
    %1496 = vmatpush1.xpose.msra.mxu0 0.0
    %1497 = vmatprep.subr.mxu0 0.0
    %1498 = vmatpush1.xpose.msra.mxu0 0.0
    %1499 = vmatprep.subr.mxu0 0.0
    %1500 = vmatpush1.xpose.msra.mxu0 0.0
    %1501 = vmatprep.subr.mxu0 0.0
    %1502 = vmatpush1.xpose.msra.mxu0 0.0
    %1503 = vmatprep.subr.mxu0 0.0
    %1504 = vmatpush1.xpose.msra.mxu0 0.0
    %1505 = vmatprep.subr.mxu0 0.0
    %1506 = vmatpush1.xpose.msra.mxu0 0.0
    %1507 = vmatprep.subr.mxu0 0.0
    %1508 = vmatpush1.xpose.msra.mxu0 %v1475
    %1509 = vmatprep.subr.mxu0 0.0
    %1510 = vmatpush2.xpose.msra.mxu0 0.0
    %1511 = vmatprep.subr.mxu0 0.0
    %1512 = vmatpush2.xpose.msra.mxu0 0.0
    %1513 = vmatprep.subr.mxu0 0.0
    %1514 = vmatpush2.xpose.msra.mxu0 0.0
    %1515 = vmatprep.subr.mxu0 0.0
    %1516 = vmatpush2.xpose.msra.mxu0 0.0
    %1517 = vmatprep.subr.mxu0 0.0
    %1518 = vmatpush2.xpose.msra.mxu0 0.0
    %1519 = vmatprep.subr.mxu0 0.0
    %1520 = vmatpush2.xpose.msra.mxu0 0.0
    %1521 = vmatprep.subr.mxu0 0.0
    %1522 = vmatpush2.xpose.msra.mxu0 0.0
    %1523 = vmatprep.subr.mxu0 0.0
    %1524 = vmatpush2.xpose.msra.mxu0 0.0
    %1525 = vmatprep.subr.mxu0 0.0
    %1526 = vmatpush2.xpose.msra.mxu0 0.0
    %1527 = vmatprep.subr.mxu0 0.0
    %1528 = vmatpush2.xpose.msra.mxu0 0.0
    %1529 = vmatprep.subr.mxu0 0.0
    %1530 = vmatpush2.xpose.msra.mxu0 0.0
    %1531 = vmatprep.subr.mxu0 0.0
    %1532 = vmatpush2.xpose.msra.mxu0 0.0
    %1533 = vmatprep.subr.mxu0 0.0
    %1534 = vmatpush2.xpose.msra.mxu0 0.0
    %1535 = vmatprep.subr.mxu0 0.0
    %1536 = vmatpush2.xpose.msra.mxu0 0.0
    %1537 = vmatprep.subr.mxu0 0.0
    %1538 = vmatpush2.xpose.msra.mxu0 0.0
    %1539 = vmatprep.subr.mxu0 0.0
    %1540 = vmatpush2.xpose.msra.mxu0 0.0
    %1541 = vmatprep.mubr.f32.mxu0 0.0
    %1542 = vmatmul.mubr.f32.gmra.mxu0 %v1473
    %v1543 = vpop.f32.mrf.mxu0
    %v1544 = vadd.f32 0.0, %v1543
    %v1545 = vpop.f32.mrf.mxu0
    %1546 = vdwg.mxu0
    %v1547 = vmul.f32 %v1544, 0.35355338
    %v1548 = vsel %vm294, %v1547, -inf
    %1549 = vmax.xlane.f32.xlu0 %v1548
    %v1550 = vpop.xlane.xlu0 %1549
    %v1551 = vsub.f32 %v1547, %v1550
    %v1552 = vmul.f32 %v1551, 1.442695
    %v1553 = vpow.pop %v1552
    %v1554 = vsel %vm294, %v1553, 0.0
    %1555 = vadd.xlane.f32.xlu0 %v1554
    %v1556 = vpop.xlane.xlu0 %1555
    %v1557 = vrcp.pop %v1556
    %v1558 = vmul.f32 %v1553, %v1557
    %1559 = vrot.lane.b32.xlu0 %v288, 40
    %v1560 = vpop.permute.xlu0 %1559
    %v1563 = vsel %vm294, %v1558, 0
    %1565 = vmatprep.subr.mxu0 0.0
    %1566 = vmatpush1.msra.mxu0 0.0
    %1567 = vmatprep.subr.mxu0 0.0
    %1568 = vmatpush1.msra.mxu0 0.0
    %1569 = vmatprep.subr.mxu0 0.0
    %1570 = vmatpush1.msra.mxu0 0.0
    %1571 = vmatprep.subr.mxu0 0.0
    %1572 = vmatpush1.msra.mxu0 0.0
    %1573 = vmatprep.subr.mxu0 0.0
    %1574 = vmatpush1.msra.mxu0 0.0
    %1575 = vmatprep.subr.mxu0 0.0
    %1576 = vmatpush1.msra.mxu0 0.0
    %1577 = vmatprep.subr.mxu0 0.0
    %1578 = vmatpush1.msra.mxu0 0.0
    %1579 = vmatprep.subr.mxu0 0.0
    %1580 = vmatpush1.msra.mxu0 0.0
    %1581 = vmatprep.subr.mxu0 0.0
    %1582 = vmatpush1.msra.mxu0 0.0
    %1583 = vmatprep.subr.mxu0 0.0
    %1584 = vmatpush1.msra.mxu0 0.0
    %1585 = vmatprep.subr.mxu0 0.0
    %1586 = vmatpush1.msra.mxu0 0.0
    %1587 = vmatprep.subr.mxu0 0.0
    %1588 = vmatpush1.msra.mxu0 0.0
    %1589 = vmatprep.subr.mxu0 0.0
    %1590 = vmatpush1.msra.mxu0 0.0
    %1591 = vmatprep.subr.mxu0 0.0
    %1592 = vmatpush1.msra.mxu0 0.0
    %1593 = vmatprep.subr.mxu0 0.0
    %1594 = vmatpush1.msra.mxu0 0.0
    %1595 = vmatprep.subr.mxu0 0.0
    %1596 = vmatpush1.msra.mxu0 %v1560
    %1597 = vmatprep.subr.mxu0 0.0
    %1598 = vmatpush2.msra.mxu0 0.0
    %1599 = vmatprep.subr.mxu0 0.0
    %1600 = vmatpush2.msra.mxu0 0.0
    %1601 = vmatprep.subr.mxu0 0.0
    %1602 = vmatpush2.msra.mxu0 0.0
    %1603 = vmatprep.subr.mxu0 0.0
    %1604 = vmatpush2.msra.mxu0 0.0
    %1605 = vmatprep.subr.mxu0 0.0
    %1606 = vmatpush2.msra.mxu0 0.0
    %1607 = vmatprep.subr.mxu0 0.0
    %1608 = vmatpush2.msra.mxu0 0.0
    %1609 = vmatprep.subr.mxu0 0.0
    %1610 = vmatpush2.msra.mxu0 0.0
    %1611 = vmatprep.subr.mxu0 0.0
    %1612 = vmatpush2.msra.mxu0 0.0
    %1613 = vmatprep.subr.mxu0 0.0
    %1614 = vmatpush2.msra.mxu0 0.0
    %1615 = vmatprep.subr.mxu0 0.0
    %1616 = vmatpush2.msra.mxu0 0.0
    %1617 = vmatprep.subr.mxu0 0.0
    %1618 = vmatpush2.msra.mxu0 0.0
    %1619 = vmatprep.subr.mxu0 0.0
    %1620 = vmatpush2.msra.mxu0 0.0
    %1621 = vmatprep.subr.mxu0 0.0
    %1622 = vmatpush2.msra.mxu0 0.0
    %1623 = vmatprep.subr.mxu0 0.0
    %1624 = vmatpush2.msra.mxu0 0.0
    %1625 = vmatprep.subr.mxu0 0.0
    %1626 = vmatpush2.msra.mxu0 0.0
    %1627 = vmatprep.subr.mxu0 0.0
    %1628 = vmatpush2.msra.mxu0 0.0
    %1629 = vmatprep.mubr.f32.mxu0 0.0
    %1630 = vmatmul.mubr.f32.gmra.mxu0 %v1563
    %v1631 = vpop.f32.mrf.mxu0
    %v1632 = vadd.f32 0.0, %v1631
    %v1633 = vpop.f32.mrf.mxu0
    %1634 = vdwg.mxu0
    %1636 = vrot.lane.b32.xlu0 %v1300, 8
    %v1637 = vpop.permute.xlu0 %1636
    %1640 = vrot.lane.b32.xlu0 %v1466, 16
    %v1641 = vpop.permute.xlu0 %1640
    %1644 = vrot.lane.b32.xlu0 %v1632, 24
    %v1645 = vpop.permute.xlu0 %1644
    %v1647 = vsel %vm294, %v1134, %v1637
    %v1648 = vsel %vm968, %v1647, %v1641
    %v1649 = vsel %vm970, %v1648, %v1645
    %v1650 = vld [vmem:[%s15] sm:$0xff]
    %v1651 = vld [vmem:[%s15 + $0x8] sm:$0xff]
    %v1652 = vld [vmem:[%s15 + $0x10] sm:$0xff]
    %v1653 = vld [vmem:[%s15 + $0x18] sm:$0xff]
    %v1654 = vld [vmem:[%s17] sm:$0x1]
    %v1656 = vlaneseq
    %v1657 = vshrl.u32 %v1656, 7
    %v1658 = vsub.s32 0, %v1657
    %v1659 = vrot.slane %v1654, %v1658
    %v1662 = vsel %vm155, %v971, 0
    %v1665 = vsel %vm155, %v1649, 0
    %1667 = vmatprep.subr.mxu0 0.0
    %1668 = vmatpush1.msra.mxu0 0.0
    %1669 = vmatprep.subr.mxu0 0.0
    %1670 = vmatpush1.msra.mxu0 0.0
    %1671 = vmatprep.subr.mxu0 0.0
    %1672 = vmatpush1.msra.mxu0 0.0
    %1673 = vmatprep.subr.mxu0 0.0
    %1674 = vmatpush1.msra.mxu0 0.0
    %1675 = vmatprep.subr.mxu0 0.0
    %1676 = vmatpush1.msra.mxu0 0.0
    %1677 = vmatprep.subr.mxu0 0.0
    %1678 = vmatpush1.msra.mxu0 0.0
    %1679 = vmatprep.subr.mxu0 0.0
    %1680 = vmatpush1.msra.mxu0 0.0
    %1681 = vmatprep.subr.mxu0 0.0
    %1682 = vmatpush1.msra.mxu0 0.0
    %1683 = vmatprep.subr.mxu0 0.0
    %1684 = vmatpush1.msra.mxu0 0.0
    %1685 = vmatprep.subr.mxu0 0.0
    %1686 = vmatpush1.msra.mxu0 0.0
    %1687 = vmatprep.subr.mxu0 0.0
    %1688 = vmatpush1.msra.mxu0 0.0
    %1689 = vmatprep.subr.mxu0 0.0
    %1690 = vmatpush1.msra.mxu0 0.0
    %1691 = vmatprep.subr.mxu0 0.0
    %1692 = vmatpush1.msra.mxu0 %v1653
    %1693 = vmatprep.subr.mxu0 0.0
    %1694 = vmatpush1.msra.mxu0 %v1652
    %1695 = vmatprep.subr.mxu0 0.0
    %1696 = vmatpush1.msra.mxu0 %v1651
    %1697 = vmatprep.subr.mxu0 0.0
    %1698 = vmatpush1.msra.mxu0 %v1650
    %1699 = vmatprep.subr.mxu0 0.0
    %1700 = vmatpush2.msra.mxu0 0.0
    %1701 = vmatprep.subr.mxu0 0.0
    %1702 = vmatpush2.msra.mxu0 0.0
    %1703 = vmatprep.subr.mxu0 0.0
    %1704 = vmatpush2.msra.mxu0 0.0
    %1705 = vmatprep.subr.mxu0 0.0
    %1706 = vmatpush2.msra.mxu0 0.0
    %1707 = vmatprep.subr.mxu0 0.0
    %1708 = vmatpush2.msra.mxu0 0.0
    %1709 = vmatprep.subr.mxu0 0.0
    %1710 = vmatpush2.msra.mxu0 0.0
    %1711 = vmatprep.subr.mxu0 0.0
    %1712 = vmatpush2.msra.mxu0 0.0
    %1713 = vmatprep.subr.mxu0 0.0
    %1714 = vmatpush2.msra.mxu0 0.0
    %1715 = vmatprep.subr.mxu0 0.0
    %1716 = vmatpush2.msra.mxu0 0.0
    %1717 = vmatprep.subr.mxu0 0.0
    %1718 = vmatpush2.msra.mxu0 0.0
    %1719 = vmatprep.subr.mxu0 0.0
    %1720 = vmatpush2.msra.mxu0 0.0
    %1721 = vmatprep.subr.mxu0 0.0
    %1722 = vmatpush2.msra.mxu0 0.0
    %1723 = vmatprep.subr.mxu0 0.0
    %1724 = vmatpush2.msra.mxu0 0.0
    %1725 = vmatprep.subr.mxu0 0.0
    %1726 = vmatpush2.msra.mxu0 0.0
    %1727 = vmatprep.subr.mxu0 0.0
    %1728 = vmatpush2.msra.mxu0 0.0
    %1729 = vmatprep.subr.mxu0 0.0
    %1730 = vmatpush2.msra.mxu0 0.0
    %1731 = vmatprep.mubr.f32.mxu0 0.0
    %1732 = vmatmul.mubr.f32.gmra.mxu0 %v1662
    %v1733 = vpop.f32.mrf.mxu0
    %v1734 = vadd.f32 %v1659, %v1733
    %v1735 = vpop.f32.mrf.mxu0
    %1736 = vmatprep.mubr.f32.mxu0 0.0
    %1737 = vmatmul.mubr.f32.gmra.mxu0 %v1665
    %v1738 = vpop.f32.mrf.mxu0
    %v1739 = vadd.f32 %v1659, %v1738
    %v1740 = vpop.f32.mrf.mxu0
    %1741 = vdwg.mxu0
    %v1742 = vadd.f32 %v1734, %v197
    %v1743 = vadd.f32 %v1739, %v198
    %v1744 = vld [vmem:[%s19] sm:$0x1]
    %v1745 = vld [vmem:[%s21] sm:$0x1]
    %v1746 = vsel %vm155, %v1742, 0.0
    %1747 = vadd.xlane.f32.xlu0 %v1746
    %v1748 = vpop.xlane.xlu0 %1747
    %v1749 = vsel %vm155, %v1743, 0.0
    %1750 = vadd.xlane.f32.xlu0 %v1749
    %v1751 = vpop.xlane.xlu0 %1750
    %v1752 = vmul.f32 %v1748, %v162
    %v1753 = vmul.f32 %v1751, %v162
    %v1754 = vsub.f32 %v1742, %v1752
    %v1755 = vsub.f32 %v1743, %v1753
    %v1756 = vmul.f32 %v1754, %v1754
    %v1757 = vmul.f32 %v1755, %v1755
    %v1758 = vsel %vm155, %v1756, 0.0
    %1759 = vadd.xlane.f32.xlu0 %v1758
    %v1760 = vpop.xlane.xlu0 %1759
    %v1761 = vsel %vm155, %v1757, 0.0
    %1762 = vadd.xlane.f32.xlu0 %v1761
    %v1763 = vpop.xlane.xlu0 %1762
    %v1764 = vmul.f32 %v1760, %v162
    %v1765 = vmul.f32 %v1763, %v162
    %v1766 = vadd.f32 %v1764, 1e-12
    %v1767 = vadd.f32 %v1765, 1e-12
    %v1768 = vrsqrt.pop %v1766
    %v1769 = vrsqrt.pop %v1767
    %v1770 = vmul.f32 %v1754, %v1768
    %v1771 = vmul.f32 %v1755, %v1769
    %v1773 = vlaneseq
    %v1774 = vshrl.u32 %v1773, 7
    %v1775 = vsub.s32 0, %v1774
    %v1776 = vrot.slane %v1744, %v1775
    %v1778 = vmul.f32 %v1770, %v1776
    %v1779 = vmul.f32 %v1771, %v1776
    %v1781 = vlaneseq
    %v1782 = vshrl.u32 %v1781, 7
    %v1783 = vsub.s32 0, %v1782
    %v1784 = vrot.slane %v1745, %v1783
    %v1786 = vadd.f32 %v1778, %v1784
    %v1787 = vadd.f32 %v1779, %v1784
    %v1788 = vld [vmem:[%s23] sm:$0xff]
    %v1789 = vld [vmem:[%s23 + $0x8] sm:$0xff]
    %v1790 = vld [vmem:[%s23 + $0x10] sm:$0xff]
    %v1791 = vld [vmem:[%s23 + $0x18] sm:$0xff]
    %v1792 = vld [vmem:[%s25] sm:$0x1]
    %v1794 = vlaneseq
    %v1795 = vshrl.u32 %v1794, 7
    %v1796 = vsub.s32 0, %v1795
    %v1797 = vrot.slane %v1792, %v1796
    %v1800 = vsel %vm155, %v1786, 0
    %v1803 = vsel %vm155, %v1787, 0
    %1805 = vmatprep.subr.mxu0 0.0
    %1806 = vmatpush1.msra.mxu0 0.0
    %1807 = vmatprep.subr.mxu0 0.0
    %1808 = vmatpush1.msra.mxu0 0.0
    %1809 = vmatprep.subr.mxu0 0.0
    %1810 = vmatpush1.msra.mxu0 0.0
    %1811 = vmatprep.subr.mxu0 0.0
    %1812 = vmatpush1.msra.mxu0 0.0
    %1813 = vmatprep.subr.mxu0 0.0
    %1814 = vmatpush1.msra.mxu0 0.0
    %1815 = vmatprep.subr.mxu0 0.0
    %1816 = vmatpush1.msra.mxu0 0.0
    %1817 = vmatprep.subr.mxu0 0.0
    %1818 = vmatpush1.msra.mxu0 0.0
    %1819 = vmatprep.subr.mxu0 0.0
    %1820 = vmatpush1.msra.mxu0 0.0
    %1821 = vmatprep.subr.mxu0 0.0
    %1822 = vmatpush1.msra.mxu0 0.0
    %1823 = vmatprep.subr.mxu0 0.0
    %1824 = vmatpush1.msra.mxu0 0.0
    %1825 = vmatprep.subr.mxu0 0.0
    %1826 = vmatpush1.msra.mxu0 0.0
    %1827 = vmatprep.subr.mxu0 0.0
    %1828 = vmatpush1.msra.mxu0 0.0
    %1829 = vmatprep.subr.mxu0 0.0
    %1830 = vmatpush1.msra.mxu0 %v1791
    %1831 = vmatprep.subr.mxu0 0.0
    %1832 = vmatpush1.msra.mxu0 %v1790
    %1833 = vmatprep.subr.mxu0 0.0
    %1834 = vmatpush1.msra.mxu0 %v1789
    %1835 = vmatprep.subr.mxu0 0.0
    %1836 = vmatpush1.msra.mxu0 %v1788
    %1837 = vmatprep.subr.mxu0 0.0
    %1838 = vmatpush2.msra.mxu0 0.0
    %1839 = vmatprep.subr.mxu0 0.0
    %1840 = vmatpush2.msra.mxu0 0.0
    %1841 = vmatprep.subr.mxu0 0.0
    %1842 = vmatpush2.msra.mxu0 0.0
    %1843 = vmatprep.subr.mxu0 0.0
    %1844 = vmatpush2.msra.mxu0 0.0
    %1845 = vmatprep.subr.mxu0 0.0
    %1846 = vmatpush2.msra.mxu0 0.0
    %1847 = vmatprep.subr.mxu0 0.0
    %1848 = vmatpush2.msra.mxu0 0.0
    %1849 = vmatprep.subr.mxu0 0.0
    %1850 = vmatpush2.msra.mxu0 0.0
    %1851 = vmatprep.subr.mxu0 0.0
    %1852 = vmatpush2.msra.mxu0 0.0
    %1853 = vmatprep.subr.mxu0 0.0
    %1854 = vmatpush2.msra.mxu0 0.0
    %1855 = vmatprep.subr.mxu0 0.0
    %1856 = vmatpush2.msra.mxu0 0.0
    %1857 = vmatprep.subr.mxu0 0.0
    %1858 = vmatpush2.msra.mxu0 0.0
    %1859 = vmatprep.subr.mxu0 0.0
    %1860 = vmatpush2.msra.mxu0 0.0
    %1861 = vmatprep.subr.mxu0 0.0
    %1862 = vmatpush2.msra.mxu0 0.0
    %1863 = vmatprep.subr.mxu0 0.0
    %1864 = vmatpush2.msra.mxu0 0.0
    %1865 = vmatprep.subr.mxu0 0.0
    %1866 = vmatpush2.msra.mxu0 0.0
    %1867 = vmatprep.subr.mxu0 0.0
    %1868 = vmatpush2.msra.mxu0 0.0
    %1869 = vmatprep.mubr.f32.mxu0 0.0
    %1870 = vmatmul.mubr.f32.gmra.mxu0 %v1800
    %v1871 = vpop.f32.mrf.mxu0
    %v1872 = vadd.f32 %v1797, %v1871
    %v1873 = vpop.f32.mrf.mxu0
    %1874 = vmatprep.mubr.f32.mxu0 0.0
    %1875 = vmatmul.mubr.f32.gmra.mxu0 %v1803
    %v1876 = vpop.f32.mrf.mxu0
    %v1877 = vadd.f32 %v1797, %v1876
    %v1878 = vpop.f32.mrf.mxu0
    %1879 = vdwg.mxu0
    %v1880 = vmul.f32 %v1872, %v1872
    %v1881 = vmul.f32 %v1877, %v1877
    %v1882 = vmul.f32 %v1872, %v1880
    %v1883 = vmul.f32 %v1877, %v1881
    %v1884 = vmul.f32 %v1882, 0.044715
    %v1885 = vmul.f32 %v1883, 0.044715
    %v1886 = vadd.f32 %v1872, %v1884
    %v1887 = vadd.f32 %v1877, %v1885
    %v1888 = vmul.f32 %v1886, 0.7978846
    %v1889 = vmul.f32 %v1887, 0.7978846
    %v1890 = vtanh.pop %v1888
    %v1891 = vtanh.pop %v1889
    %v1892 = vadd.f32 %v1890, 1.0
    %v1893 = vadd.f32 %v1891, 1.0
    %v1894 = vmul.f32 %v1892, 0.5
    %v1895 = vmul.f32 %v1893, 0.5
    %v1896 = vmul.f32 %v1872, %v1894
    %v1897 = vmul.f32 %v1877, %v1895
    %v1898 = vld [vmem:[%s27] sm:$0xff]
    %v1899 = vld [vmem:[%s27 + $0x8] sm:$0xff]
    %v1900 = vld [vmem:[%s27 + $0x10] sm:$0xff]
    %v1901 = vld [vmem:[%s27 + $0x18] sm:$0xff]
    %v1902 = vld [vmem:[%s27 + $0x20] sm:$0xff]
    %v1903 = vld [vmem:[%s27 + $0x28] sm:$0xff]
    %v1904 = vld [vmem:[%s27 + $0x30] sm:$0xff]
    %v1905 = vld [vmem:[%s27 + $0x38] sm:$0xff]
    %v1906 = vld [vmem:[%s27 + $0x40] sm:$0xff]
    %v1907 = vld [vmem:[%s27 + $0x48] sm:$0xff]
    %v1908 = vld [vmem:[%s27 + $0x50] sm:$0xff]
    %v1909 = vld [vmem:[%s27 + $0x58] sm:$0xff]
    %v1910 = vld [vmem:[%s27 + $0x60] sm:$0xff]
    %v1911 = vld [vmem:[%s27 + $0x68] sm:$0xff]
    %v1912 = vld [vmem:[%s27 + $0x70] sm:$0xff]
    %v1913 = vld [vmem:[%s27 + $0x78] sm:$0xff]
    %v1914 = vld [vmem:[%s29] sm:$0x1]
    %v1916 = vlaneseq
    %v1917 = vshrl.u32 %v1916, 7
    %v1918 = vsub.s32 0, %v1917
    %v1919 = vrot.slane %v1914, %v1918
    %1921 = vmatprep.subr.mxu0 0.0
    %1922 = vmatpush1.msra.mxu0 %v1913
    %1923 = vmatprep.subr.mxu0 0.0
    %1924 = vmatpush1.msra.mxu0 %v1912
    %1925 = vmatprep.subr.mxu0 0.0
    %1926 = vmatpush1.msra.mxu0 %v1911
    %1927 = vmatprep.subr.mxu0 0.0
    %1928 = vmatpush1.msra.mxu0 %v1910
    %1929 = vmatprep.subr.mxu0 0.0
    %1930 = vmatpush1.msra.mxu0 %v1909
    %1931 = vmatprep.subr.mxu0 0.0
    %1932 = vmatpush1.msra.mxu0 %v1908
    %1933 = vmatprep.subr.mxu0 0.0
    %1934 = vmatpush1.msra.mxu0 %v1907
    %1935 = vmatprep.subr.mxu0 0.0
    %1936 = vmatpush1.msra.mxu0 %v1906
    %1937 = vmatprep.subr.mxu0 0.0
    %1938 = vmatpush1.msra.mxu0 %v1905
    %1939 = vmatprep.subr.mxu0 0.0
    %1940 = vmatpush1.msra.mxu0 %v1904
    %1941 = vmatprep.subr.mxu0 0.0
    %1942 = vmatpush1.msra.mxu0 %v1903
    %1943 = vmatprep.subr.mxu0 0.0
    %1944 = vmatpush1.msra.mxu0 %v1902
    %1945 = vmatprep.subr.mxu0 0.0
    %1946 = vmatpush1.msra.mxu0 %v1901
    %1947 = vmatprep.subr.mxu0 0.0
    %1948 = vmatpush1.msra.mxu0 %v1900
    %1949 = vmatprep.subr.mxu0 0.0
    %1950 = vmatpush1.msra.mxu0 %v1899
    %1951 = vmatprep.subr.mxu0 0.0
    %1952 = vmatpush1.msra.mxu0 %v1898
    %1953 = vmatprep.subr.mxu0 0.0
    %1954 = vmatpush2.msra.mxu0 0.0
    %1955 = vmatprep.subr.mxu0 0.0
    %1956 = vmatpush2.msra.mxu0 0.0
    %1957 = vmatprep.subr.mxu0 0.0
    %1958 = vmatpush2.msra.mxu0 0.0
    %1959 = vmatprep.subr.mxu0 0.0
    %1960 = vmatpush2.msra.mxu0 0.0
    %1961 = vmatprep.subr.mxu0 0.0
    %1962 = vmatpush2.msra.mxu0 0.0
    %1963 = vmatprep.subr.mxu0 0.0
    %1964 = vmatpush2.msra.mxu0 0.0
    %1965 = vmatprep.subr.mxu0 0.0
    %1966 = vmatpush2.msra.mxu0 0.0
    %1967 = vmatprep.subr.mxu0 0.0
    %1968 = vmatpush2.msra.mxu0 0.0
    %1969 = vmatprep.subr.mxu0 0.0
    %1970 = vmatpush2.msra.mxu0 0.0
    %1971 = vmatprep.subr.mxu0 0.0
    %1972 = vmatpush2.msra.mxu0 0.0
    %1973 = vmatprep.subr.mxu0 0.0
    %1974 = vmatpush2.msra.mxu0 0.0
    %1975 = vmatprep.subr.mxu0 0.0
    %1976 = vmatpush2.msra.mxu0 0.0
    %1977 = vmatprep.subr.mxu0 0.0
    %1978 = vmatpush2.msra.mxu0 0.0
    %1979 = vmatprep.subr.mxu0 0.0
    %1980 = vmatpush2.msra.mxu0 0.0
    %1981 = vmatprep.subr.mxu0 0.0
    %1982 = vmatpush2.msra.mxu0 0.0
    %1983 = vmatprep.subr.mxu0 0.0
    %1984 = vmatpush2.msra.mxu0 0.0
    %1985 = vmatprep.mubr.f32.mxu0 0.0
    %1986 = vmatmul.mubr.f32.gmra.mxu0 %v1896
    %v1987 = vpop.f32.mrf.mxu0
    %v1988 = vadd.f32 %v1919, %v1987
    %v1989 = vpop.f32.mrf.mxu0
    %1990 = vmatprep.mubr.f32.mxu0 0.0
    %1991 = vmatmul.mubr.f32.gmra.mxu0 %v1897
    %v1992 = vpop.f32.mrf.mxu0
    %v1993 = vadd.f32 %v1919, %v1992
    %v1994 = vpop.f32.mrf.mxu0
    %1995 = vdwg.mxu0
    %v1996 = vadd.f32 %v1988, %v1786
    %v1997 = vadd.f32 %v1993, %v1787
    %v1998 = vld [vmem:[%s31] sm:$0x1]
    %v1999 = vld [vmem:[%s33] sm:$0x1]
    %v2000 = vsel %vm155, %v1996, 0.0
    %2001 = vadd.xlane.f32.xlu0 %v2000
    %v2002 = vpop.xlane.xlu0 %2001
    %v2003 = vsel %vm155, %v1997, 0.0
    %2004 = vadd.xlane.f32.xlu0 %v2003
    %v2005 = vpop.xlane.xlu0 %2004
    %v2006 = vmul.f32 %v2002, %v162
    %v2007 = vmul.f32 %v2005, %v162
    %v2008 = vsub.f32 %v1996, %v2006
    %v2009 = vsub.f32 %v1997, %v2007
    %v2010 = vmul.f32 %v2008, %v2008
    %v2011 = vmul.f32 %v2009, %v2009
    %v2012 = vsel %vm155, %v2010, 0.0
    %2013 = vadd.xlane.f32.xlu0 %v2012
    %v2014 = vpop.xlane.xlu0 %2013
    %v2015 = vsel %vm155, %v2011, 0.0
    %2016 = vadd.xlane.f32.xlu0 %v2015
    %v2017 = vpop.xlane.xlu0 %2016
    %v2018 = vmul.f32 %v2014, %v162
    %v2019 = vmul.f32 %v2017, %v162
    %v2020 = vadd.f32 %v2018, 1e-12
    %v2021 = vadd.f32 %v2019, 1e-12
    %v2022 = vrsqrt.pop %v2020
    %v2023 = vrsqrt.pop %v2021
    %v2024 = vmul.f32 %v2008, %v2022
    %v2025 = vmul.f32 %v2009, %v2023
    %v2027 = vlaneseq
    %v2028 = vshrl.u32 %v2027, 7
    %v2029 = vsub.s32 0, %v2028
    %v2030 = vrot.slane %v1998, %v2029
    %v2032 = vmul.f32 %v2024, %v2030
    %v2033 = vmul.f32 %v2025, %v2030
    %v2035 = vlaneseq
    %v2036 = vshrl.u32 %v2035, 7
    %v2037 = vsub.s32 0, %v2036
    %v2038 = vrot.slane %v1999, %v2037
    %v2040 = vadd.f32 %v2032, %v2038
    %v2041 = vadd.f32 %v2033, %v2038
    %v2042 = vld [vmem:[%s35] sm:$0xff]
    %v2043 = vld [vmem:[%s35 + $0x8] sm:$0xff]
    %v2044 = vld [vmem:[%s35 + $0x10] sm:$0xff]
    %v2045 = vld [vmem:[%s35 + $0x18] sm:$0xff]
    %v2046 = vld [vmem:[%s37] sm:$0x1]
    %v2048 = vlaneseq
    %v2049 = vshrl.u32 %v2048, 7
    %v2050 = vsub.s32 0, %v2049
    %v2051 = vrot.slane %v2046, %v2050
    %v2054 = vsel %vm155, %v2040, 0
    %v2057 = vsel %vm155, %v2041, 0
    %2059 = vmatprep.subr.mxu0 0.0
    %2060 = vmatpush1.msra.mxu0 0.0
    %2061 = vmatprep.subr.mxu0 0.0
    %2062 = vmatpush1.msra.mxu0 0.0
    %2063 = vmatprep.subr.mxu0 0.0
    %2064 = vmatpush1.msra.mxu0 0.0
    %2065 = vmatprep.subr.mxu0 0.0
    %2066 = vmatpush1.msra.mxu0 0.0
    %2067 = vmatprep.subr.mxu0 0.0
    %2068 = vmatpush1.msra.mxu0 0.0
    %2069 = vmatprep.subr.mxu0 0.0
    %2070 = vmatpush1.msra.mxu0 0.0
    %2071 = vmatprep.subr.mxu0 0.0
    %2072 = vmatpush1.msra.mxu0 0.0
    %2073 = vmatprep.subr.mxu0 0.0
    %2074 = vmatpush1.msra.mxu0 0.0
    %2075 = vmatprep.subr.mxu0 0.0
    %2076 = vmatpush1.msra.mxu0 0.0
    %2077 = vmatprep.subr.mxu0 0.0
    %2078 = vmatpush1.msra.mxu0 0.0
    %2079 = vmatprep.subr.mxu0 0.0
    %2080 = vmatpush1.msra.mxu0 0.0
    %2081 = vmatprep.subr.mxu0 0.0
    %2082 = vmatpush1.msra.mxu0 0.0
    %2083 = vmatprep.subr.mxu0 0.0
    %2084 = vmatpush1.msra.mxu0 %v2045
    %2085 = vmatprep.subr.mxu0 0.0
    %2086 = vmatpush1.msra.mxu0 %v2044
    %2087 = vmatprep.subr.mxu0 0.0
    %2088 = vmatpush1.msra.mxu0 %v2043
    %2089 = vmatprep.subr.mxu0 0.0
    %2090 = vmatpush1.msra.mxu0 %v2042
    %2091 = vmatprep.subr.mxu0 0.0
    %2092 = vmatpush2.msra.mxu0 0.0
    %2093 = vmatprep.subr.mxu0 0.0
    %2094 = vmatpush2.msra.mxu0 0.0
    %2095 = vmatprep.subr.mxu0 0.0
    %2096 = vmatpush2.msra.mxu0 0.0
    %2097 = vmatprep.subr.mxu0 0.0
    %2098 = vmatpush2.msra.mxu0 0.0
    %2099 = vmatprep.subr.mxu0 0.0
    %2100 = vmatpush2.msra.mxu0 0.0
    %2101 = vmatprep.subr.mxu0 0.0
    %2102 = vmatpush2.msra.mxu0 0.0
    %2103 = vmatprep.subr.mxu0 0.0
    %2104 = vmatpush2.msra.mxu0 0.0
    %2105 = vmatprep.subr.mxu0 0.0
    %2106 = vmatpush2.msra.mxu0 0.0
    %2107 = vmatprep.subr.mxu0 0.0
    %2108 = vmatpush2.msra.mxu0 0.0
    %2109 = vmatprep.subr.mxu0 0.0
    %2110 = vmatpush2.msra.mxu0 0.0
    %2111 = vmatprep.subr.mxu0 0.0
    %2112 = vmatpush2.msra.mxu0 0.0
    %2113 = vmatprep.subr.mxu0 0.0
    %2114 = vmatpush2.msra.mxu0 0.0
    %2115 = vmatprep.subr.mxu0 0.0
    %2116 = vmatpush2.msra.mxu0 0.0
    %2117 = vmatprep.subr.mxu0 0.0
    %2118 = vmatpush2.msra.mxu0 0.0
    %2119 = vmatprep.subr.mxu0 0.0
    %2120 = vmatpush2.msra.mxu0 0.0
    %2121 = vmatprep.subr.mxu0 0.0
    %2122 = vmatpush2.msra.mxu0 0.0
    %2123 = vmatprep.mubr.f32.mxu0 0.0
    %2124 = vmatmul.mubr.f32.gmra.mxu0 %v2054
    %v2125 = vpop.f32.mrf.mxu0
    %v2126 = vadd.f32 %v2051, %v2125
    %v2127 = vpop.f32.mrf.mxu0
    %2128 = vmatprep.mubr.f32.mxu0 0.0
    %2129 = vmatmul.mubr.f32.gmra.mxu0 %v2057
    %v2130 = vpop.f32.mrf.mxu0
    %v2131 = vadd.f32 %v2051, %v2130
    %v2132 = vpop.f32.mrf.mxu0
    %2133 = vdwg.mxu0
    %2135 = vrot.lane.b32.xlu0 %v2126, 96
    %v2136 = vpop.permute.xlu0 %2135
    %v2137 = vsel %vm294, %v2126, 0
    %v2139 = vsel %vm294, %v2136, 0
    %2141 = vmatprep.subr.mxu0 0.0
    %2142 = vmatpush1.xpose.msra.mxu0 0.0
    %2143 = vmatprep.subr.mxu0 0.0
    %2144 = vmatpush1.xpose.msra.mxu0 0.0
    %2145 = vmatprep.subr.mxu0 0.0
    %2146 = vmatpush1.xpose.msra.mxu0 0.0
    %2147 = vmatprep.subr.mxu0 0.0
    %2148 = vmatpush1.xpose.msra.mxu0 0.0
    %2149 = vmatprep.subr.mxu0 0.0
    %2150 = vmatpush1.xpose.msra.mxu0 0.0
    %2151 = vmatprep.subr.mxu0 0.0
    %2152 = vmatpush1.xpose.msra.mxu0 0.0
    %2153 = vmatprep.subr.mxu0 0.0
    %2154 = vmatpush1.xpose.msra.mxu0 0.0
    %2155 = vmatprep.subr.mxu0 0.0
    %2156 = vmatpush1.xpose.msra.mxu0 0.0
    %2157 = vmatprep.subr.mxu0 0.0
    %2158 = vmatpush1.xpose.msra.mxu0 0.0
    %2159 = vmatprep.subr.mxu0 0.0
    %2160 = vmatpush1.xpose.msra.mxu0 0.0
    %2161 = vmatprep.subr.mxu0 0.0
    %2162 = vmatpush1.xpose.msra.mxu0 0.0
    %2163 = vmatprep.subr.mxu0 0.0
    %2164 = vmatpush1.xpose.msra.mxu0 0.0
    %2165 = vmatprep.subr.mxu0 0.0
    %2166 = vmatpush1.xpose.msra.mxu0 0.0
    %2167 = vmatprep.subr.mxu0 0.0
    %2168 = vmatpush1.xpose.msra.mxu0 0.0
    %2169 = vmatprep.subr.mxu0 0.0
    %2170 = vmatpush1.xpose.msra.mxu0 0.0
    %2171 = vmatprep.subr.mxu0 0.0
    %2172 = vmatpush1.xpose.msra.mxu0 %v2139
    %2173 = vmatprep.subr.mxu0 0.0
    %2174 = vmatpush2.xpose.msra.mxu0 0.0
    %2175 = vmatprep.subr.mxu0 0.0
    %2176 = vmatpush2.xpose.msra.mxu0 0.0
    %2177 = vmatprep.subr.mxu0 0.0
    %2178 = vmatpush2.xpose.msra.mxu0 0.0
    %2179 = vmatprep.subr.mxu0 0.0
    %2180 = vmatpush2.xpose.msra.mxu0 0.0
    %2181 = vmatprep.subr.mxu0 0.0
    %2182 = vmatpush2.xpose.msra.mxu0 0.0
    %2183 = vmatprep.subr.mxu0 0.0
    %2184 = vmatpush2.xpose.msra.mxu0 0.0
    %2185 = vmatprep.subr.mxu0 0.0
    %2186 = vmatpush2.xpose.msra.mxu0 0.0
    %2187 = vmatprep.subr.mxu0 0.0
    %2188 = vmatpush2.xpose.msra.mxu0 0.0
    %2189 = vmatprep.subr.mxu0 0.0
    %2190 = vmatpush2.xpose.msra.mxu0 0.0
    %2191 = vmatprep.subr.mxu0 0.0
    %2192 = vmatpush2.xpose.msra.mxu0 0.0
    %2193 = vmatprep.subr.mxu0 0.0
    %2194 = vmatpush2.xpose.msra.mxu0 0.0
    %2195 = vmatprep.subr.mxu0 0.0
    %2196 = vmatpush2.xpose.msra.mxu0 0.0
    %2197 = vmatprep.subr.mxu0 0.0
    %2198 = vmatpush2.xpose.msra.mxu0 0.0
    %2199 = vmatprep.subr.mxu0 0.0
    %2200 = vmatpush2.xpose.msra.mxu0 0.0
    %2201 = vmatprep.subr.mxu0 0.0
    %2202 = vmatpush2.xpose.msra.mxu0 0.0
    %2203 = vmatprep.subr.mxu0 0.0
    %2204 = vmatpush2.xpose.msra.mxu0 0.0
    %2205 = vmatprep.mubr.f32.mxu0 0.0
    %2206 = vmatmul.mubr.f32.gmra.mxu0 %v2137
    %v2207 = vpop.f32.mrf.mxu0
    %v2208 = vadd.f32 0.0, %v2207
    %v2209 = vpop.f32.mrf.mxu0
    %2210 = vdwg.mxu0
    %v2211 = vmul.f32 %v2208, 0.35355338
    %v2212 = vsel %vm294, %v2211, -inf
    %2213 = vmax.xlane.f32.xlu0 %v2212
    %v2214 = vpop.xlane.xlu0 %2213
    %v2215 = vsub.f32 %v2211, %v2214
    %v2216 = vmul.f32 %v2215, 1.442695
    %v2217 = vpow.pop %v2216
    %v2218 = vsel %vm294, %v2217, 0.0
    %2219 = vadd.xlane.f32.xlu0 %v2218
    %v2220 = vpop.xlane.xlu0 %2219
    %v2221 = vrcp.pop %v2220
    %v2222 = vmul.f32 %v2217, %v2221
    %2223 = vrot.lane.b32.xlu0 %v2126, 64
    %v2224 = vpop.permute.xlu0 %2223
    %v2227 = vsel %vm294, %v2222, 0
    %2229 = vmatprep.subr.mxu0 0.0
    %2230 = vmatpush1.msra.mxu0 0.0
    %2231 = vmatprep.subr.mxu0 0.0
    %2232 = vmatpush1.msra.mxu0 0.0
    %2233 = vmatprep.subr.mxu0 0.0
    %2234 = vmatpush1.msra.mxu0 0.0
    %2235 = vmatprep.subr.mxu0 0.0
    %2236 = vmatpush1.msra.mxu0 0.0
    %2237 = vmatprep.subr.mxu0 0.0
    %2238 = vmatpush1.msra.mxu0 0.0
    %2239 = vmatprep.subr.mxu0 0.0
    %2240 = vmatpush1.msra.mxu0 0.0
    %2241 = vmatprep.subr.mxu0 0.0
    %2242 = vmatpush1.msra.mxu0 0.0
    %2243 = vmatprep.subr.mxu0 0.0
    %2244 = vmatpush1.msra.mxu0 0.0
    %2245 = vmatprep.subr.mxu0 0.0
    %2246 = vmatpush1.msra.mxu0 0.0
    %2247 = vmatprep.subr.mxu0 0.0
    %2248 = vmatpush1.msra.mxu0 0.0
    %2249 = vmatprep.subr.mxu0 0.0
    %2250 = vmatpush1.msra.mxu0 0.0
    %2251 = vmatprep.subr.mxu0 0.0
    %2252 = vmatpush1.msra.mxu0 0.0
    %2253 = vmatprep.subr.mxu0 0.0
    %2254 = vmatpush1.msra.mxu0 0.0
    %2255 = vmatprep.subr.mxu0 0.0
    %2256 = vmatpush1.msra.mxu0 0.0
    %2257 = vmatprep.subr.mxu0 0.0
    %2258 = vmatpush1.msra.mxu0 0.0
    %2259 = vmatprep.subr.mxu0 0.0
    %2260 = vmatpush1.msra.mxu0 %v2224
    %2261 = vmatprep.subr.mxu0 0.0
    %2262 = vmatpush2.msra.mxu0 0.0
    %2263 = vmatprep.subr.mxu0 0.0
    %2264 = vmatpush2.msra.mxu0 0.0
    %2265 = vmatprep.subr.mxu0 0.0
    %2266 = vmatpush2.msra.mxu0 0.0
    %2267 = vmatprep.subr.mxu0 0.0
    %2268 = vmatpush2.msra.mxu0 0.0
    %2269 = vmatprep.subr.mxu0 0.0
    %2270 = vmatpush2.msra.mxu0 0.0
    %2271 = vmatprep.subr.mxu0 0.0
    %2272 = vmatpush2.msra.mxu0 0.0
    %2273 = vmatprep.subr.mxu0 0.0
    %2274 = vmatpush2.msra.mxu0 0.0
    %2275 = vmatprep.subr.mxu0 0.0
    %2276 = vmatpush2.msra.mxu0 0.0
    %2277 = vmatprep.subr.mxu0 0.0
    %2278 = vmatpush2.msra.mxu0 0.0
    %2279 = vmatprep.subr.mxu0 0.0
    %2280 = vmatpush2.msra.mxu0 0.0
    %2281 = vmatprep.subr.mxu0 0.0
    %2282 = vmatpush2.msra.mxu0 0.0
    %2283 = vmatprep.subr.mxu0 0.0
    %2284 = vmatpush2.msra.mxu0 0.0
    %2285 = vmatprep.subr.mxu0 0.0
    %2286 = vmatpush2.msra.mxu0 0.0
    %2287 = vmatprep.subr.mxu0 0.0
    %2288 = vmatpush2.msra.mxu0 0.0
    %2289 = vmatprep.subr.mxu0 0.0
    %2290 = vmatpush2.msra.mxu0 0.0
    %2291 = vmatprep.subr.mxu0 0.0
    %2292 = vmatpush2.msra.mxu0 0.0
    %2293 = vmatprep.mubr.f32.mxu0 0.0
    %2294 = vmatmul.mubr.f32.gmra.mxu0 %v2227
    %v2295 = vpop.f32.mrf.mxu0
    %v2296 = vadd.f32 0.0, %v2295
    %v2297 = vpop.f32.mrf.mxu0
    %2298 = vdwg.mxu0
    %2299 = vrot.lane.b32.xlu0 %v2126, 120
    %v2300 = vpop.permute.xlu0 %2299
    %2301 = vrot.lane.b32.xlu0 %v2126, 88
    %v2302 = vpop.permute.xlu0 %2301
    %v2303 = vsel %vm294, %v2300, 0
    %v2305 = vsel %vm294, %v2302, 0
    %2307 = vmatprep.subr.mxu0 0.0
    %2308 = vmatpush1.xpose.msra.mxu0 0.0
    %2309 = vmatprep.subr.mxu0 0.0
    %2310 = vmatpush1.xpose.msra.mxu0 0.0
    %2311 = vmatprep.subr.mxu0 0.0
    %2312 = vmatpush1.xpose.msra.mxu0 0.0
    %2313 = vmatprep.subr.mxu0 0.0
    %2314 = vmatpush1.xpose.msra.mxu0 0.0
    %2315 = vmatprep.subr.mxu0 0.0
    %2316 = vmatpush1.xpose.msra.mxu0 0.0
    %2317 = vmatprep.subr.mxu0 0.0
    %2318 = vmatpush1.xpose.msra.mxu0 0.0
    %2319 = vmatprep.subr.mxu0 0.0
    %2320 = vmatpush1.xpose.msra.mxu0 0.0
    %2321 = vmatprep.subr.mxu0 0.0
    %2322 = vmatpush1.xpose.msra.mxu0 0.0
    %2323 = vmatprep.subr.mxu0 0.0
    %2324 = vmatpush1.xpose.msra.mxu0 0.0
    %2325 = vmatprep.subr.mxu0 0.0
    %2326 = vmatpush1.xpose.msra.mxu0 0.0
    %2327 = vmatprep.subr.mxu0 0.0
    %2328 = vmatpush1.xpose.msra.mxu0 0.0
    %2329 = vmatprep.subr.mxu0 0.0
    %2330 = vmatpush1.xpose.msra.mxu0 0.0
    %2331 = vmatprep.subr.mxu0 0.0
    %2332 = vmatpush1.xpose.msra.mxu0 0.0
    %2333 = vmatprep.subr.mxu0 0.0
    %2334 = vmatpush1.xpose.msra.mxu0 0.0
    %2335 = vmatprep.subr.mxu0 0.0
    %2336 = vmatpush1.xpose.msra.mxu0 0.0
    %2337 = vmatprep.subr.mxu0 0.0
    %2338 = vmatpush1.xpose.msra.mxu0 %v2305
    %2339 = vmatprep.subr.mxu0 0.0
    %2340 = vmatpush2.xpose.msra.mxu0 0.0
    %2341 = vmatprep.subr.mxu0 0.0
    %2342 = vmatpush2.xpose.msra.mxu0 0.0
    %2343 = vmatprep.subr.mxu0 0.0
    %2344 = vmatpush2.xpose.msra.mxu0 0.0
    %2345 = vmatprep.subr.mxu0 0.0
    %2346 = vmatpush2.xpose.msra.mxu0 0.0
    %2347 = vmatprep.subr.mxu0 0.0
    %2348 = vmatpush2.xpose.msra.mxu0 0.0
    %2349 = vmatprep.subr.mxu0 0.0
    %2350 = vmatpush2.xpose.msra.mxu0 0.0
    %2351 = vmatprep.subr.mxu0 0.0
    %2352 = vmatpush2.xpose.msra.mxu0 0.0
    %2353 = vmatprep.subr.mxu0 0.0
    %2354 = vmatpush2.xpose.msra.mxu0 0.0
    %2355 = vmatprep.subr.mxu0 0.0
    %2356 = vmatpush2.xpose.msra.mxu0 0.0
    %2357 = vmatprep.subr.mxu0 0.0
    %2358 = vmatpush2.xpose.msra.mxu0 0.0
    %2359 = vmatprep.subr.mxu0 0.0
    %2360 = vmatpush2.xpose.msra.mxu0 0.0
    %2361 = vmatprep.subr.mxu0 0.0
    %2362 = vmatpush2.xpose.msra.mxu0 0.0
    %2363 = vmatprep.subr.mxu0 0.0
    %2364 = vmatpush2.xpose.msra.mxu0 0.0
    %2365 = vmatprep.subr.mxu0 0.0
    %2366 = vmatpush2.xpose.msra.mxu0 0.0
    %2367 = vmatprep.subr.mxu0 0.0
    %2368 = vmatpush2.xpose.msra.mxu0 0.0
    %2369 = vmatprep.subr.mxu0 0.0
    %2370 = vmatpush2.xpose.msra.mxu0 0.0
    %2371 = vmatprep.mubr.f32.mxu0 0.0
    %2372 = vmatmul.mubr.f32.gmra.mxu0 %v2303
    %v2373 = vpop.f32.mrf.mxu0
    %v2374 = vadd.f32 0.0, %v2373
    %v2375 = vpop.f32.mrf.mxu0
    %2376 = vdwg.mxu0
    %v2377 = vmul.f32 %v2374, 0.35355338
    %v2378 = vsel %vm294, %v2377, -inf
    %2379 = vmax.xlane.f32.xlu0 %v2378
    %v2380 = vpop.xlane.xlu0 %2379
    %v2381 = vsub.f32 %v2377, %v2380
    %v2382 = vmul.f32 %v2381, 1.442695
    %v2383 = vpow.pop %v2382
    %v2384 = vsel %vm294, %v2383, 0.0
    %2385 = vadd.xlane.f32.xlu0 %v2384
    %v2386 = vpop.xlane.xlu0 %2385
    %v2387 = vrcp.pop %v2386
    %v2388 = vmul.f32 %v2383, %v2387
    %2389 = vrot.lane.b32.xlu0 %v2126, 56
    %v2390 = vpop.permute.xlu0 %2389
    %v2393 = vsel %vm294, %v2388, 0
    %2395 = vmatprep.subr.mxu0 0.0
    %2396 = vmatpush1.msra.mxu0 0.0
    %2397 = vmatprep.subr.mxu0 0.0
    %2398 = vmatpush1.msra.mxu0 0.0
    %2399 = vmatprep.subr.mxu0 0.0
    %2400 = vmatpush1.msra.mxu0 0.0
    %2401 = vmatprep.subr.mxu0 0.0
    %2402 = vmatpush1.msra.mxu0 0.0
    %2403 = vmatprep.subr.mxu0 0.0
    %2404 = vmatpush1.msra.mxu0 0.0
    %2405 = vmatprep.subr.mxu0 0.0
    %2406 = vmatpush1.msra.mxu0 0.0
    %2407 = vmatprep.subr.mxu0 0.0
    %2408 = vmatpush1.msra.mxu0 0.0
    %2409 = vmatprep.subr.mxu0 0.0
    %2410 = vmatpush1.msra.mxu0 0.0
    %2411 = vmatprep.subr.mxu0 0.0
    %2412 = vmatpush1.msra.mxu0 0.0
    %2413 = vmatprep.subr.mxu0 0.0
    %2414 = vmatpush1.msra.mxu0 0.0
    %2415 = vmatprep.subr.mxu0 0.0
    %2416 = vmatpush1.msra.mxu0 0.0
    %2417 = vmatprep.subr.mxu0 0.0
    %2418 = vmatpush1.msra.mxu0 0.0
    %2419 = vmatprep.subr.mxu0 0.0
    %2420 = vmatpush1.msra.mxu0 0.0
    %2421 = vmatprep.subr.mxu0 0.0
    %2422 = vmatpush1.msra.mxu0 0.0
    %2423 = vmatprep.subr.mxu0 0.0
    %2424 = vmatpush1.msra.mxu0 0.0
    %2425 = vmatprep.subr.mxu0 0.0
    %2426 = vmatpush1.msra.mxu0 %v2390
    %2427 = vmatprep.subr.mxu0 0.0
    %2428 = vmatpush2.msra.mxu0 0.0
    %2429 = vmatprep.subr.mxu0 0.0
    %2430 = vmatpush2.msra.mxu0 0.0
    %2431 = vmatprep.subr.mxu0 0.0
    %2432 = vmatpush2.msra.mxu0 0.0
    %2433 = vmatprep.subr.mxu0 0.0
    %2434 = vmatpush2.msra.mxu0 0.0
    %2435 = vmatprep.subr.mxu0 0.0
    %2436 = vmatpush2.msra.mxu0 0.0
    %2437 = vmatprep.subr.mxu0 0.0
    %2438 = vmatpush2.msra.mxu0 0.0
    %2439 = vmatprep.subr.mxu0 0.0
    %2440 = vmatpush2.msra.mxu0 0.0
    %2441 = vmatprep.subr.mxu0 0.0
    %2442 = vmatpush2.msra.mxu0 0.0
    %2443 = vmatprep.subr.mxu0 0.0
    %2444 = vmatpush2.msra.mxu0 0.0
    %2445 = vmatprep.subr.mxu0 0.0
    %2446 = vmatpush2.msra.mxu0 0.0
    %2447 = vmatprep.subr.mxu0 0.0
    %2448 = vmatpush2.msra.mxu0 0.0
    %2449 = vmatprep.subr.mxu0 0.0
    %2450 = vmatpush2.msra.mxu0 0.0
    %2451 = vmatprep.subr.mxu0 0.0
    %2452 = vmatpush2.msra.mxu0 0.0
    %2453 = vmatprep.subr.mxu0 0.0
    %2454 = vmatpush2.msra.mxu0 0.0
    %2455 = vmatprep.subr.mxu0 0.0
    %2456 = vmatpush2.msra.mxu0 0.0
    %2457 = vmatprep.subr.mxu0 0.0
    %2458 = vmatpush2.msra.mxu0 0.0
    %2459 = vmatprep.mubr.f32.mxu0 0.0
    %2460 = vmatmul.mubr.f32.gmra.mxu0 %v2393
    %v2461 = vpop.f32.mrf.mxu0
    %v2462 = vadd.f32 0.0, %v2461
    %v2463 = vpop.f32.mrf.mxu0
    %2464 = vdwg.mxu0
    %2465 = vrot.lane.b32.xlu0 %v2126, 112
    %v2466 = vpop.permute.xlu0 %2465
    %2467 = vrot.lane.b32.xlu0 %v2126, 80
    %v2468 = vpop.permute.xlu0 %2467
    %v2469 = vsel %vm294, %v2466, 0
    %v2471 = vsel %vm294, %v2468, 0
    %2473 = vmatprep.subr.mxu0 0.0
    %2474 = vmatpush1.xpose.msra.mxu0 0.0
    %2475 = vmatprep.subr.mxu0 0.0
    %2476 = vmatpush1.xpose.msra.mxu0 0.0
    %2477 = vmatprep.subr.mxu0 0.0
    %2478 = vmatpush1.xpose.msra.mxu0 0.0
    %2479 = vmatprep.subr.mxu0 0.0
    %2480 = vmatpush1.xpose.msra.mxu0 0.0
    %2481 = vmatprep.subr.mxu0 0.0
    %2482 = vmatpush1.xpose.msra.mxu0 0.0
    %2483 = vmatprep.subr.mxu0 0.0
    %2484 = vmatpush1.xpose.msra.mxu0 0.0
    %2485 = vmatprep.subr.mxu0 0.0
    %2486 = vmatpush1.xpose.msra.mxu0 0.0
    %2487 = vmatprep.subr.mxu0 0.0
    %2488 = vmatpush1.xpose.msra.mxu0 0.0
    %2489 = vmatprep.subr.mxu0 0.0
    %2490 = vmatpush1.xpose.msra.mxu0 0.0
    %2491 = vmatprep.subr.mxu0 0.0
    %2492 = vmatpush1.xpose.msra.mxu0 0.0
    %2493 = vmatprep.subr.mxu0 0.0
    %2494 = vmatpush1.xpose.msra.mxu0 0.0
    %2495 = vmatprep.subr.mxu0 0.0
    %2496 = vmatpush1.xpose.msra.mxu0 0.0
    %2497 = vmatprep.subr.mxu0 0.0
    %2498 = vmatpush1.xpose.msra.mxu0 0.0
    %2499 = vmatprep.subr.mxu0 0.0
    %2500 = vmatpush1.xpose.msra.mxu0 0.0
    %2501 = vmatprep.subr.mxu0 0.0
    %2502 = vmatpush1.xpose.msra.mxu0 0.0
    %2503 = vmatprep.subr.mxu0 0.0
    %2504 = vmatpush1.xpose.msra.mxu0 %v2471
    %2505 = vmatprep.subr.mxu0 0.0
    %2506 = vmatpush2.xpose.msra.mxu0 0.0
    %2507 = vmatprep.subr.mxu0 0.0
    %2508 = vmatpush2.xpose.msra.mxu0 0.0
    %2509 = vmatprep.subr.mxu0 0.0
    %2510 = vmatpush2.xpose.msra.mxu0 0.0
    %2511 = vmatprep.subr.mxu0 0.0
    %2512 = vmatpush2.xpose.msra.mxu0 0.0
    %2513 = vmatprep.subr.mxu0 0.0
    %2514 = vmatpush2.xpose.msra.mxu0 0.0
    %2515 = vmatprep.subr.mxu0 0.0
    %2516 = vmatpush2.xpose.msra.mxu0 0.0
    %2517 = vmatprep.subr.mxu0 0.0
    %2518 = vmatpush2.xpose.msra.mxu0 0.0
    %2519 = vmatprep.subr.mxu0 0.0
    %2520 = vmatpush2.xpose.msra.mxu0 0.0
    %2521 = vmatprep.subr.mxu0 0.0
    %2522 = vmatpush2.xpose.msra.mxu0 0.0
    %2523 = vmatprep.subr.mxu0 0.0
    %2524 = vmatpush2.xpose.msra.mxu0 0.0
    %2525 = vmatprep.subr.mxu0 0.0
    %2526 = vmatpush2.xpose.msra.mxu0 0.0
    %2527 = vmatprep.subr.mxu0 0.0
    %2528 = vmatpush2.xpose.msra.mxu0 0.0
    %2529 = vmatprep.subr.mxu0 0.0
    %2530 = vmatpush2.xpose.msra.mxu0 0.0
    %2531 = vmatprep.subr.mxu0 0.0
    %2532 = vmatpush2.xpose.msra.mxu0 0.0
    %2533 = vmatprep.subr.mxu0 0.0
    %2534 = vmatpush2.xpose.msra.mxu0 0.0
    %2535 = vmatprep.subr.mxu0 0.0
    %2536 = vmatpush2.xpose.msra.mxu0 0.0
    %2537 = vmatprep.mubr.f32.mxu0 0.0
    %2538 = vmatmul.mubr.f32.gmra.mxu0 %v2469
    %v2539 = vpop.f32.mrf.mxu0
    %v2540 = vadd.f32 0.0, %v2539
    %v2541 = vpop.f32.mrf.mxu0
    %2542 = vdwg.mxu0
    %v2543 = vmul.f32 %v2540, 0.35355338
    %v2544 = vsel %vm294, %v2543, -inf
    %2545 = vmax.xlane.f32.xlu0 %v2544
    %v2546 = vpop.xlane.xlu0 %2545
    %v2547 = vsub.f32 %v2543, %v2546
    %v2548 = vmul.f32 %v2547, 1.442695
    %v2549 = vpow.pop %v2548
    %v2550 = vsel %vm294, %v2549, 0.0
    %2551 = vadd.xlane.f32.xlu0 %v2550
    %v2552 = vpop.xlane.xlu0 %2551
    %v2553 = vrcp.pop %v2552
    %v2554 = vmul.f32 %v2549, %v2553
    %2555 = vrot.lane.b32.xlu0 %v2126, 48
    %v2556 = vpop.permute.xlu0 %2555
    %v2559 = vsel %vm294, %v2554, 0
    %2561 = vmatprep.subr.mxu0 0.0
    %2562 = vmatpush1.msra.mxu0 0.0
    %2563 = vmatprep.subr.mxu0 0.0
    %2564 = vmatpush1.msra.mxu0 0.0
    %2565 = vmatprep.subr.mxu0 0.0
    %2566 = vmatpush1.msra.mxu0 0.0
    %2567 = vmatprep.subr.mxu0 0.0
    %2568 = vmatpush1.msra.mxu0 0.0
    %2569 = vmatprep.subr.mxu0 0.0
    %2570 = vmatpush1.msra.mxu0 0.0
    %2571 = vmatprep.subr.mxu0 0.0
    %2572 = vmatpush1.msra.mxu0 0.0
    %2573 = vmatprep.subr.mxu0 0.0
    %2574 = vmatpush1.msra.mxu0 0.0
    %2575 = vmatprep.subr.mxu0 0.0
    %2576 = vmatpush1.msra.mxu0 0.0
    %2577 = vmatprep.subr.mxu0 0.0
    %2578 = vmatpush1.msra.mxu0 0.0
    %2579 = vmatprep.subr.mxu0 0.0
    %2580 = vmatpush1.msra.mxu0 0.0
    %2581 = vmatprep.subr.mxu0 0.0
    %2582 = vmatpush1.msra.mxu0 0.0
    %2583 = vmatprep.subr.mxu0 0.0
    %2584 = vmatpush1.msra.mxu0 0.0
    %2585 = vmatprep.subr.mxu0 0.0
    %2586 = vmatpush1.msra.mxu0 0.0
    %2587 = vmatprep.subr.mxu0 0.0
    %2588 = vmatpush1.msra.mxu0 0.0
    %2589 = vmatprep.subr.mxu0 0.0
    %2590 = vmatpush1.msra.mxu0 0.0
    %2591 = vmatprep.subr.mxu0 0.0
    %2592 = vmatpush1.msra.mxu0 %v2556
    %2593 = vmatprep.subr.mxu0 0.0
    %2594 = vmatpush2.msra.mxu0 0.0
    %2595 = vmatprep.subr.mxu0 0.0
    %2596 = vmatpush2.msra.mxu0 0.0
    %2597 = vmatprep.subr.mxu0 0.0
    %2598 = vmatpush2.msra.mxu0 0.0
    %2599 = vmatprep.subr.mxu0 0.0
    %2600 = vmatpush2.msra.mxu0 0.0
    %2601 = vmatprep.subr.mxu0 0.0
    %2602 = vmatpush2.msra.mxu0 0.0
    %2603 = vmatprep.subr.mxu0 0.0
    %2604 = vmatpush2.msra.mxu0 0.0
    %2605 = vmatprep.subr.mxu0 0.0
    %2606 = vmatpush2.msra.mxu0 0.0
    %2607 = vmatprep.subr.mxu0 0.0
    %2608 = vmatpush2.msra.mxu0 0.0
    %2609 = vmatprep.subr.mxu0 0.0
    %2610 = vmatpush2.msra.mxu0 0.0
    %2611 = vmatprep.subr.mxu0 0.0
    %2612 = vmatpush2.msra.mxu0 0.0
    %2613 = vmatprep.subr.mxu0 0.0
    %2614 = vmatpush2.msra.mxu0 0.0
    %2615 = vmatprep.subr.mxu0 0.0
    %2616 = vmatpush2.msra.mxu0 0.0
    %2617 = vmatprep.subr.mxu0 0.0
    %2618 = vmatpush2.msra.mxu0 0.0
    %2619 = vmatprep.subr.mxu0 0.0
    %2620 = vmatpush2.msra.mxu0 0.0
    %2621 = vmatprep.subr.mxu0 0.0
    %2622 = vmatpush2.msra.mxu0 0.0
    %2623 = vmatprep.subr.mxu0 0.0
    %2624 = vmatpush2.msra.mxu0 0.0
    %2625 = vmatprep.mubr.f32.mxu0 0.0
    %2626 = vmatmul.mubr.f32.gmra.mxu0 %v2559
    %v2627 = vpop.f32.mrf.mxu0
    %v2628 = vadd.f32 0.0, %v2627
    %v2629 = vpop.f32.mrf.mxu0
    %2630 = vdwg.mxu0
    %2631 = vrot.lane.b32.xlu0 %v2126, 104
    %v2632 = vpop.permute.xlu0 %2631
    %2633 = vrot.lane.b32.xlu0 %v2126, 72
    %v2634 = vpop.permute.xlu0 %2633
    %v2635 = vsel %vm294, %v2632, 0
    %v2637 = vsel %vm294, %v2634, 0
    %2639 = vmatprep.subr.mxu0 0.0
    %2640 = vmatpush1.xpose.msra.mxu0 0.0
    %2641 = vmatprep.subr.mxu0 0.0
    %2642 = vmatpush1.xpose.msra.mxu0 0.0
    %2643 = vmatprep.subr.mxu0 0.0
    %2644 = vmatpush1.xpose.msra.mxu0 0.0
    %2645 = vmatprep.subr.mxu0 0.0
    %2646 = vmatpush1.xpose.msra.mxu0 0.0
    %2647 = vmatprep.subr.mxu0 0.0
    %2648 = vmatpush1.xpose.msra.mxu0 0.0
    %2649 = vmatprep.subr.mxu0 0.0
    %2650 = vmatpush1.xpose.msra.mxu0 0.0
    %2651 = vmatprep.subr.mxu0 0.0
    %2652 = vmatpush1.xpose.msra.mxu0 0.0
    %2653 = vmatprep.subr.mxu0 0.0
    %2654 = vmatpush1.xpose.msra.mxu0 0.0
    %2655 = vmatprep.subr.mxu0 0.0
    %2656 = vmatpush1.xpose.msra.mxu0 0.0
    %2657 = vmatprep.subr.mxu0 0.0
    %2658 = vmatpush1.xpose.msra.mxu0 0.0
    %2659 = vmatprep.subr.mxu0 0.0
    %2660 = vmatpush1.xpose.msra.mxu0 0.0
    %2661 = vmatprep.subr.mxu0 0.0
    %2662 = vmatpush1.xpose.msra.mxu0 0.0
    %2663 = vmatprep.subr.mxu0 0.0
    %2664 = vmatpush1.xpose.msra.mxu0 0.0
    %2665 = vmatprep.subr.mxu0 0.0
    %2666 = vmatpush1.xpose.msra.mxu0 0.0
    %2667 = vmatprep.subr.mxu0 0.0
    %2668 = vmatpush1.xpose.msra.mxu0 0.0
    %2669 = vmatprep.subr.mxu0 0.0
    %2670 = vmatpush1.xpose.msra.mxu0 %v2637
    %2671 = vmatprep.subr.mxu0 0.0
    %2672 = vmatpush2.xpose.msra.mxu0 0.0
    %2673 = vmatprep.subr.mxu0 0.0
    %2674 = vmatpush2.xpose.msra.mxu0 0.0
    %2675 = vmatprep.subr.mxu0 0.0
    %2676 = vmatpush2.xpose.msra.mxu0 0.0
    %2677 = vmatprep.subr.mxu0 0.0
    %2678 = vmatpush2.xpose.msra.mxu0 0.0
    %2679 = vmatprep.subr.mxu0 0.0
    %2680 = vmatpush2.xpose.msra.mxu0 0.0
    %2681 = vmatprep.subr.mxu0 0.0
    %2682 = vmatpush2.xpose.msra.mxu0 0.0
    %2683 = vmatprep.subr.mxu0 0.0
    %2684 = vmatpush2.xpose.msra.mxu0 0.0
    %2685 = vmatprep.subr.mxu0 0.0
    %2686 = vmatpush2.xpose.msra.mxu0 0.0
    %2687 = vmatprep.subr.mxu0 0.0
    %2688 = vmatpush2.xpose.msra.mxu0 0.0
    %2689 = vmatprep.subr.mxu0 0.0
    %2690 = vmatpush2.xpose.msra.mxu0 0.0
    %2691 = vmatprep.subr.mxu0 0.0
    %2692 = vmatpush2.xpose.msra.mxu0 0.0
    %2693 = vmatprep.subr.mxu0 0.0
    %2694 = vmatpush2.xpose.msra.mxu0 0.0
    %2695 = vmatprep.subr.mxu0 0.0
    %2696 = vmatpush2.xpose.msra.mxu0 0.0
    %2697 = vmatprep.subr.mxu0 0.0
    %2698 = vmatpush2.xpose.msra.mxu0 0.0
    %2699 = vmatprep.subr.mxu0 0.0
    %2700 = vmatpush2.xpose.msra.mxu0 0.0
    %2701 = vmatprep.subr.mxu0 0.0
    %2702 = vmatpush2.xpose.msra.mxu0 0.0
    %2703 = vmatprep.mubr.f32.mxu0 0.0
    %2704 = vmatmul.mubr.f32.gmra.mxu0 %v2635
    %v2705 = vpop.f32.mrf.mxu0
    %v2706 = vadd.f32 0.0, %v2705
    %v2707 = vpop.f32.mrf.mxu0
    %2708 = vdwg.mxu0
    %v2709 = vmul.f32 %v2706, 0.35355338
    %v2710 = vsel %vm294, %v2709, -inf
    %2711 = vmax.xlane.f32.xlu0 %v2710
    %v2712 = vpop.xlane.xlu0 %2711
    %v2713 = vsub.f32 %v2709, %v2712
    %v2714 = vmul.f32 %v2713, 1.442695
    %v2715 = vpow.pop %v2714
    %v2716 = vsel %vm294, %v2715, 0.0
    %2717 = vadd.xlane.f32.xlu0 %v2716
    %v2718 = vpop.xlane.xlu0 %2717
    %v2719 = vrcp.pop %v2718
    %v2720 = vmul.f32 %v2715, %v2719
    %2721 = vrot.lane.b32.xlu0 %v2126, 40
    %v2722 = vpop.permute.xlu0 %2721
    %v2725 = vsel %vm294, %v2720, 0
    %2727 = vmatprep.subr.mxu0 0.0
    %2728 = vmatpush1.msra.mxu0 0.0
    %2729 = vmatprep.subr.mxu0 0.0
    %2730 = vmatpush1.msra.mxu0 0.0
    %2731 = vmatprep.subr.mxu0 0.0
    %2732 = vmatpush1.msra.mxu0 0.0
    %2733 = vmatprep.subr.mxu0 0.0
    %2734 = vmatpush1.msra.mxu0 0.0
    %2735 = vmatprep.subr.mxu0 0.0
    %2736 = vmatpush1.msra.mxu0 0.0
    %2737 = vmatprep.subr.mxu0 0.0
    %2738 = vmatpush1.msra.mxu0 0.0
    %2739 = vmatprep.subr.mxu0 0.0
    %2740 = vmatpush1.msra.mxu0 0.0
    %2741 = vmatprep.subr.mxu0 0.0
    %2742 = vmatpush1.msra.mxu0 0.0
    %2743 = vmatprep.subr.mxu0 0.0
    %2744 = vmatpush1.msra.mxu0 0.0
    %2745 = vmatprep.subr.mxu0 0.0
    %2746 = vmatpush1.msra.mxu0 0.0
    %2747 = vmatprep.subr.mxu0 0.0
    %2748 = vmatpush1.msra.mxu0 0.0
    %2749 = vmatprep.subr.mxu0 0.0
    %2750 = vmatpush1.msra.mxu0 0.0
    %2751 = vmatprep.subr.mxu0 0.0
    %2752 = vmatpush1.msra.mxu0 0.0
    %2753 = vmatprep.subr.mxu0 0.0
    %2754 = vmatpush1.msra.mxu0 0.0
    %2755 = vmatprep.subr.mxu0 0.0
    %2756 = vmatpush1.msra.mxu0 0.0
    %2757 = vmatprep.subr.mxu0 0.0
    %2758 = vmatpush1.msra.mxu0 %v2722
    %2759 = vmatprep.subr.mxu0 0.0
    %2760 = vmatpush2.msra.mxu0 0.0
    %2761 = vmatprep.subr.mxu0 0.0
    %2762 = vmatpush2.msra.mxu0 0.0
    %2763 = vmatprep.subr.mxu0 0.0
    %2764 = vmatpush2.msra.mxu0 0.0
    %2765 = vmatprep.subr.mxu0 0.0
    %2766 = vmatpush2.msra.mxu0 0.0
    %2767 = vmatprep.subr.mxu0 0.0
    %2768 = vmatpush2.msra.mxu0 0.0
    %2769 = vmatprep.subr.mxu0 0.0
    %2770 = vmatpush2.msra.mxu0 0.0
    %2771 = vmatprep.subr.mxu0 0.0
    %2772 = vmatpush2.msra.mxu0 0.0
    %2773 = vmatprep.subr.mxu0 0.0
    %2774 = vmatpush2.msra.mxu0 0.0
    %2775 = vmatprep.subr.mxu0 0.0
    %2776 = vmatpush2.msra.mxu0 0.0
    %2777 = vmatprep.subr.mxu0 0.0
    %2778 = vmatpush2.msra.mxu0 0.0
    %2779 = vmatprep.subr.mxu0 0.0
    %2780 = vmatpush2.msra.mxu0 0.0
    %2781 = vmatprep.subr.mxu0 0.0
    %2782 = vmatpush2.msra.mxu0 0.0
    %2783 = vmatprep.subr.mxu0 0.0
    %2784 = vmatpush2.msra.mxu0 0.0
    %2785 = vmatprep.subr.mxu0 0.0
    %2786 = vmatpush2.msra.mxu0 0.0
    %2787 = vmatprep.subr.mxu0 0.0
    %2788 = vmatpush2.msra.mxu0 0.0
    %2789 = vmatprep.subr.mxu0 0.0
    %2790 = vmatpush2.msra.mxu0 0.0
    %2791 = vmatprep.mubr.f32.mxu0 0.0
    %2792 = vmatmul.mubr.f32.gmra.mxu0 %v2725
    %v2793 = vpop.f32.mrf.mxu0
    %v2794 = vadd.f32 0.0, %v2793
    %v2795 = vpop.f32.mrf.mxu0
    %2796 = vdwg.mxu0
    %2798 = vrot.lane.b32.xlu0 %v2462, 8
    %v2799 = vpop.permute.xlu0 %2798
    %2802 = vrot.lane.b32.xlu0 %v2628, 16
    %v2803 = vpop.permute.xlu0 %2802
    %2806 = vrot.lane.b32.xlu0 %v2794, 24
    %v2807 = vpop.permute.xlu0 %2806
    %v2809 = vsel %vm294, %v2296, %v2799
    %v2810 = vsel %vm968, %v2809, %v2803
    %v2811 = vsel %vm970, %v2810, %v2807
    %2813 = vrot.lane.b32.xlu0 %v2131, 96
    %v2814 = vpop.permute.xlu0 %2813
    %v2815 = vsel %vm294, %v2131, 0
    %v2817 = vsel %vm294, %v2814, 0
    %2819 = vmatprep.subr.mxu0 0.0
    %2820 = vmatpush1.xpose.msra.mxu0 0.0
    %2821 = vmatprep.subr.mxu0 0.0
    %2822 = vmatpush1.xpose.msra.mxu0 0.0
    %2823 = vmatprep.subr.mxu0 0.0
    %2824 = vmatpush1.xpose.msra.mxu0 0.0
    %2825 = vmatprep.subr.mxu0 0.0
    %2826 = vmatpush1.xpose.msra.mxu0 0.0
    %2827 = vmatprep.subr.mxu0 0.0
    %2828 = vmatpush1.xpose.msra.mxu0 0.0
    %2829 = vmatprep.subr.mxu0 0.0
    %2830 = vmatpush1.xpose.msra.mxu0 0.0
    %2831 = vmatprep.subr.mxu0 0.0
    %2832 = vmatpush1.xpose.msra.mxu0 0.0
    %2833 = vmatprep.subr.mxu0 0.0
    %2834 = vmatpush1.xpose.msra.mxu0 0.0
    %2835 = vmatprep.subr.mxu0 0.0
    %2836 = vmatpush1.xpose.msra.mxu0 0.0
    %2837 = vmatprep.subr.mxu0 0.0
    %2838 = vmatpush1.xpose.msra.mxu0 0.0
    %2839 = vmatprep.subr.mxu0 0.0
    %2840 = vmatpush1.xpose.msra.mxu0 0.0
    %2841 = vmatprep.subr.mxu0 0.0
    %2842 = vmatpush1.xpose.msra.mxu0 0.0
    %2843 = vmatprep.subr.mxu0 0.0
    %2844 = vmatpush1.xpose.msra.mxu0 0.0
    %2845 = vmatprep.subr.mxu0 0.0
    %2846 = vmatpush1.xpose.msra.mxu0 0.0
    %2847 = vmatprep.subr.mxu0 0.0
    %2848 = vmatpush1.xpose.msra.mxu0 0.0
    %2849 = vmatprep.subr.mxu0 0.0
    %2850 = vmatpush1.xpose.msra.mxu0 %v2817
    %2851 = vmatprep.subr.mxu0 0.0
    %2852 = vmatpush2.xpose.msra.mxu0 0.0
    %2853 = vmatprep.subr.mxu0 0.0
    %2854 = vmatpush2.xpose.msra.mxu0 0.0
    %2855 = vmatprep.subr.mxu0 0.0
    %2856 = vmatpush2.xpose.msra.mxu0 0.0
    %2857 = vmatprep.subr.mxu0 0.0
    %2858 = vmatpush2.xpose.msra.mxu0 0.0
    %2859 = vmatprep.subr.mxu0 0.0
    %2860 = vmatpush2.xpose.msra.mxu0 0.0
    %2861 = vmatprep.subr.mxu0 0.0
    %2862 = vmatpush2.xpose.msra.mxu0 0.0
    %2863 = vmatprep.subr.mxu0 0.0
    %2864 = vmatpush2.xpose.msra.mxu0 0.0
    %2865 = vmatprep.subr.mxu0 0.0
    %2866 = vmatpush2.xpose.msra.mxu0 0.0
    %2867 = vmatprep.subr.mxu0 0.0
    %2868 = vmatpush2.xpose.msra.mxu0 0.0
    %2869 = vmatprep.subr.mxu0 0.0
    %2870 = vmatpush2.xpose.msra.mxu0 0.0
    %2871 = vmatprep.subr.mxu0 0.0
    %2872 = vmatpush2.xpose.msra.mxu0 0.0
    %2873 = vmatprep.subr.mxu0 0.0
    %2874 = vmatpush2.xpose.msra.mxu0 0.0
    %2875 = vmatprep.subr.mxu0 0.0
    %2876 = vmatpush2.xpose.msra.mxu0 0.0
    %2877 = vmatprep.subr.mxu0 0.0
    %2878 = vmatpush2.xpose.msra.mxu0 0.0
    %2879 = vmatprep.subr.mxu0 0.0
    %2880 = vmatpush2.xpose.msra.mxu0 0.0
    %2881 = vmatprep.subr.mxu0 0.0
    %2882 = vmatpush2.xpose.msra.mxu0 0.0
    %2883 = vmatprep.mubr.f32.mxu0 0.0
    %2884 = vmatmul.mubr.f32.gmra.mxu0 %v2815
    %v2885 = vpop.f32.mrf.mxu0
    %v2886 = vadd.f32 0.0, %v2885
    %v2887 = vpop.f32.mrf.mxu0
    %2888 = vdwg.mxu0
    %v2889 = vmul.f32 %v2886, 0.35355338
    %v2890 = vsel %vm294, %v2889, -inf
    %2891 = vmax.xlane.f32.xlu0 %v2890
    %v2892 = vpop.xlane.xlu0 %2891
    %v2893 = vsub.f32 %v2889, %v2892
    %v2894 = vmul.f32 %v2893, 1.442695
    %v2895 = vpow.pop %v2894
    %v2896 = vsel %vm294, %v2895, 0.0
    %2897 = vadd.xlane.f32.xlu0 %v2896
    %v2898 = vpop.xlane.xlu0 %2897
    %v2899 = vrcp.pop %v2898
    %v2900 = vmul.f32 %v2895, %v2899
    %2901 = vrot.lane.b32.xlu0 %v2131, 64
    %v2902 = vpop.permute.xlu0 %2901
    %v2905 = vsel %vm294, %v2900, 0
    %2907 = vmatprep.subr.mxu0 0.0
    %2908 = vmatpush1.msra.mxu0 0.0
    %2909 = vmatprep.subr.mxu0 0.0
    %2910 = vmatpush1.msra.mxu0 0.0
    %2911 = vmatprep.subr.mxu0 0.0
    %2912 = vmatpush1.msra.mxu0 0.0
    %2913 = vmatprep.subr.mxu0 0.0
    %2914 = vmatpush1.msra.mxu0 0.0
    %2915 = vmatprep.subr.mxu0 0.0
    %2916 = vmatpush1.msra.mxu0 0.0
    %2917 = vmatprep.subr.mxu0 0.0
    %2918 = vmatpush1.msra.mxu0 0.0
    %2919 = vmatprep.subr.mxu0 0.0
    %2920 = vmatpush1.msra.mxu0 0.0
    %2921 = vmatprep.subr.mxu0 0.0
    %2922 = vmatpush1.msra.mxu0 0.0
    %2923 = vmatprep.subr.mxu0 0.0
    %2924 = vmatpush1.msra.mxu0 0.0
    %2925 = vmatprep.subr.mxu0 0.0
    %2926 = vmatpush1.msra.mxu0 0.0
    %2927 = vmatprep.subr.mxu0 0.0
    %2928 = vmatpush1.msra.mxu0 0.0
    %2929 = vmatprep.subr.mxu0 0.0
    %2930 = vmatpush1.msra.mxu0 0.0
    %2931 = vmatprep.subr.mxu0 0.0
    %2932 = vmatpush1.msra.mxu0 0.0
    %2933 = vmatprep.subr.mxu0 0.0
    %2934 = vmatpush1.msra.mxu0 0.0
    %2935 = vmatprep.subr.mxu0 0.0
    %2936 = vmatpush1.msra.mxu0 0.0
    %2937 = vmatprep.subr.mxu0 0.0
    %2938 = vmatpush1.msra.mxu0 %v2902
    %2939 = vmatprep.subr.mxu0 0.0
    %2940 = vmatpush2.msra.mxu0 0.0
    %2941 = vmatprep.subr.mxu0 0.0
    %2942 = vmatpush2.msra.mxu0 0.0
    %2943 = vmatprep.subr.mxu0 0.0
    %2944 = vmatpush2.msra.mxu0 0.0
    %2945 = vmatprep.subr.mxu0 0.0
    %2946 = vmatpush2.msra.mxu0 0.0
    %2947 = vmatprep.subr.mxu0 0.0
    %2948 = vmatpush2.msra.mxu0 0.0
    %2949 = vmatprep.subr.mxu0 0.0
    %2950 = vmatpush2.msra.mxu0 0.0
    %2951 = vmatprep.subr.mxu0 0.0
    %2952 = vmatpush2.msra.mxu0 0.0
    %2953 = vmatprep.subr.mxu0 0.0
    %2954 = vmatpush2.msra.mxu0 0.0
    %2955 = vmatprep.subr.mxu0 0.0
    %2956 = vmatpush2.msra.mxu0 0.0
    %2957 = vmatprep.subr.mxu0 0.0
    %2958 = vmatpush2.msra.mxu0 0.0
    %2959 = vmatprep.subr.mxu0 0.0
    %2960 = vmatpush2.msra.mxu0 0.0
    %2961 = vmatprep.subr.mxu0 0.0
    %2962 = vmatpush2.msra.mxu0 0.0
    %2963 = vmatprep.subr.mxu0 0.0
    %2964 = vmatpush2.msra.mxu0 0.0
    %2965 = vmatprep.subr.mxu0 0.0
    %2966 = vmatpush2.msra.mxu0 0.0
    %2967 = vmatprep.subr.mxu0 0.0
    %2968 = vmatpush2.msra.mxu0 0.0
    %2969 = vmatprep.subr.mxu0 0.0
    %2970 = vmatpush2.msra.mxu0 0.0
    %2971 = vmatprep.mubr.f32.mxu0 0.0
    %2972 = vmatmul.mubr.f32.gmra.mxu0 %v2905
    %v2973 = vpop.f32.mrf.mxu0
    %v2974 = vadd.f32 0.0, %v2973
    %v2975 = vpop.f32.mrf.mxu0
    %2976 = vdwg.mxu0
    %2977 = vrot.lane.b32.xlu0 %v2131, 120
    %v2978 = vpop.permute.xlu0 %2977
    %2979 = vrot.lane.b32.xlu0 %v2131, 88
    %v2980 = vpop.permute.xlu0 %2979
    %v2981 = vsel %vm294, %v2978, 0
    %v2983 = vsel %vm294, %v2980, 0
    %2985 = vmatprep.subr.mxu0 0.0
    %2986 = vmatpush1.xpose.msra.mxu0 0.0
    %2987 = vmatprep.subr.mxu0 0.0
    %2988 = vmatpush1.xpose.msra.mxu0 0.0
    %2989 = vmatprep.subr.mxu0 0.0
    %2990 = vmatpush1.xpose.msra.mxu0 0.0
    %2991 = vmatprep.subr.mxu0 0.0
    %2992 = vmatpush1.xpose.msra.mxu0 0.0
    %2993 = vmatprep.subr.mxu0 0.0
    %2994 = vmatpush1.xpose.msra.mxu0 0.0
    %2995 = vmatprep.subr.mxu0 0.0
    %2996 = vmatpush1.xpose.msra.mxu0 0.0
    %2997 = vmatprep.subr.mxu0 0.0
    %2998 = vmatpush1.xpose.msra.mxu0 0.0
    %2999 = vmatprep.subr.mxu0 0.0
    %3000 = vmatpush1.xpose.msra.mxu0 0.0
    %3001 = vmatprep.subr.mxu0 0.0
    %3002 = vmatpush1.xpose.msra.mxu0 0.0
    %3003 = vmatprep.subr.mxu0 0.0
    %3004 = vmatpush1.xpose.msra.mxu0 0.0
    %3005 = vmatprep.subr.mxu0 0.0
    %3006 = vmatpush1.xpose.msra.mxu0 0.0
    %3007 = vmatprep.subr.mxu0 0.0
    %3008 = vmatpush1.xpose.msra.mxu0 0.0
    %3009 = vmatprep.subr.mxu0 0.0
    %3010 = vmatpush1.xpose.msra.mxu0 0.0
    %3011 = vmatprep.subr.mxu0 0.0
    %3012 = vmatpush1.xpose.msra.mxu0 0.0
    %3013 = vmatprep.subr.mxu0 0.0
    %3014 = vmatpush1.xpose.msra.mxu0 0.0
    %3015 = vmatprep.subr.mxu0 0.0
    %3016 = vmatpush1.xpose.msra.mxu0 %v2983
    %3017 = vmatprep.subr.mxu0 0.0
    %3018 = vmatpush2.xpose.msra.mxu0 0.0
    %3019 = vmatprep.subr.mxu0 0.0
    %3020 = vmatpush2.xpose.msra.mxu0 0.0
    %3021 = vmatprep.subr.mxu0 0.0
    %3022 = vmatpush2.xpose.msra.mxu0 0.0
    %3023 = vmatprep.subr.mxu0 0.0
    %3024 = vmatpush2.xpose.msra.mxu0 0.0
    %3025 = vmatprep.subr.mxu0 0.0
    %3026 = vmatpush2.xpose.msra.mxu0 0.0
    %3027 = vmatprep.subr.mxu0 0.0
    %3028 = vmatpush2.xpose.msra.mxu0 0.0
    %3029 = vmatprep.subr.mxu0 0.0
    %3030 = vmatpush2.xpose.msra.mxu0 0.0
    %3031 = vmatprep.subr.mxu0 0.0
    %3032 = vmatpush2.xpose.msra.mxu0 0.0
    %3033 = vmatprep.subr.mxu0 0.0
    %3034 = vmatpush2.xpose.msra.mxu0 0.0
    %3035 = vmatprep.subr.mxu0 0.0
    %3036 = vmatpush2.xpose.msra.mxu0 0.0
    %3037 = vmatprep.subr.mxu0 0.0
    %3038 = vmatpush2.xpose.msra.mxu0 0.0
    %3039 = vmatprep.subr.mxu0 0.0
    %3040 = vmatpush2.xpose.msra.mxu0 0.0
    %3041 = vmatprep.subr.mxu0 0.0
    %3042 = vmatpush2.xpose.msra.mxu0 0.0
    %3043 = vmatprep.subr.mxu0 0.0
    %3044 = vmatpush2.xpose.msra.mxu0 0.0
    %3045 = vmatprep.subr.mxu0 0.0
    %3046 = vmatpush2.xpose.msra.mxu0 0.0
    %3047 = vmatprep.subr.mxu0 0.0
    %3048 = vmatpush2.xpose.msra.mxu0 0.0
    %3049 = vmatprep.mubr.f32.mxu0 0.0
    %3050 = vmatmul.mubr.f32.gmra.mxu0 %v2981
    %v3051 = vpop.f32.mrf.mxu0
    %v3052 = vadd.f32 0.0, %v3051
    %v3053 = vpop.f32.mrf.mxu0
    %3054 = vdwg.mxu0
    %v3055 = vmul.f32 %v3052, 0.35355338
    %v3056 = vsel %vm294, %v3055, -inf
    %3057 = vmax.xlane.f32.xlu0 %v3056
    %v3058 = vpop.xlane.xlu0 %3057
    %v3059 = vsub.f32 %v3055, %v3058
    %v3060 = vmul.f32 %v3059, 1.442695
    %v3061 = vpow.pop %v3060
    %v3062 = vsel %vm294, %v3061, 0.0
    %3063 = vadd.xlane.f32.xlu0 %v3062
    %v3064 = vpop.xlane.xlu0 %3063
    %v3065 = vrcp.pop %v3064
    %v3066 = vmul.f32 %v3061, %v3065
    %3067 = vrot.lane.b32.xlu0 %v2131, 56
    %v3068 = vpop.permute.xlu0 %3067
    %v3071 = vsel %vm294, %v3066, 0
    %3073 = vmatprep.subr.mxu0 0.0
    %3074 = vmatpush1.msra.mxu0 0.0
    %3075 = vmatprep.subr.mxu0 0.0
    %3076 = vmatpush1.msra.mxu0 0.0
    %3077 = vmatprep.subr.mxu0 0.0
    %3078 = vmatpush1.msra.mxu0 0.0
    %3079 = vmatprep.subr.mxu0 0.0
    %3080 = vmatpush1.msra.mxu0 0.0
    %3081 = vmatprep.subr.mxu0 0.0
    %3082 = vmatpush1.msra.mxu0 0.0
    %3083 = vmatprep.subr.mxu0 0.0
    %3084 = vmatpush1.msra.mxu0 0.0
    %3085 = vmatprep.subr.mxu0 0.0
    %3086 = vmatpush1.msra.mxu0 0.0
    %3087 = vmatprep.subr.mxu0 0.0
    %3088 = vmatpush1.msra.mxu0 0.0
    %3089 = vmatprep.subr.mxu0 0.0
    %3090 = vmatpush1.msra.mxu0 0.0
    %3091 = vmatprep.subr.mxu0 0.0
    %3092 = vmatpush1.msra.mxu0 0.0
    %3093 = vmatprep.subr.mxu0 0.0
    %3094 = vmatpush1.msra.mxu0 0.0
    %3095 = vmatprep.subr.mxu0 0.0
    %3096 = vmatpush1.msra.mxu0 0.0
    %3097 = vmatprep.subr.mxu0 0.0
    %3098 = vmatpush1.msra.mxu0 0.0
    %3099 = vmatprep.subr.mxu0 0.0
    %3100 = vmatpush1.msra.mxu0 0.0
    %3101 = vmatprep.subr.mxu0 0.0
    %3102 = vmatpush1.msra.mxu0 0.0
    %3103 = vmatprep.subr.mxu0 0.0
    %3104 = vmatpush1.msra.mxu0 %v3068
    %3105 = vmatprep.subr.mxu0 0.0
    %3106 = vmatpush2.msra.mxu0 0.0
    %3107 = vmatprep.subr.mxu0 0.0
    %3108 = vmatpush2.msra.mxu0 0.0
    %3109 = vmatprep.subr.mxu0 0.0
    %3110 = vmatpush2.msra.mxu0 0.0
    %3111 = vmatprep.subr.mxu0 0.0
    %3112 = vmatpush2.msra.mxu0 0.0
    %3113 = vmatprep.subr.mxu0 0.0
    %3114 = vmatpush2.msra.mxu0 0.0
    %3115 = vmatprep.subr.mxu0 0.0
    %3116 = vmatpush2.msra.mxu0 0.0
    %3117 = vmatprep.subr.mxu0 0.0
    %3118 = vmatpush2.msra.mxu0 0.0
    %3119 = vmatprep.subr.mxu0 0.0
    %3120 = vmatpush2.msra.mxu0 0.0
    %3121 = vmatprep.subr.mxu0 0.0
    %3122 = vmatpush2.msra.mxu0 0.0
    %3123 = vmatprep.subr.mxu0 0.0
    %3124 = vmatpush2.msra.mxu0 0.0
    %3125 = vmatprep.subr.mxu0 0.0
    %3126 = vmatpush2.msra.mxu0 0.0
    %3127 = vmatprep.subr.mxu0 0.0
    %3128 = vmatpush2.msra.mxu0 0.0
    %3129 = vmatprep.subr.mxu0 0.0
    %3130 = vmatpush2.msra.mxu0 0.0
    %3131 = vmatprep.subr.mxu0 0.0
    %3132 = vmatpush2.msra.mxu0 0.0
    %3133 = vmatprep.subr.mxu0 0.0
    %3134 = vmatpush2.msra.mxu0 0.0
    %3135 = vmatprep.subr.mxu0 0.0
    %3136 = vmatpush2.msra.mxu0 0.0
    %3137 = vmatprep.mubr.f32.mxu0 0.0
    %3138 = vmatmul.mubr.f32.gmra.mxu0 %v3071
    %v3139 = vpop.f32.mrf.mxu0
    %v3140 = vadd.f32 0.0, %v3139
    %v3141 = vpop.f32.mrf.mxu0
    %3142 = vdwg.mxu0
    %3143 = vrot.lane.b32.xlu0 %v2131, 112
    %v3144 = vpop.permute.xlu0 %3143
    %3145 = vrot.lane.b32.xlu0 %v2131, 80
    %v3146 = vpop.permute.xlu0 %3145
    %v3147 = vsel %vm294, %v3144, 0
    %v3149 = vsel %vm294, %v3146, 0
    %3151 = vmatprep.subr.mxu0 0.0
    %3152 = vmatpush1.xpose.msra.mxu0 0.0
    %3153 = vmatprep.subr.mxu0 0.0
    %3154 = vmatpush1.xpose.msra.mxu0 0.0
    %3155 = vmatprep.subr.mxu0 0.0
    %3156 = vmatpush1.xpose.msra.mxu0 0.0
    %3157 = vmatprep.subr.mxu0 0.0
    %3158 = vmatpush1.xpose.msra.mxu0 0.0
    %3159 = vmatprep.subr.mxu0 0.0
    %3160 = vmatpush1.xpose.msra.mxu0 0.0
    %3161 = vmatprep.subr.mxu0 0.0
    %3162 = vmatpush1.xpose.msra.mxu0 0.0
    %3163 = vmatprep.subr.mxu0 0.0
    %3164 = vmatpush1.xpose.msra.mxu0 0.0
    %3165 = vmatprep.subr.mxu0 0.0
    %3166 = vmatpush1.xpose.msra.mxu0 0.0
    %3167 = vmatprep.subr.mxu0 0.0
    %3168 = vmatpush1.xpose.msra.mxu0 0.0
    %3169 = vmatprep.subr.mxu0 0.0
    %3170 = vmatpush1.xpose.msra.mxu0 0.0
    %3171 = vmatprep.subr.mxu0 0.0
    %3172 = vmatpush1.xpose.msra.mxu0 0.0
    %3173 = vmatprep.subr.mxu0 0.0
    %3174 = vmatpush1.xpose.msra.mxu0 0.0
    %3175 = vmatprep.subr.mxu0 0.0
    %3176 = vmatpush1.xpose.msra.mxu0 0.0
    %3177 = vmatprep.subr.mxu0 0.0
    %3178 = vmatpush1.xpose.msra.mxu0 0.0
    %3179 = vmatprep.subr.mxu0 0.0
    %3180 = vmatpush1.xpose.msra.mxu0 0.0
    %3181 = vmatprep.subr.mxu0 0.0
    %3182 = vmatpush1.xpose.msra.mxu0 %v3149
    %3183 = vmatprep.subr.mxu0 0.0
    %3184 = vmatpush2.xpose.msra.mxu0 0.0
    %3185 = vmatprep.subr.mxu0 0.0
    %3186 = vmatpush2.xpose.msra.mxu0 0.0
    %3187 = vmatprep.subr.mxu0 0.0
    %3188 = vmatpush2.xpose.msra.mxu0 0.0
    %3189 = vmatprep.subr.mxu0 0.0
    %3190 = vmatpush2.xpose.msra.mxu0 0.0
    %3191 = vmatprep.subr.mxu0 0.0
    %3192 = vmatpush2.xpose.msra.mxu0 0.0
    %3193 = vmatprep.subr.mxu0 0.0
    %3194 = vmatpush2.xpose.msra.mxu0 0.0
    %3195 = vmatprep.subr.mxu0 0.0
    %3196 = vmatpush2.xpose.msra.mxu0 0.0
    %3197 = vmatprep.subr.mxu0 0.0
    %3198 = vmatpush2.xpose.msra.mxu0 0.0
    %3199 = vmatprep.subr.mxu0 0.0
    %3200 = vmatpush2.xpose.msra.mxu0 0.0
    %3201 = vmatprep.subr.mxu0 0.0
    %3202 = vmatpush2.xpose.msra.mxu0 0.0
    %3203 = vmatprep.subr.mxu0 0.0
    %3204 = vmatpush2.xpose.msra.mxu0 0.0
    %3205 = vmatprep.subr.mxu0 0.0
    %3206 = vmatpush2.xpose.msra.mxu0 0.0
    %3207 = vmatprep.subr.mxu0 0.0
    %3208 = vmatpush2.xpose.msra.mxu0 0.0
    %3209 = vmatprep.subr.mxu0 0.0
    %3210 = vmatpush2.xpose.msra.mxu0 0.0
    %3211 = vmatprep.subr.mxu0 0.0
    %3212 = vmatpush2.xpose.msra.mxu0 0.0
    %3213 = vmatprep.subr.mxu0 0.0
    %3214 = vmatpush2.xpose.msra.mxu0 0.0
    %3215 = vmatprep.mubr.f32.mxu0 0.0
    %3216 = vmatmul.mubr.f32.gmra.mxu0 %v3147
    %v3217 = vpop.f32.mrf.mxu0
    %v3218 = vadd.f32 0.0, %v3217
    %v3219 = vpop.f32.mrf.mxu0
    %3220 = vdwg.mxu0
    %v3221 = vmul.f32 %v3218, 0.35355338
    %v3222 = vsel %vm294, %v3221, -inf
    %3223 = vmax.xlane.f32.xlu0 %v3222
    %v3224 = vpop.xlane.xlu0 %3223
    %v3225 = vsub.f32 %v3221, %v3224
    %v3226 = vmul.f32 %v3225, 1.442695
    %v3227 = vpow.pop %v3226
    %v3228 = vsel %vm294, %v3227, 0.0
    %3229 = vadd.xlane.f32.xlu0 %v3228
    %v3230 = vpop.xlane.xlu0 %3229
    %v3231 = vrcp.pop %v3230
    %v3232 = vmul.f32 %v3227, %v3231
    %3233 = vrot.lane.b32.xlu0 %v2131, 48
    %v3234 = vpop.permute.xlu0 %3233
    %v3237 = vsel %vm294, %v3232, 0
    %3239 = vmatprep.subr.mxu0 0.0
    %3240 = vmatpush1.msra.mxu0 0.0
    %3241 = vmatprep.subr.mxu0 0.0
    %3242 = vmatpush1.msra.mxu0 0.0
    %3243 = vmatprep.subr.mxu0 0.0
    %3244 = vmatpush1.msra.mxu0 0.0
    %3245 = vmatprep.subr.mxu0 0.0
    %3246 = vmatpush1.msra.mxu0 0.0
    %3247 = vmatprep.subr.mxu0 0.0
    %3248 = vmatpush1.msra.mxu0 0.0
    %3249 = vmatprep.subr.mxu0 0.0
    %3250 = vmatpush1.msra.mxu0 0.0
    %3251 = vmatprep.subr.mxu0 0.0
    %3252 = vmatpush1.msra.mxu0 0.0
    %3253 = vmatprep.subr.mxu0 0.0
    %3254 = vmatpush1.msra.mxu0 0.0
    %3255 = vmatprep.subr.mxu0 0.0
    %3256 = vmatpush1.msra.mxu0 0.0
    %3257 = vmatprep.subr.mxu0 0.0
    %3258 = vmatpush1.msra.mxu0 0.0
    %3259 = vmatprep.subr.mxu0 0.0
    %3260 = vmatpush1.msra.mxu0 0.0
    %3261 = vmatprep.subr.mxu0 0.0
    %3262 = vmatpush1.msra.mxu0 0.0
    %3263 = vmatprep.subr.mxu0 0.0
    %3264 = vmatpush1.msra.mxu0 0.0
    %3265 = vmatprep.subr.mxu0 0.0
    %3266 = vmatpush1.msra.mxu0 0.0
    %3267 = vmatprep.subr.mxu0 0.0
    %3268 = vmatpush1.msra.mxu0 0.0
    %3269 = vmatprep.subr.mxu0 0.0
    %3270 = vmatpush1.msra.mxu0 %v3234
    %3271 = vmatprep.subr.mxu0 0.0
    %3272 = vmatpush2.msra.mxu0 0.0
    %3273 = vmatprep.subr.mxu0 0.0
    %3274 = vmatpush2.msra.mxu0 0.0
    %3275 = vmatprep.subr.mxu0 0.0
    %3276 = vmatpush2.msra.mxu0 0.0
    %3277 = vmatprep.subr.mxu0 0.0
    %3278 = vmatpush2.msra.mxu0 0.0
    %3279 = vmatprep.subr.mxu0 0.0
    %3280 = vmatpush2.msra.mxu0 0.0
    %3281 = vmatprep.subr.mxu0 0.0
    %3282 = vmatpush2.msra.mxu0 0.0
    %3283 = vmatprep.subr.mxu0 0.0
    %3284 = vmatpush2.msra.mxu0 0.0
    %3285 = vmatprep.subr.mxu0 0.0
    %3286 = vmatpush2.msra.mxu0 0.0
    %3287 = vmatprep.subr.mxu0 0.0
    %3288 = vmatpush2.msra.mxu0 0.0
    %3289 = vmatprep.subr.mxu0 0.0
    %3290 = vmatpush2.msra.mxu0 0.0
    %3291 = vmatprep.subr.mxu0 0.0
    %3292 = vmatpush2.msra.mxu0 0.0
    %3293 = vmatprep.subr.mxu0 0.0
    %3294 = vmatpush2.msra.mxu0 0.0
    %3295 = vmatprep.subr.mxu0 0.0
    %3296 = vmatpush2.msra.mxu0 0.0
    %3297 = vmatprep.subr.mxu0 0.0
    %3298 = vmatpush2.msra.mxu0 0.0
    %3299 = vmatprep.subr.mxu0 0.0
    %3300 = vmatpush2.msra.mxu0 0.0
    %3301 = vmatprep.subr.mxu0 0.0
    %3302 = vmatpush2.msra.mxu0 0.0
    %3303 = vmatprep.mubr.f32.mxu0 0.0
    %3304 = vmatmul.mubr.f32.gmra.mxu0 %v3237
    %v3305 = vpop.f32.mrf.mxu0
    %v3306 = vadd.f32 0.0, %v3305
    %v3307 = vpop.f32.mrf.mxu0
    %3308 = vdwg.mxu0
    %3309 = vrot.lane.b32.xlu0 %v2131, 104
    %v3310 = vpop.permute.xlu0 %3309
    %3311 = vrot.lane.b32.xlu0 %v2131, 72
    %v3312 = vpop.permute.xlu0 %3311
    %v3313 = vsel %vm294, %v3310, 0
    %v3315 = vsel %vm294, %v3312, 0
    %3317 = vmatprep.subr.mxu0 0.0
    %3318 = vmatpush1.xpose.msra.mxu0 0.0
    %3319 = vmatprep.subr.mxu0 0.0
    %3320 = vmatpush1.xpose.msra.mxu0 0.0
    %3321 = vmatprep.subr.mxu0 0.0
    %3322 = vmatpush1.xpose.msra.mxu0 0.0
    %3323 = vmatprep.subr.mxu0 0.0
    %3324 = vmatpush1.xpose.msra.mxu0 0.0
    %3325 = vmatprep.subr.mxu0 0.0
    %3326 = vmatpush1.xpose.msra.mxu0 0.0
    %3327 = vmatprep.subr.mxu0 0.0
    %3328 = vmatpush1.xpose.msra.mxu0 0.0
    %3329 = vmatprep.subr.mxu0 0.0
    %3330 = vmatpush1.xpose.msra.mxu0 0.0
    %3331 = vmatprep.subr.mxu0 0.0
    %3332 = vmatpush1.xpose.msra.mxu0 0.0
    %3333 = vmatprep.subr.mxu0 0.0
    %3334 = vmatpush1.xpose.msra.mxu0 0.0
    %3335 = vmatprep.subr.mxu0 0.0
    %3336 = vmatpush1.xpose.msra.mxu0 0.0
    %3337 = vmatprep.subr.mxu0 0.0
    %3338 = vmatpush1.xpose.msra.mxu0 0.0
    %3339 = vmatprep.subr.mxu0 0.0
    %3340 = vmatpush1.xpose.msra.mxu0 0.0
    %3341 = vmatprep.subr.mxu0 0.0
    %3342 = vmatpush1.xpose.msra.mxu0 0.0
    %3343 = vmatprep.subr.mxu0 0.0
    %3344 = vmatpush1.xpose.msra.mxu0 0.0
    %3345 = vmatprep.subr.mxu0 0.0
    %3346 = vmatpush1.xpose.msra.mxu0 0.0
    %3347 = vmatprep.subr.mxu0 0.0
    %3348 = vmatpush1.xpose.msra.mxu0 %v3315
    %3349 = vmatprep.subr.mxu0 0.0
    %3350 = vmatpush2.xpose.msra.mxu0 0.0
    %3351 = vmatprep.subr.mxu0 0.0
    %3352 = vmatpush2.xpose.msra.mxu0 0.0
    %3353 = vmatprep.subr.mxu0 0.0
    %3354 = vmatpush2.xpose.msra.mxu0 0.0
    %3355 = vmatprep.subr.mxu0 0.0
    %3356 = vmatpush2.xpose.msra.mxu0 0.0
    %3357 = vmatprep.subr.mxu0 0.0
    %3358 = vmatpush2.xpose.msra.mxu0 0.0
    %3359 = vmatprep.subr.mxu0 0.0
    %3360 = vmatpush2.xpose.msra.mxu0 0.0
    %3361 = vmatprep.subr.mxu0 0.0
    %3362 = vmatpush2.xpose.msra.mxu0 0.0
    %3363 = vmatprep.subr.mxu0 0.0
    %3364 = vmatpush2.xpose.msra.mxu0 0.0
    %3365 = vmatprep.subr.mxu0 0.0
    %3366 = vmatpush2.xpose.msra.mxu0 0.0
    %3367 = vmatprep.subr.mxu0 0.0
    %3368 = vmatpush2.xpose.msra.mxu0 0.0
    %3369 = vmatprep.subr.mxu0 0.0
    %3370 = vmatpush2.xpose.msra.mxu0 0.0
    %3371 = vmatprep.subr.mxu0 0.0
    %3372 = vmatpush2.xpose.msra.mxu0 0.0
    %3373 = vmatprep.subr.mxu0 0.0
    %3374 = vmatpush2.xpose.msra.mxu0 0.0
    %3375 = vmatprep.subr.mxu0 0.0
    %3376 = vmatpush2.xpose.msra.mxu0 0.0
    %3377 = vmatprep.subr.mxu0 0.0
    %3378 = vmatpush2.xpose.msra.mxu0 0.0
    %3379 = vmatprep.subr.mxu0 0.0
    %3380 = vmatpush2.xpose.msra.mxu0 0.0
    %3381 = vmatprep.mubr.f32.mxu0 0.0
    %3382 = vmatmul.mubr.f32.gmra.mxu0 %v3313
    %v3383 = vpop.f32.mrf.mxu0
    %v3384 = vadd.f32 0.0, %v3383
    %v3385 = vpop.f32.mrf.mxu0
    %3386 = vdwg.mxu0
    %v3387 = vmul.f32 %v3384, 0.35355338
    %v3388 = vsel %vm294, %v3387, -inf
    %3389 = vmax.xlane.f32.xlu0 %v3388
    %v3390 = vpop.xlane.xlu0 %3389
    %v3391 = vsub.f32 %v3387, %v3390
    %v3392 = vmul.f32 %v3391, 1.442695
    %v3393 = vpow.pop %v3392
    %v3394 = vsel %vm294, %v3393, 0.0
    %3395 = vadd.xlane.f32.xlu0 %v3394
    %v3396 = vpop.xlane.xlu0 %3395
    %v3397 = vrcp.pop %v3396
    %v3398 = vmul.f32 %v3393, %v3397
    %3399 = vrot.lane.b32.xlu0 %v2131, 40
    %v3400 = vpop.permute.xlu0 %3399
    %v3403 = vsel %vm294, %v3398, 0
    %3405 = vmatprep.subr.mxu0 0.0
    %3406 = vmatpush1.msra.mxu0 0.0
    %3407 = vmatprep.subr.mxu0 0.0
    %3408 = vmatpush1.msra.mxu0 0.0
    %3409 = vmatprep.subr.mxu0 0.0
    %3410 = vmatpush1.msra.mxu0 0.0
    %3411 = vmatprep.subr.mxu0 0.0
    %3412 = vmatpush1.msra.mxu0 0.0
    %3413 = vmatprep.subr.mxu0 0.0
    %3414 = vmatpush1.msra.mxu0 0.0
    %3415 = vmatprep.subr.mxu0 0.0
    %3416 = vmatpush1.msra.mxu0 0.0
    %3417 = vmatprep.subr.mxu0 0.0
    %3418 = vmatpush1.msra.mxu0 0.0
    %3419 = vmatprep.subr.mxu0 0.0
    %3420 = vmatpush1.msra.mxu0 0.0
    %3421 = vmatprep.subr.mxu0 0.0
    %3422 = vmatpush1.msra.mxu0 0.0
    %3423 = vmatprep.subr.mxu0 0.0
    %3424 = vmatpush1.msra.mxu0 0.0
    %3425 = vmatprep.subr.mxu0 0.0
    %3426 = vmatpush1.msra.mxu0 0.0
    %3427 = vmatprep.subr.mxu0 0.0
    %3428 = vmatpush1.msra.mxu0 0.0
    %3429 = vmatprep.subr.mxu0 0.0
    %3430 = vmatpush1.msra.mxu0 0.0
    %3431 = vmatprep.subr.mxu0 0.0
    %3432 = vmatpush1.msra.mxu0 0.0
    %3433 = vmatprep.subr.mxu0 0.0
    %3434 = vmatpush1.msra.mxu0 0.0
    %3435 = vmatprep.subr.mxu0 0.0
    %3436 = vmatpush1.msra.mxu0 %v3400
    %3437 = vmatprep.subr.mxu0 0.0
    %3438 = vmatpush2.msra.mxu0 0.0
    %3439 = vmatprep.subr.mxu0 0.0
    %3440 = vmatpush2.msra.mxu0 0.0
    %3441 = vmatprep.subr.mxu0 0.0
    %3442 = vmatpush2.msra.mxu0 0.0
    %3443 = vmatprep.subr.mxu0 0.0
    %3444 = vmatpush2.msra.mxu0 0.0
    %3445 = vmatprep.subr.mxu0 0.0
    %3446 = vmatpush2.msra.mxu0 0.0
    %3447 = vmatprep.subr.mxu0 0.0
    %3448 = vmatpush2.msra.mxu0 0.0
    %3449 = vmatprep.subr.mxu0 0.0
    %3450 = vmatpush2.msra.mxu0 0.0
    %3451 = vmatprep.subr.mxu0 0.0
    %3452 = vmatpush2.msra.mxu0 0.0
    %3453 = vmatprep.subr.mxu0 0.0
    %3454 = vmatpush2.msra.mxu0 0.0
    %3455 = vmatprep.subr.mxu0 0.0
    %3456 = vmatpush2.msra.mxu0 0.0
    %3457 = vmatprep.subr.mxu0 0.0
    %3458 = vmatpush2.msra.mxu0 0.0
    %3459 = vmatprep.subr.mxu0 0.0
    %3460 = vmatpush2.msra.mxu0 0.0
    %3461 = vmatprep.subr.mxu0 0.0
    %3462 = vmatpush2.msra.mxu0 0.0
    %3463 = vmatprep.subr.mxu0 0.0
    %3464 = vmatpush2.msra.mxu0 0.0
    %3465 = vmatprep.subr.mxu0 0.0
    %3466 = vmatpush2.msra.mxu0 0.0
    %3467 = vmatprep.subr.mxu0 0.0
    %3468 = vmatpush2.msra.mxu0 0.0
    %3469 = vmatprep.mubr.f32.mxu0 0.0
    %3470 = vmatmul.mubr.f32.gmra.mxu0 %v3403
    %v3471 = vpop.f32.mrf.mxu0
    %v3472 = vadd.f32 0.0, %v3471
    %v3473 = vpop.f32.mrf.mxu0
    %3474 = vdwg.mxu0
    %3476 = vrot.lane.b32.xlu0 %v3140, 8
    %v3477 = vpop.permute.xlu0 %3476
    %3480 = vrot.lane.b32.xlu0 %v3306, 16
    %v3481 = vpop.permute.xlu0 %3480
    %3484 = vrot.lane.b32.xlu0 %v3472, 24
    %v3485 = vpop.permute.xlu0 %3484
    %v3487 = vsel %vm294, %v2974, %v3477
    %v3488 = vsel %vm968, %v3487, %v3481
    %v3489 = vsel %vm970, %v3488, %v3485
    %v3490 = vld [vmem:[%s39] sm:$0xff]
    %v3491 = vld [vmem:[%s39 + $0x8] sm:$0xff]
    %v3492 = vld [vmem:[%s39 + $0x10] sm:$0xff]
    %v3493 = vld [vmem:[%s39 + $0x18] sm:$0xff]
    %v3494 = vld [vmem:[%s41] sm:$0x1]
    %v3496 = vlaneseq
    %v3497 = vshrl.u32 %v3496, 7
    %v3498 = vsub.s32 0, %v3497
    %v3499 = vrot.slane %v3494, %v3498
    %v3502 = vsel %vm155, %v2811, 0
    %v3505 = vsel %vm155, %v3489, 0
    %3507 = vmatprep.subr.mxu0 0.0
    %3508 = vmatpush1.msra.mxu0 0.0
    %3509 = vmatprep.subr.mxu0 0.0
    %3510 = vmatpush1.msra.mxu0 0.0
    %3511 = vmatprep.subr.mxu0 0.0
    %3512 = vmatpush1.msra.mxu0 0.0
    %3513 = vmatprep.subr.mxu0 0.0
    %3514 = vmatpush1.msra.mxu0 0.0
    %3515 = vmatprep.subr.mxu0 0.0
    %3516 = vmatpush1.msra.mxu0 0.0
    %3517 = vmatprep.subr.mxu0 0.0
    %3518 = vmatpush1.msra.mxu0 0.0
    %3519 = vmatprep.subr.mxu0 0.0
    %3520 = vmatpush1.msra.mxu0 0.0
    %3521 = vmatprep.subr.mxu0 0.0
    %3522 = vmatpush1.msra.mxu0 0.0
    %3523 = vmatprep.subr.mxu0 0.0
    %3524 = vmatpush1.msra.mxu0 0.0
    %3525 = vmatprep.subr.mxu0 0.0
    %3526 = vmatpush1.msra.mxu0 0.0
    %3527 = vmatprep.subr.mxu0 0.0
    %3528 = vmatpush1.msra.mxu0 0.0
    %3529 = vmatprep.subr.mxu0 0.0
    %3530 = vmatpush1.msra.mxu0 0.0
    %3531 = vmatprep.subr.mxu0 0.0
    %3532 = vmatpush1.msra.mxu0 %v3493
    %3533 = vmatprep.subr.mxu0 0.0
    %3534 = vmatpush1.msra.mxu0 %v3492
    %3535 = vmatprep.subr.mxu0 0.0
    %3536 = vmatpush1.msra.mxu0 %v3491
    %3537 = vmatprep.subr.mxu0 0.0
    %3538 = vmatpush1.msra.mxu0 %v3490
    %3539 = vmatprep.subr.mxu0 0.0
    %3540 = vmatpush2.msra.mxu0 0.0
    %3541 = vmatprep.subr.mxu0 0.0
    %3542 = vmatpush2.msra.mxu0 0.0
    %3543 = vmatprep.subr.mxu0 0.0
    %3544 = vmatpush2.msra.mxu0 0.0
    %3545 = vmatprep.subr.mxu0 0.0
    %3546 = vmatpush2.msra.mxu0 0.0
    %3547 = vmatprep.subr.mxu0 0.0
    %3548 = vmatpush2.msra.mxu0 0.0
    %3549 = vmatprep.subr.mxu0 0.0
    %3550 = vmatpush2.msra.mxu0 0.0
    %3551 = vmatprep.subr.mxu0 0.0
    %3552 = vmatpush2.msra.mxu0 0.0
    %3553 = vmatprep.subr.mxu0 0.0
    %3554 = vmatpush2.msra.mxu0 0.0
    %3555 = vmatprep.subr.mxu0 0.0
    %3556 = vmatpush2.msra.mxu0 0.0
    %3557 = vmatprep.subr.mxu0 0.0
    %3558 = vmatpush2.msra.mxu0 0.0
    %3559 = vmatprep.subr.mxu0 0.0
    %3560 = vmatpush2.msra.mxu0 0.0
    %3561 = vmatprep.subr.mxu0 0.0
    %3562 = vmatpush2.msra.mxu0 0.0
    %3563 = vmatprep.subr.mxu0 0.0
    %3564 = vmatpush2.msra.mxu0 0.0
    %3565 = vmatprep.subr.mxu0 0.0
    %3566 = vmatpush2.msra.mxu0 0.0
    %3567 = vmatprep.subr.mxu0 0.0
    %3568 = vmatpush2.msra.mxu0 0.0
    %3569 = vmatprep.subr.mxu0 0.0
    %3570 = vmatpush2.msra.mxu0 0.0
    %3571 = vmatprep.mubr.f32.mxu0 0.0
    %3572 = vmatmul.mubr.f32.gmra.mxu0 %v3502
    %v3573 = vpop.f32.mrf.mxu0
    %v3574 = vadd.f32 %v3499, %v3573
    %v3575 = vpop.f32.mrf.mxu0
    %3576 = vmatprep.mubr.f32.mxu0 0.0
    %3577 = vmatmul.mubr.f32.gmra.mxu0 %v3505
    %v3578 = vpop.f32.mrf.mxu0
    %v3579 = vadd.f32 %v3499, %v3578
    %v3580 = vpop.f32.mrf.mxu0
    %3581 = vdwg.mxu0
    %v3582 = vadd.f32 %v3574, %v2040
    %v3583 = vadd.f32 %v3579, %v2041
    %v3584 = vld [vmem:[%s43] sm:$0x1]
    %v3585 = vld [vmem:[%s45] sm:$0x1]
    %v3586 = vsel %vm155, %v3582, 0.0
    %3587 = vadd.xlane.f32.xlu0 %v3586
    %v3588 = vpop.xlane.xlu0 %3587
    %v3589 = vsel %vm155, %v3583, 0.0
    %3590 = vadd.xlane.f32.xlu0 %v3589
    %v3591 = vpop.xlane.xlu0 %3590
    %v3592 = vmul.f32 %v3588, %v162
    %v3593 = vmul.f32 %v3591, %v162
    %v3594 = vsub.f32 %v3582, %v3592
    %v3595 = vsub.f32 %v3583, %v3593
    %v3596 = vmul.f32 %v3594, %v3594
    %v3597 = vmul.f32 %v3595, %v3595
    %v3598 = vsel %vm155, %v3596, 0.0
    %3599 = vadd.xlane.f32.xlu0 %v3598
    %v3600 = vpop.xlane.xlu0 %3599
    %v3601 = vsel %vm155, %v3597, 0.0
    %3602 = vadd.xlane.f32.xlu0 %v3601
    %v3603 = vpop.xlane.xlu0 %3602
    %v3604 = vmul.f32 %v3600, %v162
    %v3605 = vmul.f32 %v3603, %v162
    %v3606 = vadd.f32 %v3604, 1e-12
    %v3607 = vadd.f32 %v3605, 1e-12
    %v3608 = vrsqrt.pop %v3606
    %v3609 = vrsqrt.pop %v3607
    %v3610 = vmul.f32 %v3594, %v3608
    %v3611 = vmul.f32 %v3595, %v3609
    %v3613 = vlaneseq
    %v3614 = vshrl.u32 %v3613, 7
    %v3615 = vsub.s32 0, %v3614
    %v3616 = vrot.slane %v3584, %v3615
    %v3618 = vmul.f32 %v3610, %v3616
    %v3619 = vmul.f32 %v3611, %v3616
    %v3621 = vlaneseq
    %v3622 = vshrl.u32 %v3621, 7
    %v3623 = vsub.s32 0, %v3622
    %v3624 = vrot.slane %v3585, %v3623
    %v3626 = vadd.f32 %v3618, %v3624
    %v3627 = vadd.f32 %v3619, %v3624
    %v3628 = vld [vmem:[%s47] sm:$0xff]
    %v3629 = vld [vmem:[%s47 + $0x8] sm:$0xff]
    %v3630 = vld [vmem:[%s47 + $0x10] sm:$0xff]
    %v3631 = vld [vmem:[%s47 + $0x18] sm:$0xff]
    %v3632 = vld [vmem:[%s49] sm:$0x1]
    %v3634 = vlaneseq
    %v3635 = vshrl.u32 %v3634, 7
    %v3636 = vsub.s32 0, %v3635
    %v3637 = vrot.slane %v3632, %v3636
    %v3640 = vsel %vm155, %v3626, 0
    %v3643 = vsel %vm155, %v3627, 0
    %3645 = vmatprep.subr.mxu0 0.0
    %3646 = vmatpush1.msra.mxu0 0.0
    %3647 = vmatprep.subr.mxu0 0.0
    %3648 = vmatpush1.msra.mxu0 0.0
    %3649 = vmatprep.subr.mxu0 0.0
    %3650 = vmatpush1.msra.mxu0 0.0
    %3651 = vmatprep.subr.mxu0 0.0
    %3652 = vmatpush1.msra.mxu0 0.0
    %3653 = vmatprep.subr.mxu0 0.0
    %3654 = vmatpush1.msra.mxu0 0.0
    %3655 = vmatprep.subr.mxu0 0.0
    %3656 = vmatpush1.msra.mxu0 0.0
    %3657 = vmatprep.subr.mxu0 0.0
    %3658 = vmatpush1.msra.mxu0 0.0
    %3659 = vmatprep.subr.mxu0 0.0
    %3660 = vmatpush1.msra.mxu0 0.0
    %3661 = vmatprep.subr.mxu0 0.0
    %3662 = vmatpush1.msra.mxu0 0.0
    %3663 = vmatprep.subr.mxu0 0.0
    %3664 = vmatpush1.msra.mxu0 0.0
    %3665 = vmatprep.subr.mxu0 0.0
    %3666 = vmatpush1.msra.mxu0 0.0
    %3667 = vmatprep.subr.mxu0 0.0
    %3668 = vmatpush1.msra.mxu0 0.0
    %3669 = vmatprep.subr.mxu0 0.0
    %3670 = vmatpush1.msra.mxu0 %v3631
    %3671 = vmatprep.subr.mxu0 0.0
    %3672 = vmatpush1.msra.mxu0 %v3630
    %3673 = vmatprep.subr.mxu0 0.0
    %3674 = vmatpush1.msra.mxu0 %v3629
    %3675 = vmatprep.subr.mxu0 0.0
    %3676 = vmatpush1.msra.mxu0 %v3628
    %3677 = vmatprep.subr.mxu0 0.0
    %3678 = vmatpush2.msra.mxu0 0.0
    %3679 = vmatprep.subr.mxu0 0.0
    %3680 = vmatpush2.msra.mxu0 0.0
    %3681 = vmatprep.subr.mxu0 0.0
    %3682 = vmatpush2.msra.mxu0 0.0
    %3683 = vmatprep.subr.mxu0 0.0
    %3684 = vmatpush2.msra.mxu0 0.0
    %3685 = vmatprep.subr.mxu0 0.0
    %3686 = vmatpush2.msra.mxu0 0.0
    %3687 = vmatprep.subr.mxu0 0.0
    %3688 = vmatpush2.msra.mxu0 0.0
    %3689 = vmatprep.subr.mxu0 0.0
    %3690 = vmatpush2.msra.mxu0 0.0
    %3691 = vmatprep.subr.mxu0 0.0
    %3692 = vmatpush2.msra.mxu0 0.0
    %3693 = vmatprep.subr.mxu0 0.0
    %3694 = vmatpush2.msra.mxu0 0.0
    %3695 = vmatprep.subr.mxu0 0.0
    %3696 = vmatpush2.msra.mxu0 0.0
    %3697 = vmatprep.subr.mxu0 0.0
    %3698 = vmatpush2.msra.mxu0 0.0
    %3699 = vmatprep.subr.mxu0 0.0
    %3700 = vmatpush2.msra.mxu0 0.0
    %3701 = vmatprep.subr.mxu0 0.0
    %3702 = vmatpush2.msra.mxu0 0.0
    %3703 = vmatprep.subr.mxu0 0.0
    %3704 = vmatpush2.msra.mxu0 0.0
    %3705 = vmatprep.subr.mxu0 0.0
    %3706 = vmatpush2.msra.mxu0 0.0
    %3707 = vmatprep.subr.mxu0 0.0
    %3708 = vmatpush2.msra.mxu0 0.0
    %3709 = vmatprep.mubr.f32.mxu0 0.0
    %3710 = vmatmul.mubr.f32.gmra.mxu0 %v3640
    %v3711 = vpop.f32.mrf.mxu0
    %v3712 = vadd.f32 %v3637, %v3711
    %v3713 = vpop.f32.mrf.mxu0
    %3714 = vmatprep.mubr.f32.mxu0 0.0
    %3715 = vmatmul.mubr.f32.gmra.mxu0 %v3643
    %v3716 = vpop.f32.mrf.mxu0
    %v3717 = vadd.f32 %v3637, %v3716
    %v3718 = vpop.f32.mrf.mxu0
    %3719 = vdwg.mxu0
    %v3720 = vmul.f32 %v3712, %v3712
    %v3721 = vmul.f32 %v3717, %v3717
    %v3722 = vmul.f32 %v3712, %v3720
    %v3723 = vmul.f32 %v3717, %v3721
    %v3724 = vmul.f32 %v3722, 0.044715
    %v3725 = vmul.f32 %v3723, 0.044715
    %v3726 = vadd.f32 %v3712, %v3724
    %v3727 = vadd.f32 %v3717, %v3725
    %v3728 = vmul.f32 %v3726, 0.7978846
    %v3729 = vmul.f32 %v3727, 0.7978846
    %v3730 = vtanh.pop %v3728
    %v3731 = vtanh.pop %v3729
    %v3732 = vadd.f32 %v3730, 1.0
    %v3733 = vadd.f32 %v3731, 1.0
    %v3734 = vmul.f32 %v3732, 0.5
    %v3735 = vmul.f32 %v3733, 0.5
    %v3736 = vmul.f32 %v3712, %v3734
    %v3737 = vmul.f32 %v3717, %v3735
    %v3738 = vld [vmem:[%s51] sm:$0xff]
    %v3739 = vld [vmem:[%s51 + $0x8] sm:$0xff]
    %v3740 = vld [vmem:[%s51 + $0x10] sm:$0xff]
    %v3741 = vld [vmem:[%s51 + $0x18] sm:$0xff]
    %v3742 = vld [vmem:[%s51 + $0x20] sm:$0xff]
    %v3743 = vld [vmem:[%s51 + $0x28] sm:$0xff]
    %v3744 = vld [vmem:[%s51 + $0x30] sm:$0xff]
    %v3745 = vld [vmem:[%s51 + $0x38] sm:$0xff]
    %v3746 = vld [vmem:[%s51 + $0x40] sm:$0xff]
    %v3747 = vld [vmem:[%s51 + $0x48] sm:$0xff]
    %v3748 = vld [vmem:[%s51 + $0x50] sm:$0xff]
    %v3749 = vld [vmem:[%s51 + $0x58] sm:$0xff]
    %v3750 = vld [vmem:[%s51 + $0x60] sm:$0xff]
    %v3751 = vld [vmem:[%s51 + $0x68] sm:$0xff]
    %v3752 = vld [vmem:[%s51 + $0x70] sm:$0xff]
    %v3753 = vld [vmem:[%s51 + $0x78] sm:$0xff]
    %v3754 = vld [vmem:[%s53] sm:$0x1]
    %v3756 = vlaneseq
    %v3757 = vshrl.u32 %v3756, 7
    %v3758 = vsub.s32 0, %v3757
    %v3759 = vrot.slane %v3754, %v3758
    %3761 = vmatprep.subr.mxu0 0.0
    %3762 = vmatpush1.msra.mxu0 %v3753
    %3763 = vmatprep.subr.mxu0 0.0
    %3764 = vmatpush1.msra.mxu0 %v3752
    %3765 = vmatprep.subr.mxu0 0.0
    %3766 = vmatpush1.msra.mxu0 %v3751
    %3767 = vmatprep.subr.mxu0 0.0
    %3768 = vmatpush1.msra.mxu0 %v3750
    %3769 = vmatprep.subr.mxu0 0.0
    %3770 = vmatpush1.msra.mxu0 %v3749
    %3771 = vmatprep.subr.mxu0 0.0
    %3772 = vmatpush1.msra.mxu0 %v3748
    %3773 = vmatprep.subr.mxu0 0.0
    %3774 = vmatpush1.msra.mxu0 %v3747
    %3775 = vmatprep.subr.mxu0 0.0
    %3776 = vmatpush1.msra.mxu0 %v3746
    %3777 = vmatprep.subr.mxu0 0.0
    %3778 = vmatpush1.msra.mxu0 %v3745
    %3779 = vmatprep.subr.mxu0 0.0
    %3780 = vmatpush1.msra.mxu0 %v3744
    %3781 = vmatprep.subr.mxu0 0.0
    %3782 = vmatpush1.msra.mxu0 %v3743
    %3783 = vmatprep.subr.mxu0 0.0
    %3784 = vmatpush1.msra.mxu0 %v3742
    %3785 = vmatprep.subr.mxu0 0.0
    %3786 = vmatpush1.msra.mxu0 %v3741
    %3787 = vmatprep.subr.mxu0 0.0
    %3788 = vmatpush1.msra.mxu0 %v3740
    %3789 = vmatprep.subr.mxu0 0.0
    %3790 = vmatpush1.msra.mxu0 %v3739
    %3791 = vmatprep.subr.mxu0 0.0
    %3792 = vmatpush1.msra.mxu0 %v3738
    %3793 = vmatprep.subr.mxu0 0.0
    %3794 = vmatpush2.msra.mxu0 0.0
    %3795 = vmatprep.subr.mxu0 0.0
    %3796 = vmatpush2.msra.mxu0 0.0
    %3797 = vmatprep.subr.mxu0 0.0
    %3798 = vmatpush2.msra.mxu0 0.0
    %3799 = vmatprep.subr.mxu0 0.0
    %3800 = vmatpush2.msra.mxu0 0.0
    %3801 = vmatprep.subr.mxu0 0.0
    %3802 = vmatpush2.msra.mxu0 0.0
    %3803 = vmatprep.subr.mxu0 0.0
    %3804 = vmatpush2.msra.mxu0 0.0
    %3805 = vmatprep.subr.mxu0 0.0
    %3806 = vmatpush2.msra.mxu0 0.0
    %3807 = vmatprep.subr.mxu0 0.0
    %3808 = vmatpush2.msra.mxu0 0.0
    %3809 = vmatprep.subr.mxu0 0.0
    %3810 = vmatpush2.msra.mxu0 0.0
    %3811 = vmatprep.subr.mxu0 0.0
    %3812 = vmatpush2.msra.mxu0 0.0
    %3813 = vmatprep.subr.mxu0 0.0
    %3814 = vmatpush2.msra.mxu0 0.0
    %3815 = vmatprep.subr.mxu0 0.0
    %3816 = vmatpush2.msra.mxu0 0.0
    %3817 = vmatprep.subr.mxu0 0.0
    %3818 = vmatpush2.msra.mxu0 0.0
    %3819 = vmatprep.subr.mxu0 0.0
    %3820 = vmatpush2.msra.mxu0 0.0
    %3821 = vmatprep.subr.mxu0 0.0
    %3822 = vmatpush2.msra.mxu0 0.0
    %3823 = vmatprep.subr.mxu0 0.0
    %3824 = vmatpush2.msra.mxu0 0.0
    %3825 = vmatprep.mubr.f32.mxu0 0.0
    %3826 = vmatmul.mubr.f32.gmra.mxu0 %v3736
    %v3827 = vpop.f32.mrf.mxu0
    %v3828 = vadd.f32 %v3759, %v3827
    %v3829 = vpop.f32.mrf.mxu0
    %3830 = vmatprep.mubr.f32.mxu0 0.0
    %3831 = vmatmul.mubr.f32.gmra.mxu0 %v3737
    %v3832 = vpop.f32.mrf.mxu0
    %v3833 = vadd.f32 %v3759, %v3832
    %v3834 = vpop.f32.mrf.mxu0
    %3835 = vdwg.mxu0
    %v3836 = vadd.f32 %v3828, %v3626
    %v3837 = vadd.f32 %v3833, %v3627
    %v3838 = vld [vmem:[%s55] sm:$0x1]
    %v3839 = vld [vmem:[%s57] sm:$0x1]
    %v3840 = vsel %vm155, %v3836, 0.0
    %3841 = vadd.xlane.f32.xlu0 %v3840
    %v3842 = vpop.xlane.xlu0 %3841
    %v3843 = vsel %vm155, %v3837, 0.0
    %3844 = vadd.xlane.f32.xlu0 %v3843
    %v3845 = vpop.xlane.xlu0 %3844
    %v3846 = vmul.f32 %v3842, %v162
    %v3847 = vmul.f32 %v3845, %v162
    %v3848 = vsub.f32 %v3836, %v3846
    %v3849 = vsub.f32 %v3837, %v3847
    %v3850 = vmul.f32 %v3848, %v3848
    %v3851 = vmul.f32 %v3849, %v3849
    %v3852 = vsel %vm155, %v3850, 0.0
    %3853 = vadd.xlane.f32.xlu0 %v3852
    %v3854 = vpop.xlane.xlu0 %3853
    %v3855 = vsel %vm155, %v3851, 0.0
    %3856 = vadd.xlane.f32.xlu0 %v3855
    %v3857 = vpop.xlane.xlu0 %3856
    %v3858 = vmul.f32 %v3854, %v162
    %v3859 = vmul.f32 %v3857, %v162
    %v3860 = vadd.f32 %v3858, 1e-12
    %v3861 = vadd.f32 %v3859, 1e-12
    %v3862 = vrsqrt.pop %v3860
    %v3863 = vrsqrt.pop %v3861
    %v3864 = vmul.f32 %v3848, %v3862
    %v3865 = vmul.f32 %v3849, %v3863
    %v3867 = vlaneseq
    %v3868 = vshrl.u32 %v3867, 7
    %v3869 = vsub.s32 0, %v3868
    %v3870 = vrot.slane %v3838, %v3869
    %v3872 = vmul.f32 %v3864, %v3870
    %v3873 = vmul.f32 %v3865, %v3870
    %v3875 = vlaneseq
    %v3876 = vshrl.u32 %v3875, 7
    %v3877 = vsub.s32 0, %v3876
    %v3878 = vrot.slane %v3839, %v3877
    %v3880 = vadd.f32 %v3872, %v3878
    %v3881 = vadd.f32 %v3873, %v3878
    %v3883 = vrot.slane %v3881, 7
    %vm3885 = vcmask 1040384
    %v3886 = vsel %vm3885, %v3880, %v3883
    %v3887 = vld [vmem:[%s59] sm:$0xff]
    %v3888 = vld [vmem:[%s59 + $0x8] sm:$0xff]
    %v3889 = vld [vmem:[%s59 + $0x10] sm:$0xff]
    %v3890 = vld [vmem:[%s59 + $0x18] sm:$0xff]
    %v3891 = vld [vmem:[%s61] sm:$0x1]
    %v3893 = vlaneseq
    %v3894 = vshrl.u32 %v3893, 7
    %v3895 = vsub.s32 0, %v3894
    %v3896 = vrot.slane %v3891, %v3895
    %v3899 = vsel %vm155, %v3886, 0
    %3901 = vmatprep.subr.mxu0 0.0
    %3902 = vmatpush1.msra.mxu0 0.0
    %3903 = vmatprep.subr.mxu0 0.0
    %3904 = vmatpush1.msra.mxu0 0.0
    %3905 = vmatprep.subr.mxu0 0.0
    %3906 = vmatpush1.msra.mxu0 0.0
    %3907 = vmatprep.subr.mxu0 0.0
    %3908 = vmatpush1.msra.mxu0 0.0
    %3909 = vmatprep.subr.mxu0 0.0
    %3910 = vmatpush1.msra.mxu0 0.0
    %3911 = vmatprep.subr.mxu0 0.0
    %3912 = vmatpush1.msra.mxu0 0.0
    %3913 = vmatprep.subr.mxu0 0.0
    %3914 = vmatpush1.msra.mxu0 0.0
    %3915 = vmatprep.subr.mxu0 0.0
    %3916 = vmatpush1.msra.mxu0 0.0
    %3917 = vmatprep.subr.mxu0 0.0
    %3918 = vmatpush1.msra.mxu0 0.0
    %3919 = vmatprep.subr.mxu0 0.0
    %3920 = vmatpush1.msra.mxu0 0.0
    %3921 = vmatprep.subr.mxu0 0.0
    %3922 = vmatpush1.msra.mxu0 0.0
    %3923 = vmatprep.subr.mxu0 0.0
    %3924 = vmatpush1.msra.mxu0 0.0
    %3925 = vmatprep.subr.mxu0 0.0
    %3926 = vmatpush1.msra.mxu0 %v3890
    %3927 = vmatprep.subr.mxu0 0.0
    %3928 = vmatpush1.msra.mxu0 %v3889
    %3929 = vmatprep.subr.mxu0 0.0
    %3930 = vmatpush1.msra.mxu0 %v3888
    %3931 = vmatprep.subr.mxu0 0.0
    %3932 = vmatpush1.msra.mxu0 %v3887
    %3933 = vmatprep.subr.mxu0 0.0
    %3934 = vmatpush2.msra.mxu0 0.0
    %3935 = vmatprep.subr.mxu0 0.0
    %3936 = vmatpush2.msra.mxu0 0.0
    %3937 = vmatprep.subr.mxu0 0.0
    %3938 = vmatpush2.msra.mxu0 0.0
    %3939 = vmatprep.subr.mxu0 0.0
    %3940 = vmatpush2.msra.mxu0 0.0
    %3941 = vmatprep.subr.mxu0 0.0
    %3942 = vmatpush2.msra.mxu0 0.0
    %3943 = vmatprep.subr.mxu0 0.0
    %3944 = vmatpush2.msra.mxu0 0.0
    %3945 = vmatprep.subr.mxu0 0.0
    %3946 = vmatpush2.msra.mxu0 0.0
    %3947 = vmatprep.subr.mxu0 0.0
    %3948 = vmatpush2.msra.mxu0 0.0
    %3949 = vmatprep.subr.mxu0 0.0
    %3950 = vmatpush2.msra.mxu0 0.0
    %3951 = vmatprep.subr.mxu0 0.0
    %3952 = vmatpush2.msra.mxu0 0.0
    %3953 = vmatprep.subr.mxu0 0.0
    %3954 = vmatpush2.msra.mxu0 0.0
    %3955 = vmatprep.subr.mxu0 0.0
    %3956 = vmatpush2.msra.mxu0 0.0
    %3957 = vmatprep.subr.mxu0 0.0
    %3958 = vmatpush2.msra.mxu0 0.0
    %3959 = vmatprep.subr.mxu0 0.0
    %3960 = vmatpush2.msra.mxu0 0.0
    %3961 = vmatprep.subr.mxu0 0.0
    %3962 = vmatpush2.msra.mxu0 0.0
    %3963 = vmatprep.subr.mxu0 0.0
    %3964 = vmatpush2.msra.mxu0 0.0
    %3965 = vmatprep.mubr.f32.mxu0 0.0
    %3966 = vmatmul.mubr.f32.gmra.mxu0 %v3899
    %v3967 = vpop.f32.mrf.mxu0
    %v3968 = vadd.f32 %v3896, %v3967
    %v3969 = vpop.f32.mrf.mxu0
    %3970 = vdwg.mxu0
    %v3971 = vtanh.pop %v3968
    %v3972 = vld [vmem:[%s63] sm:$0xff]
    %v3973 = vld [vmem:[%s63 + $0x8] sm:$0xff]
    %v3974 = vld [vmem:[%s63 + $0x10] sm:$0xff]
    %v3975 = vld [vmem:[%s63 + $0x18] sm:$0xff]
    %v3976 = vld [vmem:[%s63 + $0x20] sm:$0xff]
    %v3977 = vld [vmem:[%s63 + $0x28] sm:$0xff]
    %v3978 = vld [vmem:[%s63 + $0x30] sm:$0xff]
    %v3979 = vld [vmem:[%s63 + $0x38] sm:$0xff]
    %v3980 = vld [vmem:[%s63 + $0x40] sm:$0xff]
    %v3981 = vld [vmem:[%s63 + $0x48] sm:$0xff]
    %v3982 = vld [vmem:[%s63 + $0x50] sm:$0xff]
    %v3983 = vld [vmem:[%s63 + $0x58] sm:$0xff]
    %v3984 = vld [vmem:[%s63 + $0x60] sm:$0xff]
    %v3985 = vld [vmem:[%s63 + $0x68] sm:$0xff]
    %v3986 = vld [vmem:[%s63 + $0x70] sm:$0xff]
    %v3987 = vld [vmem:[%s63 + $0x78] sm:$0xff]
    %v3988 = vld [vmem:[%s63 + $0x80] sm:$0xff]
    %v3989 = vld [vmem:[%s63 + $0x88] sm:$0xff]
    %v3990 = vld [vmem:[%s63 + $0x90] sm:$0xff]
    %v3991 = vld [vmem:[%s63 + $0x98] sm:$0xff]
    %v3992 = vld [vmem:[%s63 + $0xa0] sm:$0xff]
    %v3993 = vld [vmem:[%s63 + $0xa8] sm:$0xff]
    %v3994 = vld [vmem:[%s63 + $0xb0] sm:$0xff]
    %v3995 = vld [vmem:[%s63 + $0xb8] sm:$0xff]
    %v3996 = vld [vmem:[%s63 + $0xc0] sm:$0xff]
    %v3997 = vld [vmem:[%s63 + $0xc8] sm:$0xff]
    %v3998 = vld [vmem:[%s63 + $0xd0] sm:$0xff]
    %v3999 = vld [vmem:[%s63 + $0xd8] sm:$0xff]
    %v4000 = vld [vmem:[%s63 + $0xe0] sm:$0xff]
    %v4001 = vld [vmem:[%s63 + $0xe8] sm:$0xff]
    %v4002 = vld [vmem:[%s63 + $0xf0] sm:$0xff]
    %v4003 = vld [vmem:[%s63 + $0xf8] sm:$0xff]
    %v4004 = vld [vmem:[%s63 + $0x100] sm:$0xff]
    %v4005 = vld [vmem:[%s63 + $0x108] sm:$0xff]
    %v4006 = vld [vmem:[%s63 + $0x110] sm:$0xff]
    %v4007 = vld [vmem:[%s63 + $0x118] sm:$0xff]
    %v4008 = vld [vmem:[%s63 + $0x120] sm:$0xff]
    %v4009 = vld [vmem:[%s63 + $0x128] sm:$0xff]
    %v4010 = vld [vmem:[%s63 + $0x130] sm:$0xff]
    %v4011 = vld [vmem:[%s63 + $0x138] sm:$0xff]
    %v4012 = vld [vmem:[%s63 + $0x140] sm:$0xff]
    %v4013 = vld [vmem:[%s63 + $0x148] sm:$0xff]
    %v4014 = vld [vmem:[%s63 + $0x150] sm:$0xff]
    %v4015 = vld [vmem:[%s63 + $0x158] sm:$0xff]
    %v4016 = vld [vmem:[%s63 + $0x160] sm:$0xff]
    %v4017 = vld [vmem:[%s63 + $0x168] sm:$0xff]
    %v4018 = vld [vmem:[%s63 + $0x170] sm:$0xff]
    %v4019 = vld [vmem:[%s63 + $0x178] sm:$0xff]
    %v4020 = vld [vmem:[%s63 + $0x180] sm:$0xff]
    %v4021 = vld [vmem:[%s63 + $0x188] sm:$0xff]
    %v4022 = vld [vmem:[%s63 + $0x190] sm:$0xff]
    %v4023 = vld [vmem:[%s63 + $0x198] sm:$0xff]
    %v4024 = vld [vmem:[%s63 + $0x1a0] sm:$0xff]
    %v4025 = vld [vmem:[%s63 + $0x1a8] sm:$0xff]
    %v4026 = vld [vmem:[%s63 + $0x1b0] sm:$0xff]
    %v4027 = vld [vmem:[%s63 + $0x1b8] sm:$0xff]
    %v4028 = vld [vmem:[%s63 + $0x1c0] sm:$0xff]
    %v4029 = vld [vmem:[%s63 + $0x1c8] sm:$0xff]
    %v4030 = vld [vmem:[%s63 + $0x1d0] sm:$0xff]
    %v4031 = vld [vmem:[%s63 + $0x1d8] sm:$0xff]
    %v4032 = vld [vmem:[%s63 + $0x1e0] sm:$0xff]
    %v4033 = vld [vmem:[%s63 + $0x1e8] sm:$0xff]
    %v4034 = vld [vmem:[%s63 + $0x1f0] sm:$0xff]
    %v4035 = vld [vmem:[%s63 + $0x1f8] sm:$0xff]
    %v4036 = vld [vmem:[%s65] sm:$0xff]
    %v4037 = vld [vmem:[%s65 + $0x8] sm:$0xff]
    %v4040 = vlaneseq
    %v4041 = vshrl.u32 %v4040, 7
    %v4042 = vsub.s32 0, %v4041
    %v4043 = vrot.slane %v4036, %v4042
    %v4044 = vlaneseq
    %v4045 = vshrl.u32 %v4044, 7
    %v4046 = vsub.s32 1, %v4045
    %v4047 = vrot.slane %v4036, %v4046
    %v4048 = vlaneseq
    %v4049 = vshrl.u32 %v4048, 7
    %v4050 = vsub.s32 2, %v4049
    %v4051 = vrot.slane %v4036, %v4050
    %v4052 = vlaneseq
    %v4053 = vshrl.u32 %v4052, 7
    %v4054 = vsub.s32 3, %v4053
    %v4055 = vrot.slane %v4036, %v4054
    %v4056 = vlaneseq
    %v4057 = vshrl.u32 %v4056, 7
    %v4058 = vsub.s32 4, %v4057
    %v4059 = vrot.slane %v4036, %v4058
    %v4060 = vlaneseq
    %v4061 = vshrl.u32 %v4060, 7
    %v4062 = vsub.s32 5, %v4061
    %v4063 = vrot.slane %v4036, %v4062
    %v4064 = vlaneseq
    %v4065 = vshrl.u32 %v4064, 7
    %v4066 = vsub.s32 6, %v4065
    %v4067 = vrot.slane %v4036, %v4066
    %v4068 = vlaneseq
    %v4069 = vshrl.u32 %v4068, 7
    %v4070 = vsub.s32 7, %v4069
    %v4071 = vrot.slane %v4036, %v4070
    %v4072 = vlaneseq
    %v4073 = vshrl.u32 %v4072, 7
    %v4074 = vsub.s32 0, %v4073
    %v4075 = vrot.slane %v4037, %v4074
    %v4076 = vlaneseq
    %v4077 = vshrl.u32 %v4076, 7
    %v4078 = vsub.s32 1, %v4077
    %v4079 = vrot.slane %v4037, %v4078
    %v4080 = vlaneseq
    %v4081 = vshrl.u32 %v4080, 7
    %v4082 = vsub.s32 2, %v4081
    %v4083 = vrot.slane %v4037, %v4082
    %v4084 = vlaneseq
    %v4085 = vshrl.u32 %v4084, 7
    %v4086 = vsub.s32 3, %v4085
    %v4087 = vrot.slane %v4037, %v4086
    %v4088 = vlaneseq
    %v4089 = vshrl.u32 %v4088, 7
    %v4090 = vsub.s32 4, %v4089
    %v4091 = vrot.slane %v4037, %v4090
    %v4092 = vlaneseq
    %v4093 = vshrl.u32 %v4092, 7
    %v4094 = vsub.s32 5, %v4093
    %v4095 = vrot.slane %v4037, %v4094
    %v4096 = vlaneseq
    %v4097 = vshrl.u32 %v4096, 7
    %v4098 = vsub.s32 6, %v4097
    %v4099 = vrot.slane %v4037, %v4098
    %v4100 = vlaneseq
    %v4101 = vshrl.u32 %v4100, 7
    %v4102 = vsub.s32 7, %v4101
    %v4103 = vrot.slane %v4037, %v4102
    %v4121 = vsel %vm155, %v3971, 0
    %4123 = vmatprep.subr.mxu0 0.0
    %4124 = vmatpush1.msra.mxu0 0.0
    %4125 = vmatprep.subr.mxu0 0.0
    %4126 = vmatpush1.msra.mxu0 0.0
    %4127 = vmatprep.subr.mxu0 0.0
    %4128 = vmatpush1.msra.mxu0 0.0
    %4129 = vmatprep.subr.mxu0 0.0
    %4130 = vmatpush1.msra.mxu0 0.0
    %4131 = vmatprep.subr.mxu0 0.0
    %4132 = vmatpush1.msra.mxu0 0.0
    %4133 = vmatprep.subr.mxu0 0.0
    %4134 = vmatpush1.msra.mxu0 0.0
    %4135 = vmatprep.subr.mxu0 0.0
    %4136 = vmatpush1.msra.mxu0 0.0
    %4137 = vmatprep.subr.mxu0 0.0
    %4138 = vmatpush1.msra.mxu0 0.0
    %4139 = vmatprep.subr.mxu0 0.0
    %4140 = vmatpush1.msra.mxu0 0.0
    %4141 = vmatprep.subr.mxu0 0.0
    %4142 = vmatpush1.msra.mxu0 0.0
    %4143 = vmatprep.subr.mxu0 0.0
    %4144 = vmatpush1.msra.mxu0 0.0
    %4145 = vmatprep.subr.mxu0 0.0
    %4146 = vmatpush1.msra.mxu0 0.0
    %4147 = vmatprep.subr.mxu0 %v4021
    %4148 = vmatpush1.msra.mxu0 %v4020
    %4149 = vmatprep.subr.mxu0 %v4005
    %4150 = vmatpush1.msra.mxu0 %v4004
    %4151 = vmatprep.subr.mxu0 %v3989
    %4152 = vmatpush1.msra.mxu0 %v3988
    %4153 = vmatprep.subr.mxu0 %v3973
    %4154 = vmatpush1.msra.mxu0 %v3972
    %4155 = vmatprep.subr.mxu0 0.0
    %4156 = vmatpush2.msra.mxu0 0.0
    %4157 = vmatprep.subr.mxu0 0.0
    %4158 = vmatpush2.msra.mxu0 0.0
    %4159 = vmatprep.subr.mxu0 0.0
    %4160 = vmatpush2.msra.mxu0 0.0
    %4161 = vmatprep.subr.mxu0 0.0
    %4162 = vmatpush2.msra.mxu0 0.0
    %4163 = vmatprep.subr.mxu0 0.0
    %4164 = vmatpush2.msra.mxu0 0.0
    %4165 = vmatprep.subr.mxu0 0.0
    %4166 = vmatpush2.msra.mxu0 0.0
    %4167 = vmatprep.subr.mxu0 0.0
    %4168 = vmatpush2.msra.mxu0 0.0
    %4169 = vmatprep.subr.mxu0 0.0
    %4170 = vmatpush2.msra.mxu0 0.0
    %4171 = vmatprep.subr.mxu0 0.0
    %4172 = vmatpush2.msra.mxu0 0.0
    %4173 = vmatprep.subr.mxu0 0.0
    %4174 = vmatpush2.msra.mxu0 0.0
    %4175 = vmatprep.subr.mxu0 0.0
    %4176 = vmatpush2.msra.mxu0 0.0
    %4177 = vmatprep.subr.mxu0 0.0
    %4178 = vmatpush2.msra.mxu0 0.0
    %4179 = vmatprep.subr.mxu0 0.0
    %4180 = vmatpush2.msra.mxu0 0.0
    %4181 = vmatprep.subr.mxu0 0.0
    %4182 = vmatpush2.msra.mxu0 0.0
    %4183 = vmatprep.subr.mxu0 0.0
    %4184 = vmatpush2.msra.mxu0 0.0
    %4185 = vmatprep.subr.mxu0 0.0
    %4186 = vmatpush2.msra.mxu0 0.0
    %4187 = vmatprep.mubr.f32.mxu0 0.0
    %4188 = vmatmul.mubr.f32.gmra.mxu0 %v4121
    %v4189 = vpop.f32.mrf.mxu0
    %v4190 = vadd.f32 %v4043, %v4189
    %v4191 = vpop.f32.mrf.mxu0
    %v4192 = vadd.f32 %v4047, %v4191
    %4193 = vdwg.mxu0
    %4194 = vmatprep.subr.mxu0 0.0
    %4195 = vmatpush1.msra.mxu0 0.0
    %4196 = vmatprep.subr.mxu0 0.0
    %4197 = vmatpush1.msra.mxu0 0.0
    %4198 = vmatprep.subr.mxu0 0.0
    %4199 = vmatpush1.msra.mxu0 0.0
    %4200 = vmatprep.subr.mxu0 0.0
    %4201 = vmatpush1.msra.mxu0 0.0
    %4202 = vmatprep.subr.mxu0 0.0
    %4203 = vmatpush1.msra.mxu0 0.0
    %4204 = vmatprep.subr.mxu0 0.0
    %4205 = vmatpush1.msra.mxu0 0.0
    %4206 = vmatprep.subr.mxu0 0.0
    %4207 = vmatpush1.msra.mxu0 0.0
    %4208 = vmatprep.subr.mxu0 0.0
    %4209 = vmatpush1.msra.mxu0 0.0
    %4210 = vmatprep.subr.mxu0 0.0
    %4211 = vmatpush1.msra.mxu0 0.0
    %4212 = vmatprep.subr.mxu0 0.0
    %4213 = vmatpush1.msra.mxu0 0.0
    %4214 = vmatprep.subr.mxu0 0.0
    %4215 = vmatpush1.msra.mxu0 0.0
    %4216 = vmatprep.subr.mxu0 0.0
    %4217 = vmatpush1.msra.mxu0 0.0
    %4218 = vmatprep.subr.mxu0 %v4023
    %4219 = vmatpush1.msra.mxu0 %v4022
    %4220 = vmatprep.subr.mxu0 %v4007
    %4221 = vmatpush1.msra.mxu0 %v4006
    %4222 = vmatprep.subr.mxu0 %v3991
    %4223 = vmatpush1.msra.mxu0 %v3990
    %4224 = vmatprep.subr.mxu0 %v3975
    %4225 = vmatpush1.msra.mxu0 %v3974
    %4226 = vmatprep.subr.mxu0 0.0
    %4227 = vmatpush2.msra.mxu0 0.0
    %4228 = vmatprep.subr.mxu0 0.0
    %4229 = vmatpush2.msra.mxu0 0.0
    %4230 = vmatprep.subr.mxu0 0.0
    %4231 = vmatpush2.msra.mxu0 0.0
    %4232 = vmatprep.subr.mxu0 0.0
    %4233 = vmatpush2.msra.mxu0 0.0
    %4234 = vmatprep.subr.mxu0 0.0
    %4235 = vmatpush2.msra.mxu0 0.0
    %4236 = vmatprep.subr.mxu0 0.0
    %4237 = vmatpush2.msra.mxu0 0.0
    %4238 = vmatprep.subr.mxu0 0.0
    %4239 = vmatpush2.msra.mxu0 0.0
    %4240 = vmatprep.subr.mxu0 0.0
    %4241 = vmatpush2.msra.mxu0 0.0
    %4242 = vmatprep.subr.mxu0 0.0
    %4243 = vmatpush2.msra.mxu0 0.0
    %4244 = vmatprep.subr.mxu0 0.0
    %4245 = vmatpush2.msra.mxu0 0.0
    %4246 = vmatprep.subr.mxu0 0.0
    %4247 = vmatpush2.msra.mxu0 0.0
    %4248 = vmatprep.subr.mxu0 0.0
    %4249 = vmatpush2.msra.mxu0 0.0
    %4250 = vmatprep.subr.mxu0 0.0
    %4251 = vmatpush2.msra.mxu0 0.0
    %4252 = vmatprep.subr.mxu0 0.0
    %4253 = vmatpush2.msra.mxu0 0.0
    %4254 = vmatprep.subr.mxu0 0.0
    %4255 = vmatpush2.msra.mxu0 0.0
    %4256 = vmatprep.subr.mxu0 0.0
    %4257 = vmatpush2.msra.mxu0 0.0
    %4258 = vmatprep.mubr.f32.mxu0 0.0
    %4259 = vmatmul.mubr.f32.gmra.mxu0 %v4121
    %v4260 = vpop.f32.mrf.mxu0
    %v4261 = vadd.f32 %v4051, %v4260
    %v4262 = vpop.f32.mrf.mxu0
    %v4263 = vadd.f32 %v4055, %v4262
    %4264 = vdwg.mxu0
    %4265 = vmatprep.subr.mxu0 0.0
    %4266 = vmatpush1.msra.mxu0 0.0
    %4267 = vmatprep.subr.mxu0 0.0
    %4268 = vmatpush1.msra.mxu0 0.0
    %4269 = vmatprep.subr.mxu0 0.0
    %4270 = vmatpush1.msra.mxu0 0.0
    %4271 = vmatprep.subr.mxu0 0.0
    %4272 = vmatpush1.msra.mxu0 0.0
    %4273 = vmatprep.subr.mxu0 0.0
    %4274 = vmatpush1.msra.mxu0 0.0
    %4275 = vmatprep.subr.mxu0 0.0
    %4276 = vmatpush1.msra.mxu0 0.0
    %4277 = vmatprep.subr.mxu0 0.0
    %4278 = vmatpush1.msra.mxu0 0.0
    %4279 = vmatprep.subr.mxu0 0.0
    %4280 = vmatpush1.msra.mxu0 0.0
    %4281 = vmatprep.subr.mxu0 0.0
    %4282 = vmatpush1.msra.mxu0 0.0
    %4283 = vmatprep.subr.mxu0 0.0
    %4284 = vmatpush1.msra.mxu0 0.0
    %4285 = vmatprep.subr.mxu0 0.0
    %4286 = vmatpush1.msra.mxu0 0.0
    %4287 = vmatprep.subr.mxu0 0.0
    %4288 = vmatpush1.msra.mxu0 0.0
    %4289 = vmatprep.subr.mxu0 %v4025
    %4290 = vmatpush1.msra.mxu0 %v4024
    %4291 = vmatprep.subr.mxu0 %v4009
    %4292 = vmatpush1.msra.mxu0 %v4008
    %4293 = vmatprep.subr.mxu0 %v3993
    %4294 = vmatpush1.msra.mxu0 %v3992
    %4295 = vmatprep.subr.mxu0 %v3977
    %4296 = vmatpush1.msra.mxu0 %v3976
    %4297 = vmatprep.subr.mxu0 0.0
    %4298 = vmatpush2.msra.mxu0 0.0
    %4299 = vmatprep.subr.mxu0 0.0
    %4300 = vmatpush2.msra.mxu0 0.0
    %4301 = vmatprep.subr.mxu0 0.0
    %4302 = vmatpush2.msra.mxu0 0.0
    %4303 = vmatprep.subr.mxu0 0.0
    %4304 = vmatpush2.msra.mxu0 0.0
    %4305 = vmatprep.subr.mxu0 0.0
    %4306 = vmatpush2.msra.mxu0 0.0
    %4307 = vmatprep.subr.mxu0 0.0
    %4308 = vmatpush2.msra.mxu0 0.0
    %4309 = vmatprep.subr.mxu0 0.0
    %4310 = vmatpush2.msra.mxu0 0.0
    %4311 = vmatprep.subr.mxu0 0.0
    %4312 = vmatpush2.msra.mxu0 0.0
    %4313 = vmatprep.subr.mxu0 0.0
    %4314 = vmatpush2.msra.mxu0 0.0
    %4315 = vmatprep.subr.mxu0 0.0
    %4316 = vmatpush2.msra.mxu0 0.0
    %4317 = vmatprep.subr.mxu0 0.0
    %4318 = vmatpush2.msra.mxu0 0.0
    %4319 = vmatprep.subr.mxu0 0.0
    %4320 = vmatpush2.msra.mxu0 0.0
    %4321 = vmatprep.subr.mxu0 0.0
    %4322 = vmatpush2.msra.mxu0 0.0
    %4323 = vmatprep.subr.mxu0 0.0
    %4324 = vmatpush2.msra.mxu0 0.0
    %4325 = vmatprep.subr.mxu0 0.0
    %4326 = vmatpush2.msra.mxu0 0.0
    %4327 = vmatprep.subr.mxu0 0.0
    %4328 = vmatpush2.msra.mxu0 0.0
    %4329 = vmatprep.mubr.f32.mxu0 0.0
    %4330 = vmatmul.mubr.f32.gmra.mxu0 %v4121
    %v4331 = vpop.f32.mrf.mxu0
    %v4332 = vadd.f32 %v4059, %v4331
    %v4333 = vpop.f32.mrf.mxu0
    %v4334 = vadd.f32 %v4063, %v4333
    %4335 = vdwg.mxu0
    %4336 = vmatprep.subr.mxu0 0.0
    %4337 = vmatpush1.msra.mxu0 0.0
    %4338 = vmatprep.subr.mxu0 0.0
    %4339 = vmatpush1.msra.mxu0 0.0
    %4340 = vmatprep.subr.mxu0 0.0
    %4341 = vmatpush1.msra.mxu0 0.0
    %4342 = vmatprep.subr.mxu0 0.0
    %4343 = vmatpush1.msra.mxu0 0.0
    %4344 = vmatprep.subr.mxu0 0.0
    %4345 = vmatpush1.msra.mxu0 0.0
    %4346 = vmatprep.subr.mxu0 0.0
    %4347 = vmatpush1.msra.mxu0 0.0
    %4348 = vmatprep.subr.mxu0 0.0
    %4349 = vmatpush1.msra.mxu0 0.0
    %4350 = vmatprep.subr.mxu0 0.0
    %4351 = vmatpush1.msra.mxu0 0.0
    %4352 = vmatprep.subr.mxu0 0.0
    %4353 = vmatpush1.msra.mxu0 0.0
    %4354 = vmatprep.subr.mxu0 0.0
    %4355 = vmatpush1.msra.mxu0 0.0
    %4356 = vmatprep.subr.mxu0 0.0
    %4357 = vmatpush1.msra.mxu0 0.0
    %4358 = vmatprep.subr.mxu0 0.0
    %4359 = vmatpush1.msra.mxu0 0.0
    %4360 = vmatprep.subr.mxu0 %v4027
    %4361 = vmatpush1.msra.mxu0 %v4026
    %4362 = vmatprep.subr.mxu0 %v4011
    %4363 = vmatpush1.msra.mxu0 %v4010
    %4364 = vmatprep.subr.mxu0 %v3995
    %4365 = vmatpush1.msra.mxu0 %v3994
    %4366 = vmatprep.subr.mxu0 %v3979
    %4367 = vmatpush1.msra.mxu0 %v3978
    %4368 = vmatprep.subr.mxu0 0.0
    %4369 = vmatpush2.msra.mxu0 0.0
    %4370 = vmatprep.subr.mxu0 0.0
    %4371 = vmatpush2.msra.mxu0 0.0
    %4372 = vmatprep.subr.mxu0 0.0
    %4373 = vmatpush2.msra.mxu0 0.0
    %4374 = vmatprep.subr.mxu0 0.0
    %4375 = vmatpush2.msra.mxu0 0.0
    %4376 = vmatprep.subr.mxu0 0.0
    %4377 = vmatpush2.msra.mxu0 0.0
    %4378 = vmatprep.subr.mxu0 0.0
    %4379 = vmatpush2.msra.mxu0 0.0
    %4380 = vmatprep.subr.mxu0 0.0
    %4381 = vmatpush2.msra.mxu0 0.0
    %4382 = vmatprep.subr.mxu0 0.0
    %4383 = vmatpush2.msra.mxu0 0.0
    %4384 = vmatprep.subr.mxu0 0.0
    %4385 = vmatpush2.msra.mxu0 0.0
    %4386 = vmatprep.subr.mxu0 0.0
    %4387 = vmatpush2.msra.mxu0 0.0
    %4388 = vmatprep.subr.mxu0 0.0
    %4389 = vmatpush2.msra.mxu0 0.0
    %4390 = vmatprep.subr.mxu0 0.0
    %4391 = vmatpush2.msra.mxu0 0.0
    %4392 = vmatprep.subr.mxu0 0.0
    %4393 = vmatpush2.msra.mxu0 0.0
    %4394 = vmatprep.subr.mxu0 0.0
    %4395 = vmatpush2.msra.mxu0 0.0
    %4396 = vmatprep.subr.mxu0 0.0
    %4397 = vmatpush2.msra.mxu0 0.0
    %4398 = vmatprep.subr.mxu0 0.0
    %4399 = vmatpush2.msra.mxu0 0.0
    %4400 = vmatprep.mubr.f32.mxu0 0.0
    %4401 = vmatmul.mubr.f32.gmra.mxu0 %v4121
    %v4402 = vpop.f32.mrf.mxu0
    %v4403 = vadd.f32 %v4067, %v4402
    %v4404 = vpop.f32.mrf.mxu0
    %v4405 = vadd.f32 %v4071, %v4404
    %4406 = vdwg.mxu0
    %4407 = vmatprep.subr.mxu0 0.0
    %4408 = vmatpush1.msra.mxu0 0.0
    %4409 = vmatprep.subr.mxu0 0.0
    %4410 = vmatpush1.msra.mxu0 0.0
    %4411 = vmatprep.subr.mxu0 0.0
    %4412 = vmatpush1.msra.mxu0 0.0
    %4413 = vmatprep.subr.mxu0 0.0
    %4414 = vmatpush1.msra.mxu0 0.0
    %4415 = vmatprep.subr.mxu0 0.0
    %4416 = vmatpush1.msra.mxu0 0.0
    %4417 = vmatprep.subr.mxu0 0.0
    %4418 = vmatpush1.msra.mxu0 0.0
    %4419 = vmatprep.subr.mxu0 0.0
    %4420 = vmatpush1.msra.mxu0 0.0
    %4421 = vmatprep.subr.mxu0 0.0
    %4422 = vmatpush1.msra.mxu0 0.0
    %4423 = vmatprep.subr.mxu0 0.0
    %4424 = vmatpush1.msra.mxu0 0.0
    %4425 = vmatprep.subr.mxu0 0.0
    %4426 = vmatpush1.msra.mxu0 0.0
    %4427 = vmatprep.subr.mxu0 0.0
    %4428 = vmatpush1.msra.mxu0 0.0
    %4429 = vmatprep.subr.mxu0 0.0
    %4430 = vmatpush1.msra.mxu0 0.0
    %4431 = vmatprep.subr.mxu0 %v4029
    %4432 = vmatpush1.msra.mxu0 %v4028
    %4433 = vmatprep.subr.mxu0 %v4013
    %4434 = vmatpush1.msra.mxu0 %v4012
    %4435 = vmatprep.subr.mxu0 %v3997
    %4436 = vmatpush1.msra.mxu0 %v3996
    %4437 = vmatprep.subr.mxu0 %v3981
    %4438 = vmatpush1.msra.mxu0 %v3980
    %4439 = vmatprep.subr.mxu0 0.0
    %4440 = vmatpush2.msra.mxu0 0.0
    %4441 = vmatprep.subr.mxu0 0.0
    %4442 = vmatpush2.msra.mxu0 0.0
    %4443 = vmatprep.subr.mxu0 0.0
    %4444 = vmatpush2.msra.mxu0 0.0
    %4445 = vmatprep.subr.mxu0 0.0
    %4446 = vmatpush2.msra.mxu0 0.0
    %4447 = vmatprep.subr.mxu0 0.0
    %4448 = vmatpush2.msra.mxu0 0.0
    %4449 = vmatprep.subr.mxu0 0.0
    %4450 = vmatpush2.msra.mxu0 0.0
    %4451 = vmatprep.subr.mxu0 0.0
    %4452 = vmatpush2.msra.mxu0 0.0
    %4453 = vmatprep.subr.mxu0 0.0
    %4454 = vmatpush2.msra.mxu0 0.0
    %4455 = vmatprep.subr.mxu0 0.0
    %4456 = vmatpush2.msra.mxu0 0.0
    %4457 = vmatprep.subr.mxu0 0.0
    %4458 = vmatpush2.msra.mxu0 0.0
    %4459 = vmatprep.subr.mxu0 0.0
    %4460 = vmatpush2.msra.mxu0 0.0
    %4461 = vmatprep.subr.mxu0 0.0
    %4462 = vmatpush2.msra.mxu0 0.0
    %4463 = vmatprep.subr.mxu0 0.0
    %4464 = vmatpush2.msra.mxu0 0.0
    %4465 = vmatprep.subr.mxu0 0.0
    %4466 = vmatpush2.msra.mxu0 0.0
    %4467 = vmatprep.subr.mxu0 0.0
    %4468 = vmatpush2.msra.mxu0 0.0
    %4469 = vmatprep.subr.mxu0 0.0
    %4470 = vmatpush2.msra.mxu0 0.0
    %4471 = vmatprep.mubr.f32.mxu0 0.0
    %4472 = vmatmul.mubr.f32.gmra.mxu0 %v4121
    %v4473 = vpop.f32.mrf.mxu0
    %v4474 = vadd.f32 %v4075, %v4473
    %v4475 = vpop.f32.mrf.mxu0
    %v4476 = vadd.f32 %v4079, %v4475
    %4477 = vdwg.mxu0
    %4478 = vmatprep.subr.mxu0 0.0
    %4479 = vmatpush1.msra.mxu0 0.0
    %4480 = vmatprep.subr.mxu0 0.0
    %4481 = vmatpush1.msra.mxu0 0.0
    %4482 = vmatprep.subr.mxu0 0.0
    %4483 = vmatpush1.msra.mxu0 0.0
    %4484 = vmatprep.subr.mxu0 0.0
    %4485 = vmatpush1.msra.mxu0 0.0
    %4486 = vmatprep.subr.mxu0 0.0
    %4487 = vmatpush1.msra.mxu0 0.0
    %4488 = vmatprep.subr.mxu0 0.0
    %4489 = vmatpush1.msra.mxu0 0.0
    %4490 = vmatprep.subr.mxu0 0.0
    %4491 = vmatpush1.msra.mxu0 0.0
    %4492 = vmatprep.subr.mxu0 0.0
    %4493 = vmatpush1.msra.mxu0 0.0
    %4494 = vmatprep.subr.mxu0 0.0
    %4495 = vmatpush1.msra.mxu0 0.0
    %4496 = vmatprep.subr.mxu0 0.0
    %4497 = vmatpush1.msra.mxu0 0.0
    %4498 = vmatprep.subr.mxu0 0.0
    %4499 = vmatpush1.msra.mxu0 0.0
    %4500 = vmatprep.subr.mxu0 0.0
    %4501 = vmatpush1.msra.mxu0 0.0
    %4502 = vmatprep.subr.mxu0 %v4031
    %4503 = vmatpush1.msra.mxu0 %v4030
    %4504 = vmatprep.subr.mxu0 %v4015
    %4505 = vmatpush1.msra.mxu0 %v4014
    %4506 = vmatprep.subr.mxu0 %v3999
    %4507 = vmatpush1.msra.mxu0 %v3998
    %4508 = vmatprep.subr.mxu0 %v3983
    %4509 = vmatpush1.msra.mxu0 %v3982
    %4510 = vmatprep.subr.mxu0 0.0
    %4511 = vmatpush2.msra.mxu0 0.0
    %4512 = vmatprep.subr.mxu0 0.0
    %4513 = vmatpush2.msra.mxu0 0.0
    %4514 = vmatprep.subr.mxu0 0.0
    %4515 = vmatpush2.msra.mxu0 0.0
    %4516 = vmatprep.subr.mxu0 0.0
    %4517 = vmatpush2.msra.mxu0 0.0
    %4518 = vmatprep.subr.mxu0 0.0
    %4519 = vmatpush2.msra.mxu0 0.0
    %4520 = vmatprep.subr.mxu0 0.0
    %4521 = vmatpush2.msra.mxu0 0.0
    %4522 = vmatprep.subr.mxu0 0.0
    %4523 = vmatpush2.msra.mxu0 0.0
    %4524 = vmatprep.subr.mxu0 0.0
    %4525 = vmatpush2.msra.mxu0 0.0
    %4526 = vmatprep.subr.mxu0 0.0
    %4527 = vmatpush2.msra.mxu0 0.0
    %4528 = vmatprep.subr.mxu0 0.0
    %4529 = vmatpush2.msra.mxu0 0.0
    %4530 = vmatprep.subr.mxu0 0.0
    %4531 = vmatpush2.msra.mxu0 0.0
    %4532 = vmatprep.subr.mxu0 0.0
    %4533 = vmatpush2.msra.mxu0 0.0
    %4534 = vmatprep.subr.mxu0 0.0
    %4535 = vmatpush2.msra.mxu0 0.0
    %4536 = vmatprep.subr.mxu0 0.0
    %4537 = vmatpush2.msra.mxu0 0.0
    %4538 = vmatprep.subr.mxu0 0.0
    %4539 = vmatpush2.msra.mxu0 0.0
    %4540 = vmatprep.subr.mxu0 0.0
    %4541 = vmatpush2.msra.mxu0 0.0
    %4542 = vmatprep.mubr.f32.mxu0 0.0
    %4543 = vmatmul.mubr.f32.gmra.mxu0 %v4121
    %v4544 = vpop.f32.mrf.mxu0
    %v4545 = vadd.f32 %v4083, %v4544
    %v4546 = vpop.f32.mrf.mxu0
    %v4547 = vadd.f32 %v4087, %v4546
    %4548 = vdwg.mxu0
    %4549 = vmatprep.subr.mxu0 0.0
    %4550 = vmatpush1.msra.mxu0 0.0
    %4551 = vmatprep.subr.mxu0 0.0
    %4552 = vmatpush1.msra.mxu0 0.0
    %4553 = vmatprep.subr.mxu0 0.0
    %4554 = vmatpush1.msra.mxu0 0.0
    %4555 = vmatprep.subr.mxu0 0.0
    %4556 = vmatpush1.msra.mxu0 0.0
    %4557 = vmatprep.subr.mxu0 0.0
    %4558 = vmatpush1.msra.mxu0 0.0
    %4559 = vmatprep.subr.mxu0 0.0
    %4560 = vmatpush1.msra.mxu0 0.0
    %4561 = vmatprep.subr.mxu0 0.0
    %4562 = vmatpush1.msra.mxu0 0.0
    %4563 = vmatprep.subr.mxu0 0.0
    %4564 = vmatpush1.msra.mxu0 0.0
    %4565 = vmatprep.subr.mxu0 0.0
    %4566 = vmatpush1.msra.mxu0 0.0
    %4567 = vmatprep.subr.mxu0 0.0
    %4568 = vmatpush1.msra.mxu0 0.0
    %4569 = vmatprep.subr.mxu0 0.0
    %4570 = vmatpush1.msra.mxu0 0.0
    %4571 = vmatprep.subr.mxu0 0.0
    %4572 = vmatpush1.msra.mxu0 0.0
    %4573 = vmatprep.subr.mxu0 %v4033
    %4574 = vmatpush1.msra.mxu0 %v4032
    %4575 = vmatprep.subr.mxu0 %v4017
    %4576 = vmatpush1.msra.mxu0 %v4016
    %4577 = vmatprep.subr.mxu0 %v4001
    %4578 = vmatpush1.msra.mxu0 %v4000
    %4579 = vmatprep.subr.mxu0 %v3985
    %4580 = vmatpush1.msra.mxu0 %v3984
    %4581 = vmatprep.subr.mxu0 0.0
    %4582 = vmatpush2.msra.mxu0 0.0
    %4583 = vmatprep.subr.mxu0 0.0
    %4584 = vmatpush2.msra.mxu0 0.0
    %4585 = vmatprep.subr.mxu0 0.0
    %4586 = vmatpush2.msra.mxu0 0.0
    %4587 = vmatprep.subr.mxu0 0.0
    %4588 = vmatpush2.msra.mxu0 0.0
    %4589 = vmatprep.subr.mxu0 0.0
    %4590 = vmatpush2.msra.mxu0 0.0
    %4591 = vmatprep.subr.mxu0 0.0
    %4592 = vmatpush2.msra.mxu0 0.0
    %4593 = vmatprep.subr.mxu0 0.0
    %4594 = vmatpush2.msra.mxu0 0.0
    %4595 = vmatprep.subr.mxu0 0.0
    %4596 = vmatpush2.msra.mxu0 0.0
    %4597 = vmatprep.subr.mxu0 0.0
    %4598 = vmatpush2.msra.mxu0 0.0
    %4599 = vmatprep.subr.mxu0 0.0
    %4600 = vmatpush2.msra.mxu0 0.0
    %4601 = vmatprep.subr.mxu0 0.0
    %4602 = vmatpush2.msra.mxu0 0.0
    %4603 = vmatprep.subr.mxu0 0.0
    %4604 = vmatpush2.msra.mxu0 0.0
    %4605 = vmatprep.subr.mxu0 0.0
    %4606 = vmatpush2.msra.mxu0 0.0
    %4607 = vmatprep.subr.mxu0 0.0
    %4608 = vmatpush2.msra.mxu0 0.0
    %4609 = vmatprep.subr.mxu0 0.0
    %4610 = vmatpush2.msra.mxu0 0.0
    %4611 = vmatprep.subr.mxu0 0.0
    %4612 = vmatpush2.msra.mxu0 0.0
    %4613 = vmatprep.mubr.f32.mxu0 0.0
    %4614 = vmatmul.mubr.f32.gmra.mxu0 %v4121
    %v4615 = vpop.f32.mrf.mxu0
    %v4616 = vadd.f32 %v4091, %v4615
    %v4617 = vpop.f32.mrf.mxu0
    %v4618 = vadd.f32 %v4095, %v4617
    %4619 = vdwg.mxu0
    %4620 = vmatprep.subr.mxu0 0.0
    %4621 = vmatpush1.msra.mxu0 0.0
    %4622 = vmatprep.subr.mxu0 0.0
    %4623 = vmatpush1.msra.mxu0 0.0
    %4624 = vmatprep.subr.mxu0 0.0
    %4625 = vmatpush1.msra.mxu0 0.0
    %4626 = vmatprep.subr.mxu0 0.0
    %4627 = vmatpush1.msra.mxu0 0.0
    %4628 = vmatprep.subr.mxu0 0.0
    %4629 = vmatpush1.msra.mxu0 0.0
    %4630 = vmatprep.subr.mxu0 0.0
    %4631 = vmatpush1.msra.mxu0 0.0
    %4632 = vmatprep.subr.mxu0 0.0
    %4633 = vmatpush1.msra.mxu0 0.0
    %4634 = vmatprep.subr.mxu0 0.0
    %4635 = vmatpush1.msra.mxu0 0.0
    %4636 = vmatprep.subr.mxu0 0.0
    %4637 = vmatpush1.msra.mxu0 0.0
    %4638 = vmatprep.subr.mxu0 0.0
    %4639 = vmatpush1.msra.mxu0 0.0
    %4640 = vmatprep.subr.mxu0 0.0
    %4641 = vmatpush1.msra.mxu0 0.0
    %4642 = vmatprep.subr.mxu0 0.0
    %4643 = vmatpush1.msra.mxu0 0.0
    %4644 = vmatprep.subr.mxu0 %v4035
    %4645 = vmatpush1.msra.mxu0 %v4034
    %4646 = vmatprep.subr.mxu0 %v4019
    %4647 = vmatpush1.msra.mxu0 %v4018
    %4648 = vmatprep.subr.mxu0 %v4003
    %4649 = vmatpush1.msra.mxu0 %v4002
    %4650 = vmatprep.subr.mxu0 %v3987
    %4651 = vmatpush1.msra.mxu0 %v3986
    %4652 = vmatprep.subr.mxu0 0.0
    %4653 = vmatpush2.msra.mxu0 0.0
    %4654 = vmatprep.subr.mxu0 0.0
    %4655 = vmatpush2.msra.mxu0 0.0
    %4656 = vmatprep.subr.mxu0 0.0
    %4657 = vmatpush2.msra.mxu0 0.0
    %4658 = vmatprep.subr.mxu0 0.0
    %4659 = vmatpush2.msra.mxu0 0.0
    %4660 = vmatprep.subr.mxu0 0.0
    %4661 = vmatpush2.msra.mxu0 0.0
    %4662 = vmatprep.subr.mxu0 0.0
    %4663 = vmatpush2.msra.mxu0 0.0
    %4664 = vmatprep.subr.mxu0 0.0
    %4665 = vmatpush2.msra.mxu0 0.0
    %4666 = vmatprep.subr.mxu0 0.0
    %4667 = vmatpush2.msra.mxu0 0.0
    %4668 = vmatprep.subr.mxu0 0.0
    %4669 = vmatpush2.msra.mxu0 0.0
    %4670 = vmatprep.subr.mxu0 0.0
    %4671 = vmatpush2.msra.mxu0 0.0
    %4672 = vmatprep.subr.mxu0 0.0
    %4673 = vmatpush2.msra.mxu0 0.0
    %4674 = vmatprep.subr.mxu0 0.0
    %4675 = vmatpush2.msra.mxu0 0.0
    %4676 = vmatprep.subr.mxu0 0.0
    %4677 = vmatpush2.msra.mxu0 0.0
    %4678 = vmatprep.subr.mxu0 0.0
    %4679 = vmatpush2.msra.mxu0 0.0
    %4680 = vmatprep.subr.mxu0 0.0
    %4681 = vmatpush2.msra.mxu0 0.0
    %4682 = vmatprep.subr.mxu0 0.0
    %4683 = vmatpush2.msra.mxu0 0.0
    %4684 = vmatprep.mubr.f32.mxu0 0.0
    %4685 = vmatmul.mubr.f32.gmra.mxu0 %v4121
    %v4686 = vpop.f32.mrf.mxu0
    %v4687 = vadd.f32 %v4099, %v4686
    %v4688 = vpop.f32.mrf.mxu0
    %v4689 = vadd.f32 %v4103, %v4688
    %4690 = vdwg.mxu0
    %v4691 = vld [vmem:[%s5] sm:$0xff]
    %v4692 = vld [vmem:[%s5 + $0x8] sm:$0xff]
    %v4693 = vld [vmem:[%s5 + $0x10] sm:$0xff]
    %v4694 = vld [vmem:[%s5 + $0x18] sm:$0xff]
    %v4699 = vcombine.high %v4691, %v4691
    %v4701 = vunpack.c.l.s4 1983009808
    %v4702 = vunpack.c.0.s8 %v4701
    %v4703 = vlaneseq
    %v4704 = vshrl.u32 %v4703, 7
    %v4705 = vsub.s32 %v4702, %v4704
    %v4706 = vrot.slane %v4691, %v4705
    %v4708 = vunpack.c.l.s4 1983009808
    %v4709 = vunpack.c.0.s8 %v4708
    %v4710 = vlaneseq
    %v4711 = vshrl.u32 %v4710, 7
    %v4712 = vsub.s32 %v4709, %v4711
    %v4713 = vrot.slane %v4699, %v4712
    %v4714 = vcombine.high %v4706, %v4706
    %v4715 = vcombine.high %v4713, %v4713
    %v4716 = vcombine.high %v4692, %v4692
    %v4718 = vunpack.c.l.s4 1983009808
    %v4719 = vunpack.c.0.s8 %v4718
    %v4720 = vlaneseq
    %v4721 = vshrl.u32 %v4720, 7
    %v4722 = vsub.s32 %v4719, %v4721
    %v4723 = vrot.slane %v4692, %v4722
    %v4725 = vunpack.c.l.s4 1983009808
    %v4726 = vunpack.c.0.s8 %v4725
    %v4727 = vlaneseq
    %v4728 = vshrl.u32 %v4727, 7
    %v4729 = vsub.s32 %v4726, %v4728
    %v4730 = vrot.slane %v4716, %v4729
    %v4731 = vcombine.high %v4723, %v4723
    %v4732 = vcombine.high %v4730, %v4730
    %v4733 = vcombine.high %v4693, %v4693
    %v4735 = vunpack.c.l.s4 1983009808
    %v4736 = vunpack.c.0.s8 %v4735
    %v4737 = vlaneseq
    %v4738 = vshrl.u32 %v4737, 7
    %v4739 = vsub.s32 %v4736, %v4738
    %v4740 = vrot.slane %v4693, %v4739
    %v4742 = vunpack.c.l.s4 1983009808
    %v4743 = vunpack.c.0.s8 %v4742
    %v4744 = vlaneseq
    %v4745 = vshrl.u32 %v4744, 7
    %v4746 = vsub.s32 %v4743, %v4745
    %v4747 = vrot.slane %v4733, %v4746
    %v4748 = vcombine.high %v4740, %v4740
    %v4749 = vcombine.high %v4747, %v4747
    %v4750 = vcombine.high %v4694, %v4694
    %v4752 = vunpack.c.l.s4 1983009808
    %v4753 = vunpack.c.0.s8 %v4752
    %v4754 = vlaneseq
    %v4755 = vshrl.u32 %v4754, 7
    %v4756 = vsub.s32 %v4753, %v4755
    %v4757 = vrot.slane %v4694, %v4756
    %v4759 = vunpack.c.l.s4 1983009808
    %v4760 = vunpack.c.0.s8 %v4759
    %v4761 = vlaneseq
    %v4762 = vshrl.u32 %v4761, 7
    %v4763 = vsub.s32 %v4760, %v4762
    %v4764 = vrot.slane %v4750, %v4763
    %v4765 = vcombine.high %v4757, %v4757
    %v4766 = vcombine.high %v4764, %v4764
    %v4783 = vmul.f32 %v4190, %v4706
    %v4784 = vmul.f32 %v4192, %v4714
    %v4785 = vmul.f32 %v4261, %v4713
    %v4786 = vmul.f32 %v4263, %v4715
    %v4787 = vmul.f32 %v4332, %v4723
    %v4788 = vmul.f32 %v4334, %v4731
    %v4789 = vmul.f32 %v4403, %v4730
    %v4790 = vmul.f32 %v4405, %v4732
    %v4791 = vmul.f32 %v4474, %v4740
    %v4792 = vmul.f32 %v4476, %v4748
    %v4793 = vmul.f32 %v4545, %v4747
    %v4794 = vmul.f32 %v4547, %v4749
    %v4795 = vmul.f32 %v4616, %v4757
    %v4796 = vmul.f32 %v4618, %v4765
    %v4797 = vmul.f32 %v4687, %v4764
    %v4798 = vmul.f32 %v4689, %v4766
    %v4799 = vld [vmem:[%s67] sm:$0xff]
    %v4800 = vld [vmem:[%s67 + $0x8] sm:$0xff]
    %v4801 = vld [vmem:[%s67 + $0x10] sm:$0xff]
    %v4802 = vld [vmem:[%s67 + $0x18] sm:$0xff]
    %v4803 = vld [vmem:[%s67 + $0x20] sm:$0xff]
    %v4804 = vld [vmem:[%s67 + $0x28] sm:$0xff]
    %v4805 = vld [vmem:[%s67 + $0x30] sm:$0xff]
    %v4806 = vld [vmem:[%s67 + $0x38] sm:$0xff]
    %v4807 = vld [vmem:[%s67 + $0x40] sm:$0xff]
    %v4808 = vld [vmem:[%s67 + $0x48] sm:$0xff]
    %v4809 = vld [vmem:[%s67 + $0x50] sm:$0xff]
    %v4810 = vld [vmem:[%s67 + $0x58] sm:$0xff]
    %v4811 = vld [vmem:[%s67 + $0x60] sm:$0xff]
    %v4812 = vld [vmem:[%s67 + $0x68] sm:$0xff]
    %v4813 = vld [vmem:[%s67 + $0x70] sm:$0xff]
    %v4814 = vld [vmem:[%s67 + $0x78] sm:$0xff]
    %v4815 = vld [vmem:[%s67 + $0x80] sm:$0xff]
    %v4816 = vld [vmem:[%s67 + $0x88] sm:$0xff]
    %v4817 = vld [vmem:[%s67 + $0x90] sm:$0xff]
    %v4818 = vld [vmem:[%s67 + $0x98] sm:$0xff]
    %v4819 = vld [vmem:[%s67 + $0xa0] sm:$0xff]
    %v4820 = vld [vmem:[%s67 + $0xa8] sm:$0xff]
    %v4821 = vld [vmem:[%s67 + $0xb0] sm:$0xff]
    %v4822 = vld [vmem:[%s67 + $0xb8] sm:$0xff]
    %v4823 = vld [vmem:[%s67 + $0xc0] sm:$0xff]
    %v4824 = vld [vmem:[%s67 + $0xc8] sm:$0xff]
    %v4825 = vld [vmem:[%s67 + $0xd0] sm:$0xff]
    %v4826 = vld [vmem:[%s67 + $0xd8] sm:$0xff]
    %v4827 = vld [vmem:[%s67 + $0xe0] sm:$0xff]
    %v4828 = vld [vmem:[%s67 + $0xe8] sm:$0xff]
    %v4829 = vld [vmem:[%s67 + $0xf0] sm:$0xff]
    %v4830 = vld [vmem:[%s67 + $0xf8] sm:$0xff]
    %v4831 = vld [vmem:[%s67 + $0x100] sm:$0xff]
    %v4832 = vld [vmem:[%s67 + $0x108] sm:$0xff]
    %v4833 = vld [vmem:[%s67 + $0x110] sm:$0xff]
    %v4834 = vld [vmem:[%s67 + $0x118] sm:$0xff]
    %v4835 = vld [vmem:[%s67 + $0x120] sm:$0xff]
    %v4836 = vld [vmem:[%s67 + $0x128] sm:$0xff]
    %v4837 = vld [vmem:[%s67 + $0x130] sm:$0xff]
    %v4838 = vld [vmem:[%s67 + $0x138] sm:$0xff]
    %v4839 = vld [vmem:[%s67 + $0x140] sm:$0xff]
    %v4840 = vld [vmem:[%s67 + $0x148] sm:$0xff]
    %v4841 = vld [vmem:[%s67 + $0x150] sm:$0xff]
    %v4842 = vld [vmem:[%s67 + $0x158] sm:$0xff]
    %v4843 = vld [vmem:[%s67 + $0x160] sm:$0xff]
    %v4844 = vld [vmem:[%s67 + $0x168] sm:$0xff]
    %v4845 = vld [vmem:[%s67 + $0x170] sm:$0xff]
    %v4846 = vld [vmem:[%s67 + $0x178] sm:$0xff]
    %v4847 = vld [vmem:[%s67 + $0x180] sm:$0xff]
    %v4848 = vld [vmem:[%s67 + $0x188] sm:$0xff]
    %v4849 = vld [vmem:[%s67 + $0x190] sm:$0xff]
    %v4850 = vld [vmem:[%s67 + $0x198] sm:$0xff]
    %v4851 = vld [vmem:[%s67 + $0x1a0] sm:$0xff]
    %v4852 = vld [vmem:[%s67 + $0x1a8] sm:$0xff]
    %v4853 = vld [vmem:[%s67 + $0x1b0] sm:$0xff]
    %v4854 = vld [vmem:[%s67 + $0x1b8] sm:$0xff]
    %v4855 = vld [vmem:[%s67 + $0x1c0] sm:$0xff]
    %v4856 = vld [vmem:[%s67 + $0x1c8] sm:$0xff]
    %v4857 = vld [vmem:[%s67 + $0x1d0] sm:$0xff]
    %v4858 = vld [vmem:[%s67 + $0x1d8] sm:$0xff]
    %v4859 = vld [vmem:[%s67 + $0x1e0] sm:$0xff]
    %v4860 = vld [vmem:[%s67 + $0x1e8] sm:$0xff]
    %v4861 = vld [vmem:[%s67 + $0x1f0] sm:$0xff]
    %v4862 = vld [vmem:[%s67 + $0x1f8] sm:$0xff]
    %v4863 = vld [vmem:[%s67 + $0x200] sm:$0xff]
    %v4864 = vld [vmem:[%s67 + $0x208] sm:$0xff]
    %v4865 = vld [vmem:[%s67 + $0x210] sm:$0xff]
    %v4866 = vld [vmem:[%s67 + $0x218] sm:$0xff]
    %v4867 = vld [vmem:[%s67 + $0x220] sm:$0xff]
    %v4868 = vld [vmem:[%s67 + $0x228] sm:$0xff]
    %v4869 = vld [vmem:[%s67 + $0x230] sm:$0xff]
    %v4870 = vld [vmem:[%s67 + $0x238] sm:$0xff]
    %v4871 = vld [vmem:[%s67 + $0x240] sm:$0xff]
    %v4872 = vld [vmem:[%s67 + $0x248] sm:$0xff]
    %v4873 = vld [vmem:[%s67 + $0x250] sm:$0xff]
    %v4874 = vld [vmem:[%s67 + $0x258] sm:$0xff]
    %v4875 = vld [vmem:[%s67 + $0x260] sm:$0xff]
    %v4876 = vld [vmem:[%s67 + $0x268] sm:$0xff]
    %v4877 = vld [vmem:[%s67 + $0x270] sm:$0xff]
    %v4878 = vld [vmem:[%s67 + $0x278] sm:$0xff]
    %v4879 = vld [vmem:[%s67 + $0x280] sm:$0xff]
    %v4880 = vld [vmem:[%s67 + $0x288] sm:$0xff]
    %v4881 = vld [vmem:[%s67 + $0x290] sm:$0xff]
    %v4882 = vld [vmem:[%s67 + $0x298] sm:$0xff]
    %v4883 = vld [vmem:[%s67 + $0x2a0] sm:$0xff]
    %v4884 = vld [vmem:[%s67 + $0x2a8] sm:$0xff]
    %v4885 = vld [vmem:[%s67 + $0x2b0] sm:$0xff]
    %v4886 = vld [vmem:[%s67 + $0x2b8] sm:$0xff]
    %v4887 = vld [vmem:[%s67 + $0x2c0] sm:$0xff]
    %v4888 = vld [vmem:[%s67 + $0x2c8] sm:$0xff]
    %v4889 = vld [vmem:[%s67 + $0x2d0] sm:$0xff]
    %v4890 = vld [vmem:[%s67 + $0x2d8] sm:$0xff]
    %v4891 = vld [vmem:[%s67 + $0x2e0] sm:$0xff]
    %v4892 = vld [vmem:[%s67 + $0x2e8] sm:$0xff]
    %v4893 = vld [vmem:[%s67 + $0x2f0] sm:$0xff]
    %v4894 = vld [vmem:[%s67 + $0x2f8] sm:$0xff]
    %v4895 = vld [vmem:[%s67 + $0x300] sm:$0xff]
    %v4896 = vld [vmem:[%s67 + $0x308] sm:$0xff]
    %v4897 = vld [vmem:[%s67 + $0x310] sm:$0xff]
    %v4898 = vld [vmem:[%s67 + $0x318] sm:$0xff]
    %v4899 = vld [vmem:[%s67 + $0x320] sm:$0xff]
    %v4900 = vld [vmem:[%s67 + $0x328] sm:$0xff]
    %v4901 = vld [vmem:[%s67 + $0x330] sm:$0xff]
    %v4902 = vld [vmem:[%s67 + $0x338] sm:$0xff]
    %v4903 = vld [vmem:[%s67 + $0x340] sm:$0xff]
    %v4904 = vld [vmem:[%s67 + $0x348] sm:$0xff]
    %v4905 = vld [vmem:[%s67 + $0x350] sm:$0xff]
    %v4906 = vld [vmem:[%s67 + $0x358] sm:$0xff]
    %v4907 = vld [vmem:[%s67 + $0x360] sm:$0xff]
    %v4908 = vld [vmem:[%s67 + $0x368] sm:$0xff]
    %v4909 = vld [vmem:[%s67 + $0x370] sm:$0xff]
    %v4910 = vld [vmem:[%s67 + $0x378] sm:$0xff]
    %v4911 = vld [vmem:[%s67 + $0x380] sm:$0xff]
    %v4912 = vld [vmem:[%s67 + $0x388] sm:$0xff]
    %v4913 = vld [vmem:[%s67 + $0x390] sm:$0xff]
    %v4914 = vld [vmem:[%s67 + $0x398] sm:$0xff]
    %v4915 = vld [vmem:[%s67 + $0x3a0] sm:$0xff]
    %v4916 = vld [vmem:[%s67 + $0x3a8] sm:$0xff]
    %v4917 = vld [vmem:[%s67 + $0x3b0] sm:$0xff]
    %v4918 = vld [vmem:[%s67 + $0x3b8] sm:$0xff]
    %v4919 = vld [vmem:[%s67 + $0x3c0] sm:$0xff]
    %v4920 = vld [vmem:[%s67 + $0x3c8] sm:$0xff]
    %v4921 = vld [vmem:[%s67 + $0x3d0] sm:$0xff]
    %v4922 = vld [vmem:[%s67 + $0x3d8] sm:$0xff]
    %v4923 = vld [vmem:[%s67 + $0x3e0] sm:$0xff]
    %v4924 = vld [vmem:[%s67 + $0x3e8] sm:$0xff]
    %v4925 = vld [vmem:[%s67 + $0x3f0] sm:$0xff]
    %v4926 = vld [vmem:[%s67 + $0x3f8] sm:$0xff]
    %v4927 = vld [vmem:[%s67 + $0x400] sm:$0xff]
    %v4928 = vld [vmem:[%s67 + $0x408] sm:$0xff]
    %v4929 = vld [vmem:[%s67 + $0x410] sm:$0xff]
    %v4930 = vld [vmem:[%s67 + $0x418] sm:$0xff]
    %v4931 = vld [vmem:[%s67 + $0x420] sm:$0xff]
    %v4932 = vld [vmem:[%s67 + $0x428] sm:$0xff]
    %v4933 = vld [vmem:[%s67 + $0x430] sm:$0xff]
    %v4934 = vld [vmem:[%s67 + $0x438] sm:$0xff]
    %v4935 = vld [vmem:[%s67 + $0x440] sm:$0xff]
    %v4936 = vld [vmem:[%s67 + $0x448] sm:$0xff]
    %v4937 = vld [vmem:[%s67 + $0x450] sm:$0xff]
    %v4938 = vld [vmem:[%s67 + $0x458] sm:$0xff]
    %v4939 = vld [vmem:[%s67 + $0x460] sm:$0xff]
    %v4940 = vld [vmem:[%s67 + $0x468] sm:$0xff]
    %v4941 = vld [vmem:[%s67 + $0x470] sm:$0xff]
    %v4942 = vld [vmem:[%s67 + $0x478] sm:$0xff]
    %v4943 = vld [vmem:[%s67 + $0x480] sm:$0xff]
    %v4944 = vld [vmem:[%s67 + $0x488] sm:$0xff]
    %v4945 = vld [vmem:[%s67 + $0x490] sm:$0xff]
    %v4946 = vld [vmem:[%s67 + $0x498] sm:$0xff]
    %v4947 = vld [vmem:[%s67 + $0x4a0] sm:$0xff]
    %v4948 = vld [vmem:[%s67 + $0x4a8] sm:$0xff]
    %v4949 = vld [vmem:[%s67 + $0x4b0] sm:$0xff]
    %v4950 = vld [vmem:[%s67 + $0x4b8] sm:$0xff]
    %v4951 = vld [vmem:[%s67 + $0x4c0] sm:$0xff]
    %v4952 = vld [vmem:[%s67 + $0x4c8] sm:$0xff]
    %v4953 = vld [vmem:[%s67 + $0x4d0] sm:$0xff]
    %v4954 = vld [vmem:[%s67 + $0x4d8] sm:$0xff]
    %v4955 = vld [vmem:[%s67 + $0x4e0] sm:$0xff]
    %v4956 = vld [vmem:[%s67 + $0x4e8] sm:$0xff]
    %v4957 = vld [vmem:[%s67 + $0x4f0] sm:$0xff]
    %v4958 = vld [vmem:[%s67 + $0x4f8] sm:$0xff]
    %v4959 = vld [vmem:[%s67 + $0x500] sm:$0xff]
    %v4960 = vld [vmem:[%s67 + $0x508] sm:$0xff]
    %v4961 = vld [vmem:[%s67 + $0x510] sm:$0xff]
    %v4962 = vld [vmem:[%s67 + $0x518] sm:$0xff]
    %v4963 = vld [vmem:[%s67 + $0x520] sm:$0xff]
    %v4964 = vld [vmem:[%s67 + $0x528] sm:$0xff]
    %v4965 = vld [vmem:[%s67 + $0x530] sm:$0xff]
    %v4966 = vld [vmem:[%s67 + $0x538] sm:$0xff]
    %v4967 = vld [vmem:[%s67 + $0x540] sm:$0xff]
    %v4968 = vld [vmem:[%s67 + $0x548] sm:$0xff]
    %v4969 = vld [vmem:[%s67 + $0x550] sm:$0xff]
    %v4970 = vld [vmem:[%s67 + $0x558] sm:$0xff]
    %v4971 = vld [vmem:[%s67 + $0x560] sm:$0xff]
    %v4972 = vld [vmem:[%s67 + $0x568] sm:$0xff]
    %v4973 = vld [vmem:[%s67 + $0x570] sm:$0xff]
    %v4974 = vld [vmem:[%s67 + $0x578] sm:$0xff]
    %v4975 = vld [vmem:[%s67 + $0x580] sm:$0xff]
    %v4976 = vld [vmem:[%s67 + $0x588] sm:$0xff]
    %v4977 = vld [vmem:[%s67 + $0x590] sm:$0xff]
    %v4978 = vld [vmem:[%s67 + $0x598] sm:$0xff]
    %v4979 = vld [vmem:[%s67 + $0x5a0] sm:$0xff]
    %v4980 = vld [vmem:[%s67 + $0x5a8] sm:$0xff]
    %v4981 = vld [vmem:[%s67 + $0x5b0] sm:$0xff]
    %v4982 = vld [vmem:[%s67 + $0x5b8] sm:$0xff]
    %v4983 = vld [vmem:[%s67 + $0x5c0] sm:$0xff]
    %v4984 = vld [vmem:[%s67 + $0x5c8] sm:$0xff]
    %v4985 = vld [vmem:[%s67 + $0x5d0] sm:$0xff]
    %v4986 = vld [vmem:[%s67 + $0x5d8] sm:$0xff]
    %v4987 = vld [vmem:[%s67 + $0x5e0] sm:$0xff]
    %v4988 = vld [vmem:[%s67 + $0x5e8] sm:$0xff]
    %v4989 = vld [vmem:[%s67 + $0x5f0] sm:$0xff]
    %v4990 = vld [vmem:[%s67 + $0x5f8] sm:$0xff]
    %v4991 = vld [vmem:[%s67 + $0x600] sm:$0xff]
    %v4992 = vld [vmem:[%s67 + $0x608] sm:$0xff]
    %v4993 = vld [vmem:[%s67 + $0x610] sm:$0xff]
    %v4994 = vld [vmem:[%s67 + $0x618] sm:$0xff]
    %v4995 = vld [vmem:[%s67 + $0x620] sm:$0xff]
    %v4996 = vld [vmem:[%s67 + $0x628] sm:$0xff]
    %v4997 = vld [vmem:[%s67 + $0x630] sm:$0xff]
    %v4998 = vld [vmem:[%s67 + $0x638] sm:$0xff]
    %v4999 = vld [vmem:[%s67 + $0x640] sm:$0xff]
    %v5000 = vld [vmem:[%s67 + $0x648] sm:$0xff]
    %v5001 = vld [vmem:[%s67 + $0x650] sm:$0xff]
    %v5002 = vld [vmem:[%s67 + $0x658] sm:$0xff]
    %v5003 = vld [vmem:[%s67 + $0x660] sm:$0xff]
    %v5004 = vld [vmem:[%s67 + $0x668] sm:$0xff]
    %v5005 = vld [vmem:[%s67 + $0x670] sm:$0xff]
    %v5006 = vld [vmem:[%s67 + $0x678] sm:$0xff]
    %v5007 = vld [vmem:[%s67 + $0x680] sm:$0xff]
    %v5008 = vld [vmem:[%s67 + $0x688] sm:$0xff]
    %v5009 = vld [vmem:[%s67 + $0x690] sm:$0xff]
    %v5010 = vld [vmem:[%s67 + $0x698] sm:$0xff]
    %v5011 = vld [vmem:[%s67 + $0x6a0] sm:$0xff]
    %v5012 = vld [vmem:[%s67 + $0x6a8] sm:$0xff]
    %v5013 = vld [vmem:[%s67 + $0x6b0] sm:$0xff]
    %v5014 = vld [vmem:[%s67 + $0x6b8] sm:$0xff]
    %v5015 = vld [vmem:[%s67 + $0x6c0] sm:$0xff]
    %v5016 = vld [vmem:[%s67 + $0x6c8] sm:$0xff]
    %v5017 = vld [vmem:[%s67 + $0x6d0] sm:$0xff]
    %v5018 = vld [vmem:[%s67 + $0x6d8] sm:$0xff]
    %v5019 = vld [vmem:[%s67 + $0x6e0] sm:$0xff]
    %v5020 = vld [vmem:[%s67 + $0x6e8] sm:$0xff]
    %v5021 = vld [vmem:[%s67 + $0x6f0] sm:$0xff]
    %v5022 = vld [vmem:[%s67 + $0x6f8] sm:$0xff]
    %v5023 = vld [vmem:[%s67 + $0x700] sm:$0xff]
    %v5024 = vld [vmem:[%s67 + $0x708] sm:$0xff]
    %v5025 = vld [vmem:[%s67 + $0x710] sm:$0xff]
    %v5026 = vld [vmem:[%s67 + $0x718] sm:$0xff]
    %v5027 = vld [vmem:[%s67 + $0x720] sm:$0xff]
    %v5028 = vld [vmem:[%s67 + $0x728] sm:$0xff]
    %v5029 = vld [vmem:[%s67 + $0x730] sm:$0xff]
    %v5030 = vld [vmem:[%s67 + $0x738] sm:$0xff]
    %v5031 = vld [vmem:[%s67 + $0x740] sm:$0xff]
    %v5032 = vld [vmem:[%s67 + $0x748] sm:$0xff]
    %v5033 = vld [vmem:[%s67 + $0x750] sm:$0xff]
    %v5034 = vld [vmem:[%s67 + $0x758] sm:$0xff]
    %v5035 = vld [vmem:[%s67 + $0x760] sm:$0xff]
    %v5036 = vld [vmem:[%s67 + $0x768] sm:$0xff]
    %v5037 = vld [vmem:[%s67 + $0x770] sm:$0xff]
    %v5038 = vld [vmem:[%s67 + $0x778] sm:$0xff]
    %v5039 = vld [vmem:[%s67 + $0x780] sm:$0xff]
    %v5040 = vld [vmem:[%s67 + $0x788] sm:$0xff]
    %v5041 = vld [vmem:[%s67 + $0x790] sm:$0xff]
    %v5042 = vld [vmem:[%s67 + $0x798] sm:$0xff]
    %v5043 = vld [vmem:[%s67 + $0x7a0] sm:$0xff]
    %v5044 = vld [vmem:[%s67 + $0x7a8] sm:$0xff]
    %v5045 = vld [vmem:[%s67 + $0x7b0] sm:$0xff]
    %v5046 = vld [vmem:[%s67 + $0x7b8] sm:$0xff]
    %v5047 = vld [vmem:[%s67 + $0x7c0] sm:$0xff]
    %v5048 = vld [vmem:[%s67 + $0x7c8] sm:$0xff]
    %v5049 = vld [vmem:[%s67 + $0x7d0] sm:$0xff]
    %v5050 = vld [vmem:[%s67 + $0x7d8] sm:$0xff]
    %v5051 = vld [vmem:[%s67 + $0x7e0] sm:$0xff]
    %v5052 = vld [vmem:[%s67 + $0x7e8] sm:$0xff]
    %v5053 = vld [vmem:[%s67 + $0x7f0] sm:$0xff]
    %v5054 = vld [vmem:[%s67 + $0x7f8] sm:$0xff]
    %v5055 = vld [vmem:[%s69] sm:$0x1]
    %v5057 = vlaneseq
    %v5058 = vshrl.u32 %v5057, 7
    %v5059 = vsub.s32 0, %v5058
    %v5060 = vrot.slane %v5055, %v5059
    %5062 = vmatprep.subr.mxu0 0.0
    %5063 = vmatpush1.msra.mxu0 %v4814
    %5064 = vmatprep.subr.mxu0 0.0
    %5065 = vmatpush1.msra.mxu0 %v4813
    %5066 = vmatprep.subr.mxu0 0.0
    %5067 = vmatpush1.msra.mxu0 %v4812
    %5068 = vmatprep.subr.mxu0 0.0
    %5069 = vmatpush1.msra.mxu0 %v4811
    %5070 = vmatprep.subr.mxu0 0.0
    %5071 = vmatpush1.msra.mxu0 %v4810
    %5072 = vmatprep.subr.mxu0 0.0
    %5073 = vmatpush1.msra.mxu0 %v4809
    %5074 = vmatprep.subr.mxu0 0.0
    %5075 = vmatpush1.msra.mxu0 %v4808
    %5076 = vmatprep.subr.mxu0 0.0
    %5077 = vmatpush1.msra.mxu0 %v4807
    %5078 = vmatprep.subr.mxu0 0.0
    %5079 = vmatpush1.msra.mxu0 %v4806
    %5080 = vmatprep.subr.mxu0 0.0
    %5081 = vmatpush1.msra.mxu0 %v4805
    %5082 = vmatprep.subr.mxu0 0.0
    %5083 = vmatpush1.msra.mxu0 %v4804
    %5084 = vmatprep.subr.mxu0 0.0
    %5085 = vmatpush1.msra.mxu0 %v4803
    %5086 = vmatprep.subr.mxu0 0.0
    %5087 = vmatpush1.msra.mxu0 %v4802
    %5088 = vmatprep.subr.mxu0 0.0
    %5089 = vmatpush1.msra.mxu0 %v4801
    %5090 = vmatprep.subr.mxu0 0.0
    %5091 = vmatpush1.msra.mxu0 %v4800
    %5092 = vmatprep.subr.mxu0 0.0
    %5093 = vmatpush1.msra.mxu0 %v4799
    %5094 = vmatprep.subr.mxu0 0.0
    %5095 = vmatpush2.msra.mxu0 %v4830
    %5096 = vmatprep.subr.mxu0 0.0
    %5097 = vmatpush2.msra.mxu0 %v4829
    %5098 = vmatprep.subr.mxu0 0.0
    %5099 = vmatpush2.msra.mxu0 %v4828
    %5100 = vmatprep.subr.mxu0 0.0
    %5101 = vmatpush2.msra.mxu0 %v4827
    %5102 = vmatprep.subr.mxu0 0.0
    %5103 = vmatpush2.msra.mxu0 %v4826
    %5104 = vmatprep.subr.mxu0 0.0
    %5105 = vmatpush2.msra.mxu0 %v4825
    %5106 = vmatprep.subr.mxu0 0.0
    %5107 = vmatpush2.msra.mxu0 %v4824
    %5108 = vmatprep.subr.mxu0 0.0
    %5109 = vmatpush2.msra.mxu0 %v4823
    %5110 = vmatprep.subr.mxu0 0.0
    %5111 = vmatpush2.msra.mxu0 %v4822
    %5112 = vmatprep.subr.mxu0 0.0
    %5113 = vmatpush2.msra.mxu0 %v4821
    %5114 = vmatprep.subr.mxu0 0.0
    %5115 = vmatpush2.msra.mxu0 %v4820
    %5116 = vmatprep.subr.mxu0 0.0
    %5117 = vmatpush2.msra.mxu0 %v4819
    %5118 = vmatprep.subr.mxu0 0.0
    %5119 = vmatpush2.msra.mxu0 %v4818
    %5120 = vmatprep.subr.mxu0 0.0
    %5121 = vmatpush2.msra.mxu0 %v4817
    %5122 = vmatprep.subr.mxu0 0.0
    %5123 = vmatpush2.msra.mxu0 %v4816
    %5124 = vmatprep.subr.mxu0 0.0
    %5125 = vmatpush2.msra.mxu0 %v4815
    %5126 = vmatprep.mubr.f32.mxu0 %v4784
    %5127 = vmatmul.mubr.f32.gmra.mxu0 %v4783
    %v5128 = vpop.f32.mrf.mxu0
    %v5129 = vadd.f32 %v5060, %v5128
    %v5130 = vpop.f32.mrf.mxu0
    %5131 = vdwg.mxu0
    %5132 = vmatprep.subr.mxu0 0.0
    %5133 = vmatpush1.msra.mxu0 %v4846
    %5134 = vmatprep.subr.mxu0 0.0
    %5135 = vmatpush1.msra.mxu0 %v4845
    %5136 = vmatprep.subr.mxu0 0.0
    %5137 = vmatpush1.msra.mxu0 %v4844
    %5138 = vmatprep.subr.mxu0 0.0
    %5139 = vmatpush1.msra.mxu0 %v4843
    %5140 = vmatprep.subr.mxu0 0.0
    %5141 = vmatpush1.msra.mxu0 %v4842
    %5142 = vmatprep.subr.mxu0 0.0
    %5143 = vmatpush1.msra.mxu0 %v4841
    %5144 = vmatprep.subr.mxu0 0.0
    %5145 = vmatpush1.msra.mxu0 %v4840
    %5146 = vmatprep.subr.mxu0 0.0
    %5147 = vmatpush1.msra.mxu0 %v4839
    %5148 = vmatprep.subr.mxu0 0.0
    %5149 = vmatpush1.msra.mxu0 %v4838
    %5150 = vmatprep.subr.mxu0 0.0
    %5151 = vmatpush1.msra.mxu0 %v4837
    %5152 = vmatprep.subr.mxu0 0.0
    %5153 = vmatpush1.msra.mxu0 %v4836
    %5154 = vmatprep.subr.mxu0 0.0
    %5155 = vmatpush1.msra.mxu0 %v4835
    %5156 = vmatprep.subr.mxu0 0.0
    %5157 = vmatpush1.msra.mxu0 %v4834
    %5158 = vmatprep.subr.mxu0 0.0
    %5159 = vmatpush1.msra.mxu0 %v4833
    %5160 = vmatprep.subr.mxu0 0.0
    %5161 = vmatpush1.msra.mxu0 %v4832
    %5162 = vmatprep.subr.mxu0 0.0
    %5163 = vmatpush1.msra.mxu0 %v4831
    %5164 = vmatprep.subr.mxu0 0.0
    %5165 = vmatpush2.msra.mxu0 %v4862
    %5166 = vmatprep.subr.mxu0 0.0
    %5167 = vmatpush2.msra.mxu0 %v4861
    %5168 = vmatprep.subr.mxu0 0.0
    %5169 = vmatpush2.msra.mxu0 %v4860
    %5170 = vmatprep.subr.mxu0 0.0
    %5171 = vmatpush2.msra.mxu0 %v4859
    %5172 = vmatprep.subr.mxu0 0.0
    %5173 = vmatpush2.msra.mxu0 %v4858
    %5174 = vmatprep.subr.mxu0 0.0
    %5175 = vmatpush2.msra.mxu0 %v4857
    %5176 = vmatprep.subr.mxu0 0.0
    %5177 = vmatpush2.msra.mxu0 %v4856
    %5178 = vmatprep.subr.mxu0 0.0
    %5179 = vmatpush2.msra.mxu0 %v4855
    %5180 = vmatprep.subr.mxu0 0.0
    %5181 = vmatpush2.msra.mxu0 %v4854
    %5182 = vmatprep.subr.mxu0 0.0
    %5183 = vmatpush2.msra.mxu0 %v4853
    %5184 = vmatprep.subr.mxu0 0.0
    %5185 = vmatpush2.msra.mxu0 %v4852
    %5186 = vmatprep.subr.mxu0 0.0
    %5187 = vmatpush2.msra.mxu0 %v4851
    %5188 = vmatprep.subr.mxu0 0.0
    %5189 = vmatpush2.msra.mxu0 %v4850
    %5190 = vmatprep.subr.mxu0 0.0
    %5191 = vmatpush2.msra.mxu0 %v4849
    %5192 = vmatprep.subr.mxu0 0.0
    %5193 = vmatpush2.msra.mxu0 %v4848
    %5194 = vmatprep.subr.mxu0 0.0
    %5195 = vmatpush2.msra.mxu0 %v4847
    %5196 = vmatprep.mubr.f32.mxu0 %v4786
    %5197 = vmatmul.mubr.f32.gmra.mxu0 %v4785
    %v5198 = vpop.f32.mrf.mxu0
    %v5199 = vadd.f32 %v5129, %v5198
    %v5200 = vpop.f32.mrf.mxu0
    %5201 = vdwg.mxu0
    %5202 = vmatprep.subr.mxu0 0.0
    %5203 = vmatpush1.msra.mxu0 %v4878
    %5204 = vmatprep.subr.mxu0 0.0
    %5205 = vmatpush1.msra.mxu0 %v4877
    %5206 = vmatprep.subr.mxu0 0.0
    %5207 = vmatpush1.msra.mxu0 %v4876
    %5208 = vmatprep.subr.mxu0 0.0
    %5209 = vmatpush1.msra.mxu0 %v4875
    %5210 = vmatprep.subr.mxu0 0.0
    %5211 = vmatpush1.msra.mxu0 %v4874
    %5212 = vmatprep.subr.mxu0 0.0
    %5213 = vmatpush1.msra.mxu0 %v4873
    %5214 = vmatprep.subr.mxu0 0.0
    %5215 = vmatpush1.msra.mxu0 %v4872
    %5216 = vmatprep.subr.mxu0 0.0
    %5217 = vmatpush1.msra.mxu0 %v4871
    %5218 = vmatprep.subr.mxu0 0.0
    %5219 = vmatpush1.msra.mxu0 %v4870
    %5220 = vmatprep.subr.mxu0 0.0
    %5221 = vmatpush1.msra.mxu0 %v4869
    %5222 = vmatprep.subr.mxu0 0.0
    %5223 = vmatpush1.msra.mxu0 %v4868
    %5224 = vmatprep.subr.mxu0 0.0
    %5225 = vmatpush1.msra.mxu0 %v4867
    %5226 = vmatprep.subr.mxu0 0.0
    %5227 = vmatpush1.msra.mxu0 %v4866
    %5228 = vmatprep.subr.mxu0 0.0
    %5229 = vmatpush1.msra.mxu0 %v4865
    %5230 = vmatprep.subr.mxu0 0.0
    %5231 = vmatpush1.msra.mxu0 %v4864
    %5232 = vmatprep.subr.mxu0 0.0
    %5233 = vmatpush1.msra.mxu0 %v4863
    %5234 = vmatprep.subr.mxu0 0.0
    %5235 = vmatpush2.msra.mxu0 %v4894
    %5236 = vmatprep.subr.mxu0 0.0
    %5237 = vmatpush2.msra.mxu0 %v4893
    %5238 = vmatprep.subr.mxu0 0.0
    %5239 = vmatpush2.msra.mxu0 %v4892
    %5240 = vmatprep.subr.mxu0 0.0
    %5241 = vmatpush2.msra.mxu0 %v4891
    %5242 = vmatprep.subr.mxu0 0.0
    %5243 = vmatpush2.msra.mxu0 %v4890
    %5244 = vmatprep.subr.mxu0 0.0
    %5245 = vmatpush2.msra.mxu0 %v4889
    %5246 = vmatprep.subr.mxu0 0.0
    %5247 = vmatpush2.msra.mxu0 %v4888
    %5248 = vmatprep.subr.mxu0 0.0
    %5249 = vmatpush2.msra.mxu0 %v4887
    %5250 = vmatprep.subr.mxu0 0.0
    %5251 = vmatpush2.msra.mxu0 %v4886
    %5252 = vmatprep.subr.mxu0 0.0
    %5253 = vmatpush2.msra.mxu0 %v4885
    %5254 = vmatprep.subr.mxu0 0.0
    %5255 = vmatpush2.msra.mxu0 %v4884
    %5256 = vmatprep.subr.mxu0 0.0
    %5257 = vmatpush2.msra.mxu0 %v4883
    %5258 = vmatprep.subr.mxu0 0.0
    %5259 = vmatpush2.msra.mxu0 %v4882
    %5260 = vmatprep.subr.mxu0 0.0
    %5261 = vmatpush2.msra.mxu0 %v4881
    %5262 = vmatprep.subr.mxu0 0.0
    %5263 = vmatpush2.msra.mxu0 %v4880
    %5264 = vmatprep.subr.mxu0 0.0
    %5265 = vmatpush2.msra.mxu0 %v4879
    %5266 = vmatprep.mubr.f32.mxu0 %v4788
    %5267 = vmatmul.mubr.f32.gmra.mxu0 %v4787
    %v5268 = vpop.f32.mrf.mxu0
    %v5269 = vadd.f32 %v5199, %v5268
    %v5270 = vpop.f32.mrf.mxu0
    %5271 = vdwg.mxu0
    %5272 = vmatprep.subr.mxu0 0.0
    %5273 = vmatpush1.msra.mxu0 %v4910
    %5274 = vmatprep.subr.mxu0 0.0
    %5275 = vmatpush1.msra.mxu0 %v4909
    %5276 = vmatprep.subr.mxu0 0.0
    %5277 = vmatpush1.msra.mxu0 %v4908
    %5278 = vmatprep.subr.mxu0 0.0
    %5279 = vmatpush1.msra.mxu0 %v4907
    %5280 = vmatprep.subr.mxu0 0.0
    %5281 = vmatpush1.msra.mxu0 %v4906
    %5282 = vmatprep.subr.mxu0 0.0
    %5283 = vmatpush1.msra.mxu0 %v4905
    %5284 = vmatprep.subr.mxu0 0.0
    %5285 = vmatpush1.msra.mxu0 %v4904
    %5286 = vmatprep.subr.mxu0 0.0
    %5287 = vmatpush1.msra.mxu0 %v4903
    %5288 = vmatprep.subr.mxu0 0.0
    %5289 = vmatpush1.msra.mxu0 %v4902
    %5290 = vmatprep.subr.mxu0 0.0
    %5291 = vmatpush1.msra.mxu0 %v4901
    %5292 = vmatprep.subr.mxu0 0.0
    %5293 = vmatpush1.msra.mxu0 %v4900
    %5294 = vmatprep.subr.mxu0 0.0
    %5295 = vmatpush1.msra.mxu0 %v4899
    %5296 = vmatprep.subr.mxu0 0.0
    %5297 = vmatpush1.msra.mxu0 %v4898
    %5298 = vmatprep.subr.mxu0 0.0
    %5299 = vmatpush1.msra.mxu0 %v4897
    %5300 = vmatprep.subr.mxu0 0.0
    %5301 = vmatpush1.msra.mxu0 %v4896
    %5302 = vmatprep.subr.mxu0 0.0
    %5303 = vmatpush1.msra.mxu0 %v4895
    %5304 = vmatprep.subr.mxu0 0.0
    %5305 = vmatpush2.msra.mxu0 %v4926
    %5306 = vmatprep.subr.mxu0 0.0
    %5307 = vmatpush2.msra.mxu0 %v4925
    %5308 = vmatprep.subr.mxu0 0.0
    %5309 = vmatpush2.msra.mxu0 %v4924
    %5310 = vmatprep.subr.mxu0 0.0
    %5311 = vmatpush2.msra.mxu0 %v4923
    %5312 = vmatprep.subr.mxu0 0.0
    %5313 = vmatpush2.msra.mxu0 %v4922
    %5314 = vmatprep.subr.mxu0 0.0
    %5315 = vmatpush2.msra.mxu0 %v4921
    %5316 = vmatprep.subr.mxu0 0.0
    %5317 = vmatpush2.msra.mxu0 %v4920
    %5318 = vmatprep.subr.mxu0 0.0
    %5319 = vmatpush2.msra.mxu0 %v4919
    %5320 = vmatprep.subr.mxu0 0.0
    %5321 = vmatpush2.msra.mxu0 %v4918
    %5322 = vmatprep.subr.mxu0 0.0
    %5323 = vmatpush2.msra.mxu0 %v4917
    %5324 = vmatprep.subr.mxu0 0.0
    %5325 = vmatpush2.msra.mxu0 %v4916
    %5326 = vmatprep.subr.mxu0 0.0
    %5327 = vmatpush2.msra.mxu0 %v4915
    %5328 = vmatprep.subr.mxu0 0.0
    %5329 = vmatpush2.msra.mxu0 %v4914
    %5330 = vmatprep.subr.mxu0 0.0
    %5331 = vmatpush2.msra.mxu0 %v4913
    %5332 = vmatprep.subr.mxu0 0.0
    %5333 = vmatpush2.msra.mxu0 %v4912
    %5334 = vmatprep.subr.mxu0 0.0
    %5335 = vmatpush2.msra.mxu0 %v4911
    %5336 = vmatprep.mubr.f32.mxu0 %v4790
    %5337 = vmatmul.mubr.f32.gmra.mxu0 %v4789
    %v5338 = vpop.f32.mrf.mxu0
    %v5339 = vadd.f32 %v5269, %v5338
    %v5340 = vpop.f32.mrf.mxu0
    %5341 = vdwg.mxu0
    %5342 = vmatprep.subr.mxu0 0.0
    %5343 = vmatpush1.msra.mxu0 %v4942
    %5344 = vmatprep.subr.mxu0 0.0
    %5345 = vmatpush1.msra.mxu0 %v4941
    %5346 = vmatprep.subr.mxu0 0.0
    %5347 = vmatpush1.msra.mxu0 %v4940
    %5348 = vmatprep.subr.mxu0 0.0
    %5349 = vmatpush1.msra.mxu0 %v4939
    %5350 = vmatprep.subr.mxu0 0.0
    %5351 = vmatpush1.msra.mxu0 %v4938
    %5352 = vmatprep.subr.mxu0 0.0
    %5353 = vmatpush1.msra.mxu0 %v4937
    %5354 = vmatprep.subr.mxu0 0.0
    %5355 = vmatpush1.msra.mxu0 %v4936
    %5356 = vmatprep.subr.mxu0 0.0
    %5357 = vmatpush1.msra.mxu0 %v4935
    %5358 = vmatprep.subr.mxu0 0.0
    %5359 = vmatpush1.msra.mxu0 %v4934
    %5360 = vmatprep.subr.mxu0 0.0
    %5361 = vmatpush1.msra.mxu0 %v4933
    %5362 = vmatprep.subr.mxu0 0.0
    %5363 = vmatpush1.msra.mxu0 %v4932
    %5364 = vmatprep.subr.mxu0 0.0
    %5365 = vmatpush1.msra.mxu0 %v4931
    %5366 = vmatprep.subr.mxu0 0.0
    %5367 = vmatpush1.msra.mxu0 %v4930
    %5368 = vmatprep.subr.mxu0 0.0
    %5369 = vmatpush1.msra.mxu0 %v4929
    %5370 = vmatprep.subr.mxu0 0.0
    %5371 = vmatpush1.msra.mxu0 %v4928
    %5372 = vmatprep.subr.mxu0 0.0
    %5373 = vmatpush1.msra.mxu0 %v4927
    %5374 = vmatprep.subr.mxu0 0.0
    %5375 = vmatpush2.msra.mxu0 %v4958
    %5376 = vmatprep.subr.mxu0 0.0
    %5377 = vmatpush2.msra.mxu0 %v4957
    %5378 = vmatprep.subr.mxu0 0.0
    %5379 = vmatpush2.msra.mxu0 %v4956
    %5380 = vmatprep.subr.mxu0 0.0
    %5381 = vmatpush2.msra.mxu0 %v4955
    %5382 = vmatprep.subr.mxu0 0.0
    %5383 = vmatpush2.msra.mxu0 %v4954
    %5384 = vmatprep.subr.mxu0 0.0
    %5385 = vmatpush2.msra.mxu0 %v4953
    %5386 = vmatprep.subr.mxu0 0.0
    %5387 = vmatpush2.msra.mxu0 %v4952
    %5388 = vmatprep.subr.mxu0 0.0
    %5389 = vmatpush2.msra.mxu0 %v4951
    %5390 = vmatprep.subr.mxu0 0.0
    %5391 = vmatpush2.msra.mxu0 %v4950
    %5392 = vmatprep.subr.mxu0 0.0
    %5393 = vmatpush2.msra.mxu0 %v4949
    %5394 = vmatprep.subr.mxu0 0.0
    %5395 = vmatpush2.msra.mxu0 %v4948
    %5396 = vmatprep.subr.mxu0 0.0
    %5397 = vmatpush2.msra.mxu0 %v4947
    %5398 = vmatprep.subr.mxu0 0.0
    %5399 = vmatpush2.msra.mxu0 %v4946
    %5400 = vmatprep.subr.mxu0 0.0
    %5401 = vmatpush2.msra.mxu0 %v4945
    %5402 = vmatprep.subr.mxu0 0.0
    %5403 = vmatpush2.msra.mxu0 %v4944
    %5404 = vmatprep.subr.mxu0 0.0
    %5405 = vmatpush2.msra.mxu0 %v4943
    %5406 = vmatprep.mubr.f32.mxu0 %v4792
    %5407 = vmatmul.mubr.f32.gmra.mxu0 %v4791
    %v5408 = vpop.f32.mrf.mxu0
    %v5409 = vadd.f32 %v5339, %v5408
    %v5410 = vpop.f32.mrf.mxu0
    %5411 = vdwg.mxu0
    %5412 = vmatprep.subr.mxu0 0.0
    %5413 = vmatpush1.msra.mxu0 %v4974
    %5414 = vmatprep.subr.mxu0 0.0
    %5415 = vmatpush1.msra.mxu0 %v4973
    %5416 = vmatprep.subr.mxu0 0.0
    %5417 = vmatpush1.msra.mxu0 %v4972
    %5418 = vmatprep.subr.mxu0 0.0
    %5419 = vmatpush1.msra.mxu0 %v4971
    %5420 = vmatprep.subr.mxu0 0.0
    %5421 = vmatpush1.msra.mxu0 %v4970
    %5422 = vmatprep.subr.mxu0 0.0
    %5423 = vmatpush1.msra.mxu0 %v4969
    %5424 = vmatprep.subr.mxu0 0.0
    %5425 = vmatpush1.msra.mxu0 %v4968
    %5426 = vmatprep.subr.mxu0 0.0
    %5427 = vmatpush1.msra.mxu0 %v4967
    %5428 = vmatprep.subr.mxu0 0.0
    %5429 = vmatpush1.msra.mxu0 %v4966
    %5430 = vmatprep.subr.mxu0 0.0
    %5431 = vmatpush1.msra.mxu0 %v4965
    %5432 = vmatprep.subr.mxu0 0.0
    %5433 = vmatpush1.msra.mxu0 %v4964
    %5434 = vmatprep.subr.mxu0 0.0
    %5435 = vmatpush1.msra.mxu0 %v4963
    %5436 = vmatprep.subr.mxu0 0.0
    %5437 = vmatpush1.msra.mxu0 %v4962
    %5438 = vmatprep.subr.mxu0 0.0
    %5439 = vmatpush1.msra.mxu0 %v4961
    %5440 = vmatprep.subr.mxu0 0.0
    %5441 = vmatpush1.msra.mxu0 %v4960
    %5442 = vmatprep.subr.mxu0 0.0
    %5443 = vmatpush1.msra.mxu0 %v4959
    %5444 = vmatprep.subr.mxu0 0.0
    %5445 = vmatpush2.msra.mxu0 %v4990
    %5446 = vmatprep.subr.mxu0 0.0
    %5447 = vmatpush2.msra.mxu0 %v4989
    %5448 = vmatprep.subr.mxu0 0.0
    %5449 = vmatpush2.msra.mxu0 %v4988
    %5450 = vmatprep.subr.mxu0 0.0
    %5451 = vmatpush2.msra.mxu0 %v4987
    %5452 = vmatprep.subr.mxu0 0.0
    %5453 = vmatpush2.msra.mxu0 %v4986
    %5454 = vmatprep.subr.mxu0 0.0
    %5455 = vmatpush2.msra.mxu0 %v4985
    %5456 = vmatprep.subr.mxu0 0.0
    %5457 = vmatpush2.msra.mxu0 %v4984
    %5458 = vmatprep.subr.mxu0 0.0
    %5459 = vmatpush2.msra.mxu0 %v4983
    %5460 = vmatprep.subr.mxu0 0.0
    %5461 = vmatpush2.msra.mxu0 %v4982
    %5462 = vmatprep.subr.mxu0 0.0
    %5463 = vmatpush2.msra.mxu0 %v4981
    %5464 = vmatprep.subr.mxu0 0.0
    %5465 = vmatpush2.msra.mxu0 %v4980
    %5466 = vmatprep.subr.mxu0 0.0
    %5467 = vmatpush2.msra.mxu0 %v4979
    %5468 = vmatprep.subr.mxu0 0.0
    %5469 = vmatpush2.msra.mxu0 %v4978
    %5470 = vmatprep.subr.mxu0 0.0
    %5471 = vmatpush2.msra.mxu0 %v4977
    %5472 = vmatprep.subr.mxu0 0.0
    %5473 = vmatpush2.msra.mxu0 %v4976
    %5474 = vmatprep.subr.mxu0 0.0
    %5475 = vmatpush2.msra.mxu0 %v4975
    %5476 = vmatprep.mubr.f32.mxu0 %v4794
    %5477 = vmatmul.mubr.f32.gmra.mxu0 %v4793
    %v5478 = vpop.f32.mrf.mxu0
    %v5479 = vadd.f32 %v5409, %v5478
    %v5480 = vpop.f32.mrf.mxu0
    %5481 = vdwg.mxu0
    %5482 = vmatprep.subr.mxu0 0.0
    %5483 = vmatpush1.msra.mxu0 %v5006
    %5484 = vmatprep.subr.mxu0 0.0
    %5485 = vmatpush1.msra.mxu0 %v5005
    %5486 = vmatprep.subr.mxu0 0.0
    %5487 = vmatpush1.msra.mxu0 %v5004
    %5488 = vmatprep.subr.mxu0 0.0
    %5489 = vmatpush1.msra.mxu0 %v5003
    %5490 = vmatprep.subr.mxu0 0.0
    %5491 = vmatpush1.msra.mxu0 %v5002
    %5492 = vmatprep.subr.mxu0 0.0
    %5493 = vmatpush1.msra.mxu0 %v5001
    %5494 = vmatprep.subr.mxu0 0.0
    %5495 = vmatpush1.msra.mxu0 %v5000
    %5496 = vmatprep.subr.mxu0 0.0
    %5497 = vmatpush1.msra.mxu0 %v4999
    %5498 = vmatprep.subr.mxu0 0.0
    %5499 = vmatpush1.msra.mxu0 %v4998
    %5500 = vmatprep.subr.mxu0 0.0
    %5501 = vmatpush1.msra.mxu0 %v4997
    %5502 = vmatprep.subr.mxu0 0.0
    %5503 = vmatpush1.msra.mxu0 %v4996
    %5504 = vmatprep.subr.mxu0 0.0
    %5505 = vmatpush1.msra.mxu0 %v4995
    %5506 = vmatprep.subr.mxu0 0.0
    %5507 = vmatpush1.msra.mxu0 %v4994
    %5508 = vmatprep.subr.mxu0 0.0
    %5509 = vmatpush1.msra.mxu0 %v4993
    %5510 = vmatprep.subr.mxu0 0.0
    %5511 = vmatpush1.msra.mxu0 %v4992
    %5512 = vmatprep.subr.mxu0 0.0
    %5513 = vmatpush1.msra.mxu0 %v4991
    %5514 = vmatprep.subr.mxu0 0.0
    %5515 = vmatpush2.msra.mxu0 %v5022
    %5516 = vmatprep.subr.mxu0 0.0
    %5517 = vmatpush2.msra.mxu0 %v5021
    %5518 = vmatprep.subr.mxu0 0.0
    %5519 = vmatpush2.msra.mxu0 %v5020
    %5520 = vmatprep.subr.mxu0 0.0
    %5521 = vmatpush2.msra.mxu0 %v5019
    %5522 = vmatprep.subr.mxu0 0.0
    %5523 = vmatpush2.msra.mxu0 %v5018
    %5524 = vmatprep.subr.mxu0 0.0
    %5525 = vmatpush2.msra.mxu0 %v5017
    %5526 = vmatprep.subr.mxu0 0.0
    %5527 = vmatpush2.msra.mxu0 %v5016
    %5528 = vmatprep.subr.mxu0 0.0
    %5529 = vmatpush2.msra.mxu0 %v5015
    %5530 = vmatprep.subr.mxu0 0.0
    %5531 = vmatpush2.msra.mxu0 %v5014
    %5532 = vmatprep.subr.mxu0 0.0
    %5533 = vmatpush2.msra.mxu0 %v5013
    %5534 = vmatprep.subr.mxu0 0.0
    %5535 = vmatpush2.msra.mxu0 %v5012
    %5536 = vmatprep.subr.mxu0 0.0
    %5537 = vmatpush2.msra.mxu0 %v5011
    %5538 = vmatprep.subr.mxu0 0.0
    %5539 = vmatpush2.msra.mxu0 %v5010
    %5540 = vmatprep.subr.mxu0 0.0
    %5541 = vmatpush2.msra.mxu0 %v5009
    %5542 = vmatprep.subr.mxu0 0.0
    %5543 = vmatpush2.msra.mxu0 %v5008
    %5544 = vmatprep.subr.mxu0 0.0
    %5545 = vmatpush2.msra.mxu0 %v5007
    %5546 = vmatprep.mubr.f32.mxu0 %v4796
    %5547 = vmatmul.mubr.f32.gmra.mxu0 %v4795
    %v5548 = vpop.f32.mrf.mxu0
    %v5549 = vadd.f32 %v5479, %v5548
    %v5550 = vpop.f32.mrf.mxu0
    %5551 = vdwg.mxu0
    %5552 = vmatprep.subr.mxu0 0.0
    %5553 = vmatpush1.msra.mxu0 %v5038
    %5554 = vmatprep.subr.mxu0 0.0
    %5555 = vmatpush1.msra.mxu0 %v5037
    %5556 = vmatprep.subr.mxu0 0.0
    %5557 = vmatpush1.msra.mxu0 %v5036
    %5558 = vmatprep.subr.mxu0 0.0
    %5559 = vmatpush1.msra.mxu0 %v5035
    %5560 = vmatprep.subr.mxu0 0.0
    %5561 = vmatpush1.msra.mxu0 %v5034
    %5562 = vmatprep.subr.mxu0 0.0
    %5563 = vmatpush1.msra.mxu0 %v5033
    %5564 = vmatprep.subr.mxu0 0.0
    %5565 = vmatpush1.msra.mxu0 %v5032
    %5566 = vmatprep.subr.mxu0 0.0
    %5567 = vmatpush1.msra.mxu0 %v5031
    %5568 = vmatprep.subr.mxu0 0.0
    %5569 = vmatpush1.msra.mxu0 %v5030
    %5570 = vmatprep.subr.mxu0 0.0
    %5571 = vmatpush1.msra.mxu0 %v5029
    %5572 = vmatprep.subr.mxu0 0.0
    %5573 = vmatpush1.msra.mxu0 %v5028
    %5574 = vmatprep.subr.mxu0 0.0
    %5575 = vmatpush1.msra.mxu0 %v5027
    %5576 = vmatprep.subr.mxu0 0.0
    %5577 = vmatpush1.msra.mxu0 %v5026
    %5578 = vmatprep.subr.mxu0 0.0
    %5579 = vmatpush1.msra.mxu0 %v5025
    %5580 = vmatprep.subr.mxu0 0.0
    %5581 = vmatpush1.msra.mxu0 %v5024
    %5582 = vmatprep.subr.mxu0 0.0
    %5583 = vmatpush1.msra.mxu0 %v5023
    %5584 = vmatprep.subr.mxu0 0.0
    %5585 = vmatpush2.msra.mxu0 %v5054
    %5586 = vmatprep.subr.mxu0 0.0
    %5587 = vmatpush2.msra.mxu0 %v5053
    %5588 = vmatprep.subr.mxu0 0.0
    %5589 = vmatpush2.msra.mxu0 %v5052
    %5590 = vmatprep.subr.mxu0 0.0
    %5591 = vmatpush2.msra.mxu0 %v5051
    %5592 = vmatprep.subr.mxu0 0.0
    %5593 = vmatpush2.msra.mxu0 %v5050
    %5594 = vmatprep.subr.mxu0 0.0
    %5595 = vmatpush2.msra.mxu0 %v5049
    %5596 = vmatprep.subr.mxu0 0.0
    %5597 = vmatpush2.msra.mxu0 %v5048
    %5598 = vmatprep.subr.mxu0 0.0
    %5599 = vmatpush2.msra.mxu0 %v5047
    %5600 = vmatprep.subr.mxu0 0.0
    %5601 = vmatpush2.msra.mxu0 %v5046
    %5602 = vmatprep.subr.mxu0 0.0
    %5603 = vmatpush2.msra.mxu0 %v5045
    %5604 = vmatprep.subr.mxu0 0.0
    %5605 = vmatpush2.msra.mxu0 %v5044
    %5606 = vmatprep.subr.mxu0 0.0
    %5607 = vmatpush2.msra.mxu0 %v5043
    %5608 = vmatprep.subr.mxu0 0.0
    %5609 = vmatpush2.msra.mxu0 %v5042
    %5610 = vmatprep.subr.mxu0 0.0
    %5611 = vmatpush2.msra.mxu0 %v5041
    %5612 = vmatprep.subr.mxu0 0.0
    %5613 = vmatpush2.msra.mxu0 %v5040
    %5614 = vmatprep.subr.mxu0 0.0
    %5615 = vmatpush2.msra.mxu0 %v5039
    %5616 = vmatprep.mubr.f32.mxu0 %v4798
    %5617 = vmatmul.mubr.f32.gmra.mxu0 %v4797
    %v5618 = vpop.f32.mrf.mxu0
    %v5619 = vadd.f32 %v5549, %v5618
    %v5620 = vpop.f32.mrf.mxu0
    %5621 = vdwg.mxu0
    %v5622 = vxor.u32 %v5619, 2147483648
    %v5623 = vmul.f32 %v5622, 1.442695
    %v5624 = vpow.pop %v5623
    %v5625 = vadd.f32 %v5624, 1.0
    %v5626 = vrcp.pop %v5625
    %v5627 = vmul.f32 1.0, %v5626
    %vm5628 = vcmask 9216
    %v5629 = vsel %vm5628, %v5627, -inf
    %5630 = vmax.xlane.f32.xlu0 %v5629
    %v5631 = vpop.xlane.xlu0 %5630
    %v5632 = vsub.f32 %v5627, %v5631
    %v5633 = vmul.f32 %v5632, 1.442695
    %v5634 = vpow.pop %v5633
    %v5635 = vsel %vm5628, %v5634, 0.0
    %5636 = vadd.xlane.f32.xlu0 %v5635
    %v5637 = vpop.xlane.xlu0 %5636
    %v5638 = vlog2.pop %v5637
    %v5639 = vmul.f32 %v5638, 0.6931472
    %v5640 = vadd.f32 %v5631, %v5639
    %v5641 = vsub.f32 %v5627, %v5640
    %v5642 = vlaneseq
    %v5643 = vand.u32 %v5642, 127
    %v5644 = vld [vmem:[%s3] sm:$0x3]
    %5645 = vset.pattern.permute.xlu0 0
    %5646 = vperm.xlu0 %5645, %v5644
    %v5647 = vpop.permute.xlu0 %5646
    %vm5648 = vcmp.eq.s32.totalorder %v5643, %v5647
    %v5649 = vsel %vm5648, 1, 0
    %v5650 = vcvt.s32.f32 %v5649
    %v5651 = vmul.f32 %v5650, %v5641
    %v5652 = vsel %vm5628, %v5651, 0.0
    %5653 = vadd.xlane.f32.xlu0 %v5652
    %v5654 = vpop.xlane.xlu0 %5653
    %v5655 = vrot.slane %v5654, 4
    %v5656 = vadd.f32 %v5654, %v5655
    %v5657 = vrot.slane %v5656, 2
    %v5658 = vadd.f32 %v5656, %v5657
    %v5659 = vrot.slane %v5658, 1
    %v5660 = vadd.f32 %v5658, %v5659
    %s5661 = vtos %v5660
    %s5662 = ssub.f32 0.0, %s5661
    %v5663 = vrcp.pop 2.0
    %s5664 = vtos %v5663
    %s5665 = smul.f32 %s5662, %s5664
    %5666 = vst.msk [vmem:[#allocation2] sm:$0x3] %vm5628, %v5627
    %v5667 = vstv %s5665
    %vm5668 = vcmask 0
    %5669 = vst.msk [vmem:[#allocation4] sm:$0x1] %vm5668, %v5667
    // Predicated region
    $region142: #{matching_model_forward.1} parent=1 // pred_check
      _
    $region143: #{matching_model_forward.1} parent=1 // pred_check_branch
      %5671 = sbr.rel (0) target = $region145
    $region144: #{matching_model_forward.1} parent=1 // pred_region
      %s5673 = ssub.s32 32, 32
      %5674 = vsyncadd [#allocation3], %s5673
      %s5676 = sshll.u32 [#allocation2], 4
      %s5677 = int_to_ptr.vmem [resolvable:$true] %s5676
      %5679 = dma.vmem_to_hbm [thread:$0]  %s5677, 32, %s71, [#allocation3]
    $region145: #{matching_model_forward.1} parent=1 // pred_fallthru
      _
    // Predicated region
    $region146: #{matching_model_forward.1} parent=1 // pred_check
      _
    $region147: #{matching_model_forward.1} parent=1 // pred_check_branch
      %5681 = sbr.rel (0) target = $region149
    $region148: #{matching_model_forward.1} parent=1 // pred_region
      %s5683 = ssub.s32 16, 16
      %5684 = vsyncadd [#allocation5], %s5683
      %s5686 = sshll.u32 [#allocation4], 4
      %s5687 = int_to_ptr.vmem [resolvable:$true] %s5686
      %5689 = dma.vmem_to_hbm [thread:$0]  %s5687, 16, %s73, [#allocation5]
    $region149: #{matching_model_forward.1} parent=1 // pred_fallthru
      _
    // Predicated region
    $region150: #{matching_model_forward.1} parent=1 // pred_check
      _
    $region151: #{matching_model_forward.1} parent=1 // pred_check_branch
      %5691 = sbr.rel (0) target = $region153
    $region152: #{matching_model_forward.1} parent=1 // pred_region
      %5692 = dma.done [#allocation3], 32
    $region153: #{matching_model_forward.1} parent=1 // pred_fallthru
      _
    // Predicated region
    $region154: #{matching_model_forward.1} parent=1 // pred_check
      _
    $region155: #{matching_model_forward.1} parent=1 // pred_check_branch
      %5694 = sbr.rel (0) target = $region157
    $region156: #{matching_model_forward.1} parent=1 // pred_region
      %5695 = dma.done [#allocation5], 16
    $region157: #{matching_model_forward.1} parent=1 // pred_fallthru
      _
    %5696 = vsyncpa [#allocation3], 1
    %5697 = vsyncpa [#allocation5], 1

</llo_original>
